<compile_context>
chip_gen: v6e
topology: v6e:2x2x1
jax: 0.10.0
libtpu: 0.0.40
codegen_flags: <defaults>
</compile_context>

<pallas_src>
import functools

import jax
import jax.numpy as jnp
from jax import lax
from jax.experimental import pallas as pl
from jax.experimental.pallas import tpu as pltpu


def _round_up(x, m):
    return (x + m - 1) // m * m


# ----------------------------------------------------------------------------
# Kernel 1: RoI max pooling (separable two-stage masked max)
# ----------------------------------------------------------------------------
def _roi_pool_kernel(P, perm_ref, bidx_ref, hs_ref, he_ref, ws_ref, we_ref,
                     x_ref, out_ref):
    del perm_ref, bidx_ref                      # used only in the index_maps
    n = pl.program_id(0)
    x = x_ref[0]                                # (H, W, C) f32, C lane-dense
    H, W, C = x.shape
    neg_inf = jnp.float32(-jnp.inf)

    w_ids = lax.broadcasted_iota(jnp.int32, (W, C), 0)   # sublane-varying
    h_ids = lax.broadcasted_iota(jnp.int32, (H, C), 0)

    # Stage 1: P column-bin maxes over W  -> each (H, C)
    cols = []
    for pw in range(P):
        ws_v = ws_ref[n * P + pw]
        we_v = we_ref[n * P + pw]
        wmask = (w_ids >= ws_v) & (w_ids < we_v)          # (W, C)
        cols.append(jnp.max(jnp.where(wmask[None, :, :], x, neg_inf), axis=1))

    # Stage 2: P*P row-bin maxes over H -> lane-dense (1, C) rows of output
    for ph in range(P):
        hs_v = hs_ref[n * P + ph]
        he_v = he_ref[n * P + ph]
        hmask = (h_ids >= hs_v) & (h_ids < he_v)          # (H, C)
        h_empty = he_v <= hs_v
        for pw in range(P):
            ws_v = ws_ref[n * P + pw]
            we_v = we_ref[n * P + pw]
            v = jnp.max(jnp.where(hmask, cols[pw], neg_inf),
                        axis=0, keepdims=True)            # (1, C)
            empty = jnp.logical_or(h_empty, we_v <= ws_v)
            v = jnp.where(empty, jnp.float32(0.0), v)     # CUDA kernel: empty bin -> 0
            out_ref[0, pl.ds(ph * P + pw, 1), :] = v


def roi_pool(x_nhwc, perm, bidx_sorted, hs, he, ws, we, P):
    """x_nhwc: (B, H, W, C) f32.  perm/bidx_sorted: (N,) i32.  hs/he/ws/we: (N*P,) i32.

    Returns pooled (N, P*P, C) f32 in ORIGINAL RoI order (bin index = ph*P+pw).
    """
    B, H, W, C = x_nhwc.shape
    N = perm.shape[0]
    PP = P * P
    kernel = functools.partial(_roi_pool_kernel, P)

    grid_spec = pltpu.PrefetchScalarGridSpec(
        num_scalar_prefetch=6,
        grid=(N,),
        in_specs=[
            # RoIs are pre-sorted by image index -> consecutive steps reuse
            # the same block index and Pallas skips the re-DMA.
            pl.BlockSpec((1, H, W, C),
                         lambda n, perm, bidx, hs, he, ws, we: (bidx[n], 0, 0, 0)),
        ],
        out_specs=pl.BlockSpec((1, PP, C),
                               lambda n, perm, bidx, hs, he, ws, we: (perm[n], 0, 0)),
    )
    return pl.pallas_call(
        kernel,
        out_shape=jax.ShapeDtypeStruct((N, PP, C), jnp.float32),
        grid_spec=grid_spec,
        # "arbitrary": sequential grid keeps the sorted-by-image DMA reuse;
        # on v7x this axis could be flipped to "parallel" to use both TCs.
        compiler_params=pltpu.CompilerParams(
            dimension_semantics=("arbitrary",)),
        cost_estimate=pl.CostEstimate(
            flops=2 * N * (P * H * W * C + PP * H * C),
            transcendentals=0,
            bytes_accessed=B * H * W * C * 4 + N * PP * C * 4),
    )(perm, bidx_sorted, hs, he, ws, we, x_nhwc)


# ----------------------------------------------------------------------------
# Kernel 2: tiled classifier (Linear+ReLU) fused with the two head Linears
# ----------------------------------------------------------------------------
def _head_mlp_kernel(pooled_ref, w1_ref, b1_ref, w2_ref, b2_ref, out_ref,
                     h_acc, out_acc):
    j = pl.program_id(1)          # hidden tile
    k = pl.program_id(2)          # K (input-feature) tile
    nj = pl.num_programs(1)
    nk = pl.num_programs(2)

    @pl.when(jnp.logical_and(j == 0, k == 0))
    def _():
        out_acc[...] = jnp.zeros_like(out_acc)

    @pl.when(k == 0)
    def _():
        h_acc[...] = jnp.zeros_like(h_acc)

    h_acc[...] += jnp.dot(pooled_ref[...].astype(w1_ref.dtype), w1_ref[...],
                          preferred_element_type=jnp.float32)

    @pl.when(k == nk - 1)
    def _():
        h = jnp.maximum(h_acc[...] + b1_ref[...], 0.0)        # bias + ReLU (f32)
        out_acc[...] += jnp.dot(h.astype(w2_ref.dtype), w2_ref[...],
                                preferred_element_type=jnp.float32)

    @pl.when(jnp.logical_and(k == nk - 1, j == nj - 1))
    def _():
        out_ref[...] = (out_acc[...] + b2_ref[...]).astype(out_ref.dtype)


def head_mlp(pooled_flat, w1, b1, w2, b2, n_loc, n_sc, *,
             weight_dtype=jnp.float32, tm_max=128, tk_max=512, tn_max=512):
    """pooled_flat: (N, K).  w1: (K, hidden).  w2: (hidden, n_loc+n_sc) fused heads."""
    N, K = pooled_flat.shape
    hidden = w1.shape[1]
    n_out = w2.shape[1]

    tm = min(tm_max, _round_up(N, 8))
    tk = min(tk_max, _round_up(K, 128))
    tn = min(tn_max, _round_up(hidden, 128))

    M_pad = _round_up(N, tm)
    K_pad = _round_up(K, tk)
    H_pad = _round_up(hidden, tn)
    O_pad = _round_up(n_out, 128)          # lane-dense fused head output

    x = jnp.pad(pooled_flat, ((0, M_pad - N), (0, K_pad - K)))
    w1p = jnp.pad(w1, ((0, K_pad - K), (0, H_pad - hidden))).astype(weight_dtype)
    b1p = jnp.pad(b1.reshape(1, -1), ((0, 0), (0, H_pad - hidden)))
    w2p = jnp.pad(w2, ((0, H_pad - hidden), (0, O_pad - n_out))).astype(weight_dtype)
    b2p = jnp.pad(b2.reshape(1, -1), ((0, 0), (0, O_pad - n_out)))

    grid = (M_pad // tm, H_pad // tn, K_pad // tk)
    wbytes = jnp.dtype(weight_dtype).itemsize

    out = pl.pallas_call(
        _head_mlp_kernel,
        out_shape=jax.ShapeDtypeStruct((M_pad, O_pad), jnp.float32),
        grid_spec=pltpu.PrefetchScalarGridSpec(
            num_scalar_prefetch=0,
            grid=grid,
            in_specs=[
                pl.BlockSpec((tm, tk), lambda i, j, k: (i, k)),
                pl.BlockSpec((tk, tn), lambda i, j, k: (k, j)),
                pl.BlockSpec((1, tn), lambda i, j, k: (0, j)),
                pl.BlockSpec((tn, O_pad), lambda i, j, k: (j, 0)),
                pl.BlockSpec((1, O_pad), lambda i, j, k: (0, 0)),
            ],
            out_specs=pl.BlockSpec((tm, O_pad), lambda i, j, k: (i, 0)),
            scratch_shapes=[pltpu.VMEM((tm, tn), jnp.float32),
                            pltpu.VMEM((tm, O_pad), jnp.float32)],
        ),
        compiler_params=pltpu.CompilerParams(
            dimension_semantics=("parallel", "arbitrary", "arbitrary")),
        cost_estimate=pl.CostEstimate(
            flops=2 * M_pad * K_pad * H_pad + 2 * M_pad * H_pad * O_pad,
            transcendentals=0,
            bytes_accessed=(M_pad * K_pad * 4 + K_pad * H_pad * wbytes
                            + H_pad * O_pad * wbytes + M_pad * O_pad * 4)),
    )(x, w1p, b1p, w2p, b2p)

    loc = out[:N, :n_loc]
    score = out[:N, n_loc:n_loc + n_sc]
    return loc, score


# ----------------------------------------------------------------------------
# Glue: RoI bin boundary arithmetic (exactly the CUDA roi_forward formulas)
# ----------------------------------------------------------------------------
def _compute_roi_bins(roi_indice_and_roi, spatial_scale, H, W, P):
    r = roi_indice_and_roi                       # (N, 5): idx, x1, y1, x2, y2
    bidx = r[:, 0].astype(jnp.int32)

    def _round(v):                               # round-half-away (coords >= 0)
        return jnp.floor(v + 0.5).astype(jnp.int32)

    roi_start_w = _round(r[:, 1] * spatial_scale)
    roi_start_h = _round(r[:, 2] * spatial_scale)
    roi_end_w = _round(r[:, 3] * spatial_scale)
    roi_end_h = _round(r[:, 4] * spatial_scale)

    roi_w = jnp.maximum(roi_end_w - roi_start_w + 1, 1).astype(jnp.float32)
    roi_h = jnp.maximum(roi_end_h - roi_start_h + 1, 1).astype(jnp.float32)
    bin_h = roi_h / float(P)
    bin_w = roi_w / float(P)

    p = jnp.arange(P, dtype=jnp.float32)
    hstart = jnp.floor(p[None, :] * bin_h[:, None]).astype(jnp.int32)
    hend = jnp.ceil((p[None, :] + 1.0) * bin_h[:, None]).astype(jnp.int32)
    wstart = jnp.floor(p[None, :] * bin_w[:, None]).astype(jnp.int32)
    wend = jnp.ceil((p[None, :] + 1.0) * bin_w[:, None]).astype(jnp.int32)

    hstart = jnp.clip(hstart + roi_start_h[:, None], 0, H)     # (N, P)
    hend = jnp.clip(hend + roi_start_h[:, None], 0, H)
    wstart = jnp.clip(wstart + roi_start_w[:, None], 0, W)
    wend = jnp.clip(wend + roi_start_w[:, None], 0, W)
    return bidx, hstart, hend, wstart, wend


# ----------------------------------------------------------------------------
# Head forward (mirrors the PyTorch module)
# ----------------------------------------------------------------------------
def head_forward(x, roi, roi_indice, params, *, roi_size, spatial_scale,
                 weight_dtype=jnp.float32):
    B, C, H, W = x.shape
    P = roi_size
    roi = roi[0].astype(jnp.float32)                       # (N, 4) y1,x1,y2,x2
    roi_ind = roi_indice[0].astype(jnp.float32)            # (N,)
    roi_indice_and_roi = jnp.concatenate(
        [roi_ind[:, None], roi], axis=1)[:, jnp.array([0, 2, 1, 4, 3])]
    # -> (idx, x1, y1, x2, y2)

    bidx, hstart, hend, wstart, wend = _compute_roi_bins(
        roi_indice_and_roi, spatial_scale, H, W, P)

    # Group RoIs by image so the feature block is DMA'd at most B times.
    order = jnp.argsort(bidx).astype(jnp.int32)            # grid step -> RoI id
    bidx_s = bidx[order].astype(jnp.int32)
    hs = hstart[order].reshape(-1).astype(jnp.int32)       # (N*P,) 1-D for SMEM
    he = hend[order].reshape(-1).astype(jnp.int32)
    ws = wstart[order].reshape(-1).astype(jnp.int32)
    we = wend[order].reshape(-1).astype(jnp.int32)

    x_nhwc = jnp.transpose(x, (0, 2, 3, 1))                # (B, H, W, C)

    pooled = roi_pool(x_nhwc, order, bidx_s, hs, he, ws, we, P)   # (N, P*P, C)
    pooled_flat = pooled.reshape(pooled.shape[0], -1)             # (ph, pw, c) order

    w1, b1, wl, bl, wsc, bsc = params
    hidden = w1.shape[1]
    # Permute w1 rows from PyTorch's (c, ph, pw) flattening to our (ph, pw, c)
    # layout (one-time, outside the kernel) -> identical math, no transpose.
    w1p = w1.reshape(C, P, P, hidden).transpose(1, 2, 0, 3).reshape(P * P * C, hidden)
    # Fuse class_location / class_score into one lane-padded matmul.
    w2 = jnp.concatenate([wl, wsc], axis=1)
    b2 = jnp.concatenate([bl, bsc], axis=1)

    loc, score = head_mlp(pooled_flat, w1p, b1, w2, b2,
                          wl.shape[1], wsc.shape[1], weight_dtype=weight_dtype)
    return loc[None], score[None]                          # unsqueeze(0)


def init_params(key, in_dim, n_class, hidden=4096):
    k1, k2, k3 = jax.random.split(key, 3)
    # classifier: Linear(in_dim, 4096) + ReLU (deterministic synthetic init)
    w1 = jax.random.normal(k1, (in_dim, hidden), jnp.float32) * 0.01
    b1 = jnp.zeros((1, hidden), jnp.float32)
    # class_location: normal_init(mean=0, std=0.001), bias zero
    wl = jax.random.normal(k2, (hidden, n_class * 4), jnp.float32) * 0.001
    bl = jnp.zeros((1, n_class * 4), jnp.float32)
    # class_score: normal_init(mean=0, std=0.01), bias zero
    wsc = jax.random.normal(k3, (hidden, n_class), jnp.float32) * 0.01
    bsc = jnp.zeros((1, n_class), jnp.float32)
    return (w1, b1, wl, bl, wsc, bsc)


if __name__ == "__main__":
    key = jax.random.PRNGKey(0)
    B, C, Hf, Wf = 2, 8, 16, 16
    n_class, roi_size, spatial_scale = 4, 7, 0.25
    N = 8                                  # number of RoIs

    kx, kr, kp = jax.random.split(key, 3)
    x = jax.random.normal(kx, (B, C, Hf, Wf), jnp.float32)

    img = Hf / spatial_scale               # original image size = 64
    k1, k2, k3, k4 = jax.random.split(kr, 4)
    y1 = jax.random.uniform(k1, (N,), minval=0.0, maxval=img - 20.0)
    x1 = jax.random.uniform(k2, (N,), minval=0.0, maxval=img - 20.0)
    hh = jax.random.uniform(k3, (N,), minval=8.0, maxval=20.0)
    ww = jax.random.uniform(k4, (N,), minval=8.0, maxval=20.0)
    roi = jnp.stack([y1, x1, y1 + hh, x1 + ww], axis=1)[None]        # (1, N, 4)
    roi_indice = jnp.concatenate(
        [jnp.zeros(N // 2, jnp.int32), jnp.ones(N - N // 2, jnp.int32)])[None]

    params = init_params(kp, C * roi_size * roi_size, n_class)

    fwd = jax.jit(functools.partial(head_forward, roi_size=roi_size,
                                    spatial_scale=spatial_scale))
    loc, score = fwd(x, roi, roi_indice, params)
    jax.block_until_ready((loc, score))

    assert loc.shape == (1, N, n_class * 4), loc.shape
    assert score.shape == (1, N, n_class), score.shape
    assert loc.dtype == jnp.float32 and score.dtype == jnp.float32
    assert bool(jnp.all(jnp.isfinite(loc))) and bool(jnp.all(jnp.isfinite(score)))
    print("KERNEL_OK")
</pallas_src>

<mosaic_0001>
module attributes {stable_mosaic.version = 11 : i64} {
  func.func @_roi_pool_kernel(%arg0: i32, %arg1: memref<8xi32, #tpu.memory_space<smem>>, %arg2: memref<8xi32, #tpu.memory_space<smem>>, %arg3: memref<56xi32, #tpu.memory_space<smem>>, %arg4: memref<56xi32, #tpu.memory_space<smem>>, %arg5: memref<56xi32, #tpu.memory_space<smem>>, %arg6: memref<56xi32, #tpu.memory_space<smem>>, %arg7: memref<1x16x16x8xf32, #tpu.memory_space<vmem>>, %arg8: memref<1x49x8xf32, #tpu.memory_space<vmem>>) attributes {dimension_semantics = [#tpu.dimension_semantics<arbitrary>], iteration_bounds = array<i64: 8>, scalar_prefetch = 6 : i64, scratch_operands = 0 : i64, tpu.core_type = #tpu.core_type<tc>, window_params = [{transform_indices = @transform_0, window_bounds = array<i64: 1, 16, 16, 8>}, {transform_indices = @transform_1, window_bounds = array<i64: 1, 49, 8>}]} {
    %c0 = arith.constant 0 : index
    %c0_0 = arith.constant 0 : index
    %c0_1 = arith.constant 0 : index
    %c0_2 = arith.constant 0 : index
    %0 = vector.load %arg7[%c0, %c0_0, %c0_1, %c0_2] : memref<1x16x16x8xf32, #tpu.memory_space<vmem>>, vector<1x16x16x8xf32>
    %1 = vector.shape_cast %0 : vector<1x16x16x8xf32> to vector<16x16x8xf32>
    %2 = tpu.iota {dimensions = array<i32: 0>} : vector<16x8xi32>
    %3 = tpu.iota {dimensions = array<i32: 0>} : vector<16x8xi32>
    %c7_i32 = arith.constant 7 : i32
    %4 = arith.muli %arg0, %c7_i32 : i32
    %c0_i32 = arith.constant 0 : i32
    %5 = arith.addi %4, %c0_i32 : i32
    %6 = arith.index_cast %5 : i32 to index
    %7 = memref.load %arg5[%6] : memref<56xi32, #tpu.memory_space<smem>>
    %c7_i32_3 = arith.constant 7 : i32
    %8 = arith.muli %arg0, %c7_i32_3 : i32
    %c0_i32_4 = arith.constant 0 : i32
    %9 = arith.addi %8, %c0_i32_4 : i32
    %10 = arith.index_cast %9 : i32 to index
    %11 = memref.load %arg6[%10] : memref<56xi32, #tpu.memory_space<smem>>
    %12 = vector.broadcast %7 : i32 to vector<16x8xi32>
    %13 = arith.cmpi sge, %2, %12 : vector<16x8xi32>
    %14 = vector.broadcast %11 : i32 to vector<16x8xi32>
    %15 = arith.cmpi slt, %2, %14 : vector<16x8xi32>
    %16 = arith.andi %13, %15 : vector<16x8xi1>
    %17 = vector.shape_cast %16 : vector<16x8xi1> to vector<1x16x8xi1>
    %cst = arith.constant 0xFF800000 : f32
    %18 = vector.shape_cast %17 : vector<1x16x8xi1> to vector<1x16x8xi1>
    %19 = vector.broadcast %18 : vector<1x16x8xi1> to vector<16x16x8xi1>
    %20 = vector.broadcast %cst : f32 to vector<16x16x8xf32>
    %21 = arith.select %19, %1, %20 : vector<16x16x8xi1>, vector<16x16x8xf32>
    %cst_5 = arith.constant dense<0xFF800000> : vector<16x8xf32>
    %22 = vector.multi_reduction <maximumf>, %21, %cst_5 [1] : vector<16x16x8xf32> to vector<16x8xf32>
    %c7_i32_6 = arith.constant 7 : i32
    %23 = arith.muli %arg0, %c7_i32_6 : i32
    %c1_i32 = arith.constant 1 : i32
    %24 = arith.addi %23, %c1_i32 : i32
    %25 = arith.index_cast %24 : i32 to index
    %26 = memref.load %arg5[%25] : memref<56xi32, #tpu.memory_space<smem>>
    %c7_i32_7 = arith.constant 7 : i32
    %27 = arith.muli %arg0, %c7_i32_7 : i32
    %c1_i32_8 = arith.constant 1 : i32
    %28 = arith.addi %27, %c1_i32_8 : i32
    %29 = arith.index_cast %28 : i32 to index
    %30 = memref.load %arg6[%29] : memref<56xi32, #tpu.memory_space<smem>>
    %31 = vector.broadcast %26 : i32 to vector<16x8xi32>
    %32 = arith.cmpi sge, %2, %31 : vector<16x8xi32>
    %33 = vector.broadcast %30 : i32 to vector<16x8xi32>
    %34 = arith.cmpi slt, %2, %33 : vector<16x8xi32>
    %35 = arith.andi %32, %34 : vector<16x8xi1>
    %36 = vector.shape_cast %35 : vector<16x8xi1> to vector<1x16x8xi1>
    %cst_9 = arith.constant 0xFF800000 : f32
    %37 = vector.shape_cast %36 : vector<1x16x8xi1> to vector<1x16x8xi1>
    %38 = vector.broadcast %37 : vector<1x16x8xi1> to vector<16x16x8xi1>
    %39 = vector.broadcast %cst_9 : f32 to vector<16x16x8xf32>
    %40 = arith.select %38, %1, %39 : vector<16x16x8xi1>, vector<16x16x8xf32>
    %cst_10 = arith.constant dense<0xFF800000> : vector<16x8xf32>
    %41 = vector.multi_reduction <maximumf>, %40, %cst_10 [1] : vector<16x16x8xf32> to vector<16x8xf32>
    %c7_i32_11 = arith.constant 7 : i32
    %42 = arith.muli %arg0, %c7_i32_11 : i32
    %c2_i32 = arith.constant 2 : i32
    %43 = arith.addi %42, %c2_i32 : i32
    %44 = arith.index_cast %43 : i32 to index
    %45 = memref.load %arg5[%44] : memref<56xi32, #tpu.memory_space<smem>>
    %c7_i32_12 = arith.constant 7 : i32
    %46 = arith.muli %arg0, %c7_i32_12 : i32
    %c2_i32_13 = arith.constant 2 : i32
    %47 = arith.addi %46, %c2_i32_13 : i32
    %48 = arith.index_cast %47 : i32 to index
    %49 = memref.load %arg6[%48] : memref<56xi32, #tpu.memory_space<smem>>
    %50 = vector.broadcast %45 : i32 to vector<16x8xi32>
    %51 = arith.cmpi sge, %2, %50 : vector<16x8xi32>
    %52 = vector.broadcast %49 : i32 to vector<16x8xi32>
    %53 = arith.cmpi slt, %2, %52 : vector<16x8xi32>
    %54 = arith.andi %51, %53 : vector<16x8xi1>
    %55 = vector.shape_cast %54 : vector<16x8xi1> to vector<1x16x8xi1>
    %cst_14 = arith.constant 0xFF800000 : f32
    %56 = vector.shape_cast %55 : vector<1x16x8xi1> to vector<1x16x8xi1>
    %57 = vector.broadcast %56 : vector<1x16x8xi1> to vector<16x16x8xi1>
    %58 = vector.broadcast %cst_14 : f32 to vector<16x16x8xf32>
    %59 = arith.select %57, %1, %58 : vector<16x16x8xi1>, vector<16x16x8xf32>
    %cst_15 = arith.constant dense<0xFF800000> : vector<16x8xf32>
    %60 = vector.multi_reduction <maximumf>, %59, %cst_15 [1] : vector<16x16x8xf32> to vector<16x8xf32>
    %c7_i32_16 = arith.constant 7 : i32
    %61 = arith.muli %arg0, %c7_i32_16 : i32
    %c3_i32 = arith.constant 3 : i32
    %62 = arith.addi %61, %c3_i32 : i32
    %63 = arith.index_cast %62 : i32 to index
    %64 = memref.load %arg5[%63] : memref<56xi32, #tpu.memory_space<smem>>
    %c7_i32_17 = arith.constant 7 : i32
    %65 = arith.muli %arg0, %c7_i32_17 : i32
    %c3_i32_18 = arith.constant 3 : i32
    %66 = arith.addi %65, %c3_i32_18 : i32
    %67 = arith.index_cast %66 : i32 to index
    %68 = memref.load %arg6[%67] : memref<56xi32, #tpu.memory_space<smem>>
    %69 = vector.broadcast %64 : i32 to vector<16x8xi32>
    %70 = arith.cmpi sge, %2, %69 : vector<16x8xi32>
    %71 = vector.broadcast %68 : i32 to vector<16x8xi32>
    %72 = arith.cmpi slt, %2, %71 : vector<16x8xi32>
    %73 = arith.andi %70, %72 : vector<16x8xi1>
    %74 = vector.shape_cast %73 : vector<16x8xi1> to vector<1x16x8xi1>
    %cst_19 = arith.constant 0xFF800000 : f32
    %75 = vector.shape_cast %74 : vector<1x16x8xi1> to vector<1x16x8xi1>
    %76 = vector.broadcast %75 : vector<1x16x8xi1> to vector<16x16x8xi1>
    %77 = vector.broadcast %cst_19 : f32 to vector<16x16x8xf32>
    %78 = arith.select %76, %1, %77 : vector<16x16x8xi1>, vector<16x16x8xf32>
    %cst_20 = arith.constant dense<0xFF800000> : vector<16x8xf32>
    %79 = vector.multi_reduction <maximumf>, %78, %cst_20 [1] : vector<16x16x8xf32> to vector<16x8xf32>
    %c7_i32_21 = arith.constant 7 : i32
    %80 = arith.muli %arg0, %c7_i32_21 : i32
    %c4_i32 = arith.constant 4 : i32
    %81 = arith.addi %80, %c4_i32 : i32
    %82 = arith.index_cast %81 : i32 to index
    %83 = memref.load %arg5[%82] : memref<56xi32, #tpu.memory_space<smem>>
    %c7_i32_22 = arith.constant 7 : i32
    %84 = arith.muli %arg0, %c7_i32_22 : i32
    %c4_i32_23 = arith.constant 4 : i32
    %85 = arith.addi %84, %c4_i32_23 : i32
    %86 = arith.index_cast %85 : i32 to index
    %87 = memref.load %arg6[%86] : memref<56xi32, #tpu.memory_space<smem>>
    %88 = vector.broadcast %83 : i32 to vector<16x8xi32>
    %89 = arith.cmpi sge, %2, %88 : vector<16x8xi32>
    %90 = vector.broadcast %87 : i32 to vector<16x8xi32>
    %91 = arith.cmpi slt, %2, %90 : vector<16x8xi32>
    %92 = arith.andi %89, %91 : vector<16x8xi1>
    %93 = vector.shape_cast %92 : vector<16x8xi1> to vector<1x16x8xi1>
    %cst_24 = arith.constant 0xFF800000 : f32
    %94 = vector.shape_cast %93 : vector<1x16x8xi1> to vector<1x16x8xi1>
    %95 = vector.broadcast %94 : vector<1x16x8xi1> to vector<16x16x8xi1>
    %96 = vector.broadcast %cst_24 : f32 to vector<16x16x8xf32>
    %97 = arith.select %95, %1, %96 : vector<16x16x8xi1>, vector<16x16x8xf32>
    %cst_25 = arith.constant dense<0xFF800000> : vector<16x8xf32>
    %98 = vector.multi_reduction <maximumf>, %97, %cst_25 [1] : vector<16x16x8xf32> to vector<16x8xf32>
    %c7_i32_26 = arith.constant 7 : i32
    %99 = arith.muli %arg0, %c7_i32_26 : i32
    %c5_i32 = arith.constant 5 : i32
    %100 = arith.addi %99, %c5_i32 : i32
    %101 = arith.index_cast %100 : i32 to index
    %102 = memref.load %arg5[%101] : memref<56xi32, #tpu.memory_space<smem>>
    %c7_i32_27 = arith.constant 7 : i32
    %103 = arith.muli %arg0, %c7_i32_27 : i32
    %c5_i32_28 = arith.constant 5 : i32
    %104 = arith.addi %103, %c5_i32_28 : i32
    %105 = arith.index_cast %104 : i32 to index
    %106 = memref.load %arg6[%105] : memref<56xi32, #tpu.memory_space<smem>>
    %107 = vector.broadcast %102 : i32 to vector<16x8xi32>
    %108 = arith.cmpi sge, %2, %107 : vector<16x8xi32>
    %109 = vector.broadcast %106 : i32 to vector<16x8xi32>
    %110 = arith.cmpi slt, %2, %109 : vector<16x8xi32>
    %111 = arith.andi %108, %110 : vector<16x8xi1>
    %112 = vector.shape_cast %111 : vector<16x8xi1> to vector<1x16x8xi1>
    %cst_29 = arith.constant 0xFF800000 : f32
    %113 = vector.shape_cast %112 : vector<1x16x8xi1> to vector<1x16x8xi1>
    %114 = vector.broadcast %113 : vector<1x16x8xi1> to vector<16x16x8xi1>
    %115 = vector.broadcast %cst_29 : f32 to vector<16x16x8xf32>
    %116 = arith.select %114, %1, %115 : vector<16x16x8xi1>, vector<16x16x8xf32>
    %cst_30 = arith.constant dense<0xFF800000> : vector<16x8xf32>
    %117 = vector.multi_reduction <maximumf>, %116, %cst_30 [1] : vector<16x16x8xf32> to vector<16x8xf32>
    %c7_i32_31 = arith.constant 7 : i32
    %118 = arith.muli %arg0, %c7_i32_31 : i32
    %c6_i32 = arith.constant 6 : i32
    %119 = arith.addi %118, %c6_i32 : i32
    %120 = arith.index_cast %119 : i32 to index
    %121 = memref.load %arg5[%120] : memref<56xi32, #tpu.memory_space<smem>>
    %c7_i32_32 = arith.constant 7 : i32
    %122 = arith.muli %arg0, %c7_i32_32 : i32
    %c6_i32_33 = arith.constant 6 : i32
    %123 = arith.addi %122, %c6_i32_33 : i32
    %124 = arith.index_cast %123 : i32 to index
    %125 = memref.load %arg6[%124] : memref<56xi32, #tpu.memory_space<smem>>
    %126 = vector.broadcast %121 : i32 to vector<16x8xi32>
    %127 = arith.cmpi sge, %2, %126 : vector<16x8xi32>
    %128 = vector.broadcast %125 : i32 to vector<16x8xi32>
    %129 = arith.cmpi slt, %2, %128 : vector<16x8xi32>
    %130 = arith.andi %127, %129 : vector<16x8xi1>
    %131 = vector.shape_cast %130 : vector<16x8xi1> to vector<1x16x8xi1>
    %cst_34 = arith.constant 0xFF800000 : f32
    %132 = vector.shape_cast %131 : vector<1x16x8xi1> to vector<1x16x8xi1>
    %133 = vector.broadcast %132 : vector<1x16x8xi1> to vector<16x16x8xi1>
    %134 = vector.broadcast %cst_34 : f32 to vector<16x16x8xf32>
    %135 = arith.select %133, %1, %134 : vector<16x16x8xi1>, vector<16x16x8xf32>
    %cst_35 = arith.constant dense<0xFF800000> : vector<16x8xf32>
    %136 = vector.multi_reduction <maximumf>, %135, %cst_35 [1] : vector<16x16x8xf32> to vector<16x8xf32>
    %c7_i32_36 = arith.constant 7 : i32
    %137 = arith.muli %arg0, %c7_i32_36 : i32
    %c0_i32_37 = arith.constant 0 : i32
    %138 = arith.addi %137, %c0_i32_37 : i32
    %139 = arith.index_cast %138 : i32 to index
    %140 = memref.load %arg3[%139] : memref<56xi32, #tpu.memory_space<smem>>
    %c7_i32_38 = arith.constant 7 : i32
    %141 = arith.muli %arg0, %c7_i32_38 : i32
    %c0_i32_39 = arith.constant 0 : i32
    %142 = arith.addi %141, %c0_i32_39 : i32
    %143 = arith.index_cast %142 : i32 to index
    %144 = memref.load %arg4[%143] : memref<56xi32, #tpu.memory_space<smem>>
    %145 = vector.broadcast %140 : i32 to vector<16x8xi32>
    %146 = arith.cmpi sge, %3, %145 : vector<16x8xi32>
    %147 = vector.broadcast %144 : i32 to vector<16x8xi32>
    %148 = arith.cmpi slt, %3, %147 : vector<16x8xi32>
    %149 = arith.andi %146, %148 : vector<16x8xi1>
    %150 = arith.cmpi sle, %144, %140 : i32
    %c7_i32_40 = arith.constant 7 : i32
    %151 = arith.muli %arg0, %c7_i32_40 : i32
    %c0_i32_41 = arith.constant 0 : i32
    %152 = arith.addi %151, %c0_i32_41 : i32
    %153 = arith.index_cast %152 : i32 to index
    %154 = memref.load %arg5[%153] : memref<56xi32, #tpu.memory_space<smem>>
    %c7_i32_42 = arith.constant 7 : i32
    %155 = arith.muli %arg0, %c7_i32_42 : i32
    %c0_i32_43 = arith.constant 0 : i32
    %156 = arith.addi %155, %c0_i32_43 : i32
    %157 = arith.index_cast %156 : i32 to index
    %158 = memref.load %arg6[%157] : memref<56xi32, #tpu.memory_space<smem>>
    %cst_44 = arith.constant 0xFF800000 : f32
    %159 = vector.broadcast %cst_44 : f32 to vector<16x8xf32>
    %160 = arith.select %149, %22, %159 : vector<16x8xi1>, vector<16x8xf32>
    %cst_45 = arith.constant dense<0xFF800000> : vector<8xf32>
    %161 = vector.multi_reduction <maximumf>, %160, %cst_45 [0] : vector<16x8xf32> to vector<8xf32>
    %162 = vector.shape_cast %161 : vector<8xf32> to vector<1x8xf32>
    %163 = arith.cmpi sle, %158, %154 : i32
    %164 = arith.ori %150, %163 : i1
    %cst_46 = arith.constant 0.000000e+00 : f32
    %165 = vector.broadcast %cst_46 : f32 to vector<1x8xf32>
    %166 = arith.select %164, %165, %162 : vector<1x8xf32>
    %c0_47 = arith.constant 0 : index
    %c0_48 = arith.constant 0 : index
    %c0_49 = arith.constant 0 : index
    %167 = vector.load %arg8[%c0_47, %c0_48, %c0_49] : memref<1x49x8xf32, #tpu.memory_space<vmem>>, vector<1x1x8xf32>
    %168 = vector.shape_cast %167 : vector<1x1x8xf32> to vector<1x8xf32>
    %169 = vector.shape_cast %166 : vector<1x8xf32> to vector<1x1x8xf32>
    tpu.vector_store %arg8[%c0_47, %c0_48, %c0_49], %169 {strides = array<i32>} : memref<1x49x8xf32, #tpu.memory_space<vmem>>, vector<1x1x8xf32>,
    %c7_i32_50 = arith.constant 7 : i32
    %170 = arith.muli %arg0, %c7_i32_50 : i32
    %c1_i32_51 = arith.constant 1 : i32
    %171 = arith.addi %170, %c1_i32_51 : i32
    %172 = arith.index_cast %171 : i32 to index
    %173 = memref.load %arg5[%172] : memref<56xi32, #tpu.memory_space<smem>>
    %c7_i32_52 = arith.constant 7 : i32
    %174 = arith.muli %arg0, %c7_i32_52 : i32
    %c1_i32_53 = arith.constant 1 : i32
    %175 = arith.addi %174, %c1_i32_53 : i32
    %176 = arith.index_cast %175 : i32 to index
    %177 = memref.load %arg6[%176] : memref<56xi32, #tpu.memory_space<smem>>
    %cst_54 = arith.constant 0xFF800000 : f32
    %178 = vector.broadcast %cst_54 : f32 to vector<16x8xf32>
    %179 = arith.select %149, %41, %178 : vector<16x8xi1>, vector<16x8xf32>
    %cst_55 = arith.constant dense<0xFF800000> : vector<8xf32>
    %180 = vector.multi_reduction <maximumf>, %179, %cst_55 [0] : vector<16x8xf32> to vector<8xf32>
    %181 = vector.shape_cast %180 : vector<8xf32> to vector<1x8xf32>
    %182 = arith.cmpi sle, %177, %173 : i32
    %183 = arith.ori %150, %182 : i1
    %cst_56 = arith.constant 0.000000e+00 : f32
    %184 = vector.broadcast %cst_56 : f32 to vector<1x8xf32>
    %185 = arith.select %183, %184, %181 : vector<1x8xf32>
    %c0_57 = arith.constant 0 : index
    %c1 = arith.constant 1 : index
    %c0_58 = arith.constant 0 : index
    %186 = vector.load %arg8[%c0_57, %c1, %c0_58] : memref<1x49x8xf32, #tpu.memory_space<vmem>>, vector<1x1x8xf32>
    %187 = vector.shape_cast %186 : vector<1x1x8xf32> to vector<1x8xf32>
    %188 = vector.shape_cast %185 : vector<1x8xf32> to vector<1x1x8xf32>
    tpu.vector_store %arg8[%c0_57, %c1, %c0_58], %188 {strides = array<i32>} : memref<1x49x8xf32, #tpu.memory_space<vmem>>, vector<1x1x8xf32>,
    %c7_i32_59 = arith.constant 7 : i32
    %189 = arith.muli %arg0, %c7_i32_59 : i32
    %c2_i32_60 = arith.constant 2 : i32
    %190 = arith.addi %189, %c2_i32_60 : i32
    %191 = arith.index_cast %190 : i32 to index
    %192 = memref.load %arg5[%191] : memref<56xi32, #tpu.memory_space<smem>>
    %c7_i32_61 = arith.constant 7 : i32
    %193 = arith.muli %arg0, %c7_i32_61 : i32
    %c2_i32_62 = arith.constant 2 : i32
    %194 = arith.addi %193, %c2_i32_62 : i32
    %195 = arith.index_cast %194 : i32 to index
    %196 = memref.load %arg6[%195] : memref<56xi32, #tpu.memory_space<smem>>
    %cst_63 = arith.constant 0xFF800000 : f32
    %197 = vector.broadcast %cst_63 : f32 to vector<16x8xf32>
    %198 = arith.select %149, %60, %197 : vector<16x8xi1>, vector<16x8xf32>
    %cst_64 = arith.constant dense<0xFF800000> : vector<8xf32>
    %199 = vector.multi_reduction <maximumf>, %198, %cst_64 [0] : vector<16x8xf32> to vector<8xf32>
    %200 = vector.shape_cast %199 : vector<8xf32> to vector<1x8xf32>
    %201 = arith.cmpi sle, %196, %192 : i32
    %202 = arith.ori %150, %201 : i1
    %cst_65 = arith.constant 0.000000e+00 : f32
    %203 = vector.broadcast %cst_65 : f32 to vector<1x8xf32>
    %204 = arith.select %202, %203, %200 : vector<1x8xf32>
    %c0_66 = arith.constant 0 : index
    %c2 = arith.constant 2 : index
    %c0_67 = arith.constant 0 : index
    %205 = vector.load %arg8[%c0_66, %c2, %c0_67] : memref<1x49x8xf32, #tpu.memory_space<vmem>>, vector<1x1x8xf32>
    %206 = vector.shape_cast %205 : vector<1x1x8xf32> to vector<1x8xf32>
    %207 = vector.shape_cast %204 : vector<1x8xf32> to vector<1x1x8xf32>
    tpu.vector_store %arg8[%c0_66, %c2, %c0_67], %207 {strides = array<i32>} : memref<1x49x8xf32, #tpu.memory_space<vmem>>, vector<1x1x8xf32>,
    %c7_i32_68 = arith.constant 7 : i32
    %208 = arith.muli %arg0, %c7_i32_68 : i32
    %c3_i32_69 = arith.constant 3 : i32
    %209 = arith.addi %208, %c3_i32_69 : i32
    %210 = arith.index_cast %209 : i32 to index
    %211 = memref.load %arg5[%210] : memref<56xi32, #tpu.memory_space<smem>>
    %c7_i32_70 = arith.constant 7 : i32
    %212 = arith.muli %arg0, %c7_i32_70 : i32
    %c3_i32_71 = arith.constant 3 : i32
    %213 = arith.addi %212, %c3_i32_71 : i32
    %214 = arith.index_cast %213 : i32 to index
    %215 = memref.load %arg6[%214] : memref<56xi32, #tpu.memory_space<smem>>
    %cst_72 = arith.constant 0xFF800000 : f32
    %216 = vector.broadcast %cst_72 : f32 to vector<16x8xf32>
    %217 = arith.select %149, %79, %216 : vector<16x8xi1>, vector<16x8xf32>
    %cst_73 = arith.constant dense<0xFF800000> : vector<8xf32>
    %218 = vector.multi_reduction <maximumf>, %217, %cst_73 [0] : vector<16x8xf32> to vector<8xf32>
    %219 = vector.shape_cast %218 : vector<8xf32> to vector<1x8xf32>
    %220 = arith.cmpi sle, %215, %211 : i32
    %221 = arith.ori %150, %220 : i1
    %cst_74 = arith.constant 0.000000e+00 : f32
    %222 = vector.broadcast %cst_74 : f32 to vector<1x8xf32>
    %223 = arith.select %221, %222, %219 : vector<1x8xf32>
    %c0_75 = arith.constant 0 : index
    %c3 = arith.constant 3 : index
    %c0_76 = arith.constant 0 : index
    %224 = vector.load %arg8[%c0_75, %c3, %c0_76] : memref<1x49x8xf32, #tpu.memory_space<vmem>>, vector<1x1x8xf32>
    %225 = vector.shape_cast %224 : vector<1x1x8xf32> to vector<1x8xf32>
    %226 = vector.shape_cast %223 : vector<1x8xf32> to vector<1x1x8xf32>
    tpu.vector_store %arg8[%c0_75, %c3, %c0_76], %226 {strides = array<i32>} : memref<1x49x8xf32, #tpu.memory_space<vmem>>, vector<1x1x8xf32>,
    %c7_i32_77 = arith.constant 7 : i32
    %227 = arith.muli %arg0, %c7_i32_77 : i32
    %c4_i32_78 = arith.constant 4 : i32
    %228 = arith.addi %227, %c4_i32_78 : i32
    %229 = arith.index_cast %228 : i32 to index
    %230 = memref.load %arg5[%229] : memref<56xi32, #tpu.memory_space<smem>>
    %c7_i32_79 = arith.constant 7 : i32
    %231 = arith.muli %arg0, %c7_i32_79 : i32
    %c4_i32_80 = arith.constant 4 : i32
    %232 = arith.addi %231, %c4_i32_80 : i32
    %233 = arith.index_cast %232 : i32 to index
    %234 = memref.load %arg6[%233] : memref<56xi32, #tpu.memory_space<smem>>
    %cst_81 = arith.constant 0xFF800000 : f32
    %235 = vector.broadcast %cst_81 : f32 to vector<16x8xf32>
    %236 = arith.select %149, %98, %235 : vector<16x8xi1>, vector<16x8xf32>
    %cst_82 = arith.constant dense<0xFF800000> : vector<8xf32>
    %237 = vector.multi_reduction <maximumf>, %236, %cst_82 [0] : vector<16x8xf32> to vector<8xf32>
    %238 = vector.shape_cast %237 : vector<8xf32> to vector<1x8xf32>
    %239 = arith.cmpi sle, %234, %230 : i32
    %240 = arith.ori %150, %239 : i1
    %cst_83 = arith.constant 0.000000e+00 : f32
    %241 = vector.broadcast %cst_83 : f32 to vector<1x8xf32>
    %242 = arith.select %240, %241, %238 : vector<1x8xf32>
    %c0_84 = arith.constant 0 : index
    %c4 = arith.constant 4 : index
    %c0_85 = arith.constant 0 : index
    %243 = vector.load %arg8[%c0_84, %c4, %c0_85] : memref<1x49x8xf32, #tpu.memory_space<vmem>>, vector<1x1x8xf32>
    %244 = vector.shape_cast %243 : vector<1x1x8xf32> to vector<1x8xf32>
    %245 = vector.shape_cast %242 : vector<1x8xf32> to vector<1x1x8xf32>
    tpu.vector_store %arg8[%c0_84, %c4, %c0_85], %245 {strides = array<i32>} : memref<1x49x8xf32, #tpu.memory_space<vmem>>, vector<1x1x8xf32>,
    %c7_i32_86 = arith.constant 7 : i32
    %246 = arith.muli %arg0, %c7_i32_86 : i32
    %c5_i32_87 = arith.constant 5 : i32
    %247 = arith.addi %246, %c5_i32_87 : i32
    %248 = arith.index_cast %247 : i32 to index
    %249 = memref.load %arg5[%248] : memref<56xi32, #tpu.memory_space<smem>>
    %c7_i32_88 = arith.constant 7 : i32
    %250 = arith.muli %arg0, %c7_i32_88 : i32
    %c5_i32_89 = arith.constant 5 : i32
    %251 = arith.addi %250, %c5_i32_89 : i32
    %252 = arith.index_cast %251 : i32 to index
    %253 = memref.load %arg6[%252] : memref<56xi32, #tpu.memory_space<smem>>
    %cst_90 = arith.constant 0xFF800000 : f32
    %254 = vector.broadcast %cst_90 : f32 to vector<16x8xf32>
    %255 = arith.select %149, %117, %254 : vector<16x8xi1>, vector<16x8xf32>
    %cst_91 = arith.constant dense<0xFF800000> : vector<8xf32>
    %256 = vector.multi_reduction <maximumf>, %255, %cst_91 [0] : vector<16x8xf32> to vector<8xf32>
    %257 = vector.shape_cast %256 : vector<8xf32> to vector<1x8xf32>
    %258 = arith.cmpi sle, %253, %249 : i32
    %259 = arith.ori %150, %258 : i1
    %cst_92 = arith.constant 0.000000e+00 : f32
    %260 = vector.broadcast %cst_92 : f32 to vector<1x8xf32>
    %261 = arith.select %259, %260, %257 : vector<1x8xf32>
    %c0_93 = arith.constant 0 : index
    %c5 = arith.constant 5 : index
    %c0_94 = arith.constant 0 : index
    %262 = vector.load %arg8[%c0_93, %c5, %c0_94] : memref<1x49x8xf32, #tpu.memory_space<vmem>>, vector<1x1x8xf32>
    %263 = vector.shape_cast %262 : vector<1x1x8xf32> to vector<1x8xf32>
    %264 = vector.shape_cast %261 : vector<1x8xf32> to vector<1x1x8xf32>
    tpu.vector_store %arg8[%c0_93, %c5, %c0_94], %264 {strides = array<i32>} : memref<1x49x8xf32, #tpu.memory_space<vmem>>, vector<1x1x8xf32>,
    %c7_i32_95 = arith.constant 7 : i32
    %265 = arith.muli %arg0, %c7_i32_95 : i32
    %c6_i32_96 = arith.constant 6 : i32
    %266 = arith.addi %265, %c6_i32_96 : i32
    %267 = arith.index_cast %266 : i32 to index
    %268 = memref.load %arg5[%267] : memref<56xi32, #tpu.memory_space<smem>>
    %c7_i32_97 = arith.constant 7 : i32
    %269 = arith.muli %arg0, %c7_i32_97 : i32
    %c6_i32_98 = arith.constant 6 : i32
    %270 = arith.addi %269, %c6_i32_98 : i32
    %271 = arith.index_cast %270 : i32 to index
    %272 = memref.load %arg6[%271] : memref<56xi32, #tpu.memory_space<smem>>
    %cst_99 = arith.constant 0xFF800000 : f32
    %273 = vector.broadcast %cst_99 : f32 to vector<16x8xf32>
    %274 = arith.select %149, %136, %273 : vector<16x8xi1>, vector<16x8xf32>
    %cst_100 = arith.constant dense<0xFF800000> : vector<8xf32>
    %275 = vector.multi_reduction <maximumf>, %274, %cst_100 [0] : vector<16x8xf32> to vector<8xf32>
    %276 = vector.shape_cast %275 : vector<8xf32> to vector<1x8xf32>
    %277 = arith.cmpi sle, %272, %268 : i32
    %278 = arith.ori %150, %277 : i1
    %cst_101 = arith.constant 0.000000e+00 : f32
    %279 = vector.broadcast %cst_101 : f32 to vector<1x8xf32>
    %280 = arith.select %278, %279, %276 : vector<1x8xf32>
    %c0_102 = arith.constant 0 : index
    %c6 = arith.constant 6 : index
    %c0_103 = arith.constant 0 : index
    %281 = vector.load %arg8[%c0_102, %c6, %c0_103] : memref<1x49x8xf32, #tpu.memory_space<vmem>>, vector<1x1x8xf32>
    %282 = vector.shape_cast %281 : vector<1x1x8xf32> to vector<1x8xf32>
    %283 = vector.shape_cast %280 : vector<1x8xf32> to vector<1x1x8xf32>
    tpu.vector_store %arg8[%c0_102, %c6, %c0_103], %283 {strides = array<i32>} : memref<1x49x8xf32, #tpu.memory_space<vmem>>, vector<1x1x8xf32>,
    %c7_i32_104 = arith.constant 7 : i32
    %284 = arith.muli %arg0, %c7_i32_104 : i32
    %c1_i32_105 = arith.constant 1 : i32
    %285 = arith.addi %284, %c1_i32_105 : i32
    %286 = arith.index_cast %285 : i32 to index
    %287 = memref.load %arg3[%286] : memref<56xi32, #tpu.memory_space<smem>>
    %c7_i32_106 = arith.constant 7 : i32
    %288 = arith.muli %arg0, %c7_i32_106 : i32
    %c1_i32_107 = arith.constant 1 : i32
    %289 = arith.addi %288, %c1_i32_107 : i32
    %290 = arith.index_cast %289 : i32 to index
    %291 = memref.load %arg4[%290] : memref<56xi32, #tpu.memory_space<smem>>
    %292 = vector.broadcast %287 : i32 to vector<16x8xi32>
    %293 = arith.cmpi sge, %3, %292 : vector<16x8xi32>
    %294 = vector.broadcast %291 : i32 to vector<16x8xi32>
    %295 = arith.cmpi slt, %3, %294 : vector<16x8xi32>
    %296 = arith.andi %293, %295 : vector<16x8xi1>
    %297 = arith.cmpi sle, %291, %287 : i32
    %c7_i32_108 = arith.constant 7 : i32
    %298 = arith.muli %arg0, %c7_i32_108 : i32
    %c0_i32_109 = arith.constant 0 : i32
    %299 = arith.addi %298, %c0_i32_109 : i32
    %300 = arith.index_cast %299 : i32 to index
    %301 = memref.load %arg5[%300] : memref<56xi32, #tpu.memory_space<smem>>
    %c7_i32_110 = arith.constant 7 : i32
    %302 = arith.muli %arg0, %c7_i32_110 : i32
    %c0_i32_111 = arith.constant 0 : i32
    %303 = arith.addi %302, %c0_i32_111 : i32
    %304 = arith.index_cast %303 : i32 to index
    %305 = memref.load %arg6[%304] : memref<56xi32, #tpu.memory_space<smem>>
    %cst_112 = arith.constant 0xFF800000 : f32
    %306 = vector.broadcast %cst_112 : f32 to vector<16x8xf32>
    %307 = arith.select %296, %22, %306 : vector<16x8xi1>, vector<16x8xf32>
    %cst_113 = arith.constant dense<0xFF800000> : vector<8xf32>
    %308 = vector.multi_reduction <maximumf>, %307, %cst_113 [0] : vector<16x8xf32> to vector<8xf32>
    %309 = vector.shape_cast %308 : vector<8xf32> to vector<1x8xf32>
    %310 = arith.cmpi sle, %305, %301 : i32
    %311 = arith.ori %297, %310 : i1
    %cst_114 = arith.constant 0.000000e+00 : f32
    %312 = vector.broadcast %cst_114 : f32 to vector<1x8xf32>
    %313 = arith.select %311, %312, %309 : vector<1x8xf32>
    %c0_115 = arith.constant 0 : index
    %c7 = arith.constant 7 : index
    %c0_116 = arith.constant 0 : index
    %314 = vector.load %arg8[%c0_115, %c7, %c0_116] : memref<1x49x8xf32, #tpu.memory_space<vmem>>, vector<1x1x8xf32>
    %315 = vector.shape_cast %314 : vector<1x1x8xf32> to vector<1x8xf32>
    %316 = vector.shape_cast %313 : vector<1x8xf32> to vector<1x1x8xf32>
    tpu.vector_store %arg8[%c0_115, %c7, %c0_116], %316 {strides = array<i32>} : memref<1x49x8xf32, #tpu.memory_space<vmem>>, vector<1x1x8xf32>,
    %c7_i32_117 = arith.constant 7 : i32
    %317 = arith.muli %arg0, %c7_i32_117 : i32
    %c1_i32_118 = arith.constant 1 : i32
    %318 = arith.addi %317, %c1_i32_118 : i32
    %319 = arith.index_cast %318 : i32 to index
    %320 = memref.load %arg5[%319] : memref<56xi32, #tpu.memory_space<smem>>
    %c7_i32_119 = arith.constant 7 : i32
    %321 = arith.muli %arg0, %c7_i32_119 : i32
    %c1_i32_120 = arith.constant 1 : i32
    %322 = arith.addi %321, %c1_i32_120 : i32
    %323 = arith.index_cast %322 : i32 to index
    %324 = memref.load %arg6[%323] : memref<56xi32, #tpu.memory_space<smem>>
    %cst_121 = arith.constant 0xFF800000 : f32
    %325 = vector.broadcast %cst_121 : f32 to vector<16x8xf32>
    %326 = arith.select %296, %41, %325 : vector<16x8xi1>, vector<16x8xf32>
    %cst_122 = arith.constant dense<0xFF800000> : vector<8xf32>
    %327 = vector.multi_reduction <maximumf>, %326, %cst_122 [0] : vector<16x8xf32> to vector<8xf32>
    %328 = vector.shape_cast %327 : vector<8xf32> to vector<1x8xf32>
    %329 = arith.cmpi sle, %324, %320 : i32
    %330 = arith.ori %297, %329 : i1
    %cst_123 = arith.constant 0.000000e+00 : f32
    %331 = vector.broadcast %cst_123 : f32 to vector<1x8xf32>
    %332 = arith.select %330, %331, %328 : vector<1x8xf32>
    %c0_124 = arith.constant 0 : index
    %c8 = arith.constant 8 : index
    %c0_125 = arith.constant 0 : index
    %333 = vector.load %arg8[%c0_124, %c8, %c0_125] : memref<1x49x8xf32, #tpu.memory_space<vmem>>, vector<1x1x8xf32>
    %334 = vector.shape_cast %333 : vector<1x1x8xf32> to vector<1x8xf32>
    %335 = vector.shape_cast %332 : vector<1x8xf32> to vector<1x1x8xf32>
    tpu.vector_store %arg8[%c0_124, %c8, %c0_125], %335 {strides = array<i32>} : memref<1x49x8xf32, #tpu.memory_space<vmem>>, vector<1x1x8xf32>,
    %c7_i32_126 = arith.constant 7 : i32
    %336 = arith.muli %arg0, %c7_i32_126 : i32
    %c2_i32_127 = arith.constant 2 : i32
    %337 = arith.addi %336, %c2_i32_127 : i32
    %338 = arith.index_cast %337 : i32 to index
    %339 = memref.load %arg5[%338] : memref<56xi32, #tpu.memory_space<smem>>
    %c7_i32_128 = arith.constant 7 : i32
    %340 = arith.muli %arg0, %c7_i32_128 : i32
    %c2_i32_129 = arith.constant 2 : i32
    %341 = arith.addi %340, %c2_i32_129 : i32
    %342 = arith.index_cast %341 : i32 to index
    %343 = memref.load %arg6[%342] : memref<56xi32, #tpu.memory_space<smem>>
    %cst_130 = arith.constant 0xFF800000 : f32
    %344 = vector.broadcast %cst_130 : f32 to vector<16x8xf32>
    %345 = arith.select %296, %60, %344 : vector<16x8xi1>, vector<16x8xf32>
    %cst_131 = arith.constant dense<0xFF800000> : vector<8xf32>
    %346 = vector.multi_reduction <maximumf>, %345, %cst_131 [0] : vector<16x8xf32> to vector<8xf32>
    %347 = vector.shape_cast %346 : vector<8xf32> to vector<1x8xf32>
    %348 = arith.cmpi sle, %343, %339 : i32
    %349 = arith.ori %297, %348 : i1
    %cst_132 = arith.constant 0.000000e+00 : f32
    %350 = vector.broadcast %cst_132 : f32 to vector<1x8xf32>
    %351 = arith.select %349, %350, %347 : vector<1x8xf32>
    %c0_133 = arith.constant 0 : index
    %c9 = arith.constant 9 : index
    %c0_134 = arith.constant 0 : index
    %352 = vector.load %arg8[%c0_133, %c9, %c0_134] : memref<1x49x8xf32, #tpu.memory_space<vmem>>, vector<1x1x8xf32>
    %353 = vector.shape_cast %352 : vector<1x1x8xf32> to vector<1x8xf32>
    %354 = vector.shape_cast %351 : vector<1x8xf32> to vector<1x1x8xf32>
    tpu.vector_store %arg8[%c0_133, %c9, %c0_134], %354 {strides = array<i32>} : memref<1x49x8xf32, #tpu.memory_space<vmem>>, vector<1x1x8xf32>,
    %c7_i32_135 = arith.constant 7 : i32
    %355 = arith.muli %arg0, %c7_i32_135 : i32
    %c3_i32_136 = arith.constant 3 : i32
    %356 = arith.addi %355, %c3_i32_136 : i32
    %357 = arith.index_cast %356 : i32 to index
    %358 = memref.load %arg5[%357] : memref<56xi32, #tpu.memory_space<smem>>
    %c7_i32_137 = arith.constant 7 : i32
    %359 = arith.muli %arg0, %c7_i32_137 : i32
    %c3_i32_138 = arith.constant 3 : i32
    %360 = arith.addi %359, %c3_i32_138 : i32
    %361 = arith.index_cast %360 : i32 to index
    %362 = memref.load %arg6[%361] : memref<56xi32, #tpu.memory_space<smem>>
    %cst_139 = arith.constant 0xFF800000 : f32
    %363 = vector.broadcast %cst_139 : f32 to vector<16x8xf32>
    %364 = arith.select %296, %79, %363 : vector<16x8xi1>, vector<16x8xf32>
    %cst_140 = arith.constant dense<0xFF800000> : vector<8xf32>
    %365 = vector.multi_reduction <maximumf>, %364, %cst_140 [0] : vector<16x8xf32> to vector<8xf32>
    %366 = vector.shape_cast %365 : vector<8xf32> to vector<1x8xf32>
    %367 = arith.cmpi sle, %362, %358 : i32
    %368 = arith.ori %297, %367 : i1
    %cst_141 = arith.constant 0.000000e+00 : f32
    %369 = vector.broadcast %cst_141 : f32 to vector<1x8xf32>
    %370 = arith.select %368, %369, %366 : vector<1x8xf32>
    %c0_142 = arith.constant 0 : index
    %c10 = arith.constant 10 : index
    %c0_143 = arith.constant 0 : index
    %371 = vector.load %arg8[%c0_142, %c10, %c0_143] : memref<1x49x8xf32, #tpu.memory_space<vmem>>, vector<1x1x8xf32>
    %372 = vector.shape_cast %371 : vector<1x1x8xf32> to vector<1x8xf32>
    %373 = vector.shape_cast %370 : vector<1x8xf32> to vector<1x1x8xf32>
    tpu.vector_store %arg8[%c0_142, %c10, %c0_143], %373 {strides = array<i32>} : memref<1x49x8xf32, #tpu.memory_space<vmem>>, vector<1x1x8xf32>,
    %c7_i32_144 = arith.constant 7 : i32
    %374 = arith.muli %arg0, %c7_i32_144 : i32
    %c4_i32_145 = arith.constant 4 : i32
    %375 = arith.addi %374, %c4_i32_145 : i32
    %376 = arith.index_cast %375 : i32 to index
    %377 = memref.load %arg5[%376] : memref<56xi32, #tpu.memory_space<smem>>
    %c7_i32_146 = arith.constant 7 : i32
    %378 = arith.muli %arg0, %c7_i32_146 : i32
    %c4_i32_147 = arith.constant 4 : i32
    %379 = arith.addi %378, %c4_i32_147 : i32
    %380 = arith.index_cast %379 : i32 to index
    %381 = memref.load %arg6[%380] : memref<56xi32, #tpu.memory_space<smem>>
    %cst_148 = arith.constant 0xFF800000 : f32
    %382 = vector.broadcast %cst_148 : f32 to vector<16x8xf32>
    %383 = arith.select %296, %98, %382 : vector<16x8xi1>, vector<16x8xf32>
    %cst_149 = arith.constant dense<0xFF800000> : vector<8xf32>
    %384 = vector.multi_reduction <maximumf>, %383, %cst_149 [0] : vector<16x8xf32> to vector<8xf32>
    %385 = vector.shape_cast %384 : vector<8xf32> to vector<1x8xf32>
    %386 = arith.cmpi sle, %381, %377 : i32
    %387 = arith.ori %297, %386 : i1
    %cst_150 = arith.constant 0.000000e+00 : f32
    %388 = vector.broadcast %cst_150 : f32 to vector<1x8xf32>
    %389 = arith.select %387, %388, %385 : vector<1x8xf32>
    %c0_151 = arith.constant 0 : index
    %c11 = arith.constant 11 : index
    %c0_152 = arith.constant 0 : index
    %390 = vector.load %arg8[%c0_151, %c11, %c0_152] : memref<1x49x8xf32, #tpu.memory_space<vmem>>, vector<1x1x8xf32>
    %391 = vector.shape_cast %390 : vector<1x1x8xf32> to vector<1x8xf32>
    %392 = vector.shape_cast %389 : vector<1x8xf32> to vector<1x1x8xf32>
    tpu.vector_store %arg8[%c0_151, %c11, %c0_152], %392 {strides = array<i32>} : memref<1x49x8xf32, #tpu.memory_space<vmem>>, vector<1x1x8xf32>,
    %c7_i32_153 = arith.constant 7 : i32
    %393 = arith.muli %arg0, %c7_i32_153 : i32
    %c5_i32_154 = arith.constant 5 : i32
    %394 = arith.addi %393, %c5_i32_154 : i32
    %395 = arith.index_cast %394 : i32 to index
    %396 = memref.load %arg5[%395] : memref<56xi32, #tpu.memory_space<smem>>
    %c7_i32_155 = arith.constant 7 : i32
    %397 = arith.muli %arg0, %c7_i32_155 : i32
    %c5_i32_156 = arith.constant 5 : i32
    %398 = arith.addi %397, %c5_i32_156 : i32
    %399 = arith.index_cast %398 : i32 to index
    %400 = memref.load %arg6[%399] : memref<56xi32, #tpu.memory_space<smem>>
    %cst_157 = arith.constant 0xFF800000 : f32
    %401 = vector.broadcast %cst_157 : f32 to vector<16x8xf32>
    %402 = arith.select %296, %117, %401 : vector<16x8xi1>, vector<16x8xf32>
    %cst_158 = arith.constant dense<0xFF800000> : vector<8xf32>
    %403 = vector.multi_reduction <maximumf>, %402, %cst_158 [0] : vector<16x8xf32> to vector<8xf32>
    %404 = vector.shape_cast %403 : vector<8xf32> to vector<1x8xf32>
    %405 = arith.cmpi sle, %400, %396 : i32
    %406 = arith.ori %297, %405 : i1
    %cst_159 = arith.constant 0.000000e+00 : f32
    %407 = vector.broadcast %cst_159 : f32 to vector<1x8xf32>
    %408 = arith.select %406, %407, %404 : vector<1x8xf32>
    %c0_160 = arith.constant 0 : index
    %c12 = arith.constant 12 : index
    %c0_161 = arith.constant 0 : index
    %409 = vector.load %arg8[%c0_160, %c12, %c0_161] : memref<1x49x8xf32, #tpu.memory_space<vmem>>, vector<1x1x8xf32>
    %410 = vector.shape_cast %409 : vector<1x1x8xf32> to vector<1x8xf32>
    %411 = vector.shape_cast %408 : vector<1x8xf32> to vector<1x1x8xf32>
    tpu.vector_store %arg8[%c0_160, %c12, %c0_161], %411 {strides = array<i32>} : memref<1x49x8xf32, #tpu.memory_space<vmem>>, vector<1x1x8xf32>,
    %c7_i32_162 = arith.constant 7 : i32
    %412 = arith.muli %arg0, %c7_i32_162 : i32
    %c6_i32_163 = arith.constant 6 : i32
    %413 = arith.addi %412, %c6_i32_163 : i32
    %414 = arith.index_cast %413 : i32 to index
    %415 = memref.load %arg5[%414] : memref<56xi32, #tpu.memory_space<smem>>
    %c7_i32_164 = arith.constant 7 : i32
    %416 = arith.muli %arg0, %c7_i32_164 : i32
    %c6_i32_165 = arith.constant 6 : i32
    %417 = arith.addi %416, %c6_i32_165 : i32
    %418 = arith.index_cast %417 : i32 to index
    %419 = memref.load %arg6[%418] : memref<56xi32, #tpu.memory_space<smem>>
    %cst_166 = arith.constant 0xFF800000 : f32
    %420 = vector.broadcast %cst_166 : f32 to vector<16x8xf32>
    %421 = arith.select %296, %136, %420 : vector<16x8xi1>, vector<16x8xf32>
    %cst_167 = arith.constant dense<0xFF800000> : vector<8xf32>
    %422 = vector.multi_reduction <maximumf>, %421, %cst_167 [0] : vector<16x8xf32> to vector<8xf32>
    %423 = vector.shape_cast %422 : vector<8xf32> to vector<1x8xf32>
    %424 = arith.cmpi sle, %419, %415 : i32
    %425 = arith.ori %297, %424 : i1
    %cst_168 = arith.constant 0.000000e+00 : f32
    %426 = vector.broadcast %cst_168 : f32 to vector<1x8xf32>
    %427 = arith.select %425, %426, %423 : vector<1x8xf32>
    %c0_169 = arith.constant 0 : index
    %c13 = arith.constant 13 : index
    %c0_170 = arith.constant 0 : index
    %428 = vector.load %arg8[%c0_169, %c13, %c0_170] : memref<1x49x8xf32, #tpu.memory_space<vmem>>, vector<1x1x8xf32>
    %429 = vector.shape_cast %428 : vector<1x1x8xf32> to vector<1x8xf32>
    %430 = vector.shape_cast %427 : vector<1x8xf32> to vector<1x1x8xf32>
    tpu.vector_store %arg8[%c0_169, %c13, %c0_170], %430 {strides = array<i32>} : memref<1x49x8xf32, #tpu.memory_space<vmem>>, vector<1x1x8xf32>,
    %c7_i32_171 = arith.constant 7 : i32
    %431 = arith.muli %arg0, %c7_i32_171 : i32
    %c2_i32_172 = arith.constant 2 : i32
    %432 = arith.addi %431, %c2_i32_172 : i32
    %433 = arith.index_cast %432 : i32 to index
    %434 = memref.load %arg3[%433] : memref<56xi32, #tpu.memory_space<smem>>
    %c7_i32_173 = arith.constant 7 : i32
    %435 = arith.muli %arg0, %c7_i32_173 : i32
    %c2_i32_174 = arith.constant 2 : i32
    %436 = arith.addi %435, %c2_i32_174 : i32
    %437 = arith.index_cast %436 : i32 to index
    %438 = memref.load %arg4[%437] : memref<56xi32, #tpu.memory_space<smem>>
    %439 = vector.broadcast %434 : i32 to vector<16x8xi32>
    %440 = arith.cmpi sge, %3, %439 : vector<16x8xi32>
    %441 = vector.broadcast %438 : i32 to vector<16x8xi32>
    %442 = arith.cmpi slt, %3, %441 : vector<16x8xi32>
    %443 = arith.andi %440, %442 : vector<16x8xi1>
    %444 = arith.cmpi sle, %438, %434 : i32
    %c7_i32_175 = arith.constant 7 : i32
    %445 = arith.muli %arg0, %c7_i32_175 : i32
    %c0_i32_176 = arith.constant 0 : i32
    %446 = arith.addi %445, %c0_i32_176 : i32
    %447 = arith.index_cast %446 : i32 to index
    %448 = memref.load %arg5[%447] : memref<56xi32, #tpu.memory_space<smem>>
    %c7_i32_177 = arith.constant 7 : i32
    %449 = arith.muli %arg0, %c7_i32_177 : i32
    %c0_i32_178 = arith.constant 0 : i32
    %450 = arith.addi %449, %c0_i32_178 : i32
    %451 = arith.index_cast %450 : i32 to index
    %452 = memref.load %arg6[%451] : memref<56xi32, #tpu.memory_space<smem>>
    %cst_179 = arith.constant 0xFF800000 : f32
    %453 = vector.broadcast %cst_179 : f32 to vector<16x8xf32>
    %454 = arith.select %443, %22, %453 : vector<16x8xi1>, vector<16x8xf32>
    %cst_180 = arith.constant dense<0xFF800000> : vector<8xf32>
    %455 = vector.multi_reduction <maximumf>, %454, %cst_180 [0] : vector<16x8xf32> to vector<8xf32>
    %456 = vector.shape_cast %455 : vector<8xf32> to vector<1x8xf32>
    %457 = arith.cmpi sle, %452, %448 : i32
    %458 = arith.ori %444, %457 : i1
    %cst_181 = arith.constant 0.000000e+00 : f32
    %459 = vector.broadcast %cst_181 : f32 to vector<1x8xf32>
    %460 = arith.select %458, %459, %456 : vector<1x8xf32>
    %c0_182 = arith.constant 0 : index
    %c14 = arith.constant 14 : index
    %c0_183 = arith.constant 0 : index
    %461 = vector.load %arg8[%c0_182, %c14, %c0_183] : memref<1x49x8xf32, #tpu.memory_space<vmem>>, vector<1x1x8xf32>
    %462 = vector.shape_cast %461 : vector<1x1x8xf32> to vector<1x8xf32>
    %463 = vector.shape_cast %460 : vector<1x8xf32> to vector<1x1x8xf32>
    tpu.vector_store %arg8[%c0_182, %c14, %c0_183], %463 {strides = array<i32>} : memref<1x49x8xf32, #tpu.memory_space<vmem>>, vector<1x1x8xf32>,
    %c7_i32_184 = arith.constant 7 : i32
    %464 = arith.muli %arg0, %c7_i32_184 : i32
    %c1_i32_185 = arith.constant 1 : i32
    %465 = arith.addi %464, %c1_i32_185 : i32
    %466 = arith.index_cast %465 : i32 to index
    %467 = memref.load %arg5[%466] : memref<56xi32, #tpu.memory_space<smem>>
    %c7_i32_186 = arith.constant 7 : i32
    %468 = arith.muli %arg0, %c7_i32_186 : i32
    %c1_i32_187 = arith.constant 1 : i32
    %469 = arith.addi %468, %c1_i32_187 : i32
    %470 = arith.index_cast %469 : i32 to index
    %471 = memref.load %arg6[%470] : memref<56xi32, #tpu.memory_space<smem>>
    %cst_188 = arith.constant 0xFF800000 : f32
    %472 = vector.broadcast %cst_188 : f32 to vector<16x8xf32>
    %473 = arith.select %443, %41, %472 : vector<16x8xi1>, vector<16x8xf32>
    %cst_189 = arith.constant dense<0xFF800000> : vector<8xf32>
    %474 = vector.multi_reduction <maximumf>, %473, %cst_189 [0] : vector<16x8xf32> to vector<8xf32>
    %475 = vector.shape_cast %474 : vector<8xf32> to vector<1x8xf32>
    %476 = arith.cmpi sle, %471, %467 : i32
    %477 = arith.ori %444, %476 : i1
    %cst_190 = arith.constant 0.000000e+00 : f32
    %478 = vector.broadcast %cst_190 : f32 to vector<1x8xf32>
    %479 = arith.select %477, %478, %475 : vector<1x8xf32>
    %c0_191 = arith.constant 0 : index
    %c15 = arith.constant 15 : index
    %c0_192 = arith.constant 0 : index
    %480 = vector.load %arg8[%c0_191, %c15, %c0_192] : memref<1x49x8xf32, #tpu.memory_space<vmem>>, vector<1x1x8xf32>
    %481 = vector.shape_cast %480 : vector<1x1x8xf32> to vector<1x8xf32>
    %482 = vector.shape_cast %479 : vector<1x8xf32> to vector<1x1x8xf32>
    tpu.vector_store %arg8[%c0_191, %c15, %c0_192], %482 {strides = array<i32>} : memref<1x49x8xf32, #tpu.memory_space<vmem>>, vector<1x1x8xf32>,
    %c7_i32_193 = arith.constant 7 : i32
    %483 = arith.muli %arg0, %c7_i32_193 : i32
    %c2_i32_194 = arith.constant 2 : i32
    %484 = arith.addi %483, %c2_i32_194 : i32
    %485 = arith.index_cast %484 : i32 to index
    %486 = memref.load %arg5[%485] : memref<56xi32, #tpu.memory_space<smem>>
    %c7_i32_195 = arith.constant 7 : i32
    %487 = arith.muli %arg0, %c7_i32_195 : i32
    %c2_i32_196 = arith.constant 2 : i32
    %488 = arith.addi %487, %c2_i32_196 : i32
    %489 = arith.index_cast %488 : i32 to index
    %490 = memref.load %arg6[%489] : memref<56xi32, #tpu.memory_space<smem>>
    %cst_197 = arith.constant 0xFF800000 : f32
    %491 = vector.broadcast %cst_197 : f32 to vector<16x8xf32>
    %492 = arith.select %443, %60, %491 : vector<16x8xi1>, vector<16x8xf32>
    %cst_198 = arith.constant dense<0xFF800000> : vector<8xf32>
    %493 = vector.multi_reduction <maximumf>, %492, %cst_198 [0] : vector<16x8xf32> to vector<8xf32>
    %494 = vector.shape_cast %493 : vector<8xf32> to vector<1x8xf32>
    %495 = arith.cmpi sle, %490, %486 : i32
    %496 = arith.ori %444, %495 : i1
    %cst_199 = arith.constant 0.000000e+00 : f32
    %497 = vector.broadcast %cst_199 : f32 to vector<1x8xf32>
    %498 = arith.select %496, %497, %494 : vector<1x8xf32>
    %c0_200 = arith.constant 0 : index
    %c16 = arith.constant 16 : index
    %c0_201 = arith.constant 0 : index
    %499 = vector.load %arg8[%c0_200, %c16, %c0_201] : memref<1x49x8xf32, #tpu.memory_space<vmem>>, vector<1x1x8xf32>
    %500 = vector.shape_cast %499 : vector<1x1x8xf32> to vector<1x8xf32>
    %501 = vector.shape_cast %498 : vector<1x8xf32> to vector<1x1x8xf32>
    tpu.vector_store %arg8[%c0_200, %c16, %c0_201], %501 {strides = array<i32>} : memref<1x49x8xf32, #tpu.memory_space<vmem>>, vector<1x1x8xf32>,
    %c7_i32_202 = arith.constant 7 : i32
    %502 = arith.muli %arg0, %c7_i32_202 : i32
    %c3_i32_203 = arith.constant 3 : i32
    %503 = arith.addi %502, %c3_i32_203 : i32
    %504 = arith.index_cast %503 : i32 to index
    %505 = memref.load %arg5[%504] : memref<56xi32, #tpu.memory_space<smem>>
    %c7_i32_204 = arith.constant 7 : i32
    %506 = arith.muli %arg0, %c7_i32_204 : i32
    %c3_i32_205 = arith.constant 3 : i32
    %507 = arith.addi %506, %c3_i32_205 : i32
    %508 = arith.index_cast %507 : i32 to index
    %509 = memref.load %arg6[%508] : memref<56xi32, #tpu.memory_space<smem>>
    %cst_206 = arith.constant 0xFF800000 : f32
    %510 = vector.broadcast %cst_206 : f32 to vector<16x8xf32>
    %511 = arith.select %443, %79, %510 : vector<16x8xi1>, vector<16x8xf32>
    %cst_207 = arith.constant dense<0xFF800000> : vector<8xf32>
    %512 = vector.multi_reduction <maximumf>, %511, %cst_207 [0] : vector<16x8xf32> to vector<8xf32>
    %513 = vector.shape_cast %512 : vector<8xf32> to vector<1x8xf32>
    %514 = arith.cmpi sle, %509, %505 : i32
    %515 = arith.ori %444, %514 : i1
    %cst_208 = arith.constant 0.000000e+00 : f32
    %516 = vector.broadcast %cst_208 : f32 to vector<1x8xf32>
    %517 = arith.select %515, %516, %513 : vector<1x8xf32>
    %c0_209 = arith.constant 0 : index
    %c17 = arith.constant 17 : index
    %c0_210 = arith.constant 0 : index
    %518 = vector.load %arg8[%c0_209, %c17, %c0_210] : memref<1x49x8xf32, #tpu.memory_space<vmem>>, vector<1x1x8xf32>
    %519 = vector.shape_cast %518 : vector<1x1x8xf32> to vector<1x8xf32>
    %520 = vector.shape_cast %517 : vector<1x8xf32> to vector<1x1x8xf32>
    tpu.vector_store %arg8[%c0_209, %c17, %c0_210], %520 {strides = array<i32>} : memref<1x49x8xf32, #tpu.memory_space<vmem>>, vector<1x1x8xf32>,
    %c7_i32_211 = arith.constant 7 : i32
    %521 = arith.muli %arg0, %c7_i32_211 : i32
    %c4_i32_212 = arith.constant 4 : i32
    %522 = arith.addi %521, %c4_i32_212 : i32
    %523 = arith.index_cast %522 : i32 to index
    %524 = memref.load %arg5[%523] : memref<56xi32, #tpu.memory_space<smem>>
    %c7_i32_213 = arith.constant 7 : i32
    %525 = arith.muli %arg0, %c7_i32_213 : i32
    %c4_i32_214 = arith.constant 4 : i32
    %526 = arith.addi %525, %c4_i32_214 : i32
    %527 = arith.index_cast %526 : i32 to index
    %528 = memref.load %arg6[%527] : memref<56xi32, #tpu.memory_space<smem>>
    %cst_215 = arith.constant 0xFF800000 : f32
    %529 = vector.broadcast %cst_215 : f32 to vector<16x8xf32>
    %530 = arith.select %443, %98, %529 : vector<16x8xi1>, vector<16x8xf32>
    %cst_216 = arith.constant dense<0xFF800000> : vector<8xf32>
    %531 = vector.multi_reduction <maximumf>, %530, %cst_216 [0] : vector<16x8xf32> to vector<8xf32>
    %532 = vector.shape_cast %531 : vector<8xf32> to vector<1x8xf32>
    %533 = arith.cmpi sle, %528, %524 : i32
    %534 = arith.ori %444, %533 : i1
    %cst_217 = arith.constant 0.000000e+00 : f32
    %535 = vector.broadcast %cst_217 : f32 to vector<1x8xf32>
    %536 = arith.select %534, %535, %532 : vector<1x8xf32>
    %c0_218 = arith.constant 0 : index
    %c18 = arith.constant 18 : index
    %c0_219 = arith.constant 0 : index
    %537 = vector.load %arg8[%c0_218, %c18, %c0_219] : memref<1x49x8xf32, #tpu.memory_space<vmem>>, vector<1x1x8xf32>
    %538 = vector.shape_cast %537 : vector<1x1x8xf32> to vector<1x8xf32>
    %539 = vector.shape_cast %536 : vector<1x8xf32> to vector<1x1x8xf32>
    tpu.vector_store %arg8[%c0_218, %c18, %c0_219], %539 {strides = array<i32>} : memref<1x49x8xf32, #tpu.memory_space<vmem>>, vector<1x1x8xf32>,
    %c7_i32_220 = arith.constant 7 : i32
    %540 = arith.muli %arg0, %c7_i32_220 : i32
    %c5_i32_221 = arith.constant 5 : i32
    %541 = arith.addi %540, %c5_i32_221 : i32
    %542 = arith.index_cast %541 : i32 to index
    %543 = memref.load %arg5[%542] : memref<56xi32, #tpu.memory_space<smem>>
    %c7_i32_222 = arith.constant 7 : i32
    %544 = arith.muli %arg0, %c7_i32_222 : i32
    %c5_i32_223 = arith.constant 5 : i32
    %545 = arith.addi %544, %c5_i32_223 : i32
    %546 = arith.index_cast %545 : i32 to index
    %547 = memref.load %arg6[%546] : memref<56xi32, #tpu.memory_space<smem>>
    %cst_224 = arith.constant 0xFF800000 : f32
    %548 = vector.broadcast %cst_224 : f32 to vector<16x8xf32>
    %549 = arith.select %443, %117, %548 : vector<16x8xi1>, vector<16x8xf32>
    %cst_225 = arith.constant dense<0xFF800000> : vector<8xf32>
    %550 = vector.multi_reduction <maximumf>, %549, %cst_225 [0] : vector<16x8xf32> to vector<8xf32>
    %551 = vector.shape_cast %550 : vector<8xf32> to vector<1x8xf32>
    %552 = arith.cmpi sle, %547, %543 : i32
    %553 = arith.ori %444, %552 : i1
    %cst_226 = arith.constant 0.000000e+00 : f32
    %554 = vector.broadcast %cst_226 : f32 to vector<1x8xf32>
    %555 = arith.select %553, %554, %551 : vector<1x8xf32>
    %c0_227 = arith.constant 0 : index
    %c19 = arith.constant 19 : index
    %c0_228 = arith.constant 0 : index
    %556 = vector.load %arg8[%c0_227, %c19, %c0_228] : memref<1x49x8xf32, #tpu.memory_space<vmem>>, vector<1x1x8xf32>
    %557 = vector.shape_cast %556 : vector<1x1x8xf32> to vector<1x8xf32>
    %558 = vector.shape_cast %555 : vector<1x8xf32> to vector<1x1x8xf32>
    tpu.vector_store %arg8[%c0_227, %c19, %c0_228], %558 {strides = array<i32>} : memref<1x49x8xf32, #tpu.memory_space<vmem>>, vector<1x1x8xf32>,
    %c7_i32_229 = arith.constant 7 : i32
    %559 = arith.muli %arg0, %c7_i32_229 : i32
    %c6_i32_230 = arith.constant 6 : i32
    %560 = arith.addi %559, %c6_i32_230 : i32
    %561 = arith.index_cast %560 : i32 to index
    %562 = memref.load %arg5[%561] : memref<56xi32, #tpu.memory_space<smem>>
    %c7_i32_231 = arith.constant 7 : i32
    %563 = arith.muli %arg0, %c7_i32_231 : i32
    %c6_i32_232 = arith.constant 6 : i32
    %564 = arith.addi %563, %c6_i32_232 : i32
    %565 = arith.index_cast %564 : i32 to index
    %566 = memref.load %arg6[%565] : memref<56xi32, #tpu.memory_space<smem>>
    %cst_233 = arith.constant 0xFF800000 : f32
    %567 = vector.broadcast %cst_233 : f32 to vector<16x8xf32>
    %568 = arith.select %443, %136, %567 : vector<16x8xi1>, vector<16x8xf32>
    %cst_234 = arith.constant dense<0xFF800000> : vector<8xf32>
    %569 = vector.multi_reduction <maximumf>, %568, %cst_234 [0] : vector<16x8xf32> to vector<8xf32>
    %570 = vector.shape_cast %569 : vector<8xf32> to vector<1x8xf32>
    %571 = arith.cmpi sle, %566, %562 : i32
    %572 = arith.ori %444, %571 : i1
    %cst_235 = arith.constant 0.000000e+00 : f32
    %573 = vector.broadcast %cst_235 : f32 to vector<1x8xf32>
    %574 = arith.select %572, %573, %570 : vector<1x8xf32>
    %c0_236 = arith.constant 0 : index
    %c20 = arith.constant 20 : index
    %c0_237 = arith.constant 0 : index
    %575 = vector.load %arg8[%c0_236, %c20, %c0_237] : memref<1x49x8xf32, #tpu.memory_space<vmem>>, vector<1x1x8xf32>
    %576 = vector.shape_cast %575 : vector<1x1x8xf32> to vector<1x8xf32>
    %577 = vector.shape_cast %574 : vector<1x8xf32> to vector<1x1x8xf32>
    tpu.vector_store %arg8[%c0_236, %c20, %c0_237], %577 {strides = array<i32>} : memref<1x49x8xf32, #tpu.memory_space<vmem>>, vector<1x1x8xf32>,
    %c7_i32_238 = arith.constant 7 : i32
    %578 = arith.muli %arg0, %c7_i32_238 : i32
    %c3_i32_239 = arith.constant 3 : i32
    %579 = arith.addi %578, %c3_i32_239 : i32
    %580 = arith.index_cast %579 : i32 to index
    %581 = memref.load %arg3[%580] : memref<56xi32, #tpu.memory_space<smem>>
    %c7_i32_240 = arith.constant 7 : i32
    %582 = arith.muli %arg0, %c7_i32_240 : i32
    %c3_i32_241 = arith.constant 3 : i32
    %583 = arith.addi %582, %c3_i32_241 : i32
    %584 = arith.index_cast %583 : i32 to index
    %585 = memref.load %arg4[%584] : memref<56xi32, #tpu.memory_space<smem>>
    %586 = vector.broadcast %581 : i32 to vector<16x8xi32>
    %587 = arith.cmpi sge, %3, %586 : vector<16x8xi32>
    %588 = vector.broadcast %585 : i32 to vector<16x8xi32>
    %589 = arith.cmpi slt, %3, %588 : vector<16x8xi32>
    %590 = arith.andi %587, %589 : vector<16x8xi1>
    %591 = arith.cmpi sle, %585, %581 : i32
    %c7_i32_242 = arith.constant 7 : i32
    %592 = arith.muli %arg0, %c7_i32_242 : i32
    %c0_i32_243 = arith.constant 0 : i32
    %593 = arith.addi %592, %c0_i32_243 : i32
    %594 = arith.index_cast %593 : i32 to index
    %595 = memref.load %arg5[%594] : memref<56xi32, #tpu.memory_space<smem>>
    %c7_i32_244 = arith.constant 7 : i32
    %596 = arith.muli %arg0, %c7_i32_244 : i32
    %c0_i32_245 = arith.constant 0 : i32
    %597 = arith.addi %596, %c0_i32_245 : i32
    %598 = arith.index_cast %597 : i32 to index
    %599 = memref.load %arg6[%598] : memref<56xi32, #tpu.memory_space<smem>>
    %cst_246 = arith.constant 0xFF800000 : f32
    %600 = vector.broadcast %cst_246 : f32 to vector<16x8xf32>
    %601 = arith.select %590, %22, %600 : vector<16x8xi1>, vector<16x8xf32>
    %cst_247 = arith.constant dense<0xFF800000> : vector<8xf32>
    %602 = vector.multi_reduction <maximumf>, %601, %cst_247 [0] : vector<16x8xf32> to vector<8xf32>
    %603 = vector.shape_cast %602 : vector<8xf32> to vector<1x8xf32>
    %604 = arith.cmpi sle, %599, %595 : i32
    %605 = arith.ori %591, %604 : i1
    %cst_248 = arith.constant 0.000000e+00 : f32
    %606 = vector.broadcast %cst_248 : f32 to vector<1x8xf32>
    %607 = arith.select %605, %606, %603 : vector<1x8xf32>
    %c0_249 = arith.constant 0 : index
    %c21 = arith.constant 21 : index
    %c0_250 = arith.constant 0 : index
    %608 = vector.load %arg8[%c0_249, %c21, %c0_250] : memref<1x49x8xf32, #tpu.memory_space<vmem>>, vector<1x1x8xf32>
    %609 = vector.shape_cast %608 : vector<1x1x8xf32> to vector<1x8xf32>
    %610 = vector.shape_cast %607 : vector<1x8xf32> to vector<1x1x8xf32>
    tpu.vector_store %arg8[%c0_249, %c21, %c0_250], %610 {strides = array<i32>} : memref<1x49x8xf32, #tpu.memory_space<vmem>>, vector<1x1x8xf32>,
    %c7_i32_251 = arith.constant 7 : i32
    %611 = arith.muli %arg0, %c7_i32_251 : i32
    %c1_i32_252 = arith.constant 1 : i32
    %612 = arith.addi %611, %c1_i32_252 : i32
    %613 = arith.index_cast %612 : i32 to index
    %614 = memref.load %arg5[%613] : memref<56xi32, #tpu.memory_space<smem>>
    %c7_i32_253 = arith.constant 7 : i32
    %615 = arith.muli %arg0, %c7_i32_253 : i32
    %c1_i32_254 = arith.constant 1 : i32
    %616 = arith.addi %615, %c1_i32_254 : i32
    %617 = arith.index_cast %616 : i32 to index
    %618 = memref.load %arg6[%617] : memref<56xi32, #tpu.memory_space<smem>>
    %cst_255 = arith.constant 0xFF800000 : f32
    %619 = vector.broadcast %cst_255 : f32 to vector<16x8xf32>
    %620 = arith.select %590, %41, %619 : vector<16x8xi1>, vector<16x8xf32>
    %cst_256 = arith.constant dense<0xFF800000> : vector<8xf32>
    %621 = vector.multi_reduction <maximumf>, %620, %cst_256 [0] : vector<16x8xf32> to vector<8xf32>
    %622 = vector.shape_cast %621 : vector<8xf32> to vector<1x8xf32>
    %623 = arith.cmpi sle, %618, %614 : i32
    %624 = arith.ori %591, %623 : i1
    %cst_257 = arith.constant 0.000000e+00 : f32
    %625 = vector.broadcast %cst_257 : f32 to vector<1x8xf32>
    %626 = arith.select %624, %625, %622 : vector<1x8xf32>
    %c0_258 = arith.constant 0 : index
    %c22 = arith.constant 22 : index
    %c0_259 = arith.constant 0 : index
    %627 = vector.load %arg8[%c0_258, %c22, %c0_259] : memref<1x49x8xf32, #tpu.memory_space<vmem>>, vector<1x1x8xf32>
    %628 = vector.shape_cast %627 : vector<1x1x8xf32> to vector<1x8xf32>
    %629 = vector.shape_cast %626 : vector<1x8xf32> to vector<1x1x8xf32>
    tpu.vector_store %arg8[%c0_258, %c22, %c0_259], %629 {strides = array<i32>} : memref<1x49x8xf32, #tpu.memory_space<vmem>>, vector<1x1x8xf32>,
    %c7_i32_260 = arith.constant 7 : i32
    %630 = arith.muli %arg0, %c7_i32_260 : i32
    %c2_i32_261 = arith.constant 2 : i32
    %631 = arith.addi %630, %c2_i32_261 : i32
    %632 = arith.index_cast %631 : i32 to index
    %633 = memref.load %arg5[%632] : memref<56xi32, #tpu.memory_space<smem>>
    %c7_i32_262 = arith.constant 7 : i32
    %634 = arith.muli %arg0, %c7_i32_262 : i32
    %c2_i32_263 = arith.constant 2 : i32
    %635 = arith.addi %634, %c2_i32_263 : i32
    %636 = arith.index_cast %635 : i32 to index
    %637 = memref.load %arg6[%636] : memref<56xi32, #tpu.memory_space<smem>>
    %cst_264 = arith.constant 0xFF800000 : f32
    %638 = vector.broadcast %cst_264 : f32 to vector<16x8xf32>
    %639 = arith.select %590, %60, %638 : vector<16x8xi1>, vector<16x8xf32>
    %cst_265 = arith.constant dense<0xFF800000> : vector<8xf32>
    %640 = vector.multi_reduction <maximumf>, %639, %cst_265 [0] : vector<16x8xf32> to vector<8xf32>
    %641 = vector.shape_cast %640 : vector<8xf32> to vector<1x8xf32>
    %642 = arith.cmpi sle, %637, %633 : i32
    %643 = arith.ori %591, %642 : i1
    %cst_266 = arith.constant 0.000000e+00 : f32
    %644 = vector.broadcast %cst_266 : f32 to vector<1x8xf32>
    %645 = arith.select %643, %644, %641 : vector<1x8xf32>
    %c0_267 = arith.constant 0 : index
    %c23 = arith.constant 23 : index
    %c0_268 = arith.constant 0 : index
    %646 = vector.load %arg8[%c0_267, %c23, %c0_268] : memref<1x49x8xf32, #tpu.memory_space<vmem>>, vector<1x1x8xf32>
    %647 = vector.shape_cast %646 : vector<1x1x8xf32> to vector<1x8xf32>
    %648 = vector.shape_cast %645 : vector<1x8xf32> to vector<1x1x8xf32>
    tpu.vector_store %arg8[%c0_267, %c23, %c0_268], %648 {strides = array<i32>} : memref<1x49x8xf32, #tpu.memory_space<vmem>>, vector<1x1x8xf32>,
    %c7_i32_269 = arith.constant 7 : i32
    %649 = arith.muli %arg0, %c7_i32_269 : i32
    %c3_i32_270 = arith.constant 3 : i32
    %650 = arith.addi %649, %c3_i32_270 : i32
    %651 = arith.index_cast %650 : i32 to index
    %652 = memref.load %arg5[%651] : memref<56xi32, #tpu.memory_space<smem>>
    %c7_i32_271 = arith.constant 7 : i32
    %653 = arith.muli %arg0, %c7_i32_271 : i32
    %c3_i32_272 = arith.constant 3 : i32
    %654 = arith.addi %653, %c3_i32_272 : i32
    %655 = arith.index_cast %654 : i32 to index
    %656 = memref.load %arg6[%655] : memref<56xi32, #tpu.memory_space<smem>>
    %cst_273 = arith.constant 0xFF800000 : f32
    %657 = vector.broadcast %cst_273 : f32 to vector<16x8xf32>
    %658 = arith.select %590, %79, %657 : vector<16x8xi1>, vector<16x8xf32>
    %cst_274 = arith.constant dense<0xFF800000> : vector<8xf32>
    %659 = vector.multi_reduction <maximumf>, %658, %cst_274 [0] : vector<16x8xf32> to vector<8xf32>
    %660 = vector.shape_cast %659 : vector<8xf32> to vector<1x8xf32>
    %661 = arith.cmpi sle, %656, %652 : i32
    %662 = arith.ori %591, %661 : i1
    %cst_275 = arith.constant 0.000000e+00 : f32
    %663 = vector.broadcast %cst_275 : f32 to vector<1x8xf32>
    %664 = arith.select %662, %663, %660 : vector<1x8xf32>
    %c0_276 = arith.constant 0 : index
    %c24 = arith.constant 24 : index
    %c0_277 = arith.constant 0 : index
    %665 = vector.load %arg8[%c0_276, %c24, %c0_277] : memref<1x49x8xf32, #tpu.memory_space<vmem>>, vector<1x1x8xf32>
    %666 = vector.shape_cast %665 : vector<1x1x8xf32> to vector<1x8xf32>
    %667 = vector.shape_cast %664 : vector<1x8xf32> to vector<1x1x8xf32>
    tpu.vector_store %arg8[%c0_276, %c24, %c0_277], %667 {strides = array<i32>} : memref<1x49x8xf32, #tpu.memory_space<vmem>>, vector<1x1x8xf32>,
    %c7_i32_278 = arith.constant 7 : i32
    %668 = arith.muli %arg0, %c7_i32_278 : i32
    %c4_i32_279 = arith.constant 4 : i32
    %669 = arith.addi %668, %c4_i32_279 : i32
    %670 = arith.index_cast %669 : i32 to index
    %671 = memref.load %arg5[%670] : memref<56xi32, #tpu.memory_space<smem>>
    %c7_i32_280 = arith.constant 7 : i32
    %672 = arith.muli %arg0, %c7_i32_280 : i32
    %c4_i32_281 = arith.constant 4 : i32
    %673 = arith.addi %672, %c4_i32_281 : i32
    %674 = arith.index_cast %673 : i32 to index
    %675 = memref.load %arg6[%674] : memref<56xi32, #tpu.memory_space<smem>>
    %cst_282 = arith.constant 0xFF800000 : f32
    %676 = vector.broadcast %cst_282 : f32 to vector<16x8xf32>
    %677 = arith.select %590, %98, %676 : vector<16x8xi1>, vector<16x8xf32>
    %cst_283 = arith.constant dense<0xFF800000> : vector<8xf32>
    %678 = vector.multi_reduction <maximumf>, %677, %cst_283 [0] : vector<16x8xf32> to vector<8xf32>
    %679 = vector.shape_cast %678 : vector<8xf32> to vector<1x8xf32>
    %680 = arith.cmpi sle, %675, %671 : i32
    %681 = arith.ori %591, %680 : i1
    %cst_284 = arith.constant 0.000000e+00 : f32
    %682 = vector.broadcast %cst_284 : f32 to vector<1x8xf32>
    %683 = arith.select %681, %682, %679 : vector<1x8xf32>
    %c0_285 = arith.constant 0 : index
    %c25 = arith.constant 25 : index
    %c0_286 = arith.constant 0 : index
    %684 = vector.load %arg8[%c0_285, %c25, %c0_286] : memref<1x49x8xf32, #tpu.memory_space<vmem>>, vector<1x1x8xf32>
    %685 = vector.shape_cast %684 : vector<1x1x8xf32> to vector<1x8xf32>
    %686 = vector.shape_cast %683 : vector<1x8xf32> to vector<1x1x8xf32>
    tpu.vector_store %arg8[%c0_285, %c25, %c0_286], %686 {strides = array<i32>} : memref<1x49x8xf32, #tpu.memory_space<vmem>>, vector<1x1x8xf32>,
    %c7_i32_287 = arith.constant 7 : i32
    %687 = arith.muli %arg0, %c7_i32_287 : i32
    %c5_i32_288 = arith.constant 5 : i32
    %688 = arith.addi %687, %c5_i32_288 : i32
    %689 = arith.index_cast %688 : i32 to index
    %690 = memref.load %arg5[%689] : memref<56xi32, #tpu.memory_space<smem>>
    %c7_i32_289 = arith.constant 7 : i32
    %691 = arith.muli %arg0, %c7_i32_289 : i32
    %c5_i32_290 = arith.constant 5 : i32
    %692 = arith.addi %691, %c5_i32_290 : i32
    %693 = arith.index_cast %692 : i32 to index
    %694 = memref.load %arg6[%693] : memref<56xi32, #tpu.memory_space<smem>>
    %cst_291 = arith.constant 0xFF800000 : f32
    %695 = vector.broadcast %cst_291 : f32 to vector<16x8xf32>
    %696 = arith.select %590, %117, %695 : vector<16x8xi1>, vector<16x8xf32>
    %cst_292 = arith.constant dense<0xFF800000> : vector<8xf32>
    %697 = vector.multi_reduction <maximumf>, %696, %cst_292 [0] : vector<16x8xf32> to vector<8xf32>
    %698 = vector.shape_cast %697 : vector<8xf32> to vector<1x8xf32>
    %699 = arith.cmpi sle, %694, %690 : i32
    %700 = arith.ori %591, %699 : i1
    %cst_293 = arith.constant 0.000000e+00 : f32
    %701 = vector.broadcast %cst_293 : f32 to vector<1x8xf32>
    %702 = arith.select %700, %701, %698 : vector<1x8xf32>
    %c0_294 = arith.constant 0 : index
    %c26 = arith.constant 26 : index
    %c0_295 = arith.constant 0 : index
    %703 = vector.load %arg8[%c0_294, %c26, %c0_295] : memref<1x49x8xf32, #tpu.memory_space<vmem>>, vector<1x1x8xf32>
    %704 = vector.shape_cast %703 : vector<1x1x8xf32> to vector<1x8xf32>
    %705 = vector.shape_cast %702 : vector<1x8xf32> to vector<1x1x8xf32>
    tpu.vector_store %arg8[%c0_294, %c26, %c0_295], %705 {strides = array<i32>} : memref<1x49x8xf32, #tpu.memory_space<vmem>>, vector<1x1x8xf32>,
    %c7_i32_296 = arith.constant 7 : i32
    %706 = arith.muli %arg0, %c7_i32_296 : i32
    %c6_i32_297 = arith.constant 6 : i32
    %707 = arith.addi %706, %c6_i32_297 : i32
    %708 = arith.index_cast %707 : i32 to index
    %709 = memref.load %arg5[%708] : memref<56xi32, #tpu.memory_space<smem>>
    %c7_i32_298 = arith.constant 7 : i32
    %710 = arith.muli %arg0, %c7_i32_298 : i32
    %c6_i32_299 = arith.constant 6 : i32
    %711 = arith.addi %710, %c6_i32_299 : i32
    %712 = arith.index_cast %711 : i32 to index
    %713 = memref.load %arg6[%712] : memref<56xi32, #tpu.memory_space<smem>>
    %cst_300 = arith.constant 0xFF800000 : f32
    %714 = vector.broadcast %cst_300 : f32 to vector<16x8xf32>
    %715 = arith.select %590, %136, %714 : vector<16x8xi1>, vector<16x8xf32>
    %cst_301 = arith.constant dense<0xFF800000> : vector<8xf32>
    %716 = vector.multi_reduction <maximumf>, %715, %cst_301 [0] : vector<16x8xf32> to vector<8xf32>
    %717 = vector.shape_cast %716 : vector<8xf32> to vector<1x8xf32>
    %718 = arith.cmpi sle, %713, %709 : i32
    %719 = arith.ori %591, %718 : i1
    %cst_302 = arith.constant 0.000000e+00 : f32
    %720 = vector.broadcast %cst_302 : f32 to vector<1x8xf32>
    %721 = arith.select %719, %720, %717 : vector<1x8xf32>
    %c0_303 = arith.constant 0 : index
    %c27 = arith.constant 27 : index
    %c0_304 = arith.constant 0 : index
    %722 = vector.load %arg8[%c0_303, %c27, %c0_304] : memref<1x49x8xf32, #tpu.memory_space<vmem>>, vector<1x1x8xf32>
    %723 = vector.shape_cast %722 : vector<1x1x8xf32> to vector<1x8xf32>
    %724 = vector.shape_cast %721 : vector<1x8xf32> to vector<1x1x8xf32>
    tpu.vector_store %arg8[%c0_303, %c27, %c0_304], %724 {strides = array<i32>} : memref<1x49x8xf32, #tpu.memory_space<vmem>>, vector<1x1x8xf32>,
    %c7_i32_305 = arith.constant 7 : i32
    %725 = arith.muli %arg0, %c7_i32_305 : i32
    %c4_i32_306 = arith.constant 4 : i32
    %726 = arith.addi %725, %c4_i32_306 : i32
    %727 = arith.index_cast %726 : i32 to index
    %728 = memref.load %arg3[%727] : memref<56xi32, #tpu.memory_space<smem>>
    %c7_i32_307 = arith.constant 7 : i32
    %729 = arith.muli %arg0, %c7_i32_307 : i32
    %c4_i32_308 = arith.constant 4 : i32
    %730 = arith.addi %729, %c4_i32_308 : i32
    %731 = arith.index_cast %730 : i32 to index
    %732 = memref.load %arg4[%731] : memref<56xi32, #tpu.memory_space<smem>>
    %733 = vector.broadcast %728 : i32 to vector<16x8xi32>
    %734 = arith.cmpi sge, %3, %733 : vector<16x8xi32>
    %735 = vector.broadcast %732 : i32 to vector<16x8xi32>
    %736 = arith.cmpi slt, %3, %735 : vector<16x8xi32>
    %737 = arith.andi %734, %736 : vector<16x8xi1>
    %738 = arith.cmpi sle, %732, %728 : i32
    %c7_i32_309 = arith.constant 7 : i32
    %739 = arith.muli %arg0, %c7_i32_309 : i32
    %c0_i32_310 = arith.constant 0 : i32
    %740 = arith.addi %739, %c0_i32_310 : i32
    %741 = arith.index_cast %740 : i32 to index
    %742 = memref.load %arg5[%741] : memref<56xi32, #tpu.memory_space<smem>>
    %c7_i32_311 = arith.constant 7 : i32
    %743 = arith.muli %arg0, %c7_i32_311 : i32
    %c0_i32_312 = arith.constant 0 : i32
    %744 = arith.addi %743, %c0_i32_312 : i32
    %745 = arith.index_cast %744 : i32 to index
    %746 = memref.load %arg6[%745] : memref<56xi32, #tpu.memory_space<smem>>
    %cst_313 = arith.constant 0xFF800000 : f32
    %747 = vector.broadcast %cst_313 : f32 to vector<16x8xf32>
    %748 = arith.select %737, %22, %747 : vector<16x8xi1>, vector<16x8xf32>
    %cst_314 = arith.constant dense<0xFF800000> : vector<8xf32>
    %749 = vector.multi_reduction <maximumf>, %748, %cst_314 [0] : vector<16x8xf32> to vector<8xf32>
    %750 = vector.shape_cast %749 : vector<8xf32> to vector<1x8xf32>
    %751 = arith.cmpi sle, %746, %742 : i32
    %752 = arith.ori %738, %751 : i1
    %cst_315 = arith.constant 0.000000e+00 : f32
    %753 = vector.broadcast %cst_315 : f32 to vector<1x8xf32>
    %754 = arith.select %752, %753, %750 : vector<1x8xf32>
    %c0_316 = arith.constant 0 : index
    %c28 = arith.constant 28 : index
    %c0_317 = arith.constant 0 : index
    %755 = vector.load %arg8[%c0_316, %c28, %c0_317] : memref<1x49x8xf32, #tpu.memory_space<vmem>>, vector<1x1x8xf32>
    %756 = vector.shape_cast %755 : vector<1x1x8xf32> to vector<1x8xf32>
    %757 = vector.shape_cast %754 : vector<1x8xf32> to vector<1x1x8xf32>
    tpu.vector_store %arg8[%c0_316, %c28, %c0_317], %757 {strides = array<i32>} : memref<1x49x8xf32, #tpu.memory_space<vmem>>, vector<1x1x8xf32>,
    %c7_i32_318 = arith.constant 7 : i32
    %758 = arith.muli %arg0, %c7_i32_318 : i32
    %c1_i32_319 = arith.constant 1 : i32
    %759 = arith.addi %758, %c1_i32_319 : i32
    %760 = arith.index_cast %759 : i32 to index
    %761 = memref.load %arg5[%760] : memref<56xi32, #tpu.memory_space<smem>>
    %c7_i32_320 = arith.constant 7 : i32
    %762 = arith.muli %arg0, %c7_i32_320 : i32
    %c1_i32_321 = arith.constant 1 : i32
    %763 = arith.addi %762, %c1_i32_321 : i32
    %764 = arith.index_cast %763 : i32 to index
    %765 = memref.load %arg6[%764] : memref<56xi32, #tpu.memory_space<smem>>
    %cst_322 = arith.constant 0xFF800000 : f32
    %766 = vector.broadcast %cst_322 : f32 to vector<16x8xf32>
    %767 = arith.select %737, %41, %766 : vector<16x8xi1>, vector<16x8xf32>
    %cst_323 = arith.constant dense<0xFF800000> : vector<8xf32>
    %768 = vector.multi_reduction <maximumf>, %767, %cst_323 [0] : vector<16x8xf32> to vector<8xf32>
    %769 = vector.shape_cast %768 : vector<8xf32> to vector<1x8xf32>
    %770 = arith.cmpi sle, %765, %761 : i32
    %771 = arith.ori %738, %770 : i1
    %cst_324 = arith.constant 0.000000e+00 : f32
    %772 = vector.broadcast %cst_324 : f32 to vector<1x8xf32>
    %773 = arith.select %771, %772, %769 : vector<1x8xf32>
    %c0_325 = arith.constant 0 : index
    %c29 = arith.constant 29 : index
    %c0_326 = arith.constant 0 : index
    %774 = vector.load %arg8[%c0_325, %c29, %c0_326] : memref<1x49x8xf32, #tpu.memory_space<vmem>>, vector<1x1x8xf32>
    %775 = vector.shape_cast %774 : vector<1x1x8xf32> to vector<1x8xf32>
    %776 = vector.shape_cast %773 : vector<1x8xf32> to vector<1x1x8xf32>
    tpu.vector_store %arg8[%c0_325, %c29, %c0_326], %776 {strides = array<i32>} : memref<1x49x8xf32, #tpu.memory_space<vmem>>, vector<1x1x8xf32>,
    %c7_i32_327 = arith.constant 7 : i32
    %777 = arith.muli %arg0, %c7_i32_327 : i32
    %c2_i32_328 = arith.constant 2 : i32
    %778 = arith.addi %777, %c2_i32_328 : i32
    %779 = arith.index_cast %778 : i32 to index
    %780 = memref.load %arg5[%779] : memref<56xi32, #tpu.memory_space<smem>>
    %c7_i32_329 = arith.constant 7 : i32
    %781 = arith.muli %arg0, %c7_i32_329 : i32
    %c2_i32_330 = arith.constant 2 : i32
    %782 = arith.addi %781, %c2_i32_330 : i32
    %783 = arith.index_cast %782 : i32 to index
    %784 = memref.load %arg6[%783] : memref<56xi32, #tpu.memory_space<smem>>
    %cst_331 = arith.constant 0xFF800000 : f32
    %785 = vector.broadcast %cst_331 : f32 to vector<16x8xf32>
    %786 = arith.select %737, %60, %785 : vector<16x8xi1>, vector<16x8xf32>
    %cst_332 = arith.constant dense<0xFF800000> : vector<8xf32>
    %787 = vector.multi_reduction <maximumf>, %786, %cst_332 [0] : vector<16x8xf32> to vector<8xf32>
    %788 = vector.shape_cast %787 : vector<8xf32> to vector<1x8xf32>
    %789 = arith.cmpi sle, %784, %780 : i32
    %790 = arith.ori %738, %789 : i1
    %cst_333 = arith.constant 0.000000e+00 : f32
    %791 = vector.broadcast %cst_333 : f32 to vector<1x8xf32>
    %792 = arith.select %790, %791, %788 : vector<1x8xf32>
    %c0_334 = arith.constant 0 : index
    %c30 = arith.constant 30 : index
    %c0_335 = arith.constant 0 : index
    %793 = vector.load %arg8[%c0_334, %c30, %c0_335] : memref<1x49x8xf32, #tpu.memory_space<vmem>>, vector<1x1x8xf32>
    %794 = vector.shape_cast %793 : vector<1x1x8xf32> to vector<1x8xf32>
    %795 = vector.shape_cast %792 : vector<1x8xf32> to vector<1x1x8xf32>
    tpu.vector_store %arg8[%c0_334, %c30, %c0_335], %795 {strides = array<i32>} : memref<1x49x8xf32, #tpu.memory_space<vmem>>, vector<1x1x8xf32>,
    %c7_i32_336 = arith.constant 7 : i32
    %796 = arith.muli %arg0, %c7_i32_336 : i32
    %c3_i32_337 = arith.constant 3 : i32
    %797 = arith.addi %796, %c3_i32_337 : i32
    %798 = arith.index_cast %797 : i32 to index
    %799 = memref.load %arg5[%798] : memref<56xi32, #tpu.memory_space<smem>>
    %c7_i32_338 = arith.constant 7 : i32
    %800 = arith.muli %arg0, %c7_i32_338 : i32
    %c3_i32_339 = arith.constant 3 : i32
    %801 = arith.addi %800, %c3_i32_339 : i32
    %802 = arith.index_cast %801 : i32 to index
    %803 = memref.load %arg6[%802] : memref<56xi32, #tpu.memory_space<smem>>
    %cst_340 = arith.constant 0xFF800000 : f32
    %804 = vector.broadcast %cst_340 : f32 to vector<16x8xf32>
    %805 = arith.select %737, %79, %804 : vector<16x8xi1>, vector<16x8xf32>
    %cst_341 = arith.constant dense<0xFF800000> : vector<8xf32>
    %806 = vector.multi_reduction <maximumf>, %805, %cst_341 [0] : vector<16x8xf32> to vector<8xf32>
    %807 = vector.shape_cast %806 : vector<8xf32> to vector<1x8xf32>
    %808 = arith.cmpi sle, %803, %799 : i32
    %809 = arith.ori %738, %808 : i1
    %cst_342 = arith.constant 0.000000e+00 : f32
    %810 = vector.broadcast %cst_342 : f32 to vector<1x8xf32>
    %811 = arith.select %809, %810, %807 : vector<1x8xf32>
    %c0_343 = arith.constant 0 : index
    %c31 = arith.constant 31 : index
    %c0_344 = arith.constant 0 : index
    %812 = vector.load %arg8[%c0_343, %c31, %c0_344] : memref<1x49x8xf32, #tpu.memory_space<vmem>>, vector<1x1x8xf32>
    %813 = vector.shape_cast %812 : vector<1x1x8xf32> to vector<1x8xf32>
    %814 = vector.shape_cast %811 : vector<1x8xf32> to vector<1x1x8xf32>
    tpu.vector_store %arg8[%c0_343, %c31, %c0_344], %814 {strides = array<i32>} : memref<1x49x8xf32, #tpu.memory_space<vmem>>, vector<1x1x8xf32>,
    %c7_i32_345 = arith.constant 7 : i32
    %815 = arith.muli %arg0, %c7_i32_345 : i32
    %c4_i32_346 = arith.constant 4 : i32
    %816 = arith.addi %815, %c4_i32_346 : i32
    %817 = arith.index_cast %816 : i32 to index
    %818 = memref.load %arg5[%817] : memref<56xi32, #tpu.memory_space<smem>>
    %c7_i32_347 = arith.constant 7 : i32
    %819 = arith.muli %arg0, %c7_i32_347 : i32
    %c4_i32_348 = arith.constant 4 : i32
    %820 = arith.addi %819, %c4_i32_348 : i32
    %821 = arith.index_cast %820 : i32 to index
    %822 = memref.load %arg6[%821] : memref<56xi32, #tpu.memory_space<smem>>
    %cst_349 = arith.constant 0xFF800000 : f32
    %823 = vector.broadcast %cst_349 : f32 to vector<16x8xf32>
    %824 = arith.select %737, %98, %823 : vector<16x8xi1>, vector<16x8xf32>
    %cst_350 = arith.constant dense<0xFF800000> : vector<8xf32>
    %825 = vector.multi_reduction <maximumf>, %824, %cst_350 [0] : vector<16x8xf32> to vector<8xf32>
    %826 = vector.shape_cast %825 : vector<8xf32> to vector<1x8xf32>
    %827 = arith.cmpi sle, %822, %818 : i32
    %828 = arith.ori %738, %827 : i1
    %cst_351 = arith.constant 0.000000e+00 : f32
    %829 = vector.broadcast %cst_351 : f32 to vector<1x8xf32>
    %830 = arith.select %828, %829, %826 : vector<1x8xf32>
    %c0_352 = arith.constant 0 : index
    %c32 = arith.constant 32 : index
    %c0_353 = arith.constant 0 : index
    %831 = vector.load %arg8[%c0_352, %c32, %c0_353] : memref<1x49x8xf32, #tpu.memory_space<vmem>>, vector<1x1x8xf32>
    %832 = vector.shape_cast %831 : vector<1x1x8xf32> to vector<1x8xf32>
    %833 = vector.shape_cast %830 : vector<1x8xf32> to vector<1x1x8xf32>
    tpu.vector_store %arg8[%c0_352, %c32, %c0_353], %833 {strides = array<i32>} : memref<1x49x8xf32, #tpu.memory_space<vmem>>, vector<1x1x8xf32>,
    %c7_i32_354 = arith.constant 7 : i32
    %834 = arith.muli %arg0, %c7_i32_354 : i32
    %c5_i32_355 = arith.constant 5 : i32
    %835 = arith.addi %834, %c5_i32_355 : i32
    %836 = arith.index_cast %835 : i32 to index
    %837 = memref.load %arg5[%836] : memref<56xi32, #tpu.memory_space<smem>>
    %c7_i32_356 = arith.constant 7 : i32
    %838 = arith.muli %arg0, %c7_i32_356 : i32
    %c5_i32_357 = arith.constant 5 : i32
    %839 = arith.addi %838, %c5_i32_357 : i32
    %840 = arith.index_cast %839 : i32 to index
    %841 = memref.load %arg6[%840] : memref<56xi32, #tpu.memory_space<smem>>
    %cst_358 = arith.constant 0xFF800000 : f32
    %842 = vector.broadcast %cst_358 : f32 to vector<16x8xf32>
    %843 = arith.select %737, %117, %842 : vector<16x8xi1>, vector<16x8xf32>
    %cst_359 = arith.constant dense<0xFF800000> : vector<8xf32>
    %844 = vector.multi_reduction <maximumf>, %843, %cst_359 [0] : vector<16x8xf32> to vector<8xf32>
    %845 = vector.shape_cast %844 : vector<8xf32> to vector<1x8xf32>
    %846 = arith.cmpi sle, %841, %837 : i32
    %847 = arith.ori %738, %846 : i1
    %cst_360 = arith.constant 0.000000e+00 : f32
    %848 = vector.broadcast %cst_360 : f32 to vector<1x8xf32>
    %849 = arith.select %847, %848, %845 : vector<1x8xf32>
    %c0_361 = arith.constant 0 : index
    %c33 = arith.constant 33 : index
    %c0_362 = arith.constant 0 : index
    %850 = vector.load %arg8[%c0_361, %c33, %c0_362] : memref<1x49x8xf32, #tpu.memory_space<vmem>>, vector<1x1x8xf32>
    %851 = vector.shape_cast %850 : vector<1x1x8xf32> to vector<1x8xf32>
    %852 = vector.shape_cast %849 : vector<1x8xf32> to vector<1x1x8xf32>
    tpu.vector_store %arg8[%c0_361, %c33, %c0_362], %852 {strides = array<i32>} : memref<1x49x8xf32, #tpu.memory_space<vmem>>, vector<1x1x8xf32>,
    %c7_i32_363 = arith.constant 7 : i32
    %853 = arith.muli %arg0, %c7_i32_363 : i32
    %c6_i32_364 = arith.constant 6 : i32
    %854 = arith.addi %853, %c6_i32_364 : i32
    %855 = arith.index_cast %854 : i32 to index
    %856 = memref.load %arg5[%855] : memref<56xi32, #tpu.memory_space<smem>>
    %c7_i32_365 = arith.constant 7 : i32
    %857 = arith.muli %arg0, %c7_i32_365 : i32
    %c6_i32_366 = arith.constant 6 : i32
    %858 = arith.addi %857, %c6_i32_366 : i32
    %859 = arith.index_cast %858 : i32 to index
    %860 = memref.load %arg6[%859] : memref<56xi32, #tpu.memory_space<smem>>
    %cst_367 = arith.constant 0xFF800000 : f32
    %861 = vector.broadcast %cst_367 : f32 to vector<16x8xf32>
    %862 = arith.select %737, %136, %861 : vector<16x8xi1>, vector<16x8xf32>
    %cst_368 = arith.constant dense<0xFF800000> : vector<8xf32>
    %863 = vector.multi_reduction <maximumf>, %862, %cst_368 [0] : vector<16x8xf32> to vector<8xf32>
    %864 = vector.shape_cast %863 : vector<8xf32> to vector<1x8xf32>
    %865 = arith.cmpi sle, %860, %856 : i32
    %866 = arith.ori %738, %865 : i1
    %cst_369 = arith.constant 0.000000e+00 : f32
    %867 = vector.broadcast %cst_369 : f32 to vector<1x8xf32>
    %868 = arith.select %866, %867, %864 : vector<1x8xf32>
    %c0_370 = arith.constant 0 : index
    %c34 = arith.constant 34 : index
    %c0_371 = arith.constant 0 : index
    %869 = vector.load %arg8[%c0_370, %c34, %c0_371] : memref<1x49x8xf32, #tpu.memory_space<vmem>>, vector<1x1x8xf32>
    %870 = vector.shape_cast %869 : vector<1x1x8xf32> to vector<1x8xf32>
    %871 = vector.shape_cast %868 : vector<1x8xf32> to vector<1x1x8xf32>
    tpu.vector_store %arg8[%c0_370, %c34, %c0_371], %871 {strides = array<i32>} : memref<1x49x8xf32, #tpu.memory_space<vmem>>, vector<1x1x8xf32>,
    %c7_i32_372 = arith.constant 7 : i32
    %872 = arith.muli %arg0, %c7_i32_372 : i32
    %c5_i32_373 = arith.constant 5 : i32
    %873 = arith.addi %872, %c5_i32_373 : i32
    %874 = arith.index_cast %873 : i32 to index
    %875 = memref.load %arg3[%874] : memref<56xi32, #tpu.memory_space<smem>>
    %c7_i32_374 = arith.constant 7 : i32
    %876 = arith.muli %arg0, %c7_i32_374 : i32
    %c5_i32_375 = arith.constant 5 : i32
    %877 = arith.addi %876, %c5_i32_375 : i32
    %878 = arith.index_cast %877 : i32 to index
    %879 = memref.load %arg4[%878] : memref<56xi32, #tpu.memory_space<smem>>
    %880 = vector.broadcast %875 : i32 to vector<16x8xi32>
    %881 = arith.cmpi sge, %3, %880 : vector<16x8xi32>
    %882 = vector.broadcast %879 : i32 to vector<16x8xi32>
    %883 = arith.cmpi slt, %3, %882 : vector<16x8xi32>
    %884 = arith.andi %881, %883 : vector<16x8xi1>
    %885 = arith.cmpi sle, %879, %875 : i32
    %c7_i32_376 = arith.constant 7 : i32
    %886 = arith.muli %arg0, %c7_i32_376 : i32
    %c0_i32_377 = arith.constant 0 : i32
    %887 = arith.addi %886, %c0_i32_377 : i32
    %888 = arith.index_cast %887 : i32 to index
    %889 = memref.load %arg5[%888] : memref<56xi32, #tpu.memory_space<smem>>
    %c7_i32_378 = arith.constant 7 : i32
    %890 = arith.muli %arg0, %c7_i32_378 : i32
    %c0_i32_379 = arith.constant 0 : i32
    %891 = arith.addi %890, %c0_i32_379 : i32
    %892 = arith.index_cast %891 : i32 to index
    %893 = memref.load %arg6[%892] : memref<56xi32, #tpu.memory_space<smem>>
    %cst_380 = arith.constant 0xFF800000 : f32
    %894 = vector.broadcast %cst_380 : f32 to vector<16x8xf32>
    %895 = arith.select %884, %22, %894 : vector<16x8xi1>, vector<16x8xf32>
    %cst_381 = arith.constant dense<0xFF800000> : vector<8xf32>
    %896 = vector.multi_reduction <maximumf>, %895, %cst_381 [0] : vector<16x8xf32> to vector<8xf32>
    %897 = vector.shape_cast %896 : vector<8xf32> to vector<1x8xf32>
    %898 = arith.cmpi sle, %893, %889 : i32
    %899 = arith.ori %885, %898 : i1
    %cst_382 = arith.constant 0.000000e+00 : f32
    %900 = vector.broadcast %cst_382 : f32 to vector<1x8xf32>
    %901 = arith.select %899, %900, %897 : vector<1x8xf32>
    %c0_383 = arith.constant 0 : index
    %c35 = arith.constant 35 : index
    %c0_384 = arith.constant 0 : index
    %902 = vector.load %arg8[%c0_383, %c35, %c0_384] : memref<1x49x8xf32, #tpu.memory_space<vmem>>, vector<1x1x8xf32>
    %903 = vector.shape_cast %902 : vector<1x1x8xf32> to vector<1x8xf32>
    %904 = vector.shape_cast %901 : vector<1x8xf32> to vector<1x1x8xf32>
    tpu.vector_store %arg8[%c0_383, %c35, %c0_384], %904 {strides = array<i32>} : memref<1x49x8xf32, #tpu.memory_space<vmem>>, vector<1x1x8xf32>,
    %c7_i32_385 = arith.constant 7 : i32
    %905 = arith.muli %arg0, %c7_i32_385 : i32
    %c1_i32_386 = arith.constant 1 : i32
    %906 = arith.addi %905, %c1_i32_386 : i32
    %907 = arith.index_cast %906 : i32 to index
    %908 = memref.load %arg5[%907] : memref<56xi32, #tpu.memory_space<smem>>
    %c7_i32_387 = arith.constant 7 : i32
    %909 = arith.muli %arg0, %c7_i32_387 : i32
    %c1_i32_388 = arith.constant 1 : i32
    %910 = arith.addi %909, %c1_i32_388 : i32
    %911 = arith.index_cast %910 : i32 to index
    %912 = memref.load %arg6[%911] : memref<56xi32, #tpu.memory_space<smem>>
    %cst_389 = arith.constant 0xFF800000 : f32
    %913 = vector.broadcast %cst_389 : f32 to vector<16x8xf32>
    %914 = arith.select %884, %41, %913 : vector<16x8xi1>, vector<16x8xf32>
    %cst_390 = arith.constant dense<0xFF800000> : vector<8xf32>
    %915 = vector.multi_reduction <maximumf>, %914, %cst_390 [0] : vector<16x8xf32> to vector<8xf32>
    %916 = vector.shape_cast %915 : vector<8xf32> to vector<1x8xf32>
    %917 = arith.cmpi sle, %912, %908 : i32
    %918 = arith.ori %885, %917 : i1
    %cst_391 = arith.constant 0.000000e+00 : f32
    %919 = vector.broadcast %cst_391 : f32 to vector<1x8xf32>
    %920 = arith.select %918, %919, %916 : vector<1x8xf32>
    %c0_392 = arith.constant 0 : index
    %c36 = arith.constant 36 : index
    %c0_393 = arith.constant 0 : index
    %921 = vector.load %arg8[%c0_392, %c36, %c0_393] : memref<1x49x8xf32, #tpu.memory_space<vmem>>, vector<1x1x8xf32>
    %922 = vector.shape_cast %921 : vector<1x1x8xf32> to vector<1x8xf32>
    %923 = vector.shape_cast %920 : vector<1x8xf32> to vector<1x1x8xf32>
    tpu.vector_store %arg8[%c0_392, %c36, %c0_393], %923 {strides = array<i32>} : memref<1x49x8xf32, #tpu.memory_space<vmem>>, vector<1x1x8xf32>,
    %c7_i32_394 = arith.constant 7 : i32
    %924 = arith.muli %arg0, %c7_i32_394 : i32
    %c2_i32_395 = arith.constant 2 : i32
    %925 = arith.addi %924, %c2_i32_395 : i32
    %926 = arith.index_cast %925 : i32 to index
    %927 = memref.load %arg5[%926] : memref<56xi32, #tpu.memory_space<smem>>
    %c7_i32_396 = arith.constant 7 : i32
    %928 = arith.muli %arg0, %c7_i32_396 : i32
    %c2_i32_397 = arith.constant 2 : i32
    %929 = arith.addi %928, %c2_i32_397 : i32
    %930 = arith.index_cast %929 : i32 to index
    %931 = memref.load %arg6[%930] : memref<56xi32, #tpu.memory_space<smem>>
    %cst_398 = arith.constant 0xFF800000 : f32
    %932 = vector.broadcast %cst_398 : f32 to vector<16x8xf32>
    %933 = arith.select %884, %60, %932 : vector<16x8xi1>, vector<16x8xf32>
    %cst_399 = arith.constant dense<0xFF800000> : vector<8xf32>
    %934 = vector.multi_reduction <maximumf>, %933, %cst_399 [0] : vector<16x8xf32> to vector<8xf32>
    %935 = vector.shape_cast %934 : vector<8xf32> to vector<1x8xf32>
    %936 = arith.cmpi sle, %931, %927 : i32
    %937 = arith.ori %885, %936 : i1
    %cst_400 = arith.constant 0.000000e+00 : f32
    %938 = vector.broadcast %cst_400 : f32 to vector<1x8xf32>
    %939 = arith.select %937, %938, %935 : vector<1x8xf32>
    %c0_401 = arith.constant 0 : index
    %c37 = arith.constant 37 : index
    %c0_402 = arith.constant 0 : index
    %940 = vector.load %arg8[%c0_401, %c37, %c0_402] : memref<1x49x8xf32, #tpu.memory_space<vmem>>, vector<1x1x8xf32>
    %941 = vector.shape_cast %940 : vector<1x1x8xf32> to vector<1x8xf32>
    %942 = vector.shape_cast %939 : vector<1x8xf32> to vector<1x1x8xf32>
    tpu.vector_store %arg8[%c0_401, %c37, %c0_402], %942 {strides = array<i32>} : memref<1x49x8xf32, #tpu.memory_space<vmem>>, vector<1x1x8xf32>,
    %c7_i32_403 = arith.constant 7 : i32
    %943 = arith.muli %arg0, %c7_i32_403 : i32
    %c3_i32_404 = arith.constant 3 : i32
    %944 = arith.addi %943, %c3_i32_404 : i32
    %945 = arith.index_cast %944 : i32 to index
    %946 = memref.load %arg5[%945] : memref<56xi32, #tpu.memory_space<smem>>
    %c7_i32_405 = arith.constant 7 : i32
    %947 = arith.muli %arg0, %c7_i32_405 : i32
    %c3_i32_406 = arith.constant 3 : i32
    %948 = arith.addi %947, %c3_i32_406 : i32
    %949 = arith.index_cast %948 : i32 to index
    %950 = memref.load %arg6[%949] : memref<56xi32, #tpu.memory_space<smem>>
    %cst_407 = arith.constant 0xFF800000 : f32
    %951 = vector.broadcast %cst_407 : f32 to vector<16x8xf32>
    %952 = arith.select %884, %79, %951 : vector<16x8xi1>, vector<16x8xf32>
    %cst_408 = arith.constant dense<0xFF800000> : vector<8xf32>
    %953 = vector.multi_reduction <maximumf>, %952, %cst_408 [0] : vector<16x8xf32> to vector<8xf32>
    %954 = vector.shape_cast %953 : vector<8xf32> to vector<1x8xf32>
    %955 = arith.cmpi sle, %950, %946 : i32
    %956 = arith.ori %885, %955 : i1
    %cst_409 = arith.constant 0.000000e+00 : f32
    %957 = vector.broadcast %cst_409 : f32 to vector<1x8xf32>
    %958 = arith.select %956, %957, %954 : vector<1x8xf32>
    %c0_410 = arith.constant 0 : index
    %c38 = arith.constant 38 : index
    %c0_411 = arith.constant 0 : index
    %959 = vector.load %arg8[%c0_410, %c38, %c0_411] : memref<1x49x8xf32, #tpu.memory_space<vmem>>, vector<1x1x8xf32>
    %960 = vector.shape_cast %959 : vector<1x1x8xf32> to vector<1x8xf32>
    %961 = vector.shape_cast %958 : vector<1x8xf32> to vector<1x1x8xf32>
    tpu.vector_store %arg8[%c0_410, %c38, %c0_411], %961 {strides = array<i32>} : memref<1x49x8xf32, #tpu.memory_space<vmem>>, vector<1x1x8xf32>,
    %c7_i32_412 = arith.constant 7 : i32
    %962 = arith.muli %arg0, %c7_i32_412 : i32
    %c4_i32_413 = arith.constant 4 : i32
    %963 = arith.addi %962, %c4_i32_413 : i32
    %964 = arith.index_cast %963 : i32 to index
    %965 = memref.load %arg5[%964] : memref<56xi32, #tpu.memory_space<smem>>
    %c7_i32_414 = arith.constant 7 : i32
    %966 = arith.muli %arg0, %c7_i32_414 : i32
    %c4_i32_415 = arith.constant 4 : i32
    %967 = arith.addi %966, %c4_i32_415 : i32
    %968 = arith.index_cast %967 : i32 to index
    %969 = memref.load %arg6[%968] : memref<56xi32, #tpu.memory_space<smem>>
    %cst_416 = arith.constant 0xFF800000 : f32
    %970 = vector.broadcast %cst_416 : f32 to vector<16x8xf32>
    %971 = arith.select %884, %98, %970 : vector<16x8xi1>, vector<16x8xf32>
    %cst_417 = arith.constant dense<0xFF800000> : vector<8xf32>
    %972 = vector.multi_reduction <maximumf>, %971, %cst_417 [0] : vector<16x8xf32> to vector<8xf32>
    %973 = vector.shape_cast %972 : vector<8xf32> to vector<1x8xf32>
    %974 = arith.cmpi sle, %969, %965 : i32
    %975 = arith.ori %885, %974 : i1
    %cst_418 = arith.constant 0.000000e+00 : f32
    %976 = vector.broadcast %cst_418 : f32 to vector<1x8xf32>
    %977 = arith.select %975, %976, %973 : vector<1x8xf32>
    %c0_419 = arith.constant 0 : index
    %c39 = arith.constant 39 : index
    %c0_420 = arith.constant 0 : index
    %978 = vector.load %arg8[%c0_419, %c39, %c0_420] : memref<1x49x8xf32, #tpu.memory_space<vmem>>, vector<1x1x8xf32>
    %979 = vector.shape_cast %978 : vector<1x1x8xf32> to vector<1x8xf32>
    %980 = vector.shape_cast %977 : vector<1x8xf32> to vector<1x1x8xf32>
    tpu.vector_store %arg8[%c0_419, %c39, %c0_420], %980 {strides = array<i32>} : memref<1x49x8xf32, #tpu.memory_space<vmem>>, vector<1x1x8xf32>,
    %c7_i32_421 = arith.constant 7 : i32
    %981 = arith.muli %arg0, %c7_i32_421 : i32
    %c5_i32_422 = arith.constant 5 : i32
    %982 = arith.addi %981, %c5_i32_422 : i32
    %983 = arith.index_cast %982 : i32 to index
    %984 = memref.load %arg5[%983] : memref<56xi32, #tpu.memory_space<smem>>
    %c7_i32_423 = arith.constant 7 : i32
    %985 = arith.muli %arg0, %c7_i32_423 : i32
    %c5_i32_424 = arith.constant 5 : i32
    %986 = arith.addi %985, %c5_i32_424 : i32
    %987 = arith.index_cast %986 : i32 to index
    %988 = memref.load %arg6[%987] : memref<56xi32, #tpu.memory_space<smem>>
    %cst_425 = arith.constant 0xFF800000 : f32
    %989 = vector.broadcast %cst_425 : f32 to vector<16x8xf32>
    %990 = arith.select %884, %117, %989 : vector<16x8xi1>, vector<16x8xf32>
    %cst_426 = arith.constant dense<0xFF800000> : vector<8xf32>
    %991 = vector.multi_reduction <maximumf>, %990, %cst_426 [0] : vector<16x8xf32> to vector<8xf32>
    %992 = vector.shape_cast %991 : vector<8xf32> to vector<1x8xf32>
    %993 = arith.cmpi sle, %988, %984 : i32
    %994 = arith.ori %885, %993 : i1
    %cst_427 = arith.constant 0.000000e+00 : f32
    %995 = vector.broadcast %cst_427 : f32 to vector<1x8xf32>
    %996 = arith.select %994, %995, %992 : vector<1x8xf32>
    %c0_428 = arith.constant 0 : index
    %c40 = arith.constant 40 : index
    %c0_429 = arith.constant 0 : index
    %997 = vector.load %arg8[%c0_428, %c40, %c0_429] : memref<1x49x8xf32, #tpu.memory_space<vmem>>, vector<1x1x8xf32>
    %998 = vector.shape_cast %997 : vector<1x1x8xf32> to vector<1x8xf32>
    %999 = vector.shape_cast %996 : vector<1x8xf32> to vector<1x1x8xf32>
    tpu.vector_store %arg8[%c0_428, %c40, %c0_429], %999 {strides = array<i32>} : memref<1x49x8xf32, #tpu.memory_space<vmem>>, vector<1x1x8xf32>,
    %c7_i32_430 = arith.constant 7 : i32
    %1000 = arith.muli %arg0, %c7_i32_430 : i32
    %c6_i32_431 = arith.constant 6 : i32
    %1001 = arith.addi %1000, %c6_i32_431 : i32
    %1002 = arith.index_cast %1001 : i32 to index
    %1003 = memref.load %arg5[%1002] : memref<56xi32, #tpu.memory_space<smem>>
    %c7_i32_432 = arith.constant 7 : i32
    %1004 = arith.muli %arg0, %c7_i32_432 : i32
    %c6_i32_433 = arith.constant 6 : i32
    %1005 = arith.addi %1004, %c6_i32_433 : i32
    %1006 = arith.index_cast %1005 : i32 to index
    %1007 = memref.load %arg6[%1006] : memref<56xi32, #tpu.memory_space<smem>>
    %cst_434 = arith.constant 0xFF800000 : f32
    %1008 = vector.broadcast %cst_434 : f32 to vector<16x8xf32>
    %1009 = arith.select %884, %136, %1008 : vector<16x8xi1>, vector<16x8xf32>
    %cst_435 = arith.constant dense<0xFF800000> : vector<8xf32>
    %1010 = vector.multi_reduction <maximumf>, %1009, %cst_435 [0] : vector<16x8xf32> to vector<8xf32>
    %1011 = vector.shape_cast %1010 : vector<8xf32> to vector<1x8xf32>
    %1012 = arith.cmpi sle, %1007, %1003 : i32
    %1013 = arith.ori %885, %1012 : i1
    %cst_436 = arith.constant 0.000000e+00 : f32
    %1014 = vector.broadcast %cst_436 : f32 to vector<1x8xf32>
    %1015 = arith.select %1013, %1014, %1011 : vector<1x8xf32>
    %c0_437 = arith.constant 0 : index
    %c41 = arith.constant 41 : index
    %c0_438 = arith.constant 0 : index
    %1016 = vector.load %arg8[%c0_437, %c41, %c0_438] : memref<1x49x8xf32, #tpu.memory_space<vmem>>, vector<1x1x8xf32>
    %1017 = vector.shape_cast %1016 : vector<1x1x8xf32> to vector<1x8xf32>
    %1018 = vector.shape_cast %1015 : vector<1x8xf32> to vector<1x1x8xf32>
    tpu.vector_store %arg8[%c0_437, %c41, %c0_438], %1018 {strides = array<i32>} : memref<1x49x8xf32, #tpu.memory_space<vmem>>, vector<1x1x8xf32>,
    %c7_i32_439 = arith.constant 7 : i32
    %1019 = arith.muli %arg0, %c7_i32_439 : i32
    %c6_i32_440 = arith.constant 6 : i32
    %1020 = arith.addi %1019, %c6_i32_440 : i32
    %1021 = arith.index_cast %1020 : i32 to index
    %1022 = memref.load %arg3[%1021] : memref<56xi32, #tpu.memory_space<smem>>
    %c7_i32_441 = arith.constant 7 : i32
    %1023 = arith.muli %arg0, %c7_i32_441 : i32
    %c6_i32_442 = arith.constant 6 : i32
    %1024 = arith.addi %1023, %c6_i32_442 : i32
    %1025 = arith.index_cast %1024 : i32 to index
    %1026 = memref.load %arg4[%1025] : memref<56xi32, #tpu.memory_space<smem>>
    %1027 = vector.broadcast %1022 : i32 to vector<16x8xi32>
    %1028 = arith.cmpi sge, %3, %1027 : vector<16x8xi32>
    %1029 = vector.broadcast %1026 : i32 to vector<16x8xi32>
    %1030 = arith.cmpi slt, %3, %1029 : vector<16x8xi32>
    %1031 = arith.andi %1028, %1030 : vector<16x8xi1>
    %1032 = arith.cmpi sle, %1026, %1022 : i32
    %c7_i32_443 = arith.constant 7 : i32
    %1033 = arith.muli %arg0, %c7_i32_443 : i32
    %c0_i32_444 = arith.constant 0 : i32
    %1034 = arith.addi %1033, %c0_i32_444 : i32
    %1035 = arith.index_cast %1034 : i32 to index
    %1036 = memref.load %arg5[%1035] : memref<56xi32, #tpu.memory_space<smem>>
    %c7_i32_445 = arith.constant 7 : i32
    %1037 = arith.muli %arg0, %c7_i32_445 : i32
    %c0_i32_446 = arith.constant 0 : i32
    %1038 = arith.addi %1037, %c0_i32_446 : i32
    %1039 = arith.index_cast %1038 : i32 to index
    %1040 = memref.load %arg6[%1039] : memref<56xi32, #tpu.memory_space<smem>>
    %cst_447 = arith.constant 0xFF800000 : f32
    %1041 = vector.broadcast %cst_447 : f32 to vector<16x8xf32>
    %1042 = arith.select %1031, %22, %1041 : vector<16x8xi1>, vector<16x8xf32>
    %cst_448 = arith.constant dense<0xFF800000> : vector<8xf32>
    %1043 = vector.multi_reduction <maximumf>, %1042, %cst_448 [0] : vector<16x8xf32> to vector<8xf32>
    %1044 = vector.shape_cast %1043 : vector<8xf32> to vector<1x8xf32>
    %1045 = arith.cmpi sle, %1040, %1036 : i32
    %1046 = arith.ori %1032, %1045 : i1
    %cst_449 = arith.constant 0.000000e+00 : f32
    %1047 = vector.broadcast %cst_449 : f32 to vector<1x8xf32>
    %1048 = arith.select %1046, %1047, %1044 : vector<1x8xf32>
    %c0_450 = arith.constant 0 : index
    %c42 = arith.constant 42 : index
    %c0_451 = arith.constant 0 : index
    %1049 = vector.load %arg8[%c0_450, %c42, %c0_451] : memref<1x49x8xf32, #tpu.memory_space<vmem>>, vector<1x1x8xf32>
    %1050 = vector.shape_cast %1049 : vector<1x1x8xf32> to vector<1x8xf32>
    %1051 = vector.shape_cast %1048 : vector<1x8xf32> to vector<1x1x8xf32>
    tpu.vector_store %arg8[%c0_450, %c42, %c0_451], %1051 {strides = array<i32>} : memref<1x49x8xf32, #tpu.memory_space<vmem>>, vector<1x1x8xf32>,
    %c7_i32_452 = arith.constant 7 : i32
    %1052 = arith.muli %arg0, %c7_i32_452 : i32
    %c1_i32_453 = arith.constant 1 : i32
    %1053 = arith.addi %1052, %c1_i32_453 : i32
    %1054 = arith.index_cast %1053 : i32 to index
    %1055 = memref.load %arg5[%1054] : memref<56xi32, #tpu.memory_space<smem>>
    %c7_i32_454 = arith.constant 7 : i32
    %1056 = arith.muli %arg0, %c7_i32_454 : i32
    %c1_i32_455 = arith.constant 1 : i32
    %1057 = arith.addi %1056, %c1_i32_455 : i32
    %1058 = arith.index_cast %1057 : i32 to index
    %1059 = memref.load %arg6[%1058] : memref<56xi32, #tpu.memory_space<smem>>
    %cst_456 = arith.constant 0xFF800000 : f32
    %1060 = vector.broadcast %cst_456 : f32 to vector<16x8xf32>
    %1061 = arith.select %1031, %41, %1060 : vector<16x8xi1>, vector<16x8xf32>
    %cst_457 = arith.constant dense<0xFF800000> : vector<8xf32>
    %1062 = vector.multi_reduction <maximumf>, %1061, %cst_457 [0] : vector<16x8xf32> to vector<8xf32>
    %1063 = vector.shape_cast %1062 : vector<8xf32> to vector<1x8xf32>
    %1064 = arith.cmpi sle, %1059, %1055 : i32
    %1065 = arith.ori %1032, %1064 : i1
    %cst_458 = arith.constant 0.000000e+00 : f32
    %1066 = vector.broadcast %cst_458 : f32 to vector<1x8xf32>
    %1067 = arith.select %1065, %1066, %1063 : vector<1x8xf32>
    %c0_459 = arith.constant 0 : index
    %c43 = arith.constant 43 : index
    %c0_460 = arith.constant 0 : index
    %1068 = vector.load %arg8[%c0_459, %c43, %c0_460] : memref<1x49x8xf32, #tpu.memory_space<vmem>>, vector<1x1x8xf32>
    %1069 = vector.shape_cast %1068 : vector<1x1x8xf32> to vector<1x8xf32>
    %1070 = vector.shape_cast %1067 : vector<1x8xf32> to vector<1x1x8xf32>
    tpu.vector_store %arg8[%c0_459, %c43, %c0_460], %1070 {strides = array<i32>} : memref<1x49x8xf32, #tpu.memory_space<vmem>>, vector<1x1x8xf32>,
    %c7_i32_461 = arith.constant 7 : i32
    %1071 = arith.muli %arg0, %c7_i32_461 : i32
    %c2_i32_462 = arith.constant 2 : i32
    %1072 = arith.addi %1071, %c2_i32_462 : i32
    %1073 = arith.index_cast %1072 : i32 to index
    %1074 = memref.load %arg5[%1073] : memref<56xi32, #tpu.memory_space<smem>>
    %c7_i32_463 = arith.constant 7 : i32
    %1075 = arith.muli %arg0, %c7_i32_463 : i32
    %c2_i32_464 = arith.constant 2 : i32
    %1076 = arith.addi %1075, %c2_i32_464 : i32
    %1077 = arith.index_cast %1076 : i32 to index
    %1078 = memref.load %arg6[%1077] : memref<56xi32, #tpu.memory_space<smem>>
    %cst_465 = arith.constant 0xFF800000 : f32
    %1079 = vector.broadcast %cst_465 : f32 to vector<16x8xf32>
    %1080 = arith.select %1031, %60, %1079 : vector<16x8xi1>, vector<16x8xf32>
    %cst_466 = arith.constant dense<0xFF800000> : vector<8xf32>
    %1081 = vector.multi_reduction <maximumf>, %1080, %cst_466 [0] : vector<16x8xf32> to vector<8xf32>
    %1082 = vector.shape_cast %1081 : vector<8xf32> to vector<1x8xf32>
    %1083 = arith.cmpi sle, %1078, %1074 : i32
    %1084 = arith.ori %1032, %1083 : i1
    %cst_467 = arith.constant 0.000000e+00 : f32
    %1085 = vector.broadcast %cst_467 : f32 to vector<1x8xf32>
    %1086 = arith.select %1084, %1085, %1082 : vector<1x8xf32>
    %c0_468 = arith.constant 0 : index
    %c44 = arith.constant 44 : index
    %c0_469 = arith.constant 0 : index
    %1087 = vector.load %arg8[%c0_468, %c44, %c0_469] : memref<1x49x8xf32, #tpu.memory_space<vmem>>, vector<1x1x8xf32>
    %1088 = vector.shape_cast %1087 : vector<1x1x8xf32> to vector<1x8xf32>
    %1089 = vector.shape_cast %1086 : vector<1x8xf32> to vector<1x1x8xf32>
    tpu.vector_store %arg8[%c0_468, %c44, %c0_469], %1089 {strides = array<i32>} : memref<1x49x8xf32, #tpu.memory_space<vmem>>, vector<1x1x8xf32>,
    %c7_i32_470 = arith.constant 7 : i32
    %1090 = arith.muli %arg0, %c7_i32_470 : i32
    %c3_i32_471 = arith.constant 3 : i32
    %1091 = arith.addi %1090, %c3_i32_471 : i32
    %1092 = arith.index_cast %1091 : i32 to index
    %1093 = memref.load %arg5[%1092] : memref<56xi32, #tpu.memory_space<smem>>
    %c7_i32_472 = arith.constant 7 : i32
    %1094 = arith.muli %arg0, %c7_i32_472 : i32
    %c3_i32_473 = arith.constant 3 : i32
    %1095 = arith.addi %1094, %c3_i32_473 : i32
    %1096 = arith.index_cast %1095 : i32 to index
    %1097 = memref.load %arg6[%1096] : memref<56xi32, #tpu.memory_space<smem>>
    %cst_474 = arith.constant 0xFF800000 : f32
    %1098 = vector.broadcast %cst_474 : f32 to vector<16x8xf32>
    %1099 = arith.select %1031, %79, %1098 : vector<16x8xi1>, vector<16x8xf32>
    %cst_475 = arith.constant dense<0xFF800000> : vector<8xf32>
    %1100 = vector.multi_reduction <maximumf>, %1099, %cst_475 [0] : vector<16x8xf32> to vector<8xf32>
    %1101 = vector.shape_cast %1100 : vector<8xf32> to vector<1x8xf32>
    %1102 = arith.cmpi sle, %1097, %1093 : i32
    %1103 = arith.ori %1032, %1102 : i1
    %cst_476 = arith.constant 0.000000e+00 : f32
    %1104 = vector.broadcast %cst_476 : f32 to vector<1x8xf32>
    %1105 = arith.select %1103, %1104, %1101 : vector<1x8xf32>
    %c0_477 = arith.constant 0 : index
    %c45 = arith.constant 45 : index
    %c0_478 = arith.constant 0 : index
    %1106 = vector.load %arg8[%c0_477, %c45, %c0_478] : memref<1x49x8xf32, #tpu.memory_space<vmem>>, vector<1x1x8xf32>
    %1107 = vector.shape_cast %1106 : vector<1x1x8xf32> to vector<1x8xf32>
    %1108 = vector.shape_cast %1105 : vector<1x8xf32> to vector<1x1x8xf32>
    tpu.vector_store %arg8[%c0_477, %c45, %c0_478], %1108 {strides = array<i32>} : memref<1x49x8xf32, #tpu.memory_space<vmem>>, vector<1x1x8xf32>,
    %c7_i32_479 = arith.constant 7 : i32
    %1109 = arith.muli %arg0, %c7_i32_479 : i32
    %c4_i32_480 = arith.constant 4 : i32
    %1110 = arith.addi %1109, %c4_i32_480 : i32
    %1111 = arith.index_cast %1110 : i32 to index
    %1112 = memref.load %arg5[%1111] : memref<56xi32, #tpu.memory_space<smem>>
    %c7_i32_481 = arith.constant 7 : i32
    %1113 = arith.muli %arg0, %c7_i32_481 : i32
    %c4_i32_482 = arith.constant 4 : i32
    %1114 = arith.addi %1113, %c4_i32_482 : i32
    %1115 = arith.index_cast %1114 : i32 to index
    %1116 = memref.load %arg6[%1115] : memref<56xi32, #tpu.memory_space<smem>>
    %cst_483 = arith.constant 0xFF800000 : f32
    %1117 = vector.broadcast %cst_483 : f32 to vector<16x8xf32>
    %1118 = arith.select %1031, %98, %1117 : vector<16x8xi1>, vector<16x8xf32>
    %cst_484 = arith.constant dense<0xFF800000> : vector<8xf32>
    %1119 = vector.multi_reduction <maximumf>, %1118, %cst_484 [0] : vector<16x8xf32> to vector<8xf32>
    %1120 = vector.shape_cast %1119 : vector<8xf32> to vector<1x8xf32>
    %1121 = arith.cmpi sle, %1116, %1112 : i32
    %1122 = arith.ori %1032, %1121 : i1
    %cst_485 = arith.constant 0.000000e+00 : f32
    %1123 = vector.broadcast %cst_485 : f32 to vector<1x8xf32>
    %1124 = arith.select %1122, %1123, %1120 : vector<1x8xf32>
    %c0_486 = arith.constant 0 : index
    %c46 = arith.constant 46 : index
    %c0_487 = arith.constant 0 : index
    %1125 = vector.load %arg8[%c0_486, %c46, %c0_487] : memref<1x49x8xf32, #tpu.memory_space<vmem>>, vector<1x1x8xf32>
    %1126 = vector.shape_cast %1125 : vector<1x1x8xf32> to vector<1x8xf32>
    %1127 = vector.shape_cast %1124 : vector<1x8xf32> to vector<1x1x8xf32>
    tpu.vector_store %arg8[%c0_486, %c46, %c0_487], %1127 {strides = array<i32>} : memref<1x49x8xf32, #tpu.memory_space<vmem>>, vector<1x1x8xf32>,
    %c7_i32_488 = arith.constant 7 : i32
    %1128 = arith.muli %arg0, %c7_i32_488 : i32
    %c5_i32_489 = arith.constant 5 : i32
    %1129 = arith.addi %1128, %c5_i32_489 : i32
    %1130 = arith.index_cast %1129 : i32 to index
    %1131 = memref.load %arg5[%1130] : memref<56xi32, #tpu.memory_space<smem>>
    %c7_i32_490 = arith.constant 7 : i32
    %1132 = arith.muli %arg0, %c7_i32_490 : i32
    %c5_i32_491 = arith.constant 5 : i32
    %1133 = arith.addi %1132, %c5_i32_491 : i32
    %1134 = arith.index_cast %1133 : i32 to index
    %1135 = memref.load %arg6[%1134] : memref<56xi32, #tpu.memory_space<smem>>
    %cst_492 = arith.constant 0xFF800000 : f32
    %1136 = vector.broadcast %cst_492 : f32 to vector<16x8xf32>
    %1137 = arith.select %1031, %117, %1136 : vector<16x8xi1>, vector<16x8xf32>
    %cst_493 = arith.constant dense<0xFF800000> : vector<8xf32>
    %1138 = vector.multi_reduction <maximumf>, %1137, %cst_493 [0] : vector<16x8xf32> to vector<8xf32>
    %1139 = vector.shape_cast %1138 : vector<8xf32> to vector<1x8xf32>
    %1140 = arith.cmpi sle, %1135, %1131 : i32
    %1141 = arith.ori %1032, %1140 : i1
    %cst_494 = arith.constant 0.000000e+00 : f32
    %1142 = vector.broadcast %cst_494 : f32 to vector<1x8xf32>
    %1143 = arith.select %1141, %1142, %1139 : vector<1x8xf32>
    %c0_495 = arith.constant 0 : index
    %c47 = arith.constant 47 : index
    %c0_496 = arith.constant 0 : index
    %1144 = vector.load %arg8[%c0_495, %c47, %c0_496] : memref<1x49x8xf32, #tpu.memory_space<vmem>>, vector<1x1x8xf32>
    %1145 = vector.shape_cast %1144 : vector<1x1x8xf32> to vector<1x8xf32>
    %1146 = vector.shape_cast %1143 : vector<1x8xf32> to vector<1x1x8xf32>
    tpu.vector_store %arg8[%c0_495, %c47, %c0_496], %1146 {strides = array<i32>} : memref<1x49x8xf32, #tpu.memory_space<vmem>>, vector<1x1x8xf32>,
    %c7_i32_497 = arith.constant 7 : i32
    %1147 = arith.muli %arg0, %c7_i32_497 : i32
    %c6_i32_498 = arith.constant 6 : i32
    %1148 = arith.addi %1147, %c6_i32_498 : i32
    %1149 = arith.index_cast %1148 : i32 to index
    %1150 = memref.load %arg5[%1149] : memref<56xi32, #tpu.memory_space<smem>>
    %c7_i32_499 = arith.constant 7 : i32
    %1151 = arith.muli %arg0, %c7_i32_499 : i32
    %c6_i32_500 = arith.constant 6 : i32
    %1152 = arith.addi %1151, %c6_i32_500 : i32
    %1153 = arith.index_cast %1152 : i32 to index
    %1154 = memref.load %arg6[%1153] : memref<56xi32, #tpu.memory_space<smem>>
    %cst_501 = arith.constant 0xFF800000 : f32
    %1155 = vector.broadcast %cst_501 : f32 to vector<16x8xf32>
    %1156 = arith.select %1031, %136, %1155 : vector<16x8xi1>, vector<16x8xf32>
    %cst_502 = arith.constant dense<0xFF800000> : vector<8xf32>
    %1157 = vector.multi_reduction <maximumf>, %1156, %cst_502 [0] : vector<16x8xf32> to vector<8xf32>
    %1158 = vector.shape_cast %1157 : vector<8xf32> to vector<1x8xf32>
    %1159 = arith.cmpi sle, %1154, %1150 : i32
    %1160 = arith.ori %1032, %1159 : i1
    %cst_503 = arith.constant 0.000000e+00 : f32
    %1161 = vector.broadcast %cst_503 : f32 to vector<1x8xf32>
    %1162 = arith.select %1160, %1161, %1158 : vector<1x8xf32>
    %c0_504 = arith.constant 0 : index
    %c48 = arith.constant 48 : index
    %c0_505 = arith.constant 0 : index
    %1163 = vector.load %arg8[%c0_504, %c48, %c0_505] : memref<1x49x8xf32, #tpu.memory_space<vmem>>, vector<1x1x8xf32>
    %1164 = vector.shape_cast %1163 : vector<1x1x8xf32> to vector<1x8xf32>
    %1165 = vector.shape_cast %1162 : vector<1x8xf32> to vector<1x1x8xf32>
    tpu.vector_store %arg8[%c0_504, %c48, %c0_505], %1165 {strides = array<i32>} : memref<1x49x8xf32, #tpu.memory_space<vmem>>, vector<1x1x8xf32>,
    return
  }
  func.func @transform_0(%arg0: i32, %arg1: memref<8xi32, #tpu.memory_space<smem>>, %arg2: memref<8xi32, #tpu.memory_space<smem>>, %arg3: memref<56xi32, #tpu.memory_space<smem>>, %arg4: memref<56xi32, #tpu.memory_space<smem>>, %arg5: memref<56xi32, #tpu.memory_space<smem>>, %arg6: memref<56xi32, #tpu.memory_space<smem>>) -> (i32, i32, i32, i32) {
    %0 = arith.index_cast %arg0 : i32 to index
    %1 = memref.load %arg2[%0] : memref<8xi32, #tpu.memory_space<smem>>
    %c0_i32 = arith.constant 0 : i32
    %c0_i32_0 = arith.constant 0 : i32
    %c0_i32_1 = arith.constant 0 : i32
    %c0_i32_2 = arith.constant 0 : i32
    return %1, %c0_i32, %c0_i32_0, %c0_i32_1 : i32, i32, i32, i32
  }
  func.func @transform_1(%arg0: i32, %arg1: memref<8xi32, #tpu.memory_space<smem>>, %arg2: memref<8xi32, #tpu.memory_space<smem>>, %arg3: memref<56xi32, #tpu.memory_space<smem>>, %arg4: memref<56xi32, #tpu.memory_space<smem>>, %arg5: memref<56xi32, #tpu.memory_space<smem>>, %arg6: memref<56xi32, #tpu.memory_space<smem>>) -> (i32, i32, i32) {
    %0 = arith.index_cast %arg0 : i32 to index
    %1 = memref.load %arg1[%0] : memref<8xi32, #tpu.memory_space<smem>>
    %c0_i32 = arith.constant 0 : i32
    %c0_i32_0 = arith.constant 0 : i32
    %c0_i32_1 = arith.constant 0 : i32
    return %1, %c0_i32, %c0_i32_0 : i32, i32, i32
  }
}

module attributes {stable_mosaic.version = 11 : i64} {
  func.func @_head_mlp_kernel(%arg0: i32, %arg1: i32, %arg2: i32, %arg3: memref<8x512xf32, #tpu.memory_space<vmem>>, %arg4: memref<512x512xf32, #tpu.memory_space<vmem>>, %arg5: memref<1x512xf32, #tpu.memory_space<vmem>>, %arg6: memref<512x128xf32, #tpu.memory_space<vmem>>, %arg7: memref<1x128xf32, #tpu.memory_space<vmem>>, %arg8: memref<8x128xf32, #tpu.memory_space<vmem>>, %arg9: memref<8x512xf32, #tpu.memory_space<vmem>>, %arg10: memref<8x128xf32, #tpu.memory_space<vmem>>) attributes {dimension_semantics = [#tpu.dimension_semantics<parallel>, #tpu.dimension_semantics<arbitrary>, #tpu.dimension_semantics<arbitrary>], iteration_bounds = array<i64: 1, 8, 1>, scalar_prefetch = 0 : i64, scratch_operands = 2 : i64, tpu.core_type = #tpu.core_type<tc>, window_params = [{transform_indices = @transform_0, window_bounds = array<i64: 8, 512>}, {transform_indices = @transform_1, window_bounds = array<i64: 512, 512>}, {transform_indices = @transform_2, window_bounds = array<i64: 1, 512>}, {transform_indices = @transform_3, window_bounds = array<i64: 512, 128>}, {pipeline_mode = #tpu.pipeline_mode<synchronous>, transform_indices = @transform_4, window_bounds = array<i64: 1, 128>}, {transform_indices = @transform_5, window_bounds = array<i64: 8, 128>}]} {
    %c0_i32 = arith.constant 0 : i32
    %0 = arith.cmpi eq, %arg1, %c0_i32 : i32
    %c0_i32_0 = arith.constant 0 : i32
    %1 = arith.cmpi eq, %arg2, %c0_i32_0 : i32
    %2 = arith.andi %0, %1 : i1
    %3 = arith.extui %2 : i1 to i32
    %c0_i32_1 = arith.constant 0 : i32
    %4 = arith.cmpi ne, %3, %c0_i32_1 : i32
    scf.if %4 {
      %cst_15 = arith.constant 0.000000e+00 : f32
      %22 = vector.broadcast %cst_15 : f32 to vector<8x128xf32>
      %c0_16 = arith.constant 0 : index
      %c0_17 = arith.constant 0 : index
      %23 = vector.load %arg10[%c0_16, %c0_17] : memref<8x128xf32, #tpu.memory_space<vmem>>, vector<8x128xf32>
      tpu.vector_store %arg10[%c0_16, %c0_17], %22 {strides = array<i32>} : memref<8x128xf32, #tpu.memory_space<vmem>>, vector<8x128xf32>,
    } else {
    }
    %c0_i32_2 = arith.constant 0 : i32
    %5 = arith.cmpi eq, %arg2, %c0_i32_2 : i32
    %6 = arith.extui %5 : i1 to i32
    %c0_i32_3 = arith.constant 0 : i32
    %7 = arith.cmpi ne, %6, %c0_i32_3 : i32
    scf.if %7 {
      %cst_15 = arith.constant 0.000000e+00 : f32
      %22 = vector.broadcast %cst_15 : f32 to vector<8x512xf32>
      %c0_16 = arith.constant 0 : index
      %c0_17 = arith.constant 0 : index
      %23 = vector.load %arg9[%c0_16, %c0_17] : memref<8x512xf32, #tpu.memory_space<vmem>>, vector<8x512xf32>
      tpu.vector_store %arg9[%c0_16, %c0_17], %22 {strides = array<i32>} : memref<8x512xf32, #tpu.memory_space<vmem>>, vector<8x512xf32>,
    } else {
    }
    %c0 = arith.constant 0 : index
    %c0_4 = arith.constant 0 : index
    %8 = vector.load %arg9[%c0, %c0_4] : memref<8x512xf32, #tpu.memory_space<vmem>>, vector<8x512xf32>
    %c0_5 = arith.constant 0 : index
    %c0_6 = arith.constant 0 : index
    %9 = vector.load %arg3[%c0_5, %c0_6] : memref<8x512xf32, #tpu.memory_space<vmem>>, vector<8x512xf32>
    %c0_7 = arith.constant 0 : index
    %c0_8 = arith.constant 0 : index
    %10 = vector.load %arg4[%c0_7, %c0_8] : memref<512x512xf32, #tpu.memory_space<vmem>>, vector<512x512xf32>
    %cst = arith.constant dense<0.000000e+00> : vector<8x512xf32>
    %11 = tpu.matmul %9, %10, %cst {dimension_numbers = #tpu.dot_dimension_numbers<[1], [0], [0], [1], [0, 0, 1, 1], [], []>} : vector<8x512xf32>, vector<512x512xf32>, vector<8x512xf32> -> vector<8x512xf32>
    %12 = arith.addf %8, %11 : vector<8x512xf32>
    %c0_9 = arith.constant 0 : index
    %c0_10 = arith.constant 0 : index
    %13 = vector.load %arg9[%c0_9, %c0_10] : memref<8x512xf32, #tpu.memory_space<vmem>>, vector<8x512xf32>
    tpu.vector_store %arg9[%c0_9, %c0_10], %12 {strides = array<i32>} : memref<8x512xf32, #tpu.memory_space<vmem>>, vector<8x512xf32>,
    %c0_i32_11 = arith.constant 0 : i32
    %14 = arith.cmpi eq, %arg2, %c0_i32_11 : i32
    %15 = arith.extui %14 : i1 to i32
    %c0_i32_12 = arith.constant 0 : i32
    %16 = arith.cmpi ne, %15, %c0_i32_12 : i32
    scf.if %16 {
      %c0_15 = arith.constant 0 : index
      %c0_16 = arith.constant 0 : index
      %22 = vector.load %arg9[%c0_15, %c0_16] : memref<8x512xf32, #tpu.memory_space<vmem>>, vector<8x512xf32>
      %c0_17 = arith.constant 0 : index
      %c0_18 = arith.constant 0 : index
      %23 = vector.load %arg5[%c0_17, %c0_18] : memref<1x512xf32, #tpu.memory_space<vmem>>, vector<1x512xf32>
      %24 = vector.broadcast %23 : vector<1x512xf32> to vector<8x512xf32>
      %25 = arith.addf %22, %24 : vector<8x512xf32>
      %cst_19 = arith.constant 0.000000e+00 : f32
      %26 = vector.broadcast %cst_19 : f32 to vector<8x512xf32>
      %27 = arith.maximumf %25, %26 : vector<8x512xf32>
      %c0_20 = arith.constant 0 : index
      %c0_21 = arith.constant 0 : index
      %28 = vector.load %arg10[%c0_20, %c0_21] : memref<8x128xf32, #tpu.memory_space<vmem>>, vector<8x128xf32>
      %c0_22 = arith.constant 0 : index
      %c0_23 = arith.constant 0 : index
      %29 = vector.load %arg6[%c0_22, %c0_23] : memref<512x128xf32, #tpu.memory_space<vmem>>, vector<512x128xf32>
      %cst_24 = arith.constant dense<0.000000e+00> : vector<8x128xf32>
      %30 = tpu.matmul %27, %29, %cst_24 {dimension_numbers = #tpu.dot_dimension_numbers<[1], [0], [0], [1], [0, 0, 1, 1], [], []>} : vector<8x512xf32>, vector<512x128xf32>, vector<8x128xf32> -> vector<8x128xf32>
      %31 = arith.addf %28, %30 : vector<8x128xf32>
      %c0_25 = arith.constant 0 : index
      %c0_26 = arith.constant 0 : index
      %32 = vector.load %arg10[%c0_25, %c0_26] : memref<8x128xf32, #tpu.memory_space<vmem>>, vector<8x128xf32>
      tpu.vector_store %arg10[%c0_25, %c0_26], %31 {strides = array<i32>} : memref<8x128xf32, #tpu.memory_space<vmem>>, vector<8x128xf32>,
    } else {
    }
    %c0_i32_13 = arith.constant 0 : i32
    %17 = arith.cmpi eq, %arg2, %c0_i32_13 : i32
    %c7_i32 = arith.constant 7 : i32
    %18 = arith.cmpi eq, %arg1, %c7_i32 : i32
    %19 = arith.andi %17, %18 : i1
    %20 = arith.extui %19 : i1 to i32
    %c0_i32_14 = arith.constant 0 : i32
    %21 = arith.cmpi ne, %20, %c0_i32_14 : i32
    scf.if %21 {
      %c0_15 = arith.constant 0 : index
      %c0_16 = arith.constant 0 : index
      %22 = vector.load %arg10[%c0_15, %c0_16] : memref<8x128xf32, #tpu.memory_space<vmem>>, vector<8x128xf32>
      %c0_17 = arith.constant 0 : index
      %c0_18 = arith.constant 0 : index
      %23 = vector.load %arg7[%c0_17, %c0_18] : memref<1x128xf32, #tpu.memory_space<vmem>>, vector<1x128xf32>
      %24 = vector.broadcast %23 : vector<1x128xf32> to vector<8x128xf32>
      %25 = arith.addf %22, %24 : vector<8x128xf32>
      %c0_19 = arith.constant 0 : index
      %c0_20 = arith.constant 0 : index
      %26 = vector.load %arg8[%c0_19, %c0_20] : memref<8x128xf32, #tpu.memory_space<vmem>>, vector<8x128xf32>
      tpu.vector_store %arg8[%c0_19, %c0_20], %25 {strides = array<i32>} : memref<8x128xf32, #tpu.memory_space<vmem>>, vector<8x128xf32>,
    } else {
    }
    return
  }
  func.func @transform_0(%arg0: i32, %arg1: i32, %arg2: i32) -> (i32, i32) {
    %c0_i32 = arith.constant 0 : i32
    return %arg0, %arg2 : i32, i32
  }
  func.func @transform_1(%arg0: i32, %arg1: i32, %arg2: i32) -> (i32, i32) {
    %c0_i32 = arith.constant 0 : i32
    return %arg2, %arg1 : i32, i32
  }
  func.func @transform_2(%arg0: i32, %arg1: i32, %arg2: i32) -> (i32, i32) {
    %c0_i32 = arith.constant 0 : i32
    %c0_i32_0 = arith.constant 0 : i32
    return %c0_i32, %arg1 : i32, i32
  }
  func.func @transform_3(%arg0: i32, %arg1: i32, %arg2: i32) -> (i32, i32) {
    %c0_i32 = arith.constant 0 : i32
    %c0_i32_0 = arith.constant 0 : i32
    return %arg1, %c0_i32 : i32, i32
  }
  func.func @transform_4(%arg0: i32, %arg1: i32, %arg2: i32) -> (i32, i32) {
    %c0_i32 = arith.constant 0 : i32
    %c0_i32_0 = arith.constant 0 : i32
    %c0_i32_1 = arith.constant 0 : i32
    return %c0_i32, %c0_i32_0 : i32, i32
  }
  func.func @transform_5(%arg0: i32, %arg1: i32, %arg2: i32) -> (i32, i32) {
    %c0_i32 = arith.constant 0 : i32
    %c0_i32_0 = arith.constant 0 : i32
    return %arg0, %c0_i32 : i32, i32
  }
}

</mosaic_0001>

<llo_original>
// kernel: head_forward.2
$region0: #{head_forward.2}
  #allocation0 [shape = 'u32[]', space=smem, size = 0x4, offset = 0x4, fixed_abs, tag = 'smem constant byte address 0x4 - core index']
  #allocation1 [shape = 'u32[144,128]{1,0:T(1,128)}', space=vmem, size = 0x12000, scoped, tag = 'internal scratch']
  #allocation2 [shape = 's32[1]{0}', space=sflag, size = 0x4, scoped, tag = 'scoped memory for head_forward.2']
  #allocation3 [shape = 'u8[512]{0}', space=smem, size = 0x200, scoped, tag = 'prefetched SMEM operand 0']
  #allocation4 [shape = 'u8[512]{0}', space=smem, size = 0x200, scoped, tag = 'prefetched SMEM operand 1']
  #allocation5 [shape = 'u8[512]{0}', space=smem, size = 0x200, scoped, tag = 'prefetched SMEM operand 2']
  #allocation6 [shape = 'u8[512]{0}', space=smem, size = 0x200, scoped, tag = 'prefetched SMEM operand 3']
  #allocation7 [shape = 'u8[512]{0}', space=smem, size = 0x200, scoped, tag = 'prefetched SMEM operand 4']
  #allocation8 [shape = 'u8[512]{0}', space=smem, size = 0x200, scoped, tag = 'prefetched SMEM operand 5']
  %s0 = inlined_call_operand.vmem [shape: s32[8], index: 0, kind: input, shape index: {}]
  %s1 = inlined_call_operand.vmem [shape: s32[8], index: 1, kind: input, shape index: {}]
  %s2 = inlined_call_operand.vmem [shape: s32[56], index: 2, kind: input, shape index: {}]
  %s3 = inlined_call_operand.vmem [shape: s32[56], index: 3, kind: input, shape index: {}]
  %s4 = inlined_call_operand.vmem [shape: s32[56], index: 4, kind: input, shape index: {}]
  %s5 = inlined_call_operand.vmem [shape: s32[56], index: 5, kind: input, shape index: {}]
  %s6 = inlined_call_operand.vmem [shape: f32[2,16,16,8], index: 6, kind: input, shape index: {}]
  %s7 = inlined_call_operand.vmem [shape: f32[8,49,8], index: 7, kind: output, shape index: {}]
  %s8 = sld [smem:[#allocation0]]
  $region37: #{head_forward.2} parent=0
    _
  %s10 = ssub.s32 1, %s8
  %s11 = scalar_select 0, %s10, %s8
  %s12 = sshll.u32 %s0, 4
  %s13 = int_to_ptr.vmem [resolvable:$true] %s12
  %15 = dma.vmem_to_smem %s13, 16, [#allocation3], [#allocation2]
  %s16 = sshll.u32 %s1, 4
  %s17 = int_to_ptr.vmem [resolvable:$true] %s16
  %19 = dma.vmem_to_smem %s17, 16, [#allocation4], [#allocation2]
  %s20 = sshll.u32 %s2, 4
  %s21 = int_to_ptr.vmem [resolvable:$true] %s20
  %23 = dma.vmem_to_smem %s21, 16, [#allocation5], [#allocation2]
  %s24 = sshll.u32 %s3, 4
  %s25 = int_to_ptr.vmem [resolvable:$true] %s24
  %27 = dma.vmem_to_smem %s25, 16, [#allocation6], [#allocation2]
  %s28 = sshll.u32 %s4, 4
  %s29 = int_to_ptr.vmem [resolvable:$true] %s28
  %31 = dma.vmem_to_smem %s29, 16, [#allocation7], [#allocation2]
  %s32 = sshll.u32 %s5, 4
  %s33 = int_to_ptr.vmem [resolvable:$true] %s32
  %35 = dma.vmem_to_smem %s33, 16, [#allocation8], [#allocation2]
  %36 = dma.done [#allocation2], 96
  %37 = sfence
  loop: start=0, step=1, limit=10
  $region2: #{head_forward.2} parent=0 // loop_pre_header
    _
  $region3: #{head_forward.2} parent=0 // loop_header
    %s39 = sphi 0, %s43
    %p40 = scmp.ge.s32.totalorder %s39, 10
    %s51 = sphi 0, %s53
    %s54 = sphi 0, %s51
    %s55 = sphi 0, %s54
    %s71 = sphi 0, %s55
    %s79 = sphi 0, %s81
    %s82 = sphi 0, %s79
    %s83 = sphi 0, %s82
    %s99 = sphi 0, %s83
  $region4: #{head_forward.2} parent=0 // loop_header_branch
    %42 = sbr.rel (%p40) target = $region8
  $region5: #{head_forward.2} parent=0 // loop_body
    %s44 = ssub.s32 %s39, 1
    %s45 = ssub.s32 %s39, 2
    %s46 = sadd.s32 %s39, 1
    %s47 = sld [smem:[#allocation4 + %s39]]
    %s48 = sld [smem:[#allocation4 + %s46]]
    %s49 = ssub.s32 %s47, %s48
    %p50 = scmp.eq.s32.totalorder %s49, 0
    %s52 = sadd.s32 %s51, 1
    %s53 = scalar_select %p50, %s51, %s52
    %p56 = pneg %p50
    %p57 = scmp.eq.s32.totalorder %s39, 7
    %p58 = por %p56, %p57
    %p59 = scmp.ne.s32.totalorder %s51, %s54
    %p60 = scmp.eq.s32.totalorder %s39, 0
    %p61 = por %p59, %p60
    %p62 = scmp.ne.s32.totalorder %s51, %s54
    %p63 = scmp.eq.s32.totalorder %s44, 7
    %p64 = por %p62, %p63
    %p65 = scmp.ne.s32.totalorder %s54, %s55
    %p66 = scmp.eq.s32.totalorder %s44, 0
    %p67 = por %p65, %p66
    %p68 = scmp.ne.s32.totalorder %s54, %s55
    %p69 = scmp.eq.s32.totalorder %s45, 7
    %p70 = por %p68, %p69
    %p72 = scmp.ne.s32.totalorder %s55, %s71
    %p73 = scmp.eq.s32.totalorder %s45, 0
    %p74 = por %p72, %p73
    %s75 = sld [smem:[#allocation3 + %s39]]
    %s76 = sld [smem:[#allocation3 + %s46]]
    %s77 = ssub.s32 %s75, %s76
    %p78 = scmp.eq.s32.totalorder %s77, 0
    %s80 = sadd.s32 %s79, 1
    %s81 = scalar_select %p78, %s79, %s80
    %p84 = pneg %p78
    %p85 = scmp.eq.s32.totalorder %s39, 7
    %p86 = por %p84, %p85
    %p87 = scmp.ne.s32.totalorder %s79, %s82
    %p88 = scmp.eq.s32.totalorder %s39, 0
    %p89 = por %p87, %p88
    %p90 = scmp.ne.s32.totalorder %s79, %s82
    %p91 = scmp.eq.s32.totalorder %s44, 7
    %p92 = por %p90, %p91
    %p93 = scmp.ne.s32.totalorder %s82, %s83
    %p94 = scmp.eq.s32.totalorder %s44, 0
    %p95 = por %p93, %p94
    %p96 = scmp.ne.s32.totalorder %s82, %s83
    %p97 = scmp.eq.s32.totalorder %s45, 7
    %p98 = por %p96, %p97
    %p100 = scmp.ne.s32.totalorder %s83, %s99
    %p101 = scmp.eq.s32.totalorder %s45, 0
    %p102 = por %p100, %p101
    %p103 = scmp.le.s32.totalorder 1, %s39
    %p104 = scmp.lt.s32.totalorder %s39, 9
    %p105 = pnand %p103, %p104
    %p106 = pneg %p105
    // Predicated region
    $region9: #{head_forward.2} parent=5 // pred_check
      _
    $region10: #{head_forward.2} parent=5 // pred_check_branch
      %108 = sbr.rel (%p105) target = $region12
    $region11: #{head_forward.2} parent=5 // pred_region
      %s109 = ssub.s32 %s39, 1
    $region12: #{head_forward.2} parent=5 // pred_fallthru
      _
    %p110 = scmp.lt.s32.totalorder %s39, 8
    // Predicated region
    $region13: #{head_forward.2} parent=5 // pred_check
      %p111 = pneg %p110
    $region14: #{head_forward.2} parent=5 // pred_check_branch
      %113 = sbr.rel (%p111) target = $region16
    $region15: #{head_forward.2} parent=5 // pred_region
      // Predicated region
      $region17: #{head_forward.2} parent=15 // pred_check
        %p114 = pneg %p61
      $region18: #{head_forward.2} parent=15 // pred_check_branch
        %116 = sbr.rel (%p114) target = $region20
      $region19: #{head_forward.2} parent=15 // pred_region
        %s117 = sld [smem:[#allocation4 + %s39]]
        %p118 = scmp.lt.s32.totalorder %s117, 1
        %s119 = scalar_select %p118, %s117, 1
        %s120 = smul.addr %s119, 32
        %s121 = smul.addr %s120, 8
        %s122 = scalar_lea.vmem %s6, %s121
        %s123 = sld [smem:[#allocation4 + %s39]]
      $region20: #{head_forward.2} parent=15 // pred_fallthru
        _
    $region16: #{head_forward.2} parent=5 // pred_fallthru
      _
    %p124 = scmp.le.s32.totalorder 1, %s39
    %p125 = scmp.lt.s32.totalorder %s39, 9
    %p126 = pnand %p124, %p125
    %p127 = pneg %p126
    // Predicated region
    $region21: #{head_forward.2} parent=5 // pred_check
      _
    $region22: #{head_forward.2} parent=5 // pred_check_branch
      %129 = sbr.rel (%p126) target = $region24
    $region23: #{head_forward.2} parent=5 // pred_region
      %s130 = ssub.s32 %s39, 1
      %s131 = sld [smem:[#allocation4 + %s44]]
      %p132 = scmp.lt.s32.totalorder %s131, 1
      %s133 = scalar_select %p132, %s131, 1
      %s134 = smul.addr %s133, 32
      %s135 = smul.addr %s134, 8
      %s136 = scalar_lea.vmem %s6, %s135
      %p137 = pneg %p67
      %p138 = pneg %p64
      %p139 = pneg %p95
      %p140 = pneg %p92
      %s141 = sld [smem:[#allocation3 + %s44]]
      %p142 = scmp.lt.s32.totalorder %s141, 7
      %s143 = scalar_select %p142, %s141, 7
      %s144 = smul.addr %s143, 7
      %s145 = smul.addr %s144, 8
      %s146 = scalar_lea.vmem %s7, %s145
      %s147 = sld [smem:[#allocation4 + %s44]]
      %p148 = scmp.lt.s32.totalorder %s147, 1
      %s149 = scalar_select %p148, %s147, 1
      %s150 = smul.addr %s149, 32
      %s151 = smul.addr %s150, 8
      %s152 = scalar_lea.vmem %s6, %s151
      %s153 = sld [smem:[#allocation4 + %s44]]
      %s154 = sld [smem:[#allocation3 + %s44]]
      %p155 = scmp.lt.s32.totalorder %s154, 7
      %s156 = scalar_select %p155, %s154, 7
      %s157 = smul.addr %s156, 7
      %s158 = smul.addr %s157, 8
      %s159 = scalar_lea.vmem %s7, %s158
      %s160 = sld [smem:[#allocation3 + %s44]]
      %v161 = vld [vmem:[%s152] sm:$0xff]
      %v162 = vld [vmem:[%s152 + $0x8] sm:$0xff]
      %v163 = vld [vmem:[%s152 + $0x10] sm:$0xff]
      %v164 = vld [vmem:[%s152 + $0x18] sm:$0xff]
      %v165 = vld [vmem:[%s152 + $0x20] sm:$0xff]
      %v166 = vld [vmem:[%s152 + $0x28] sm:$0xff]
      %v167 = vld [vmem:[%s152 + $0x30] sm:$0xff]
      %v168 = vld [vmem:[%s152 + $0x38] sm:$0xff]
      %v169 = vld [vmem:[%s152 + $0x40] sm:$0xff]
      %v170 = vld [vmem:[%s152 + $0x48] sm:$0xff]
      %v171 = vld [vmem:[%s152 + $0x50] sm:$0xff]
      %v172 = vld [vmem:[%s152 + $0x58] sm:$0xff]
      %v173 = vld [vmem:[%s152 + $0x60] sm:$0xff]
      %v174 = vld [vmem:[%s152 + $0x68] sm:$0xff]
      %v175 = vld [vmem:[%s152 + $0x70] sm:$0xff]
      %v176 = vld [vmem:[%s152 + $0x78] sm:$0xff]
      %v177 = vld [vmem:[%s152 + $0x80] sm:$0xff]
      %v178 = vld [vmem:[%s152 + $0x88] sm:$0xff]
      %v179 = vld [vmem:[%s152 + $0x90] sm:$0xff]
      %v180 = vld [vmem:[%s152 + $0x98] sm:$0xff]
      %v181 = vld [vmem:[%s152 + $0xa0] sm:$0xff]
      %v182 = vld [vmem:[%s152 + $0xa8] sm:$0xff]
      %v183 = vld [vmem:[%s152 + $0xb0] sm:$0xff]
      %v184 = vld [vmem:[%s152 + $0xb8] sm:$0xff]
      %v185 = vld [vmem:[%s152 + $0xc0] sm:$0xff]
      %v186 = vld [vmem:[%s152 + $0xc8] sm:$0xff]
      %v187 = vld [vmem:[%s152 + $0xd0] sm:$0xff]
      %v188 = vld [vmem:[%s152 + $0xd8] sm:$0xff]
      %v189 = vld [vmem:[%s152 + $0xe0] sm:$0xff]
      %v190 = vld [vmem:[%s152 + $0xe8] sm:$0xff]
      %v191 = vld [vmem:[%s152 + $0xf0] sm:$0xff]
      %v192 = vld [vmem:[%s152 + $0xf8] sm:$0xff]
      %v193 = vlaneseq
      %v194 = vshrl.u32 %v193, 7
      %v195 = vadd.s32 %v194, 8
      %s196 = smul.u32 %s44, 7
      %s197 = sld [smem:[#allocation7 + %s196]]
      %s198 = sld [smem:[#allocation8 + %s196]]
      %v199 = vstv %s197
      %vm200 = vcmp.ge.s32.totalorder %v194, %v199
      %vm201 = vcmp.ge.s32.totalorder %v195, %v199
      %v202 = vstv %s198
      %vm203 = vcmp.lt.s32.totalorder %v194, %v202
      %vm204 = vcmp.lt.s32.totalorder %v195, %v202
      %vm205 = vmand %vm200, %vm203
      %vm206 = vmand %vm201, %vm204
      %v207 = vsel %vm205, 1, 0
      %v208 = vsel %vm206, 1, 0
      %vm209 = vcmp.eq.s32.totalorder %v207, 1
      %vm210 = vcmp.eq.s32.totalorder %v208, 1
      %v211 = vsel %vm209, %v161, -inf
      %v212 = vsel %vm210, %v162, -inf
      %v213 = vsel %vm209, %v163, -inf
      %v214 = vsel %vm210, %v164, -inf
      %v215 = vsel %vm209, %v165, -inf
      %v216 = vsel %vm210, %v166, -inf
      %v217 = vsel %vm209, %v167, -inf
      %v218 = vsel %vm210, %v168, -inf
      %v219 = vsel %vm209, %v169, -inf
      %v220 = vsel %vm210, %v170, -inf
      %v221 = vsel %vm209, %v171, -inf
      %v222 = vsel %vm210, %v172, -inf
      %v223 = vsel %vm209, %v173, -inf
      %v224 = vsel %vm210, %v174, -inf
      %v225 = vsel %vm209, %v175, -inf
      %v226 = vsel %vm210, %v176, -inf
      %v227 = vsel %vm209, %v177, -inf
      %v228 = vsel %vm210, %v178, -inf
      %v229 = vsel %vm209, %v179, -inf
      %v230 = vsel %vm210, %v180, -inf
      %v231 = vsel %vm209, %v181, -inf
      %v232 = vsel %vm210, %v182, -inf
      %v233 = vsel %vm209, %v183, -inf
      %v234 = vsel %vm210, %v184, -inf
      %v235 = vsel %vm209, %v185, -inf
      %v236 = vsel %vm210, %v186, -inf
      %v237 = vsel %vm209, %v187, -inf
      %v238 = vsel %vm210, %v188, -inf
      %v239 = vsel %vm209, %v189, -inf
      %v240 = vsel %vm210, %v190, -inf
      %v241 = vsel %vm209, %v191, -inf
      %v242 = vsel %vm210, %v192, -inf
      %vm243 = vcmask 64512
      %v244 = vsel %vm243, %v211, -inf
      %v245 = vsel %vm243, %v212, -inf
      %v246 = vmax.f32 %v244, %v245
      %v247 = vrot.slane %v246, 4
      %v248 = vmax.f32 %v246, %v247
      %v249 = vrot.slane %v248, 2
      %v250 = vmax.f32 %v248, %v249
      %v251 = vrot.slane %v250, 1
      %v252 = vmax.f32 %v250, %v251
      %v253 = vsel %vm243, %v213, -inf
      %v254 = vsel %vm243, %v214, -inf
      %v255 = vmax.f32 %v253, %v254
      %v256 = vrot.slane %v255, 4
      %v257 = vmax.f32 %v255, %v256
      %v258 = vrot.slane %v257, 2
      %v259 = vmax.f32 %v257, %v258
      %v260 = vrot.slane %v259, 1
      %v261 = vmax.f32 %v259, %v260
      %v262 = vsel %vm243, %v215, -inf
      %v263 = vsel %vm243, %v216, -inf
      %v264 = vmax.f32 %v262, %v263
      %v265 = vrot.slane %v264, 4
      %v266 = vmax.f32 %v264, %v265
      %v267 = vrot.slane %v266, 2
      %v268 = vmax.f32 %v266, %v267
      %v269 = vrot.slane %v268, 1
      %v270 = vmax.f32 %v268, %v269
      %v271 = vsel %vm243, %v217, -inf
      %v272 = vsel %vm243, %v218, -inf
      %v273 = vmax.f32 %v271, %v272
      %v274 = vrot.slane %v273, 4
      %v275 = vmax.f32 %v273, %v274
      %v276 = vrot.slane %v275, 2
      %v277 = vmax.f32 %v275, %v276
      %v278 = vrot.slane %v277, 1
      %v279 = vmax.f32 %v277, %v278
      %v280 = vsel %vm243, %v219, -inf
      %v281 = vsel %vm243, %v220, -inf
      %v282 = vmax.f32 %v280, %v281
      %v283 = vrot.slane %v282, 4
      %v284 = vmax.f32 %v282, %v283
      %v285 = vrot.slane %v284, 2
      %v286 = vmax.f32 %v284, %v285
      %v287 = vrot.slane %v286, 1
      %v288 = vmax.f32 %v286, %v287
      %v289 = vsel %vm243, %v221, -inf
      %v290 = vsel %vm243, %v222, -inf
      %v291 = vmax.f32 %v289, %v290
      %v292 = vrot.slane %v291, 4
      %v293 = vmax.f32 %v291, %v292
      %v294 = vrot.slane %v293, 2
      %v295 = vmax.f32 %v293, %v294
      %v296 = vrot.slane %v295, 1
      %v297 = vmax.f32 %v295, %v296
      %v298 = vsel %vm243, %v223, -inf
      %v299 = vsel %vm243, %v224, -inf
      %v300 = vmax.f32 %v298, %v299
      %v301 = vrot.slane %v300, 4
      %v302 = vmax.f32 %v300, %v301
      %v303 = vrot.slane %v302, 2
      %v304 = vmax.f32 %v302, %v303
      %v305 = vrot.slane %v304, 1
      %v306 = vmax.f32 %v304, %v305
      %v307 = vsel %vm243, %v225, -inf
      %v308 = vsel %vm243, %v226, -inf
      %v309 = vmax.f32 %v307, %v308
      %v310 = vrot.slane %v309, 4
      %v311 = vmax.f32 %v309, %v310
      %v312 = vrot.slane %v311, 2
      %v313 = vmax.f32 %v311, %v312
      %v314 = vrot.slane %v313, 1
      %v315 = vmax.f32 %v313, %v314
      %v316 = vsel %vm243, %v227, -inf
      %v317 = vsel %vm243, %v228, -inf
      %v318 = vmax.f32 %v316, %v317
      %v319 = vrot.slane %v318, 4
      %v320 = vmax.f32 %v318, %v319
      %v321 = vrot.slane %v320, 2
      %v322 = vmax.f32 %v320, %v321
      %v323 = vrot.slane %v322, 1
      %v324 = vmax.f32 %v322, %v323
      %v325 = vsel %vm243, %v229, -inf
      %v326 = vsel %vm243, %v230, -inf
      %v327 = vmax.f32 %v325, %v326
      %v328 = vrot.slane %v327, 4
      %v329 = vmax.f32 %v327, %v328
      %v330 = vrot.slane %v329, 2
      %v331 = vmax.f32 %v329, %v330
      %v332 = vrot.slane %v331, 1
      %v333 = vmax.f32 %v331, %v332
      %v334 = vsel %vm243, %v231, -inf
      %v335 = vsel %vm243, %v232, -inf
      %v336 = vmax.f32 %v334, %v335
      %v337 = vrot.slane %v336, 4
      %v338 = vmax.f32 %v336, %v337
      %v339 = vrot.slane %v338, 2
      %v340 = vmax.f32 %v338, %v339
      %v341 = vrot.slane %v340, 1
      %v342 = vmax.f32 %v340, %v341
      %v343 = vsel %vm243, %v233, -inf
      %v344 = vsel %vm243, %v234, -inf
      %v345 = vmax.f32 %v343, %v344
      %v346 = vrot.slane %v345, 4
      %v347 = vmax.f32 %v345, %v346
      %v348 = vrot.slane %v347, 2
      %v349 = vmax.f32 %v347, %v348
      %v350 = vrot.slane %v349, 1
      %v351 = vmax.f32 %v349, %v350
      %v352 = vsel %vm243, %v235, -inf
      %v353 = vsel %vm243, %v236, -inf
      %v354 = vmax.f32 %v352, %v353
      %v355 = vrot.slane %v354, 4
      %v356 = vmax.f32 %v354, %v355
      %v357 = vrot.slane %v356, 2
      %v358 = vmax.f32 %v356, %v357
      %v359 = vrot.slane %v358, 1
      %v360 = vmax.f32 %v358, %v359
      %v361 = vsel %vm243, %v237, -inf
      %v362 = vsel %vm243, %v238, -inf
      %v363 = vmax.f32 %v361, %v362
      %v364 = vrot.slane %v363, 4
      %v365 = vmax.f32 %v363, %v364
      %v366 = vrot.slane %v365, 2
      %v367 = vmax.f32 %v365, %v366
      %v368 = vrot.slane %v367, 1
      %v369 = vmax.f32 %v367, %v368
      %v370 = vsel %vm243, %v239, -inf
      %v371 = vsel %vm243, %v240, -inf
      %v372 = vmax.f32 %v370, %v371
      %v373 = vrot.slane %v372, 4
      %v374 = vmax.f32 %v372, %v373
      %v375 = vrot.slane %v374, 2
      %v376 = vmax.f32 %v374, %v375
      %v377 = vrot.slane %v376, 1
      %v378 = vmax.f32 %v376, %v377
      %v379 = vsel %vm243, %v241, -inf
      %v380 = vsel %vm243, %v242, -inf
      %v381 = vmax.f32 %v379, %v380
      %v382 = vrot.slane %v381, 4
      %v383 = vmax.f32 %v381, %v382
      %v384 = vrot.slane %v383, 2
      %v385 = vmax.f32 %v383, %v384
      %v386 = vrot.slane %v385, 1
      %v387 = vmax.f32 %v385, %v386
      %s388 = sadd.s32 %s196, 1
      %s389 = sld [smem:[#allocation7 + %s388]]
      %s390 = sld [smem:[#allocation8 + %s388]]
      %v391 = vstv %s389
      %vm392 = vcmp.ge.s32.totalorder %v194, %v391
      %vm393 = vcmp.ge.s32.totalorder %v195, %v391
      %v394 = vstv %s390
      %vm395 = vcmp.lt.s32.totalorder %v194, %v394
      %vm396 = vcmp.lt.s32.totalorder %v195, %v394
      %vm397 = vmand %vm392, %vm395
      %vm398 = vmand %vm393, %vm396
      %v399 = vsel %vm397, 1, 0
      %v400 = vsel %vm398, 1, 0
      %vm401 = vcmp.eq.s32.totalorder %v399, 1
      %vm402 = vcmp.eq.s32.totalorder %v400, 1
      %v403 = vsel %vm401, %v161, -inf
      %v404 = vsel %vm402, %v162, -inf
      %v405 = vsel %vm401, %v163, -inf
      %v406 = vsel %vm402, %v164, -inf
      %v407 = vsel %vm401, %v165, -inf
      %v408 = vsel %vm402, %v166, -inf
      %v409 = vsel %vm401, %v167, -inf
      %v410 = vsel %vm402, %v168, -inf
      %v411 = vsel %vm401, %v169, -inf
      %v412 = vsel %vm402, %v170, -inf
      %v413 = vsel %vm401, %v171, -inf
      %v414 = vsel %vm402, %v172, -inf
      %v415 = vsel %vm401, %v173, -inf
      %v416 = vsel %vm402, %v174, -inf
      %v417 = vsel %vm401, %v175, -inf
      %v418 = vsel %vm402, %v176, -inf
      %v419 = vsel %vm401, %v177, -inf
      %v420 = vsel %vm402, %v178, -inf
      %v421 = vsel %vm401, %v179, -inf
      %v422 = vsel %vm402, %v180, -inf
      %v423 = vsel %vm401, %v181, -inf
      %v424 = vsel %vm402, %v182, -inf
      %v425 = vsel %vm401, %v183, -inf
      %v426 = vsel %vm402, %v184, -inf
      %v427 = vsel %vm401, %v185, -inf
      %v428 = vsel %vm402, %v186, -inf
      %v429 = vsel %vm401, %v187, -inf
      %v430 = vsel %vm402, %v188, -inf
      %v431 = vsel %vm401, %v189, -inf
      %v432 = vsel %vm402, %v190, -inf
      %v433 = vsel %vm401, %v191, -inf
      %v434 = vsel %vm402, %v192, -inf
      %v435 = vsel %vm243, %v403, -inf
      %v436 = vsel %vm243, %v404, -inf
      %v437 = vmax.f32 %v435, %v436
      %v438 = vrot.slane %v437, 4
      %v439 = vmax.f32 %v437, %v438
      %v440 = vrot.slane %v439, 2
      %v441 = vmax.f32 %v439, %v440
      %v442 = vrot.slane %v441, 1
      %v443 = vmax.f32 %v441, %v442
      %v444 = vsel %vm243, %v405, -inf
      %v445 = vsel %vm243, %v406, -inf
      %v446 = vmax.f32 %v444, %v445
      %v447 = vrot.slane %v446, 4
      %v448 = vmax.f32 %v446, %v447
      %v449 = vrot.slane %v448, 2
      %v450 = vmax.f32 %v448, %v449
      %v451 = vrot.slane %v450, 1
      %v452 = vmax.f32 %v450, %v451
      %v453 = vsel %vm243, %v407, -inf
      %v454 = vsel %vm243, %v408, -inf
      %v455 = vmax.f32 %v453, %v454
      %v456 = vrot.slane %v455, 4
      %v457 = vmax.f32 %v455, %v456
      %v458 = vrot.slane %v457, 2
      %v459 = vmax.f32 %v457, %v458
      %v460 = vrot.slane %v459, 1
      %v461 = vmax.f32 %v459, %v460
      %v462 = vsel %vm243, %v409, -inf
      %v463 = vsel %vm243, %v410, -inf
      %v464 = vmax.f32 %v462, %v463
      %v465 = vrot.slane %v464, 4
      %v466 = vmax.f32 %v464, %v465
      %v467 = vrot.slane %v466, 2
      %v468 = vmax.f32 %v466, %v467
      %v469 = vrot.slane %v468, 1
      %v470 = vmax.f32 %v468, %v469
      %v471 = vsel %vm243, %v411, -inf
      %v472 = vsel %vm243, %v412, -inf
      %v473 = vmax.f32 %v471, %v472
      %v474 = vrot.slane %v473, 4
      %v475 = vmax.f32 %v473, %v474
      %v476 = vrot.slane %v475, 2
      %v477 = vmax.f32 %v475, %v476
      %v478 = vrot.slane %v477, 1
      %v479 = vmax.f32 %v477, %v478
      %v480 = vsel %vm243, %v413, -inf
      %v481 = vsel %vm243, %v414, -inf
      %v482 = vmax.f32 %v480, %v481
      %v483 = vrot.slane %v482, 4
      %v484 = vmax.f32 %v482, %v483
      %v485 = vrot.slane %v484, 2
      %v486 = vmax.f32 %v484, %v485
      %v487 = vrot.slane %v486, 1
      %v488 = vmax.f32 %v486, %v487
      %v489 = vsel %vm243, %v415, -inf
      %v490 = vsel %vm243, %v416, -inf
      %v491 = vmax.f32 %v489, %v490
      %v492 = vrot.slane %v491, 4
      %v493 = vmax.f32 %v491, %v492
      %v494 = vrot.slane %v493, 2
      %v495 = vmax.f32 %v493, %v494
      %v496 = vrot.slane %v495, 1
      %v497 = vmax.f32 %v495, %v496
      %v498 = vsel %vm243, %v417, -inf
      %v499 = vsel %vm243, %v418, -inf
      %v500 = vmax.f32 %v498, %v499
      %v501 = vrot.slane %v500, 4
      %v502 = vmax.f32 %v500, %v501
      %v503 = vrot.slane %v502, 2
      %v504 = vmax.f32 %v502, %v503
      %v505 = vrot.slane %v504, 1
      %v506 = vmax.f32 %v504, %v505
      %v507 = vsel %vm243, %v419, -inf
      %v508 = vsel %vm243, %v420, -inf
      %v509 = vmax.f32 %v507, %v508
      %v510 = vrot.slane %v509, 4
      %v511 = vmax.f32 %v509, %v510
      %v512 = vrot.slane %v511, 2
      %v513 = vmax.f32 %v511, %v512
      %v514 = vrot.slane %v513, 1
      %v515 = vmax.f32 %v513, %v514
      %v516 = vsel %vm243, %v421, -inf
      %v517 = vsel %vm243, %v422, -inf
      %v518 = vmax.f32 %v516, %v517
      %v519 = vrot.slane %v518, 4
      %v520 = vmax.f32 %v518, %v519
      %v521 = vrot.slane %v520, 2
      %v522 = vmax.f32 %v520, %v521
      %v523 = vrot.slane %v522, 1
      %v524 = vmax.f32 %v522, %v523
      %v525 = vsel %vm243, %v423, -inf
      %v526 = vsel %vm243, %v424, -inf
      %v527 = vmax.f32 %v525, %v526
      %v528 = vrot.slane %v527, 4
      %v529 = vmax.f32 %v527, %v528
      %v530 = vrot.slane %v529, 2
      %v531 = vmax.f32 %v529, %v530
      %v532 = vrot.slane %v531, 1
      %v533 = vmax.f32 %v531, %v532
      %v534 = vsel %vm243, %v425, -inf
      %v535 = vsel %vm243, %v426, -inf
      %v536 = vmax.f32 %v534, %v535
      %v537 = vrot.slane %v536, 4
      %v538 = vmax.f32 %v536, %v537
      %v539 = vrot.slane %v538, 2
      %v540 = vmax.f32 %v538, %v539
      %v541 = vrot.slane %v540, 1
      %v542 = vmax.f32 %v540, %v541
      %v543 = vsel %vm243, %v427, -inf
      %v544 = vsel %vm243, %v428, -inf
      %v545 = vmax.f32 %v543, %v544
      %v546 = vrot.slane %v545, 4
      %v547 = vmax.f32 %v545, %v546
      %v548 = vrot.slane %v547, 2
      %v549 = vmax.f32 %v547, %v548
      %v550 = vrot.slane %v549, 1
      %v551 = vmax.f32 %v549, %v550
      %v552 = vsel %vm243, %v429, -inf
      %v553 = vsel %vm243, %v430, -inf
      %v554 = vmax.f32 %v552, %v553
      %v555 = vrot.slane %v554, 4
      %v556 = vmax.f32 %v554, %v555
      %v557 = vrot.slane %v556, 2
      %v558 = vmax.f32 %v556, %v557
      %v559 = vrot.slane %v558, 1
      %v560 = vmax.f32 %v558, %v559
      %v561 = vsel %vm243, %v431, -inf
      %v562 = vsel %vm243, %v432, -inf
      %v563 = vmax.f32 %v561, %v562
      %v564 = vrot.slane %v563, 4
      %v565 = vmax.f32 %v563, %v564
      %v566 = vrot.slane %v565, 2
      %v567 = vmax.f32 %v565, %v566
      %v568 = vrot.slane %v567, 1
      %v569 = vmax.f32 %v567, %v568
      %v570 = vsel %vm243, %v433, -inf
      %v571 = vsel %vm243, %v434, -inf
      %v572 = vmax.f32 %v570, %v571
      %v573 = vrot.slane %v572, 4
      %v574 = vmax.f32 %v572, %v573
      %v575 = vrot.slane %v574, 2
      %v576 = vmax.f32 %v574, %v575
      %v577 = vrot.slane %v576, 1
      %v578 = vmax.f32 %v576, %v577
      %s579 = sadd.s32 %s196, 2
      %s580 = sld [smem:[#allocation7 + %s579]]
      %s581 = sld [smem:[#allocation8 + %s579]]
      %v582 = vstv %s580
      %vm583 = vcmp.ge.s32.totalorder %v194, %v582
      %vm584 = vcmp.ge.s32.totalorder %v195, %v582
      %v585 = vstv %s581
      %vm586 = vcmp.lt.s32.totalorder %v194, %v585
      %vm587 = vcmp.lt.s32.totalorder %v195, %v585
      %vm588 = vmand %vm583, %vm586
      %vm589 = vmand %vm584, %vm587
      %v590 = vsel %vm588, 1, 0
      %v591 = vsel %vm589, 1, 0
      %vm592 = vcmp.eq.s32.totalorder %v590, 1
      %vm593 = vcmp.eq.s32.totalorder %v591, 1
      %v594 = vsel %vm592, %v161, -inf
      %v595 = vsel %vm593, %v162, -inf
      %v596 = vsel %vm592, %v163, -inf
      %v597 = vsel %vm593, %v164, -inf
      %v598 = vsel %vm592, %v165, -inf
      %v599 = vsel %vm593, %v166, -inf
      %v600 = vsel %vm592, %v167, -inf
      %v601 = vsel %vm593, %v168, -inf
      %v602 = vsel %vm592, %v169, -inf
      %v603 = vsel %vm593, %v170, -inf
      %v604 = vsel %vm592, %v171, -inf
      %v605 = vsel %vm593, %v172, -inf
      %v606 = vsel %vm592, %v173, -inf
      %v607 = vsel %vm593, %v174, -inf
      %v608 = vsel %vm592, %v175, -inf
      %v609 = vsel %vm593, %v176, -inf
      %v610 = vsel %vm592, %v177, -inf
      %v611 = vsel %vm593, %v178, -inf
      %v612 = vsel %vm592, %v179, -inf
      %v613 = vsel %vm593, %v180, -inf
      %v614 = vsel %vm592, %v181, -inf
      %v615 = vsel %vm593, %v182, -inf
      %v616 = vsel %vm592, %v183, -inf
      %v617 = vsel %vm593, %v184, -inf
      %v618 = vsel %vm592, %v185, -inf
      %v619 = vsel %vm593, %v186, -inf
      %v620 = vsel %vm592, %v187, -inf
      %v621 = vsel %vm593, %v188, -inf
      %v622 = vsel %vm592, %v189, -inf
      %v623 = vsel %vm593, %v190, -inf
      %v624 = vsel %vm592, %v191, -inf
      %v625 = vsel %vm593, %v192, -inf
      %v626 = vsel %vm243, %v594, -inf
      %v627 = vsel %vm243, %v595, -inf
      %v628 = vmax.f32 %v626, %v627
      %v629 = vrot.slane %v628, 4
      %v630 = vmax.f32 %v628, %v629
      %v631 = vrot.slane %v630, 2
      %v632 = vmax.f32 %v630, %v631
      %v633 = vrot.slane %v632, 1
      %v634 = vmax.f32 %v632, %v633
      %v635 = vsel %vm243, %v596, -inf
      %v636 = vsel %vm243, %v597, -inf
      %v637 = vmax.f32 %v635, %v636
      %v638 = vrot.slane %v637, 4
      %v639 = vmax.f32 %v637, %v638
      %v640 = vrot.slane %v639, 2
      %v641 = vmax.f32 %v639, %v640
      %v642 = vrot.slane %v641, 1
      %v643 = vmax.f32 %v641, %v642
      %v644 = vsel %vm243, %v598, -inf
      %v645 = vsel %vm243, %v599, -inf
      %v646 = vmax.f32 %v644, %v645
      %v647 = vrot.slane %v646, 4
      %v648 = vmax.f32 %v646, %v647
      %v649 = vrot.slane %v648, 2
      %v650 = vmax.f32 %v648, %v649
      %v651 = vrot.slane %v650, 1
      %v652 = vmax.f32 %v650, %v651
      %v653 = vsel %vm243, %v600, -inf
      %v654 = vsel %vm243, %v601, -inf
      %v655 = vmax.f32 %v653, %v654
      %v656 = vrot.slane %v655, 4
      %v657 = vmax.f32 %v655, %v656
      %v658 = vrot.slane %v657, 2
      %v659 = vmax.f32 %v657, %v658
      %v660 = vrot.slane %v659, 1
      %v661 = vmax.f32 %v659, %v660
      %v662 = vsel %vm243, %v602, -inf
      %v663 = vsel %vm243, %v603, -inf
      %v664 = vmax.f32 %v662, %v663
      %v665 = vrot.slane %v664, 4
      %v666 = vmax.f32 %v664, %v665
      %v667 = vrot.slane %v666, 2
      %v668 = vmax.f32 %v666, %v667
      %v669 = vrot.slane %v668, 1
      %v670 = vmax.f32 %v668, %v669
      %v671 = vsel %vm243, %v604, -inf
      %v672 = vsel %vm243, %v605, -inf
      %v673 = vmax.f32 %v671, %v672
      %v674 = vrot.slane %v673, 4
      %v675 = vmax.f32 %v673, %v674
      %v676 = vrot.slane %v675, 2
      %v677 = vmax.f32 %v675, %v676
      %v678 = vrot.slane %v677, 1
      %v679 = vmax.f32 %v677, %v678
      %v680 = vsel %vm243, %v606, -inf
      %v681 = vsel %vm243, %v607, -inf
      %v682 = vmax.f32 %v680, %v681
      %v683 = vrot.slane %v682, 4
      %v684 = vmax.f32 %v682, %v683
      %v685 = vrot.slane %v684, 2
      %v686 = vmax.f32 %v684, %v685
      %v687 = vrot.slane %v686, 1
      %v688 = vmax.f32 %v686, %v687
      %v689 = vsel %vm243, %v608, -inf
      %v690 = vsel %vm243, %v609, -inf
      %v691 = vmax.f32 %v689, %v690
      %v692 = vrot.slane %v691, 4
      %v693 = vmax.f32 %v691, %v692
      %v694 = vrot.slane %v693, 2
      %v695 = vmax.f32 %v693, %v694
      %v696 = vrot.slane %v695, 1
      %v697 = vmax.f32 %v695, %v696
      %v698 = vsel %vm243, %v610, -inf
      %v699 = vsel %vm243, %v611, -inf
      %v700 = vmax.f32 %v698, %v699
      %v701 = vrot.slane %v700, 4
      %v702 = vmax.f32 %v700, %v701
      %v703 = vrot.slane %v702, 2
      %v704 = vmax.f32 %v702, %v703
      %v705 = vrot.slane %v704, 1
      %v706 = vmax.f32 %v704, %v705
      %v707 = vsel %vm243, %v612, -inf
      %v708 = vsel %vm243, %v613, -inf
      %v709 = vmax.f32 %v707, %v708
      %v710 = vrot.slane %v709, 4
      %v711 = vmax.f32 %v709, %v710
      %v712 = vrot.slane %v711, 2
      %v713 = vmax.f32 %v711, %v712
      %v714 = vrot.slane %v713, 1
      %v715 = vmax.f32 %v713, %v714
      %v716 = vsel %vm243, %v614, -inf
      %v717 = vsel %vm243, %v615, -inf
      %v718 = vmax.f32 %v716, %v717
      %v719 = vrot.slane %v718, 4
      %v720 = vmax.f32 %v718, %v719
      %v721 = vrot.slane %v720, 2
      %v722 = vmax.f32 %v720, %v721
      %v723 = vrot.slane %v722, 1
      %v724 = vmax.f32 %v722, %v723
      %v725 = vsel %vm243, %v616, -inf
      %v726 = vsel %vm243, %v617, -inf
      %v727 = vmax.f32 %v725, %v726
      %v728 = vrot.slane %v727, 4
      %v729 = vmax.f32 %v727, %v728
      %v730 = vrot.slane %v729, 2
      %v731 = vmax.f32 %v729, %v730
      %v732 = vrot.slane %v731, 1
      %v733 = vmax.f32 %v731, %v732
      %v734 = vsel %vm243, %v618, -inf
      %v735 = vsel %vm243, %v619, -inf
      %v736 = vmax.f32 %v734, %v735
      %v737 = vrot.slane %v736, 4
      %v738 = vmax.f32 %v736, %v737
      %v739 = vrot.slane %v738, 2
      %v740 = vmax.f32 %v738, %v739
      %v741 = vrot.slane %v740, 1
      %v742 = vmax.f32 %v740, %v741
      %v743 = vsel %vm243, %v620, -inf
      %v744 = vsel %vm243, %v621, -inf
      %v745 = vmax.f32 %v743, %v744
      %v746 = vrot.slane %v745, 4
      %v747 = vmax.f32 %v745, %v746
      %v748 = vrot.slane %v747, 2
      %v749 = vmax.f32 %v747, %v748
      %v750 = vrot.slane %v749, 1
      %v751 = vmax.f32 %v749, %v750
      %v752 = vsel %vm243, %v622, -inf
      %v753 = vsel %vm243, %v623, -inf
      %v754 = vmax.f32 %v752, %v753
      %v755 = vrot.slane %v754, 4
      %v756 = vmax.f32 %v754, %v755
      %v757 = vrot.slane %v756, 2
      %v758 = vmax.f32 %v756, %v757
      %v759 = vrot.slane %v758, 1
      %v760 = vmax.f32 %v758, %v759
      %v761 = vsel %vm243, %v624, -inf
      %v762 = vsel %vm243, %v625, -inf
      %v763 = vmax.f32 %v761, %v762
      %v764 = vrot.slane %v763, 4
      %v765 = vmax.f32 %v763, %v764
      %v766 = vrot.slane %v765, 2
      %v767 = vmax.f32 %v765, %v766
      %v768 = vrot.slane %v767, 1
      %v769 = vmax.f32 %v767, %v768
      %s770 = sadd.s32 %s196, 3
      %s771 = sld [smem:[#allocation7 + %s770]]
      %s772 = sld [smem:[#allocation8 + %s770]]
      %v773 = vstv %s771
      %vm774 = vcmp.ge.s32.totalorder %v194, %v773
      %vm775 = vcmp.ge.s32.totalorder %v195, %v773
      %v776 = vstv %s772
      %vm777 = vcmp.lt.s32.totalorder %v194, %v776
      %vm778 = vcmp.lt.s32.totalorder %v195, %v776
      %vm779 = vmand %vm774, %vm777
      %vm780 = vmand %vm775, %vm778
      %v781 = vsel %vm779, 1, 0
      %v782 = vsel %vm780, 1, 0
      %vm783 = vcmp.eq.s32.totalorder %v781, 1
      %vm784 = vcmp.eq.s32.totalorder %v782, 1
      %v785 = vsel %vm783, %v161, -inf
      %v786 = vsel %vm784, %v162, -inf
      %v787 = vsel %vm783, %v163, -inf
      %v788 = vsel %vm784, %v164, -inf
      %v789 = vsel %vm783, %v165, -inf
      %v790 = vsel %vm784, %v166, -inf
      %v791 = vsel %vm783, %v167, -inf
      %v792 = vsel %vm784, %v168, -inf
      %v793 = vsel %vm783, %v169, -inf
      %v794 = vsel %vm784, %v170, -inf
      %v795 = vsel %vm783, %v171, -inf
      %v796 = vsel %vm784, %v172, -inf
      %v797 = vsel %vm783, %v173, -inf
      %v798 = vsel %vm784, %v174, -inf
      %v799 = vsel %vm783, %v175, -inf
      %v800 = vsel %vm784, %v176, -inf
      %v801 = vsel %vm783, %v177, -inf
      %v802 = vsel %vm784, %v178, -inf
      %v803 = vsel %vm783, %v179, -inf
      %v804 = vsel %vm784, %v180, -inf
      %v805 = vsel %vm783, %v181, -inf
      %v806 = vsel %vm784, %v182, -inf
      %v807 = vsel %vm783, %v183, -inf
      %v808 = vsel %vm784, %v184, -inf
      %v809 = vsel %vm783, %v185, -inf
      %v810 = vsel %vm784, %v186, -inf
      %v811 = vsel %vm783, %v187, -inf
      %v812 = vsel %vm784, %v188, -inf
      %v813 = vsel %vm783, %v189, -inf
      %v814 = vsel %vm784, %v190, -inf
      %v815 = vsel %vm783, %v191, -inf
      %v816 = vsel %vm784, %v192, -inf
      %v817 = vsel %vm243, %v785, -inf
      %v818 = vsel %vm243, %v786, -inf
      %v819 = vmax.f32 %v817, %v818
      %v820 = vrot.slane %v819, 4
      %v821 = vmax.f32 %v819, %v820
      %v822 = vrot.slane %v821, 2
      %v823 = vmax.f32 %v821, %v822
      %v824 = vrot.slane %v823, 1
      %v825 = vmax.f32 %v823, %v824
      %v826 = vsel %vm243, %v787, -inf
      %v827 = vsel %vm243, %v788, -inf
      %v828 = vmax.f32 %v826, %v827
      %v829 = vrot.slane %v828, 4
      %v830 = vmax.f32 %v828, %v829
      %v831 = vrot.slane %v830, 2
      %v832 = vmax.f32 %v830, %v831
      %v833 = vrot.slane %v832, 1
      %v834 = vmax.f32 %v832, %v833
      %v835 = vsel %vm243, %v789, -inf
      %v836 = vsel %vm243, %v790, -inf
      %v837 = vmax.f32 %v835, %v836
      %v838 = vrot.slane %v837, 4
      %v839 = vmax.f32 %v837, %v838
      %v840 = vrot.slane %v839, 2
      %v841 = vmax.f32 %v839, %v840
      %v842 = vrot.slane %v841, 1
      %v843 = vmax.f32 %v841, %v842
      %v844 = vsel %vm243, %v791, -inf
      %v845 = vsel %vm243, %v792, -inf
      %v846 = vmax.f32 %v844, %v845
      %v847 = vrot.slane %v846, 4
      %v848 = vmax.f32 %v846, %v847
      %v849 = vrot.slane %v848, 2
      %v850 = vmax.f32 %v848, %v849
      %v851 = vrot.slane %v850, 1
      %v852 = vmax.f32 %v850, %v851
      %v853 = vsel %vm243, %v793, -inf
      %v854 = vsel %vm243, %v794, -inf
      %v855 = vmax.f32 %v853, %v854
      %v856 = vrot.slane %v855, 4
      %v857 = vmax.f32 %v855, %v856
      %v858 = vrot.slane %v857, 2
      %v859 = vmax.f32 %v857, %v858
      %v860 = vrot.slane %v859, 1
      %v861 = vmax.f32 %v859, %v860
      %v862 = vsel %vm243, %v795, -inf
      %v863 = vsel %vm243, %v796, -inf
      %v864 = vmax.f32 %v862, %v863
      %v865 = vrot.slane %v864, 4
      %v866 = vmax.f32 %v864, %v865
      %v867 = vrot.slane %v866, 2
      %v868 = vmax.f32 %v866, %v867
      %v869 = vrot.slane %v868, 1
      %v870 = vmax.f32 %v868, %v869
      %v871 = vsel %vm243, %v797, -inf
      %v872 = vsel %vm243, %v798, -inf
      %v873 = vmax.f32 %v871, %v872
      %v874 = vrot.slane %v873, 4
      %v875 = vmax.f32 %v873, %v874
      %v876 = vrot.slane %v875, 2
      %v877 = vmax.f32 %v875, %v876
      %v878 = vrot.slane %v877, 1
      %v879 = vmax.f32 %v877, %v878
      %v880 = vsel %vm243, %v799, -inf
      %v881 = vsel %vm243, %v800, -inf
      %v882 = vmax.f32 %v880, %v881
      %v883 = vrot.slane %v882, 4
      %v884 = vmax.f32 %v882, %v883
      %v885 = vrot.slane %v884, 2
      %v886 = vmax.f32 %v884, %v885
      %v887 = vrot.slane %v886, 1
      %v888 = vmax.f32 %v886, %v887
      %v889 = vsel %vm243, %v801, -inf
      %v890 = vsel %vm243, %v802, -inf
      %v891 = vmax.f32 %v889, %v890
      %v892 = vrot.slane %v891, 4
      %v893 = vmax.f32 %v891, %v892
      %v894 = vrot.slane %v893, 2
      %v895 = vmax.f32 %v893, %v894
      %v896 = vrot.slane %v895, 1
      %v897 = vmax.f32 %v895, %v896
      %v898 = vsel %vm243, %v803, -inf
      %v899 = vsel %vm243, %v804, -inf
      %v900 = vmax.f32 %v898, %v899
      %v901 = vrot.slane %v900, 4
      %v902 = vmax.f32 %v900, %v901
      %v903 = vrot.slane %v902, 2
      %v904 = vmax.f32 %v902, %v903
      %v905 = vrot.slane %v904, 1
      %v906 = vmax.f32 %v904, %v905
      %v907 = vsel %vm243, %v805, -inf
      %v908 = vsel %vm243, %v806, -inf
      %v909 = vmax.f32 %v907, %v908
      %v910 = vrot.slane %v909, 4
      %v911 = vmax.f32 %v909, %v910
      %v912 = vrot.slane %v911, 2
      %v913 = vmax.f32 %v911, %v912
      %v914 = vrot.slane %v913, 1
      %v915 = vmax.f32 %v913, %v914
      %v916 = vsel %vm243, %v807, -inf
      %v917 = vsel %vm243, %v808, -inf
      %v918 = vmax.f32 %v916, %v917
      %v919 = vrot.slane %v918, 4
      %v920 = vmax.f32 %v918, %v919
      %v921 = vrot.slane %v920, 2
      %v922 = vmax.f32 %v920, %v921
      %v923 = vrot.slane %v922, 1
      %v924 = vmax.f32 %v922, %v923
      %v925 = vsel %vm243, %v809, -inf
      %v926 = vsel %vm243, %v810, -inf
      %v927 = vmax.f32 %v925, %v926
      %v928 = vrot.slane %v927, 4
      %v929 = vmax.f32 %v927, %v928
      %v930 = vrot.slane %v929, 2
      %v931 = vmax.f32 %v929, %v930
      %v932 = vrot.slane %v931, 1
      %v933 = vmax.f32 %v931, %v932
      %v934 = vsel %vm243, %v811, -inf
      %v935 = vsel %vm243, %v812, -inf
      %v936 = vmax.f32 %v934, %v935
      %v937 = vrot.slane %v936, 4
      %v938 = vmax.f32 %v936, %v937
      %v939 = vrot.slane %v938, 2
      %v940 = vmax.f32 %v938, %v939
      %v941 = vrot.slane %v940, 1
      %v942 = vmax.f32 %v940, %v941
      %v943 = vsel %vm243, %v813, -inf
      %v944 = vsel %vm243, %v814, -inf
      %v945 = vmax.f32 %v943, %v944
      %v946 = vrot.slane %v945, 4
      %v947 = vmax.f32 %v945, %v946
      %v948 = vrot.slane %v947, 2
      %v949 = vmax.f32 %v947, %v948
      %v950 = vrot.slane %v949, 1
      %v951 = vmax.f32 %v949, %v950
      %v952 = vsel %vm243, %v815, -inf
      %v953 = vsel %vm243, %v816, -inf
      %v954 = vmax.f32 %v952, %v953
      %v955 = vrot.slane %v954, 4
      %v956 = vmax.f32 %v954, %v955
      %v957 = vrot.slane %v956, 2
      %v958 = vmax.f32 %v956, %v957
      %v959 = vrot.slane %v958, 1
      %v960 = vmax.f32 %v958, %v959
      %s961 = sadd.s32 %s196, 4
      %s962 = sld [smem:[#allocation7 + %s961]]
      %s963 = sld [smem:[#allocation8 + %s961]]
      %v964 = vstv %s962
      %vm965 = vcmp.ge.s32.totalorder %v194, %v964
      %vm966 = vcmp.ge.s32.totalorder %v195, %v964
      %v967 = vstv %s963
      %vm968 = vcmp.lt.s32.totalorder %v194, %v967
      %vm969 = vcmp.lt.s32.totalorder %v195, %v967
      %vm970 = vmand %vm965, %vm968
      %vm971 = vmand %vm966, %vm969
      %v972 = vsel %vm970, 1, 0
      %v973 = vsel %vm971, 1, 0
      %vm974 = vcmp.eq.s32.totalorder %v972, 1
      %vm975 = vcmp.eq.s32.totalorder %v973, 1
      %v976 = vsel %vm974, %v161, -inf
      %v977 = vsel %vm975, %v162, -inf
      %v978 = vsel %vm974, %v163, -inf
      %v979 = vsel %vm975, %v164, -inf
      %v980 = vsel %vm974, %v165, -inf
      %v981 = vsel %vm975, %v166, -inf
      %v982 = vsel %vm974, %v167, -inf
      %v983 = vsel %vm975, %v168, -inf
      %v984 = vsel %vm974, %v169, -inf
      %v985 = vsel %vm975, %v170, -inf
      %v986 = vsel %vm974, %v171, -inf
      %v987 = vsel %vm975, %v172, -inf
      %v988 = vsel %vm974, %v173, -inf
      %v989 = vsel %vm975, %v174, -inf
      %v990 = vsel %vm974, %v175, -inf
      %v991 = vsel %vm975, %v176, -inf
      %v992 = vsel %vm974, %v177, -inf
      %v993 = vsel %vm975, %v178, -inf
      %v994 = vsel %vm974, %v179, -inf
      %v995 = vsel %vm975, %v180, -inf
      %v996 = vsel %vm974, %v181, -inf
      %v997 = vsel %vm975, %v182, -inf
      %v998 = vsel %vm974, %v183, -inf
      %v999 = vsel %vm975, %v184, -inf
      %v1000 = vsel %vm974, %v185, -inf
      %v1001 = vsel %vm975, %v186, -inf
      %v1002 = vsel %vm974, %v187, -inf
      %v1003 = vsel %vm975, %v188, -inf
      %v1004 = vsel %vm974, %v189, -inf
      %v1005 = vsel %vm975, %v190, -inf
      %v1006 = vsel %vm974, %v191, -inf
      %v1007 = vsel %vm975, %v192, -inf
      %v1008 = vsel %vm243, %v976, -inf
      %v1009 = vsel %vm243, %v977, -inf
      %v1010 = vmax.f32 %v1008, %v1009
      %v1011 = vrot.slane %v1010, 4
      %v1012 = vmax.f32 %v1010, %v1011
      %v1013 = vrot.slane %v1012, 2
      %v1014 = vmax.f32 %v1012, %v1013
      %v1015 = vrot.slane %v1014, 1
      %v1016 = vmax.f32 %v1014, %v1015
      %v1017 = vsel %vm243, %v978, -inf
      %v1018 = vsel %vm243, %v979, -inf
      %v1019 = vmax.f32 %v1017, %v1018
      %v1020 = vrot.slane %v1019, 4
      %v1021 = vmax.f32 %v1019, %v1020
      %v1022 = vrot.slane %v1021, 2
      %v1023 = vmax.f32 %v1021, %v1022
      %v1024 = vrot.slane %v1023, 1
      %v1025 = vmax.f32 %v1023, %v1024
      %v1026 = vsel %vm243, %v980, -inf
      %v1027 = vsel %vm243, %v981, -inf
      %v1028 = vmax.f32 %v1026, %v1027
      %v1029 = vrot.slane %v1028, 4
      %v1030 = vmax.f32 %v1028, %v1029
      %v1031 = vrot.slane %v1030, 2
      %v1032 = vmax.f32 %v1030, %v1031
      %v1033 = vrot.slane %v1032, 1
      %v1034 = vmax.f32 %v1032, %v1033
      %v1035 = vsel %vm243, %v982, -inf
      %v1036 = vsel %vm243, %v983, -inf
      %v1037 = vmax.f32 %v1035, %v1036
      %v1038 = vrot.slane %v1037, 4
      %v1039 = vmax.f32 %v1037, %v1038
      %v1040 = vrot.slane %v1039, 2
      %v1041 = vmax.f32 %v1039, %v1040
      %v1042 = vrot.slane %v1041, 1
      %v1043 = vmax.f32 %v1041, %v1042
      %v1044 = vsel %vm243, %v984, -inf
      %v1045 = vsel %vm243, %v985, -inf
      %v1046 = vmax.f32 %v1044, %v1045
      %v1047 = vrot.slane %v1046, 4
      %v1048 = vmax.f32 %v1046, %v1047
      %v1049 = vrot.slane %v1048, 2
      %v1050 = vmax.f32 %v1048, %v1049
      %v1051 = vrot.slane %v1050, 1
      %v1052 = vmax.f32 %v1050, %v1051
      %v1053 = vsel %vm243, %v986, -inf
      %v1054 = vsel %vm243, %v987, -inf
      %v1055 = vmax.f32 %v1053, %v1054
      %v1056 = vrot.slane %v1055, 4
      %v1057 = vmax.f32 %v1055, %v1056
      %v1058 = vrot.slane %v1057, 2
      %v1059 = vmax.f32 %v1057, %v1058
      %v1060 = vrot.slane %v1059, 1
      %v1061 = vmax.f32 %v1059, %v1060
      %v1062 = vsel %vm243, %v988, -inf
      %v1063 = vsel %vm243, %v989, -inf
      %v1064 = vmax.f32 %v1062, %v1063
      %v1065 = vrot.slane %v1064, 4
      %v1066 = vmax.f32 %v1064, %v1065
      %v1067 = vrot.slane %v1066, 2
      %v1068 = vmax.f32 %v1066, %v1067
      %v1069 = vrot.slane %v1068, 1
      %v1070 = vmax.f32 %v1068, %v1069
      %v1071 = vsel %vm243, %v990, -inf
      %v1072 = vsel %vm243, %v991, -inf
      %v1073 = vmax.f32 %v1071, %v1072
      %v1074 = vrot.slane %v1073, 4
      %v1075 = vmax.f32 %v1073, %v1074
      %v1076 = vrot.slane %v1075, 2
      %v1077 = vmax.f32 %v1075, %v1076
      %v1078 = vrot.slane %v1077, 1
      %v1079 = vmax.f32 %v1077, %v1078
      %v1080 = vsel %vm243, %v992, -inf
      %v1081 = vsel %vm243, %v993, -inf
      %v1082 = vmax.f32 %v1080, %v1081
      %v1083 = vrot.slane %v1082, 4
      %v1084 = vmax.f32 %v1082, %v1083
      %v1085 = vrot.slane %v1084, 2
      %v1086 = vmax.f32 %v1084, %v1085
      %v1087 = vrot.slane %v1086, 1
      %v1088 = vmax.f32 %v1086, %v1087
      %v1089 = vsel %vm243, %v994, -inf
      %v1090 = vsel %vm243, %v995, -inf
      %v1091 = vmax.f32 %v1089, %v1090
      %v1092 = vrot.slane %v1091, 4
      %v1093 = vmax.f32 %v1091, %v1092
      %v1094 = vrot.slane %v1093, 2
      %v1095 = vmax.f32 %v1093, %v1094
      %v1096 = vrot.slane %v1095, 1
      %v1097 = vmax.f32 %v1095, %v1096
      %v1098 = vsel %vm243, %v996, -inf
      %v1099 = vsel %vm243, %v997, -inf
      %v1100 = vmax.f32 %v1098, %v1099
      %v1101 = vrot.slane %v1100, 4
      %v1102 = vmax.f32 %v1100, %v1101
      %v1103 = vrot.slane %v1102, 2
      %v1104 = vmax.f32 %v1102, %v1103
      %v1105 = vrot.slane %v1104, 1
      %v1106 = vmax.f32 %v1104, %v1105
      %v1107 = vsel %vm243, %v998, -inf
      %v1108 = vsel %vm243, %v999, -inf
      %v1109 = vmax.f32 %v1107, %v1108
      %v1110 = vrot.slane %v1109, 4
      %v1111 = vmax.f32 %v1109, %v1110
      %v1112 = vrot.slane %v1111, 2
      %v1113 = vmax.f32 %v1111, %v1112
      %v1114 = vrot.slane %v1113, 1
      %v1115 = vmax.f32 %v1113, %v1114
      %v1116 = vsel %vm243, %v1000, -inf
      %v1117 = vsel %vm243, %v1001, -inf
      %v1118 = vmax.f32 %v1116, %v1117
      %v1119 = vrot.slane %v1118, 4
      %v1120 = vmax.f32 %v1118, %v1119
      %v1121 = vrot.slane %v1120, 2
      %v1122 = vmax.f32 %v1120, %v1121
      %v1123 = vrot.slane %v1122, 1
      %v1124 = vmax.f32 %v1122, %v1123
      %v1125 = vsel %vm243, %v1002, -inf
      %v1126 = vsel %vm243, %v1003, -inf
      %v1127 = vmax.f32 %v1125, %v1126
      %v1128 = vrot.slane %v1127, 4
      %v1129 = vmax.f32 %v1127, %v1128
      %v1130 = vrot.slane %v1129, 2
      %v1131 = vmax.f32 %v1129, %v1130
      %v1132 = vrot.slane %v1131, 1
      %v1133 = vmax.f32 %v1131, %v1132
      %v1134 = vsel %vm243, %v1004, -inf
      %v1135 = vsel %vm243, %v1005, -inf
      %v1136 = vmax.f32 %v1134, %v1135
      %v1137 = vrot.slane %v1136, 4
      %v1138 = vmax.f32 %v1136, %v1137
      %v1139 = vrot.slane %v1138, 2
      %v1140 = vmax.f32 %v1138, %v1139
      %v1141 = vrot.slane %v1140, 1
      %v1142 = vmax.f32 %v1140, %v1141
      %v1143 = vsel %vm243, %v1006, -inf
      %v1144 = vsel %vm243, %v1007, -inf
      %v1145 = vmax.f32 %v1143, %v1144
      %v1146 = vrot.slane %v1145, 4
      %v1147 = vmax.f32 %v1145, %v1146
      %v1148 = vrot.slane %v1147, 2
      %v1149 = vmax.f32 %v1147, %v1148
      %v1150 = vrot.slane %v1149, 1
      %v1151 = vmax.f32 %v1149, %v1150
      %s1152 = sadd.s32 %s196, 5
      %s1153 = sld [smem:[#allocation7 + %s1152]]
      %s1154 = sld [smem:[#allocation8 + %s1152]]
      %v1155 = vstv %s1153
      %vm1156 = vcmp.ge.s32.totalorder %v194, %v1155
      %vm1157 = vcmp.ge.s32.totalorder %v195, %v1155
      %v1158 = vstv %s1154
      %vm1159 = vcmp.lt.s32.totalorder %v194, %v1158
      %vm1160 = vcmp.lt.s32.totalorder %v195, %v1158
      %vm1161 = vmand %vm1156, %vm1159
      %vm1162 = vmand %vm1157, %vm1160
      %v1163 = vsel %vm1161, 1, 0
      %v1164 = vsel %vm1162, 1, 0
      %vm1165 = vcmp.eq.s32.totalorder %v1163, 1
      %vm1166 = vcmp.eq.s32.totalorder %v1164, 1
      %v1167 = vsel %vm1165, %v161, -inf
      %v1168 = vsel %vm1166, %v162, -inf
      %v1169 = vsel %vm1165, %v163, -inf
      %v1170 = vsel %vm1166, %v164, -inf
      %v1171 = vsel %vm1165, %v165, -inf
      %v1172 = vsel %vm1166, %v166, -inf
      %v1173 = vsel %vm1165, %v167, -inf
      %v1174 = vsel %vm1166, %v168, -inf
      %v1175 = vsel %vm1165, %v169, -inf
      %v1176 = vsel %vm1166, %v170, -inf
      %v1177 = vsel %vm1165, %v171, -inf
      %v1178 = vsel %vm1166, %v172, -inf
      %v1179 = vsel %vm1165, %v173, -inf
      %v1180 = vsel %vm1166, %v174, -inf
      %v1181 = vsel %vm1165, %v175, -inf
      %v1182 = vsel %vm1166, %v176, -inf
      %v1183 = vsel %vm1165, %v177, -inf
      %v1184 = vsel %vm1166, %v178, -inf
      %v1185 = vsel %vm1165, %v179, -inf
      %v1186 = vsel %vm1166, %v180, -inf
      %v1187 = vsel %vm1165, %v181, -inf
      %v1188 = vsel %vm1166, %v182, -inf
      %v1189 = vsel %vm1165, %v183, -inf
      %v1190 = vsel %vm1166, %v184, -inf
      %v1191 = vsel %vm1165, %v185, -inf
      %v1192 = vsel %vm1166, %v186, -inf
      %v1193 = vsel %vm1165, %v187, -inf
      %v1194 = vsel %vm1166, %v188, -inf
      %v1195 = vsel %vm1165, %v189, -inf
      %v1196 = vsel %vm1166, %v190, -inf
      %v1197 = vsel %vm1165, %v191, -inf
      %v1198 = vsel %vm1166, %v192, -inf
      %v1199 = vsel %vm243, %v1167, -inf
      %v1200 = vsel %vm243, %v1168, -inf
      %v1201 = vmax.f32 %v1199, %v1200
      %v1202 = vrot.slane %v1201, 4
      %v1203 = vmax.f32 %v1201, %v1202
      %v1204 = vrot.slane %v1203, 2
      %v1205 = vmax.f32 %v1203, %v1204
      %v1206 = vrot.slane %v1205, 1
      %v1207 = vmax.f32 %v1205, %v1206
      %v1208 = vsel %vm243, %v1169, -inf
      %v1209 = vsel %vm243, %v1170, -inf
      %v1210 = vmax.f32 %v1208, %v1209
      %v1211 = vrot.slane %v1210, 4
      %v1212 = vmax.f32 %v1210, %v1211
      %v1213 = vrot.slane %v1212, 2
      %v1214 = vmax.f32 %v1212, %v1213
      %v1215 = vrot.slane %v1214, 1
      %v1216 = vmax.f32 %v1214, %v1215
      %v1217 = vsel %vm243, %v1171, -inf
      %v1218 = vsel %vm243, %v1172, -inf
      %v1219 = vmax.f32 %v1217, %v1218
      %v1220 = vrot.slane %v1219, 4
      %v1221 = vmax.f32 %v1219, %v1220
      %v1222 = vrot.slane %v1221, 2
      %v1223 = vmax.f32 %v1221, %v1222
      %v1224 = vrot.slane %v1223, 1
      %v1225 = vmax.f32 %v1223, %v1224
      %v1226 = vsel %vm243, %v1173, -inf
      %v1227 = vsel %vm243, %v1174, -inf
      %v1228 = vmax.f32 %v1226, %v1227
      %v1229 = vrot.slane %v1228, 4
      %v1230 = vmax.f32 %v1228, %v1229
      %v1231 = vrot.slane %v1230, 2
      %v1232 = vmax.f32 %v1230, %v1231
      %v1233 = vrot.slane %v1232, 1
      %v1234 = vmax.f32 %v1232, %v1233
      %v1235 = vsel %vm243, %v1175, -inf
      %v1236 = vsel %vm243, %v1176, -inf
      %v1237 = vmax.f32 %v1235, %v1236
      %v1238 = vrot.slane %v1237, 4
      %v1239 = vmax.f32 %v1237, %v1238
      %v1240 = vrot.slane %v1239, 2
      %v1241 = vmax.f32 %v1239, %v1240
      %v1242 = vrot.slane %v1241, 1
      %v1243 = vmax.f32 %v1241, %v1242
      %v1244 = vsel %vm243, %v1177, -inf
      %v1245 = vsel %vm243, %v1178, -inf
      %v1246 = vmax.f32 %v1244, %v1245
      %v1247 = vrot.slane %v1246, 4
      %v1248 = vmax.f32 %v1246, %v1247
      %v1249 = vrot.slane %v1248, 2
      %v1250 = vmax.f32 %v1248, %v1249
      %v1251 = vrot.slane %v1250, 1
      %v1252 = vmax.f32 %v1250, %v1251
      %v1253 = vsel %vm243, %v1179, -inf
      %v1254 = vsel %vm243, %v1180, -inf
      %v1255 = vmax.f32 %v1253, %v1254
      %v1256 = vrot.slane %v1255, 4
      %v1257 = vmax.f32 %v1255, %v1256
      %v1258 = vrot.slane %v1257, 2
      %v1259 = vmax.f32 %v1257, %v1258
      %v1260 = vrot.slane %v1259, 1
      %v1261 = vmax.f32 %v1259, %v1260
      %v1262 = vsel %vm243, %v1181, -inf
      %v1263 = vsel %vm243, %v1182, -inf
      %v1264 = vmax.f32 %v1262, %v1263
      %v1265 = vrot.slane %v1264, 4
      %v1266 = vmax.f32 %v1264, %v1265
      %v1267 = vrot.slane %v1266, 2
      %v1268 = vmax.f32 %v1266, %v1267
      %v1269 = vrot.slane %v1268, 1
      %v1270 = vmax.f32 %v1268, %v1269
      %v1271 = vsel %vm243, %v1183, -inf
      %v1272 = vsel %vm243, %v1184, -inf
      %v1273 = vmax.f32 %v1271, %v1272
      %v1274 = vrot.slane %v1273, 4
      %v1275 = vmax.f32 %v1273, %v1274
      %v1276 = vrot.slane %v1275, 2
      %v1277 = vmax.f32 %v1275, %v1276
      %v1278 = vrot.slane %v1277, 1
      %v1279 = vmax.f32 %v1277, %v1278
      %v1280 = vsel %vm243, %v1185, -inf
      %v1281 = vsel %vm243, %v1186, -inf
      %v1282 = vmax.f32 %v1280, %v1281
      %v1283 = vrot.slane %v1282, 4
      %v1284 = vmax.f32 %v1282, %v1283
      %v1285 = vrot.slane %v1284, 2
      %v1286 = vmax.f32 %v1284, %v1285
      %v1287 = vrot.slane %v1286, 1
      %v1288 = vmax.f32 %v1286, %v1287
      %v1289 = vsel %vm243, %v1187, -inf
      %v1290 = vsel %vm243, %v1188, -inf
      %v1291 = vmax.f32 %v1289, %v1290
      %v1292 = vrot.slane %v1291, 4
      %v1293 = vmax.f32 %v1291, %v1292
      %v1294 = vrot.slane %v1293, 2
      %v1295 = vmax.f32 %v1293, %v1294
      %v1296 = vrot.slane %v1295, 1
      %v1297 = vmax.f32 %v1295, %v1296
      %v1298 = vsel %vm243, %v1189, -inf
      %v1299 = vsel %vm243, %v1190, -inf
      %v1300 = vmax.f32 %v1298, %v1299
      %v1301 = vrot.slane %v1300, 4
      %v1302 = vmax.f32 %v1300, %v1301
      %v1303 = vrot.slane %v1302, 2
      %v1304 = vmax.f32 %v1302, %v1303
      %v1305 = vrot.slane %v1304, 1
      %v1306 = vmax.f32 %v1304, %v1305
      %v1307 = vsel %vm243, %v1191, -inf
      %v1308 = vsel %vm243, %v1192, -inf
      %v1309 = vmax.f32 %v1307, %v1308
      %v1310 = vrot.slane %v1309, 4
      %v1311 = vmax.f32 %v1309, %v1310
      %v1312 = vrot.slane %v1311, 2
      %v1313 = vmax.f32 %v1311, %v1312
      %v1314 = vrot.slane %v1313, 1
      %v1315 = vmax.f32 %v1313, %v1314
      %v1316 = vsel %vm243, %v1193, -inf
      %v1317 = vsel %vm243, %v1194, -inf
      %v1318 = vmax.f32 %v1316, %v1317
      %v1319 = vrot.slane %v1318, 4
      %v1320 = vmax.f32 %v1318, %v1319
      %v1321 = vrot.slane %v1320, 2
      %v1322 = vmax.f32 %v1320, %v1321
      %v1323 = vrot.slane %v1322, 1
      %v1324 = vmax.f32 %v1322, %v1323
      %v1325 = vsel %vm243, %v1195, -inf
      %v1326 = vsel %vm243, %v1196, -inf
      %v1327 = vmax.f32 %v1325, %v1326
      %v1328 = vrot.slane %v1327, 4
      %v1329 = vmax.f32 %v1327, %v1328
      %v1330 = vrot.slane %v1329, 2
      %v1331 = vmax.f32 %v1329, %v1330
      %v1332 = vrot.slane %v1331, 1
      %v1333 = vmax.f32 %v1331, %v1332
      %v1334 = vsel %vm243, %v1197, -inf
      %v1335 = vsel %vm243, %v1198, -inf
      %v1336 = vmax.f32 %v1334, %v1335
      %v1337 = vrot.slane %v1336, 4
      %v1338 = vmax.f32 %v1336, %v1337
      %v1339 = vrot.slane %v1338, 2
      %v1340 = vmax.f32 %v1338, %v1339
      %v1341 = vrot.slane %v1340, 1
      %v1342 = vmax.f32 %v1340, %v1341
      %s1343 = sadd.s32 %s196, 6
      %s1344 = sld [smem:[#allocation7 + %s1343]]
      %s1345 = sld [smem:[#allocation8 + %s1343]]
      %v1346 = vstv %s1344
      %vm1347 = vcmp.ge.s32.totalorder %v194, %v1346
      %vm1348 = vcmp.ge.s32.totalorder %v195, %v1346
      %v1349 = vstv %s1345
      %vm1350 = vcmp.lt.s32.totalorder %v194, %v1349
      %vm1351 = vcmp.lt.s32.totalorder %v195, %v1349
      %vm1352 = vmand %vm1347, %vm1350
      %vm1353 = vmand %vm1348, %vm1351
      %v1354 = vsel %vm1352, 1, 0
      %v1355 = vsel %vm1353, 1, 0
      %vm1356 = vcmp.eq.s32.totalorder %v1354, 1
      %vm1357 = vcmp.eq.s32.totalorder %v1355, 1
      %v1358 = vsel %vm1356, %v161, -inf
      %v1359 = vsel %vm1357, %v162, -inf
      %v1360 = vsel %vm1356, %v163, -inf
      %v1361 = vsel %vm1357, %v164, -inf
      %v1362 = vsel %vm1356, %v165, -inf
      %v1363 = vsel %vm1357, %v166, -inf
      %v1364 = vsel %vm1356, %v167, -inf
      %v1365 = vsel %vm1357, %v168, -inf
      %v1366 = vsel %vm1356, %v169, -inf
      %v1367 = vsel %vm1357, %v170, -inf
      %v1368 = vsel %vm1356, %v171, -inf
      %v1369 = vsel %vm1357, %v172, -inf
      %v1370 = vsel %vm1356, %v173, -inf
      %v1371 = vsel %vm1357, %v174, -inf
      %v1372 = vsel %vm1356, %v175, -inf
      %v1373 = vsel %vm1357, %v176, -inf
      %v1374 = vsel %vm1356, %v177, -inf
      %v1375 = vsel %vm1357, %v178, -inf
      %v1376 = vsel %vm1356, %v179, -inf
      %v1377 = vsel %vm1357, %v180, -inf
      %v1378 = vsel %vm1356, %v181, -inf
      %v1379 = vsel %vm1357, %v182, -inf
      %v1380 = vsel %vm1356, %v183, -inf
      %v1381 = vsel %vm1357, %v184, -inf
      %v1382 = vsel %vm1356, %v185, -inf
      %v1383 = vsel %vm1357, %v186, -inf
      %v1384 = vsel %vm1356, %v187, -inf
      %v1385 = vsel %vm1357, %v188, -inf
      %v1386 = vsel %vm1356, %v189, -inf
      %v1387 = vsel %vm1357, %v190, -inf
      %v1388 = vsel %vm1356, %v191, -inf
      %v1389 = vsel %vm1357, %v192, -inf
      %v1390 = vsel %vm243, %v1358, -inf
      %v1391 = vsel %vm243, %v1359, -inf
      %v1392 = vmax.f32 %v1390, %v1391
      %v1393 = vrot.slane %v1392, 4
      %v1394 = vmax.f32 %v1392, %v1393
      %v1395 = vrot.slane %v1394, 2
      %v1396 = vmax.f32 %v1394, %v1395
      %v1397 = vrot.slane %v1396, 1
      %v1398 = vmax.f32 %v1396, %v1397
      %v1399 = vsel %vm243, %v1360, -inf
      %v1400 = vsel %vm243, %v1361, -inf
      %v1401 = vmax.f32 %v1399, %v1400
      %v1402 = vrot.slane %v1401, 4
      %v1403 = vmax.f32 %v1401, %v1402
      %v1404 = vrot.slane %v1403, 2
      %v1405 = vmax.f32 %v1403, %v1404
      %v1406 = vrot.slane %v1405, 1
      %v1407 = vmax.f32 %v1405, %v1406
      %v1408 = vsel %vm243, %v1362, -inf
      %v1409 = vsel %vm243, %v1363, -inf
      %v1410 = vmax.f32 %v1408, %v1409
      %v1411 = vrot.slane %v1410, 4
      %v1412 = vmax.f32 %v1410, %v1411
      %v1413 = vrot.slane %v1412, 2
      %v1414 = vmax.f32 %v1412, %v1413
      %v1415 = vrot.slane %v1414, 1
      %v1416 = vmax.f32 %v1414, %v1415
      %v1417 = vsel %vm243, %v1364, -inf
      %v1418 = vsel %vm243, %v1365, -inf
      %v1419 = vmax.f32 %v1417, %v1418
      %v1420 = vrot.slane %v1419, 4
      %v1421 = vmax.f32 %v1419, %v1420
      %v1422 = vrot.slane %v1421, 2
      %v1423 = vmax.f32 %v1421, %v1422
      %v1424 = vrot.slane %v1423, 1
      %v1425 = vmax.f32 %v1423, %v1424
      %v1426 = vsel %vm243, %v1366, -inf
      %v1427 = vsel %vm243, %v1367, -inf
      %v1428 = vmax.f32 %v1426, %v1427
      %v1429 = vrot.slane %v1428, 4
      %v1430 = vmax.f32 %v1428, %v1429
      %v1431 = vrot.slane %v1430, 2
      %v1432 = vmax.f32 %v1430, %v1431
      %v1433 = vrot.slane %v1432, 1
      %v1434 = vmax.f32 %v1432, %v1433
      %v1435 = vsel %vm243, %v1368, -inf
      %v1436 = vsel %vm243, %v1369, -inf
      %v1437 = vmax.f32 %v1435, %v1436
      %v1438 = vrot.slane %v1437, 4
      %v1439 = vmax.f32 %v1437, %v1438
      %v1440 = vrot.slane %v1439, 2
      %v1441 = vmax.f32 %v1439, %v1440
      %v1442 = vrot.slane %v1441, 1
      %v1443 = vmax.f32 %v1441, %v1442
      %v1444 = vsel %vm243, %v1370, -inf
      %v1445 = vsel %vm243, %v1371, -inf
      %v1446 = vmax.f32 %v1444, %v1445
      %v1447 = vrot.slane %v1446, 4
      %v1448 = vmax.f32 %v1446, %v1447
      %v1449 = vrot.slane %v1448, 2
      %v1450 = vmax.f32 %v1448, %v1449
      %v1451 = vrot.slane %v1450, 1
      %v1452 = vmax.f32 %v1450, %v1451
      %v1453 = vsel %vm243, %v1372, -inf
      %v1454 = vsel %vm243, %v1373, -inf
      %v1455 = vmax.f32 %v1453, %v1454
      %v1456 = vrot.slane %v1455, 4
      %v1457 = vmax.f32 %v1455, %v1456
      %v1458 = vrot.slane %v1457, 2
      %v1459 = vmax.f32 %v1457, %v1458
      %v1460 = vrot.slane %v1459, 1
      %v1461 = vmax.f32 %v1459, %v1460
      %v1462 = vsel %vm243, %v1374, -inf
      %v1463 = vsel %vm243, %v1375, -inf
      %v1464 = vmax.f32 %v1462, %v1463
      %v1465 = vrot.slane %v1464, 4
      %v1466 = vmax.f32 %v1464, %v1465
      %v1467 = vrot.slane %v1466, 2
      %v1468 = vmax.f32 %v1466, %v1467
      %v1469 = vrot.slane %v1468, 1
      %v1470 = vmax.f32 %v1468, %v1469
      %v1471 = vsel %vm243, %v1376, -inf
      %v1472 = vsel %vm243, %v1377, -inf
      %v1473 = vmax.f32 %v1471, %v1472
      %v1474 = vrot.slane %v1473, 4
      %v1475 = vmax.f32 %v1473, %v1474
      %v1476 = vrot.slane %v1475, 2
      %v1477 = vmax.f32 %v1475, %v1476
      %v1478 = vrot.slane %v1477, 1
      %v1479 = vmax.f32 %v1477, %v1478
      %v1480 = vsel %vm243, %v1378, -inf
      %v1481 = vsel %vm243, %v1379, -inf
      %v1482 = vmax.f32 %v1480, %v1481
      %v1483 = vrot.slane %v1482, 4
      %v1484 = vmax.f32 %v1482, %v1483
      %v1485 = vrot.slane %v1484, 2
      %v1486 = vmax.f32 %v1484, %v1485
      %v1487 = vrot.slane %v1486, 1
      %v1488 = vmax.f32 %v1486, %v1487
      %v1489 = vsel %vm243, %v1380, -inf
      %v1490 = vsel %vm243, %v1381, -inf
      %v1491 = vmax.f32 %v1489, %v1490
      %v1492 = vrot.slane %v1491, 4
      %v1493 = vmax.f32 %v1491, %v1492
      %v1494 = vrot.slane %v1493, 2
      %v1495 = vmax.f32 %v1493, %v1494
      %v1496 = vrot.slane %v1495, 1
      %v1497 = vmax.f32 %v1495, %v1496
      %v1498 = vsel %vm243, %v1382, -inf
      %v1499 = vsel %vm243, %v1383, -inf
      %v1500 = vmax.f32 %v1498, %v1499
      %v1501 = vrot.slane %v1500, 4
      %v1502 = vmax.f32 %v1500, %v1501
      %v1503 = vrot.slane %v1502, 2
      %v1504 = vmax.f32 %v1502, %v1503
      %v1505 = vrot.slane %v1504, 1
      %v1506 = vmax.f32 %v1504, %v1505
      %v1507 = vsel %vm243, %v1384, -inf
      %v1508 = vsel %vm243, %v1385, -inf
      %v1509 = vmax.f32 %v1507, %v1508
      %v1510 = vrot.slane %v1509, 4
      %v1511 = vmax.f32 %v1509, %v1510
      %v1512 = vrot.slane %v1511, 2
      %v1513 = vmax.f32 %v1511, %v1512
      %v1514 = vrot.slane %v1513, 1
      %v1515 = vmax.f32 %v1513, %v1514
      %v1516 = vsel %vm243, %v1386, -inf
      %v1517 = vsel %vm243, %v1387, -inf
      %v1518 = vmax.f32 %v1516, %v1517
      %v1519 = vrot.slane %v1518, 4
      %v1520 = vmax.f32 %v1518, %v1519
      %v1521 = vrot.slane %v1520, 2
      %v1522 = vmax.f32 %v1520, %v1521
      %v1523 = vrot.slane %v1522, 1
      %v1524 = vmax.f32 %v1522, %v1523
      %v1525 = vsel %vm243, %v1388, -inf
      %v1526 = vsel %vm243, %v1389, -inf
      %v1527 = vmax.f32 %v1525, %v1526
      %v1528 = vrot.slane %v1527, 4
      %v1529 = vmax.f32 %v1527, %v1528
      %v1530 = vrot.slane %v1529, 2
      %v1531 = vmax.f32 %v1529, %v1530
      %v1532 = vrot.slane %v1531, 1
      %v1533 = vmax.f32 %v1531, %v1532
      %s1534 = sld [smem:[#allocation5 + %s196]]
      %s1535 = sld [smem:[#allocation6 + %s196]]
      %v1536 = vstv %s1534
      %vm1537 = vcmp.ge.s32.totalorder %v194, %v1536
      %vm1538 = vcmp.ge.s32.totalorder %v195, %v1536
      %v1539 = vstv %s1535
      %vm1540 = vcmp.lt.s32.totalorder %v194, %v1539
      %vm1541 = vcmp.lt.s32.totalorder %v195, %v1539
      %vm1542 = vmand %vm1537, %vm1540
      %vm1543 = vmand %vm1538, %vm1541
      %p1544 = scmp.le.s32.totalorder %s1535, %s1534
      %vm1561 = vcmask 1041409
      %v1562 = vsel %vm1561, %v261, %v252
      %vm1563 = vcmask 1042434
      %v1564 = vsel %vm1563, %v270, %v1562
      %vm1565 = vcmask 1043459
      %v1566 = vsel %vm1565, %v279, %v1564
      %vm1567 = vcmask 1044484
      %v1568 = vsel %vm1567, %v288, %v1566
      %vm1569 = vcmask 1045509
      %v1570 = vsel %vm1569, %v297, %v1568
      %vm1571 = vcmask 1046534
      %v1572 = vsel %vm1571, %v306, %v1570
      %vm1573 = vcmask 1047559
      %v1574 = vsel %vm1573, %v315, %v1572
      %v1575 = vsel %vm1561, %v333, %v324
      %v1576 = vsel %vm1563, %v342, %v1575
      %v1577 = vsel %vm1565, %v351, %v1576
      %v1578 = vsel %vm1567, %v360, %v1577
      %v1579 = vsel %vm1569, %v369, %v1578
      %v1580 = vsel %vm1571, %v378, %v1579
      %v1581 = vsel %vm1573, %v387, %v1580
      %v1584 = vsel %vm1542, %v1574, -inf
      %v1585 = vsel %vm1543, %v1581, -inf
      %v1586 = vsel %vm243, %v1584, -inf
      %v1587 = vsel %vm243, %v1585, -inf
      %v1588 = vmax.f32 %v1586, %v1587
      %v1589 = vrot.slane %v1588, 4
      %v1590 = vmax.f32 %v1588, %v1589
      %v1591 = vrot.slane %v1590, 2
      %v1592 = vmax.f32 %v1590, %v1591
      %v1593 = vrot.slane %v1592, 1
      %v1594 = vmax.f32 %v1592, %v1593
      %p1595 = scmp.le.s32.totalorder %s198, %s197
      %p1596 = por %p1544, %p1595
      %s1597 = scalar_select %p1596, 1, 0
      %v1598 = vstv %s1597
      %vm1599 = vcmp.eq.s32.totalorder %v1598, 1
      %v1600 = vsel %vm1599, 0.0, %v1594
      %vm1601 = vcmask 57344
      %1602 = vst.msk [vmem:[%s159] sm:$0x1] %vm1601, %v1600
      %s1603 = sld [smem:[#allocation7 + %s388]]
      %s1604 = sld [smem:[#allocation8 + %s388]]
      %v1621 = vsel %vm1561, %v452, %v443
      %v1622 = vsel %vm1563, %v461, %v1621
      %v1623 = vsel %vm1565, %v470, %v1622
      %v1624 = vsel %vm1567, %v479, %v1623
      %v1625 = vsel %vm1569, %v488, %v1624
      %v1626 = vsel %vm1571, %v497, %v1625
      %v1627 = vsel %vm1573, %v506, %v1626
      %v1628 = vsel %vm1561, %v524, %v515
      %v1629 = vsel %vm1563, %v533, %v1628
      %v1630 = vsel %vm1565, %v542, %v1629
      %v1631 = vsel %vm1567, %v551, %v1630
      %v1632 = vsel %vm1569, %v560, %v1631
      %v1633 = vsel %vm1571, %v569, %v1632
      %v1634 = vsel %vm1573, %v578, %v1633
      %v1637 = vsel %vm1542, %v1627, -inf
      %v1638 = vsel %vm1543, %v1634, -inf
      %v1639 = vsel %vm243, %v1637, -inf
      %v1640 = vsel %vm243, %v1638, -inf
      %v1641 = vmax.f32 %v1639, %v1640
      %v1642 = vrot.slane %v1641, 4
      %v1643 = vmax.f32 %v1641, %v1642
      %v1644 = vrot.slane %v1643, 2
      %v1645 = vmax.f32 %v1643, %v1644
      %v1646 = vrot.slane %v1645, 1
      %v1647 = vmax.f32 %v1645, %v1646
      %p1648 = scmp.le.s32.totalorder %s1604, %s1603
      %p1649 = por %p1544, %p1648
      %s1650 = scalar_select %p1649, 1, 0
      %v1651 = vstv %s1650
      %vm1652 = vcmp.eq.s32.totalorder %v1651, 1
      %v1653 = vsel %vm1652, 0.0, %v1647
      %1654 = vst.msk [vmem:[%s159 + $0x1] sm:$0x1] %vm1601, %v1653
      %s1655 = sld [smem:[#allocation7 + %s579]]
      %s1656 = sld [smem:[#allocation8 + %s579]]
      %v1673 = vsel %vm1561, %v643, %v634
      %v1674 = vsel %vm1563, %v652, %v1673
      %v1675 = vsel %vm1565, %v661, %v1674
      %v1676 = vsel %vm1567, %v670, %v1675
      %v1677 = vsel %vm1569, %v679, %v1676
      %v1678 = vsel %vm1571, %v688, %v1677
      %v1679 = vsel %vm1573, %v697, %v1678
      %v1680 = vsel %vm1561, %v715, %v706
      %v1681 = vsel %vm1563, %v724, %v1680
      %v1682 = vsel %vm1565, %v733, %v1681
      %v1683 = vsel %vm1567, %v742, %v1682
      %v1684 = vsel %vm1569, %v751, %v1683
      %v1685 = vsel %vm1571, %v760, %v1684
      %v1686 = vsel %vm1573, %v769, %v1685
      %v1689 = vsel %vm1542, %v1679, -inf
      %v1690 = vsel %vm1543, %v1686, -inf
      %v1691 = vsel %vm243, %v1689, -inf
      %v1692 = vsel %vm243, %v1690, -inf
      %v1693 = vmax.f32 %v1691, %v1692
      %v1694 = vrot.slane %v1693, 4
      %v1695 = vmax.f32 %v1693, %v1694
      %v1696 = vrot.slane %v1695, 2
      %v1697 = vmax.f32 %v1695, %v1696
      %v1698 = vrot.slane %v1697, 1
      %v1699 = vmax.f32 %v1697, %v1698
      %p1700 = scmp.le.s32.totalorder %s1656, %s1655
      %p1701 = por %p1544, %p1700
      %s1702 = scalar_select %p1701, 1, 0
      %v1703 = vstv %s1702
      %vm1704 = vcmp.eq.s32.totalorder %v1703, 1
      %v1705 = vsel %vm1704, 0.0, %v1699
      %1706 = vst.msk [vmem:[%s159 + $0x2] sm:$0x1] %vm1601, %v1705
      %s1707 = sld [smem:[#allocation7 + %s770]]
      %s1708 = sld [smem:[#allocation8 + %s770]]
      %v1725 = vsel %vm1561, %v834, %v825
      %v1726 = vsel %vm1563, %v843, %v1725
      %v1727 = vsel %vm1565, %v852, %v1726
      %v1728 = vsel %vm1567, %v861, %v1727
      %v1729 = vsel %vm1569, %v870, %v1728
      %v1730 = vsel %vm1571, %v879, %v1729
      %v1731 = vsel %vm1573, %v888, %v1730
      %v1732 = vsel %vm1561, %v906, %v897
      %v1733 = vsel %vm1563, %v915, %v1732
      %v1734 = vsel %vm1565, %v924, %v1733
      %v1735 = vsel %vm1567, %v933, %v1734
      %v1736 = vsel %vm1569, %v942, %v1735
      %v1737 = vsel %vm1571, %v951, %v1736
      %v1738 = vsel %vm1573, %v960, %v1737
      %v1741 = vsel %vm1542, %v1731, -inf
      %v1742 = vsel %vm1543, %v1738, -inf
      %v1743 = vsel %vm243, %v1741, -inf
      %v1744 = vsel %vm243, %v1742, -inf
      %v1745 = vmax.f32 %v1743, %v1744
      %v1746 = vrot.slane %v1745, 4
      %v1747 = vmax.f32 %v1745, %v1746
      %v1748 = vrot.slane %v1747, 2
      %v1749 = vmax.f32 %v1747, %v1748
      %v1750 = vrot.slane %v1749, 1
      %v1751 = vmax.f32 %v1749, %v1750
      %p1752 = scmp.le.s32.totalorder %s1708, %s1707
      %p1753 = por %p1544, %p1752
      %s1754 = scalar_select %p1753, 1, 0
      %v1755 = vstv %s1754
      %vm1756 = vcmp.eq.s32.totalorder %v1755, 1
      %v1757 = vsel %vm1756, 0.0, %v1751
      %1758 = vst.msk [vmem:[%s159 + $0x3] sm:$0x1] %vm1601, %v1757
      %s1759 = sld [smem:[#allocation7 + %s961]]
      %s1760 = sld [smem:[#allocation8 + %s961]]
      %v1777 = vsel %vm1561, %v1025, %v1016
      %v1778 = vsel %vm1563, %v1034, %v1777
      %v1779 = vsel %vm1565, %v1043, %v1778
      %v1780 = vsel %vm1567, %v1052, %v1779
      %v1781 = vsel %vm1569, %v1061, %v1780
      %v1782 = vsel %vm1571, %v1070, %v1781
      %v1783 = vsel %vm1573, %v1079, %v1782
      %v1784 = vsel %vm1561, %v1097, %v1088
      %v1785 = vsel %vm1563, %v1106, %v1784
      %v1786 = vsel %vm1565, %v1115, %v1785
      %v1787 = vsel %vm1567, %v1124, %v1786
      %v1788 = vsel %vm1569, %v1133, %v1787
      %v1789 = vsel %vm1571, %v1142, %v1788
      %v1790 = vsel %vm1573, %v1151, %v1789
      %v1793 = vsel %vm1542, %v1783, -inf
      %v1794 = vsel %vm1543, %v1790, -inf
      %v1795 = vsel %vm243, %v1793, -inf
      %v1796 = vsel %vm243, %v1794, -inf
      %v1797 = vmax.f32 %v1795, %v1796
      %v1798 = vrot.slane %v1797, 4
      %v1799 = vmax.f32 %v1797, %v1798
      %v1800 = vrot.slane %v1799, 2
      %v1801 = vmax.f32 %v1799, %v1800
      %v1802 = vrot.slane %v1801, 1
      %v1803 = vmax.f32 %v1801, %v1802
      %p1804 = scmp.le.s32.totalorder %s1760, %s1759
      %p1805 = por %p1544, %p1804
      %s1806 = scalar_select %p1805, 1, 0
      %v1807 = vstv %s1806
      %vm1808 = vcmp.eq.s32.totalorder %v1807, 1
      %v1809 = vsel %vm1808, 0.0, %v1803
      %1810 = vst.msk [vmem:[%s159 + $0x4] sm:$0x1] %vm1601, %v1809
      %s1811 = sld [smem:[#allocation7 + %s1152]]
      %s1812 = sld [smem:[#allocation8 + %s1152]]
      %v1829 = vsel %vm1561, %v1216, %v1207
      %v1830 = vsel %vm1563, %v1225, %v1829
      %v1831 = vsel %vm1565, %v1234, %v1830
      %v1832 = vsel %vm1567, %v1243, %v1831
      %v1833 = vsel %vm1569, %v1252, %v1832
      %v1834 = vsel %vm1571, %v1261, %v1833
      %v1835 = vsel %vm1573, %v1270, %v1834
      %v1836 = vsel %vm1561, %v1288, %v1279
      %v1837 = vsel %vm1563, %v1297, %v1836
      %v1838 = vsel %vm1565, %v1306, %v1837
      %v1839 = vsel %vm1567, %v1315, %v1838
      %v1840 = vsel %vm1569, %v1324, %v1839
      %v1841 = vsel %vm1571, %v1333, %v1840
      %v1842 = vsel %vm1573, %v1342, %v1841
      %v1845 = vsel %vm1542, %v1835, -inf
      %v1846 = vsel %vm1543, %v1842, -inf
      %v1847 = vsel %vm243, %v1845, -inf
      %v1848 = vsel %vm243, %v1846, -inf
      %v1849 = vmax.f32 %v1847, %v1848
      %v1850 = vrot.slane %v1849, 4
      %v1851 = vmax.f32 %v1849, %v1850
      %v1852 = vrot.slane %v1851, 2
      %v1853 = vmax.f32 %v1851, %v1852
      %v1854 = vrot.slane %v1853, 1
      %v1855 = vmax.f32 %v1853, %v1854
      %p1856 = scmp.le.s32.totalorder %s1812, %s1811
      %p1857 = por %p1544, %p1856
      %s1858 = scalar_select %p1857, 1, 0
      %v1859 = vstv %s1858
      %vm1860 = vcmp.eq.s32.totalorder %v1859, 1
      %v1861 = vsel %vm1860, 0.0, %v1855
      %1862 = vst.msk [vmem:[%s159 + $0x5] sm:$0x1] %vm1601, %v1861
      %s1863 = sld [smem:[#allocation7 + %s1343]]
      %s1864 = sld [smem:[#allocation8 + %s1343]]
      %v1881 = vsel %vm1561, %v1407, %v1398
      %v1882 = vsel %vm1563, %v1416, %v1881
      %v1883 = vsel %vm1565, %v1425, %v1882
      %v1884 = vsel %vm1567, %v1434, %v1883
      %v1885 = vsel %vm1569, %v1443, %v1884
      %v1886 = vsel %vm1571, %v1452, %v1885
      %v1887 = vsel %vm1573, %v1461, %v1886
      %v1888 = vsel %vm1561, %v1479, %v1470
      %v1889 = vsel %vm1563, %v1488, %v1888
      %v1890 = vsel %vm1565, %v1497, %v1889
      %v1891 = vsel %vm1567, %v1506, %v1890
      %v1892 = vsel %vm1569, %v1515, %v1891
      %v1893 = vsel %vm1571, %v1524, %v1892
      %v1894 = vsel %vm1573, %v1533, %v1893
      %v1897 = vsel %vm1542, %v1887, -inf
      %v1898 = vsel %vm1543, %v1894, -inf
      %v1899 = vsel %vm243, %v1897, -inf
      %v1900 = vsel %vm243, %v1898, -inf
      %v1901 = vmax.f32 %v1899, %v1900
      %v1902 = vrot.slane %v1901, 4
      %v1903 = vmax.f32 %v1901, %v1902
      %v1904 = vrot.slane %v1903, 2
      %v1905 = vmax.f32 %v1903, %v1904
      %v1906 = vrot.slane %v1905, 1
      %v1907 = vmax.f32 %v1905, %v1906
      %p1908 = scmp.le.s32.totalorder %s1864, %s1863
      %p1909 = por %p1544, %p1908
      %s1910 = scalar_select %p1909, 1, 0
      %v1911 = vstv %s1910
      %vm1912 = vcmp.eq.s32.totalorder %v1911, 1
      %v1913 = vsel %vm1912, 0.0, %v1907
      %1914 = vst.msk [vmem:[%s159 + $0x6] sm:$0x1] %vm1601, %v1913
      %s1915 = sld [smem:[#allocation5 + %s388]]
      %s1916 = sld [smem:[#allocation6 + %s388]]
      %v1917 = vstv %s1915
      %vm1918 = vcmp.ge.s32.totalorder %v194, %v1917
      %vm1919 = vcmp.ge.s32.totalorder %v195, %v1917
      %v1920 = vstv %s1916
      %vm1921 = vcmp.lt.s32.totalorder %v194, %v1920
      %vm1922 = vcmp.lt.s32.totalorder %v195, %v1920
      %vm1923 = vmand %vm1918, %vm1921
      %vm1924 = vmand %vm1919, %vm1922
      %p1925 = scmp.le.s32.totalorder %s1916, %s1915
      %s1926 = sld [smem:[#allocation7 + %s196]]
      %s1927 = sld [smem:[#allocation8 + %s196]]
      %v1928 = vsel %vm1923, %v1574, -inf
      %v1929 = vsel %vm1924, %v1581, -inf
      %v1930 = vsel %vm243, %v1928, -inf
      %v1931 = vsel %vm243, %v1929, -inf
      %v1932 = vmax.f32 %v1930, %v1931
      %v1933 = vrot.slane %v1932, 4
      %v1934 = vmax.f32 %v1932, %v1933
      %v1935 = vrot.slane %v1934, 2
      %v1936 = vmax.f32 %v1934, %v1935
      %v1937 = vrot.slane %v1936, 1
      %v1938 = vmax.f32 %v1936, %v1937
      %p1939 = scmp.le.s32.totalorder %s1927, %s1926
      %p1940 = por %p1925, %p1939
      %s1941 = scalar_select %p1940, 1, 0
      %v1942 = vstv %s1941
      %vm1943 = vcmp.eq.s32.totalorder %v1942, 1
      %v1944 = vsel %vm1943, 0.0, %v1938
      %1945 = vst.msk [vmem:[%s159 + $0x7] sm:$0x1] %vm1601, %v1944
      %s1946 = sld [smem:[#allocation7 + %s388]]
      %s1947 = sld [smem:[#allocation8 + %s388]]
      %v1948 = vsel %vm1923, %v1627, -inf
      %v1949 = vsel %vm1924, %v1634, -inf
      %v1950 = vsel %vm243, %v1948, -inf
      %v1951 = vsel %vm243, %v1949, -inf
      %v1952 = vmax.f32 %v1950, %v1951
      %v1953 = vrot.slane %v1952, 4
      %v1954 = vmax.f32 %v1952, %v1953
      %v1955 = vrot.slane %v1954, 2
      %v1956 = vmax.f32 %v1954, %v1955
      %v1957 = vrot.slane %v1956, 1
      %v1958 = vmax.f32 %v1956, %v1957
      %p1959 = scmp.le.s32.totalorder %s1947, %s1946
      %p1960 = por %p1925, %p1959
      %s1961 = scalar_select %p1960, 1, 0
      %v1962 = vstv %s1961
      %vm1963 = vcmp.eq.s32.totalorder %v1962, 1
      %v1964 = vsel %vm1963, 0.0, %v1958
      %1965 = vst.msk [vmem:[%s159 + $0x8] sm:$0x1] %vm1601, %v1964
      %s1966 = sld [smem:[#allocation7 + %s579]]
      %s1967 = sld [smem:[#allocation8 + %s579]]
      %v1968 = vsel %vm1923, %v1679, -inf
      %v1969 = vsel %vm1924, %v1686, -inf
      %v1970 = vsel %vm243, %v1968, -inf
      %v1971 = vsel %vm243, %v1969, -inf
      %v1972 = vmax.f32 %v1970, %v1971
      %v1973 = vrot.slane %v1972, 4
      %v1974 = vmax.f32 %v1972, %v1973
      %v1975 = vrot.slane %v1974, 2
      %v1976 = vmax.f32 %v1974, %v1975
      %v1977 = vrot.slane %v1976, 1
      %v1978 = vmax.f32 %v1976, %v1977
      %p1979 = scmp.le.s32.totalorder %s1967, %s1966
      %p1980 = por %p1925, %p1979
      %s1981 = scalar_select %p1980, 1, 0
      %v1982 = vstv %s1981
      %vm1983 = vcmp.eq.s32.totalorder %v1982, 1
      %v1984 = vsel %vm1983, 0.0, %v1978
      %1985 = vst.msk [vmem:[%s159 + $0x9] sm:$0x1] %vm1601, %v1984
      %s1986 = sld [smem:[#allocation7 + %s770]]
      %s1987 = sld [smem:[#allocation8 + %s770]]
      %v1988 = vsel %vm1923, %v1731, -inf
      %v1989 = vsel %vm1924, %v1738, -inf
      %v1990 = vsel %vm243, %v1988, -inf
      %v1991 = vsel %vm243, %v1989, -inf
      %v1992 = vmax.f32 %v1990, %v1991
      %v1993 = vrot.slane %v1992, 4
      %v1994 = vmax.f32 %v1992, %v1993
      %v1995 = vrot.slane %v1994, 2
      %v1996 = vmax.f32 %v1994, %v1995
      %v1997 = vrot.slane %v1996, 1
      %v1998 = vmax.f32 %v1996, %v1997
      %p1999 = scmp.le.s32.totalorder %s1987, %s1986
      %p2000 = por %p1925, %p1999
      %s2001 = scalar_select %p2000, 1, 0
      %v2002 = vstv %s2001
      %vm2003 = vcmp.eq.s32.totalorder %v2002, 1
      %v2004 = vsel %vm2003, 0.0, %v1998
      %2005 = vst.msk [vmem:[%s159 + $0xa] sm:$0x1] %vm1601, %v2004
      %s2006 = sld [smem:[#allocation7 + %s961]]
      %s2007 = sld [smem:[#allocation8 + %s961]]
      %v2008 = vsel %vm1923, %v1783, -inf
      %v2009 = vsel %vm1924, %v1790, -inf
      %v2010 = vsel %vm243, %v2008, -inf
      %v2011 = vsel %vm243, %v2009, -inf
      %v2012 = vmax.f32 %v2010, %v2011
      %v2013 = vrot.slane %v2012, 4
      %v2014 = vmax.f32 %v2012, %v2013
      %v2015 = vrot.slane %v2014, 2
      %v2016 = vmax.f32 %v2014, %v2015
      %v2017 = vrot.slane %v2016, 1
      %v2018 = vmax.f32 %v2016, %v2017
      %p2019 = scmp.le.s32.totalorder %s2007, %s2006
      %p2020 = por %p1925, %p2019
      %s2021 = scalar_select %p2020, 1, 0
      %v2022 = vstv %s2021
      %vm2023 = vcmp.eq.s32.totalorder %v2022, 1
      %v2024 = vsel %vm2023, 0.0, %v2018
      %2025 = vst.msk [vmem:[%s159 + $0xb] sm:$0x1] %vm1601, %v2024
      %s2026 = sld [smem:[#allocation7 + %s1152]]
      %s2027 = sld [smem:[#allocation8 + %s1152]]
      %v2028 = vsel %vm1923, %v1835, -inf
      %v2029 = vsel %vm1924, %v1842, -inf
      %v2030 = vsel %vm243, %v2028, -inf
      %v2031 = vsel %vm243, %v2029, -inf
      %v2032 = vmax.f32 %v2030, %v2031
      %v2033 = vrot.slane %v2032, 4
      %v2034 = vmax.f32 %v2032, %v2033
      %v2035 = vrot.slane %v2034, 2
      %v2036 = vmax.f32 %v2034, %v2035
      %v2037 = vrot.slane %v2036, 1
      %v2038 = vmax.f32 %v2036, %v2037
      %p2039 = scmp.le.s32.totalorder %s2027, %s2026
      %p2040 = por %p1925, %p2039
      %s2041 = scalar_select %p2040, 1, 0
      %v2042 = vstv %s2041
      %vm2043 = vcmp.eq.s32.totalorder %v2042, 1
      %v2044 = vsel %vm2043, 0.0, %v2038
      %2045 = vst.msk [vmem:[%s159 + $0xc] sm:$0x1] %vm1601, %v2044
      %s2046 = sld [smem:[#allocation7 + %s1343]]
      %s2047 = sld [smem:[#allocation8 + %s1343]]
      %v2048 = vsel %vm1923, %v1887, -inf
      %v2049 = vsel %vm1924, %v1894, -inf
      %v2050 = vsel %vm243, %v2048, -inf
      %v2051 = vsel %vm243, %v2049, -inf
      %v2052 = vmax.f32 %v2050, %v2051
      %v2053 = vrot.slane %v2052, 4
      %v2054 = vmax.f32 %v2052, %v2053
      %v2055 = vrot.slane %v2054, 2
      %v2056 = vmax.f32 %v2054, %v2055
      %v2057 = vrot.slane %v2056, 1
      %v2058 = vmax.f32 %v2056, %v2057
      %p2059 = scmp.le.s32.totalorder %s2047, %s2046
      %p2060 = por %p1925, %p2059
      %s2061 = scalar_select %p2060, 1, 0
      %v2062 = vstv %s2061
      %vm2063 = vcmp.eq.s32.totalorder %v2062, 1
      %v2064 = vsel %vm2063, 0.0, %v2058
      %2065 = vst.msk [vmem:[%s159 + $0xd] sm:$0x1] %vm1601, %v2064
      %s2066 = sld [smem:[#allocation5 + %s579]]
      %s2067 = sld [smem:[#allocation6 + %s579]]
      %v2068 = vstv %s2066
      %vm2069 = vcmp.ge.s32.totalorder %v194, %v2068
      %vm2070 = vcmp.ge.s32.totalorder %v195, %v2068
      %v2071 = vstv %s2067
      %vm2072 = vcmp.lt.s32.totalorder %v194, %v2071
      %vm2073 = vcmp.lt.s32.totalorder %v195, %v2071
      %vm2074 = vmand %vm2069, %vm2072
      %vm2075 = vmand %vm2070, %vm2073
      %p2076 = scmp.le.s32.totalorder %s2067, %s2066
      %s2077 = sld [smem:[#allocation7 + %s196]]
      %s2078 = sld [smem:[#allocation8 + %s196]]
      %v2079 = vsel %vm2074, %v1574, -inf
      %v2080 = vsel %vm2075, %v1581, -inf
      %v2081 = vsel %vm243, %v2079, -inf
      %v2082 = vsel %vm243, %v2080, -inf
      %v2083 = vmax.f32 %v2081, %v2082
      %v2084 = vrot.slane %v2083, 4
      %v2085 = vmax.f32 %v2083, %v2084
      %v2086 = vrot.slane %v2085, 2
      %v2087 = vmax.f32 %v2085, %v2086
      %v2088 = vrot.slane %v2087, 1
      %v2089 = vmax.f32 %v2087, %v2088
      %p2090 = scmp.le.s32.totalorder %s2078, %s2077
      %p2091 = por %p2076, %p2090
      %s2092 = scalar_select %p2091, 1, 0
      %v2093 = vstv %s2092
      %vm2094 = vcmp.eq.s32.totalorder %v2093, 1
      %v2095 = vsel %vm2094, 0.0, %v2089
      %2096 = vst.msk [vmem:[%s159 + $0xe] sm:$0x1] %vm1601, %v2095
      %s2097 = sld [smem:[#allocation7 + %s388]]
      %s2098 = sld [smem:[#allocation8 + %s388]]
      %v2099 = vsel %vm2074, %v1627, -inf
      %v2100 = vsel %vm2075, %v1634, -inf
      %v2101 = vsel %vm243, %v2099, -inf
      %v2102 = vsel %vm243, %v2100, -inf
      %v2103 = vmax.f32 %v2101, %v2102
      %v2104 = vrot.slane %v2103, 4
      %v2105 = vmax.f32 %v2103, %v2104
      %v2106 = vrot.slane %v2105, 2
      %v2107 = vmax.f32 %v2105, %v2106
      %v2108 = vrot.slane %v2107, 1
      %v2109 = vmax.f32 %v2107, %v2108
      %p2110 = scmp.le.s32.totalorder %s2098, %s2097
      %p2111 = por %p2076, %p2110
      %s2112 = scalar_select %p2111, 1, 0
      %v2113 = vstv %s2112
      %vm2114 = vcmp.eq.s32.totalorder %v2113, 1
      %v2115 = vsel %vm2114, 0.0, %v2109
      %2116 = vst.msk [vmem:[%s159 + $0xf] sm:$0x1] %vm1601, %v2115
      %s2117 = sld [smem:[#allocation7 + %s579]]
      %s2118 = sld [smem:[#allocation8 + %s579]]
      %v2119 = vsel %vm2074, %v1679, -inf
      %v2120 = vsel %vm2075, %v1686, -inf
      %v2121 = vsel %vm243, %v2119, -inf
      %v2122 = vsel %vm243, %v2120, -inf
      %v2123 = vmax.f32 %v2121, %v2122
      %v2124 = vrot.slane %v2123, 4
      %v2125 = vmax.f32 %v2123, %v2124
      %v2126 = vrot.slane %v2125, 2
      %v2127 = vmax.f32 %v2125, %v2126
      %v2128 = vrot.slane %v2127, 1
      %v2129 = vmax.f32 %v2127, %v2128
      %p2130 = scmp.le.s32.totalorder %s2118, %s2117
      %p2131 = por %p2076, %p2130
      %s2132 = scalar_select %p2131, 1, 0
      %v2133 = vstv %s2132
      %vm2134 = vcmp.eq.s32.totalorder %v2133, 1
      %v2135 = vsel %vm2134, 0.0, %v2129
      %2136 = vst.msk [vmem:[%s159 + $0x10] sm:$0x1] %vm1601, %v2135
      %s2137 = sld [smem:[#allocation7 + %s770]]
      %s2138 = sld [smem:[#allocation8 + %s770]]
      %v2139 = vsel %vm2074, %v1731, -inf
      %v2140 = vsel %vm2075, %v1738, -inf
      %v2141 = vsel %vm243, %v2139, -inf
      %v2142 = vsel %vm243, %v2140, -inf
      %v2143 = vmax.f32 %v2141, %v2142
      %v2144 = vrot.slane %v2143, 4
      %v2145 = vmax.f32 %v2143, %v2144
      %v2146 = vrot.slane %v2145, 2
      %v2147 = vmax.f32 %v2145, %v2146
      %v2148 = vrot.slane %v2147, 1
      %v2149 = vmax.f32 %v2147, %v2148
      %p2150 = scmp.le.s32.totalorder %s2138, %s2137
      %p2151 = por %p2076, %p2150
      %s2152 = scalar_select %p2151, 1, 0
      %v2153 = vstv %s2152
      %vm2154 = vcmp.eq.s32.totalorder %v2153, 1
      %v2155 = vsel %vm2154, 0.0, %v2149
      %2156 = vst.msk [vmem:[%s159 + $0x11] sm:$0x1] %vm1601, %v2155
      %s2157 = sld [smem:[#allocation7 + %s961]]
      %s2158 = sld [smem:[#allocation8 + %s961]]
      %v2159 = vsel %vm2074, %v1783, -inf
      %v2160 = vsel %vm2075, %v1790, -inf
      %v2161 = vsel %vm243, %v2159, -inf
      %v2162 = vsel %vm243, %v2160, -inf
      %v2163 = vmax.f32 %v2161, %v2162
      %v2164 = vrot.slane %v2163, 4
      %v2165 = vmax.f32 %v2163, %v2164
      %v2166 = vrot.slane %v2165, 2
      %v2167 = vmax.f32 %v2165, %v2166
      %v2168 = vrot.slane %v2167, 1
      %v2169 = vmax.f32 %v2167, %v2168
      %p2170 = scmp.le.s32.totalorder %s2158, %s2157
      %p2171 = por %p2076, %p2170
      %s2172 = scalar_select %p2171, 1, 0
      %v2173 = vstv %s2172
      %vm2174 = vcmp.eq.s32.totalorder %v2173, 1
      %v2175 = vsel %vm2174, 0.0, %v2169
      %2176 = vst.msk [vmem:[%s159 + $0x12] sm:$0x1] %vm1601, %v2175
      %s2177 = sld [smem:[#allocation7 + %s1152]]
      %s2178 = sld [smem:[#allocation8 + %s1152]]
      %v2179 = vsel %vm2074, %v1835, -inf
      %v2180 = vsel %vm2075, %v1842, -inf
      %v2181 = vsel %vm243, %v2179, -inf
      %v2182 = vsel %vm243, %v2180, -inf
      %v2183 = vmax.f32 %v2181, %v2182
      %v2184 = vrot.slane %v2183, 4
      %v2185 = vmax.f32 %v2183, %v2184
      %v2186 = vrot.slane %v2185, 2
      %v2187 = vmax.f32 %v2185, %v2186
      %v2188 = vrot.slane %v2187, 1
      %v2189 = vmax.f32 %v2187, %v2188
      %p2190 = scmp.le.s32.totalorder %s2178, %s2177
      %p2191 = por %p2076, %p2190
      %s2192 = scalar_select %p2191, 1, 0
      %v2193 = vstv %s2192
      %vm2194 = vcmp.eq.s32.totalorder %v2193, 1
      %v2195 = vsel %vm2194, 0.0, %v2189
      %2196 = vst.msk [vmem:[%s159 + $0x13] sm:$0x1] %vm1601, %v2195
      %s2197 = sld [smem:[#allocation7 + %s1343]]
      %s2198 = sld [smem:[#allocation8 + %s1343]]
      %v2199 = vsel %vm2074, %v1887, -inf
      %v2200 = vsel %vm2075, %v1894, -inf
      %v2201 = vsel %vm243, %v2199, -inf
      %v2202 = vsel %vm243, %v2200, -inf
      %v2203 = vmax.f32 %v2201, %v2202
      %v2204 = vrot.slane %v2203, 4
      %v2205 = vmax.f32 %v2203, %v2204
      %v2206 = vrot.slane %v2205, 2
      %v2207 = vmax.f32 %v2205, %v2206
      %v2208 = vrot.slane %v2207, 1
      %v2209 = vmax.f32 %v2207, %v2208
      %p2210 = scmp.le.s32.totalorder %s2198, %s2197
      %p2211 = por %p2076, %p2210
      %s2212 = scalar_select %p2211, 1, 0
      %v2213 = vstv %s2212
      %vm2214 = vcmp.eq.s32.totalorder %v2213, 1
      %v2215 = vsel %vm2214, 0.0, %v2209
      %2216 = vst.msk [vmem:[%s159 + $0x14] sm:$0x1] %vm1601, %v2215
      %s2217 = sld [smem:[#allocation5 + %s770]]
      %s2218 = sld [smem:[#allocation6 + %s770]]
      %v2219 = vstv %s2217
      %vm2220 = vcmp.ge.s32.totalorder %v194, %v2219
      %vm2221 = vcmp.ge.s32.totalorder %v195, %v2219
      %v2222 = vstv %s2218
      %vm2223 = vcmp.lt.s32.totalorder %v194, %v2222
      %vm2224 = vcmp.lt.s32.totalorder %v195, %v2222
      %vm2225 = vmand %vm2220, %vm2223
      %vm2226 = vmand %vm2221, %vm2224
      %p2227 = scmp.le.s32.totalorder %s2218, %s2217
      %s2228 = sld [smem:[#allocation7 + %s196]]
      %s2229 = sld [smem:[#allocation8 + %s196]]
      %v2230 = vsel %vm2225, %v1574, -inf
      %v2231 = vsel %vm2226, %v1581, -inf
      %v2232 = vsel %vm243, %v2230, -inf
      %v2233 = vsel %vm243, %v2231, -inf
      %v2234 = vmax.f32 %v2232, %v2233
      %v2235 = vrot.slane %v2234, 4
      %v2236 = vmax.f32 %v2234, %v2235
      %v2237 = vrot.slane %v2236, 2
      %v2238 = vmax.f32 %v2236, %v2237
      %v2239 = vrot.slane %v2238, 1
      %v2240 = vmax.f32 %v2238, %v2239
      %p2241 = scmp.le.s32.totalorder %s2229, %s2228
      %p2242 = por %p2227, %p2241
      %s2243 = scalar_select %p2242, 1, 0
      %v2244 = vstv %s2243
      %vm2245 = vcmp.eq.s32.totalorder %v2244, 1
      %v2246 = vsel %vm2245, 0.0, %v2240
      %2247 = vst.msk [vmem:[%s159 + $0x15] sm:$0x1] %vm1601, %v2246
      %s2248 = sld [smem:[#allocation7 + %s388]]
      %s2249 = sld [smem:[#allocation8 + %s388]]
      %v2250 = vsel %vm2225, %v1627, -inf
      %v2251 = vsel %vm2226, %v1634, -inf
      %v2252 = vsel %vm243, %v2250, -inf
      %v2253 = vsel %vm243, %v2251, -inf
      %v2254 = vmax.f32 %v2252, %v2253
      %v2255 = vrot.slane %v2254, 4
      %v2256 = vmax.f32 %v2254, %v2255
      %v2257 = vrot.slane %v2256, 2
      %v2258 = vmax.f32 %v2256, %v2257
      %v2259 = vrot.slane %v2258, 1
      %v2260 = vmax.f32 %v2258, %v2259
      %p2261 = scmp.le.s32.totalorder %s2249, %s2248
      %p2262 = por %p2227, %p2261
      %s2263 = scalar_select %p2262, 1, 0
      %v2264 = vstv %s2263
      %vm2265 = vcmp.eq.s32.totalorder %v2264, 1
      %v2266 = vsel %vm2265, 0.0, %v2260
      %2267 = vst.msk [vmem:[%s159 + $0x16] sm:$0x1] %vm1601, %v2266
      %s2268 = sld [smem:[#allocation7 + %s579]]
      %s2269 = sld [smem:[#allocation8 + %s579]]
      %v2270 = vsel %vm2225, %v1679, -inf
      %v2271 = vsel %vm2226, %v1686, -inf
      %v2272 = vsel %vm243, %v2270, -inf
      %v2273 = vsel %vm243, %v2271, -inf
      %v2274 = vmax.f32 %v2272, %v2273
      %v2275 = vrot.slane %v2274, 4
      %v2276 = vmax.f32 %v2274, %v2275
      %v2277 = vrot.slane %v2276, 2
      %v2278 = vmax.f32 %v2276, %v2277
      %v2279 = vrot.slane %v2278, 1
      %v2280 = vmax.f32 %v2278, %v2279
      %p2281 = scmp.le.s32.totalorder %s2269, %s2268
      %p2282 = por %p2227, %p2281
      %s2283 = scalar_select %p2282, 1, 0
      %v2284 = vstv %s2283
      %vm2285 = vcmp.eq.s32.totalorder %v2284, 1
      %v2286 = vsel %vm2285, 0.0, %v2280
      %2287 = vst.msk [vmem:[%s159 + $0x17] sm:$0x1] %vm1601, %v2286
      %s2288 = sld [smem:[#allocation7 + %s770]]
      %s2289 = sld [smem:[#allocation8 + %s770]]
      %v2290 = vsel %vm2225, %v1731, -inf
      %v2291 = vsel %vm2226, %v1738, -inf
      %v2292 = vsel %vm243, %v2290, -inf
      %v2293 = vsel %vm243, %v2291, -inf
      %v2294 = vmax.f32 %v2292, %v2293
      %v2295 = vrot.slane %v2294, 4
      %v2296 = vmax.f32 %v2294, %v2295
      %v2297 = vrot.slane %v2296, 2
      %v2298 = vmax.f32 %v2296, %v2297
      %v2299 = vrot.slane %v2298, 1
      %v2300 = vmax.f32 %v2298, %v2299
      %p2301 = scmp.le.s32.totalorder %s2289, %s2288
      %p2302 = por %p2227, %p2301
      %s2303 = scalar_select %p2302, 1, 0
      %v2304 = vstv %s2303
      %vm2305 = vcmp.eq.s32.totalorder %v2304, 1
      %v2306 = vsel %vm2305, 0.0, %v2300
      %2307 = vst.msk [vmem:[%s159 + $0x18] sm:$0x1] %vm1601, %v2306
      %s2308 = sld [smem:[#allocation7 + %s961]]
      %s2309 = sld [smem:[#allocation8 + %s961]]
      %v2310 = vsel %vm2225, %v1783, -inf
      %v2311 = vsel %vm2226, %v1790, -inf
      %v2312 = vsel %vm243, %v2310, -inf
      %v2313 = vsel %vm243, %v2311, -inf
      %v2314 = vmax.f32 %v2312, %v2313
      %v2315 = vrot.slane %v2314, 4
      %v2316 = vmax.f32 %v2314, %v2315
      %v2317 = vrot.slane %v2316, 2
      %v2318 = vmax.f32 %v2316, %v2317
      %v2319 = vrot.slane %v2318, 1
      %v2320 = vmax.f32 %v2318, %v2319
      %p2321 = scmp.le.s32.totalorder %s2309, %s2308
      %p2322 = por %p2227, %p2321
      %s2323 = scalar_select %p2322, 1, 0
      %v2324 = vstv %s2323
      %vm2325 = vcmp.eq.s32.totalorder %v2324, 1
      %v2326 = vsel %vm2325, 0.0, %v2320
      %2327 = vst.msk [vmem:[%s159 + $0x19] sm:$0x1] %vm1601, %v2326
      %s2328 = sld [smem:[#allocation7 + %s1152]]
      %s2329 = sld [smem:[#allocation8 + %s1152]]
      %v2330 = vsel %vm2225, %v1835, -inf
      %v2331 = vsel %vm2226, %v1842, -inf
      %v2332 = vsel %vm243, %v2330, -inf
      %v2333 = vsel %vm243, %v2331, -inf
      %v2334 = vmax.f32 %v2332, %v2333
      %v2335 = vrot.slane %v2334, 4
      %v2336 = vmax.f32 %v2334, %v2335
      %v2337 = vrot.slane %v2336, 2
      %v2338 = vmax.f32 %v2336, %v2337
      %v2339 = vrot.slane %v2338, 1
      %v2340 = vmax.f32 %v2338, %v2339
      %p2341 = scmp.le.s32.totalorder %s2329, %s2328
      %p2342 = por %p2227, %p2341
      %s2343 = scalar_select %p2342, 1, 0
      %v2344 = vstv %s2343
      %vm2345 = vcmp.eq.s32.totalorder %v2344, 1
      %v2346 = vsel %vm2345, 0.0, %v2340
      %2347 = vst.msk [vmem:[%s159 + $0x1a] sm:$0x1] %vm1601, %v2346
      %s2348 = sld [smem:[#allocation7 + %s1343]]
      %s2349 = sld [smem:[#allocation8 + %s1343]]
      %v2350 = vsel %vm2225, %v1887, -inf
      %v2351 = vsel %vm2226, %v1894, -inf
      %v2352 = vsel %vm243, %v2350, -inf
      %v2353 = vsel %vm243, %v2351, -inf
      %v2354 = vmax.f32 %v2352, %v2353
      %v2355 = vrot.slane %v2354, 4
      %v2356 = vmax.f32 %v2354, %v2355
      %v2357 = vrot.slane %v2356, 2
      %v2358 = vmax.f32 %v2356, %v2357
      %v2359 = vrot.slane %v2358, 1
      %v2360 = vmax.f32 %v2358, %v2359
      %p2361 = scmp.le.s32.totalorder %s2349, %s2348
      %p2362 = por %p2227, %p2361
      %s2363 = scalar_select %p2362, 1, 0
      %v2364 = vstv %s2363
      %vm2365 = vcmp.eq.s32.totalorder %v2364, 1
      %v2366 = vsel %vm2365, 0.0, %v2360
      %2367 = vst.msk [vmem:[%s159 + $0x1b] sm:$0x1] %vm1601, %v2366
      %s2368 = sld [smem:[#allocation5 + %s961]]
      %s2369 = sld [smem:[#allocation6 + %s961]]
      %v2370 = vstv %s2368
      %vm2371 = vcmp.ge.s32.totalorder %v194, %v2370
      %vm2372 = vcmp.ge.s32.totalorder %v195, %v2370
      %v2373 = vstv %s2369
      %vm2374 = vcmp.lt.s32.totalorder %v194, %v2373
      %vm2375 = vcmp.lt.s32.totalorder %v195, %v2373
      %vm2376 = vmand %vm2371, %vm2374
      %vm2377 = vmand %vm2372, %vm2375
      %p2378 = scmp.le.s32.totalorder %s2369, %s2368
      %s2379 = sld [smem:[#allocation7 + %s196]]
      %s2380 = sld [smem:[#allocation8 + %s196]]
      %v2381 = vsel %vm2376, %v1574, -inf
      %v2382 = vsel %vm2377, %v1581, -inf
      %v2383 = vsel %vm243, %v2381, -inf
      %v2384 = vsel %vm243, %v2382, -inf
      %v2385 = vmax.f32 %v2383, %v2384
      %v2386 = vrot.slane %v2385, 4
      %v2387 = vmax.f32 %v2385, %v2386
      %v2388 = vrot.slane %v2387, 2
      %v2389 = vmax.f32 %v2387, %v2388
      %v2390 = vrot.slane %v2389, 1
      %v2391 = vmax.f32 %v2389, %v2390
      %p2392 = scmp.le.s32.totalorder %s2380, %s2379
      %p2393 = por %p2378, %p2392
      %s2394 = scalar_select %p2393, 1, 0
      %v2395 = vstv %s2394
      %vm2396 = vcmp.eq.s32.totalorder %v2395, 1
      %v2397 = vsel %vm2396, 0.0, %v2391
      %2398 = vst.msk [vmem:[%s159 + $0x1c] sm:$0x1] %vm1601, %v2397
      %s2399 = sld [smem:[#allocation7 + %s388]]
      %s2400 = sld [smem:[#allocation8 + %s388]]
      %v2401 = vsel %vm2376, %v1627, -inf
      %v2402 = vsel %vm2377, %v1634, -inf
      %v2403 = vsel %vm243, %v2401, -inf
      %v2404 = vsel %vm243, %v2402, -inf
      %v2405 = vmax.f32 %v2403, %v2404
      %v2406 = vrot.slane %v2405, 4
      %v2407 = vmax.f32 %v2405, %v2406
      %v2408 = vrot.slane %v2407, 2
      %v2409 = vmax.f32 %v2407, %v2408
      %v2410 = vrot.slane %v2409, 1
      %v2411 = vmax.f32 %v2409, %v2410
      %p2412 = scmp.le.s32.totalorder %s2400, %s2399
      %p2413 = por %p2378, %p2412
      %s2414 = scalar_select %p2413, 1, 0
      %v2415 = vstv %s2414
      %vm2416 = vcmp.eq.s32.totalorder %v2415, 1
      %v2417 = vsel %vm2416, 0.0, %v2411
      %2418 = vst.msk [vmem:[%s159 + $0x1d] sm:$0x1] %vm1601, %v2417
      %s2419 = sld [smem:[#allocation7 + %s579]]
      %s2420 = sld [smem:[#allocation8 + %s579]]
      %v2421 = vsel %vm2376, %v1679, -inf
      %v2422 = vsel %vm2377, %v1686, -inf
      %v2423 = vsel %vm243, %v2421, -inf
      %v2424 = vsel %vm243, %v2422, -inf
      %v2425 = vmax.f32 %v2423, %v2424
      %v2426 = vrot.slane %v2425, 4
      %v2427 = vmax.f32 %v2425, %v2426
      %v2428 = vrot.slane %v2427, 2
      %v2429 = vmax.f32 %v2427, %v2428
      %v2430 = vrot.slane %v2429, 1
      %v2431 = vmax.f32 %v2429, %v2430
      %p2432 = scmp.le.s32.totalorder %s2420, %s2419
      %p2433 = por %p2378, %p2432
      %s2434 = scalar_select %p2433, 1, 0
      %v2435 = vstv %s2434
      %vm2436 = vcmp.eq.s32.totalorder %v2435, 1
      %v2437 = vsel %vm2436, 0.0, %v2431
      %2438 = vst.msk [vmem:[%s159 + $0x1e] sm:$0x1] %vm1601, %v2437
      %s2439 = sld [smem:[#allocation7 + %s770]]
      %s2440 = sld [smem:[#allocation8 + %s770]]
      %v2441 = vsel %vm2376, %v1731, -inf
      %v2442 = vsel %vm2377, %v1738, -inf
      %v2443 = vsel %vm243, %v2441, -inf
      %v2444 = vsel %vm243, %v2442, -inf
      %v2445 = vmax.f32 %v2443, %v2444
      %v2446 = vrot.slane %v2445, 4
      %v2447 = vmax.f32 %v2445, %v2446
      %v2448 = vrot.slane %v2447, 2
      %v2449 = vmax.f32 %v2447, %v2448
      %v2450 = vrot.slane %v2449, 1
      %v2451 = vmax.f32 %v2449, %v2450
      %p2452 = scmp.le.s32.totalorder %s2440, %s2439
      %p2453 = por %p2378, %p2452
      %s2454 = scalar_select %p2453, 1, 0
      %v2455 = vstv %s2454
      %vm2456 = vcmp.eq.s32.totalorder %v2455, 1
      %v2457 = vsel %vm2456, 0.0, %v2451
      %2458 = vst.msk [vmem:[%s159 + $0x1f] sm:$0x1] %vm1601, %v2457
      %s2459 = sld [smem:[#allocation7 + %s961]]
      %s2460 = sld [smem:[#allocation8 + %s961]]
      %v2461 = vsel %vm2376, %v1783, -inf
      %v2462 = vsel %vm2377, %v1790, -inf
      %v2463 = vsel %vm243, %v2461, -inf
      %v2464 = vsel %vm243, %v2462, -inf
      %v2465 = vmax.f32 %v2463, %v2464
      %v2466 = vrot.slane %v2465, 4
      %v2467 = vmax.f32 %v2465, %v2466
      %v2468 = vrot.slane %v2467, 2
      %v2469 = vmax.f32 %v2467, %v2468
      %v2470 = vrot.slane %v2469, 1
      %v2471 = vmax.f32 %v2469, %v2470
      %p2472 = scmp.le.s32.totalorder %s2460, %s2459
      %p2473 = por %p2378, %p2472
      %s2474 = scalar_select %p2473, 1, 0
      %v2475 = vstv %s2474
      %vm2476 = vcmp.eq.s32.totalorder %v2475, 1
      %v2477 = vsel %vm2476, 0.0, %v2471
      %2478 = vst.msk [vmem:[%s159 + $0x20] sm:$0x1] %vm1601, %v2477
      %s2479 = sld [smem:[#allocation7 + %s1152]]
      %s2480 = sld [smem:[#allocation8 + %s1152]]
      %v2481 = vsel %vm2376, %v1835, -inf
      %v2482 = vsel %vm2377, %v1842, -inf
      %v2483 = vsel %vm243, %v2481, -inf
      %v2484 = vsel %vm243, %v2482, -inf
      %v2485 = vmax.f32 %v2483, %v2484
      %v2486 = vrot.slane %v2485, 4
      %v2487 = vmax.f32 %v2485, %v2486
      %v2488 = vrot.slane %v2487, 2
      %v2489 = vmax.f32 %v2487, %v2488
      %v2490 = vrot.slane %v2489, 1
      %v2491 = vmax.f32 %v2489, %v2490
      %p2492 = scmp.le.s32.totalorder %s2480, %s2479
      %p2493 = por %p2378, %p2492
      %s2494 = scalar_select %p2493, 1, 0
      %v2495 = vstv %s2494
      %vm2496 = vcmp.eq.s32.totalorder %v2495, 1
      %v2497 = vsel %vm2496, 0.0, %v2491
      %2498 = vst.msk [vmem:[%s159 + $0x21] sm:$0x1] %vm1601, %v2497
      %s2499 = sld [smem:[#allocation7 + %s1343]]
      %s2500 = sld [smem:[#allocation8 + %s1343]]
      %v2501 = vsel %vm2376, %v1887, -inf
      %v2502 = vsel %vm2377, %v1894, -inf
      %v2503 = vsel %vm243, %v2501, -inf
      %v2504 = vsel %vm243, %v2502, -inf
      %v2505 = vmax.f32 %v2503, %v2504
      %v2506 = vrot.slane %v2505, 4
      %v2507 = vmax.f32 %v2505, %v2506
      %v2508 = vrot.slane %v2507, 2
      %v2509 = vmax.f32 %v2507, %v2508
      %v2510 = vrot.slane %v2509, 1
      %v2511 = vmax.f32 %v2509, %v2510
      %p2512 = scmp.le.s32.totalorder %s2500, %s2499
      %p2513 = por %p2378, %p2512
      %s2514 = scalar_select %p2513, 1, 0
      %v2515 = vstv %s2514
      %vm2516 = vcmp.eq.s32.totalorder %v2515, 1
      %v2517 = vsel %vm2516, 0.0, %v2511
      %2518 = vst.msk [vmem:[%s159 + $0x22] sm:$0x1] %vm1601, %v2517
      %s2519 = sld [smem:[#allocation5 + %s1152]]
      %s2520 = sld [smem:[#allocation6 + %s1152]]
      %v2521 = vstv %s2519
      %vm2522 = vcmp.ge.s32.totalorder %v194, %v2521
      %vm2523 = vcmp.ge.s32.totalorder %v195, %v2521
      %v2524 = vstv %s2520
      %vm2525 = vcmp.lt.s32.totalorder %v194, %v2524
      %vm2526 = vcmp.lt.s32.totalorder %v195, %v2524
      %vm2527 = vmand %vm2522, %vm2525
      %vm2528 = vmand %vm2523, %vm2526
      %p2529 = scmp.le.s32.totalorder %s2520, %s2519
      %s2530 = sld [smem:[#allocation7 + %s196]]
      %s2531 = sld [smem:[#allocation8 + %s196]]
      %v2532 = vsel %vm2527, %v1574, -inf
      %v2533 = vsel %vm2528, %v1581, -inf
      %v2534 = vsel %vm243, %v2532, -inf
      %v2535 = vsel %vm243, %v2533, -inf
      %v2536 = vmax.f32 %v2534, %v2535
      %v2537 = vrot.slane %v2536, 4
      %v2538 = vmax.f32 %v2536, %v2537
      %v2539 = vrot.slane %v2538, 2
      %v2540 = vmax.f32 %v2538, %v2539
      %v2541 = vrot.slane %v2540, 1
      %v2542 = vmax.f32 %v2540, %v2541
      %p2543 = scmp.le.s32.totalorder %s2531, %s2530
      %p2544 = por %p2529, %p2543
      %s2545 = scalar_select %p2544, 1, 0
      %v2546 = vstv %s2545
      %vm2547 = vcmp.eq.s32.totalorder %v2546, 1
      %v2548 = vsel %vm2547, 0.0, %v2542
      %2549 = vst.msk [vmem:[%s159 + $0x23] sm:$0x1] %vm1601, %v2548
      %s2550 = sld [smem:[#allocation7 + %s388]]
      %s2551 = sld [smem:[#allocation8 + %s388]]
      %v2552 = vsel %vm2527, %v1627, -inf
      %v2553 = vsel %vm2528, %v1634, -inf
      %v2554 = vsel %vm243, %v2552, -inf
      %v2555 = vsel %vm243, %v2553, -inf
      %v2556 = vmax.f32 %v2554, %v2555
      %v2557 = vrot.slane %v2556, 4
      %v2558 = vmax.f32 %v2556, %v2557
      %v2559 = vrot.slane %v2558, 2
      %v2560 = vmax.f32 %v2558, %v2559
      %v2561 = vrot.slane %v2560, 1
      %v2562 = vmax.f32 %v2560, %v2561
      %p2563 = scmp.le.s32.totalorder %s2551, %s2550
      %p2564 = por %p2529, %p2563
      %s2565 = scalar_select %p2564, 1, 0
      %v2566 = vstv %s2565
      %vm2567 = vcmp.eq.s32.totalorder %v2566, 1
      %v2568 = vsel %vm2567, 0.0, %v2562
      %2569 = vst.msk [vmem:[%s159 + $0x24] sm:$0x1] %vm1601, %v2568
      %s2570 = sld [smem:[#allocation7 + %s579]]
      %s2571 = sld [smem:[#allocation8 + %s579]]
      %v2572 = vsel %vm2527, %v1679, -inf
      %v2573 = vsel %vm2528, %v1686, -inf
      %v2574 = vsel %vm243, %v2572, -inf
      %v2575 = vsel %vm243, %v2573, -inf
      %v2576 = vmax.f32 %v2574, %v2575
      %v2577 = vrot.slane %v2576, 4
      %v2578 = vmax.f32 %v2576, %v2577
      %v2579 = vrot.slane %v2578, 2
      %v2580 = vmax.f32 %v2578, %v2579
      %v2581 = vrot.slane %v2580, 1
      %v2582 = vmax.f32 %v2580, %v2581
      %p2583 = scmp.le.s32.totalorder %s2571, %s2570
      %p2584 = por %p2529, %p2583
      %s2585 = scalar_select %p2584, 1, 0
      %v2586 = vstv %s2585
      %vm2587 = vcmp.eq.s32.totalorder %v2586, 1
      %v2588 = vsel %vm2587, 0.0, %v2582
      %2589 = vst.msk [vmem:[%s159 + $0x25] sm:$0x1] %vm1601, %v2588
      %s2590 = sld [smem:[#allocation7 + %s770]]
      %s2591 = sld [smem:[#allocation8 + %s770]]
      %v2592 = vsel %vm2527, %v1731, -inf
      %v2593 = vsel %vm2528, %v1738, -inf
      %v2594 = vsel %vm243, %v2592, -inf
      %v2595 = vsel %vm243, %v2593, -inf
      %v2596 = vmax.f32 %v2594, %v2595
      %v2597 = vrot.slane %v2596, 4
      %v2598 = vmax.f32 %v2596, %v2597
      %v2599 = vrot.slane %v2598, 2
      %v2600 = vmax.f32 %v2598, %v2599
      %v2601 = vrot.slane %v2600, 1
      %v2602 = vmax.f32 %v2600, %v2601
      %p2603 = scmp.le.s32.totalorder %s2591, %s2590
      %p2604 = por %p2529, %p2603
      %s2605 = scalar_select %p2604, 1, 0
      %v2606 = vstv %s2605
      %vm2607 = vcmp.eq.s32.totalorder %v2606, 1
      %v2608 = vsel %vm2607, 0.0, %v2602
      %2609 = vst.msk [vmem:[%s159 + $0x26] sm:$0x1] %vm1601, %v2608
      %s2610 = sld [smem:[#allocation7 + %s961]]
      %s2611 = sld [smem:[#allocation8 + %s961]]
      %v2612 = vsel %vm2527, %v1783, -inf
      %v2613 = vsel %vm2528, %v1790, -inf
      %v2614 = vsel %vm243, %v2612, -inf
      %v2615 = vsel %vm243, %v2613, -inf
      %v2616 = vmax.f32 %v2614, %v2615
      %v2617 = vrot.slane %v2616, 4
      %v2618 = vmax.f32 %v2616, %v2617
      %v2619 = vrot.slane %v2618, 2
      %v2620 = vmax.f32 %v2618, %v2619
      %v2621 = vrot.slane %v2620, 1
      %v2622 = vmax.f32 %v2620, %v2621
      %p2623 = scmp.le.s32.totalorder %s2611, %s2610
      %p2624 = por %p2529, %p2623
      %s2625 = scalar_select %p2624, 1, 0
      %v2626 = vstv %s2625
      %vm2627 = vcmp.eq.s32.totalorder %v2626, 1
      %v2628 = vsel %vm2627, 0.0, %v2622
      %2629 = vst.msk [vmem:[%s159 + $0x27] sm:$0x1] %vm1601, %v2628
      %s2630 = sld [smem:[#allocation7 + %s1152]]
      %s2631 = sld [smem:[#allocation8 + %s1152]]
      %v2632 = vsel %vm2527, %v1835, -inf
      %v2633 = vsel %vm2528, %v1842, -inf
      %v2634 = vsel %vm243, %v2632, -inf
      %v2635 = vsel %vm243, %v2633, -inf
      %v2636 = vmax.f32 %v2634, %v2635
      %v2637 = vrot.slane %v2636, 4
      %v2638 = vmax.f32 %v2636, %v2637
      %v2639 = vrot.slane %v2638, 2
      %v2640 = vmax.f32 %v2638, %v2639
      %v2641 = vrot.slane %v2640, 1
      %v2642 = vmax.f32 %v2640, %v2641
      %p2643 = scmp.le.s32.totalorder %s2631, %s2630
      %p2644 = por %p2529, %p2643
      %s2645 = scalar_select %p2644, 1, 0
      %v2646 = vstv %s2645
      %vm2647 = vcmp.eq.s32.totalorder %v2646, 1
      %v2648 = vsel %vm2647, 0.0, %v2642
      %2649 = vst.msk [vmem:[%s159 + $0x28] sm:$0x1] %vm1601, %v2648
      %s2650 = sld [smem:[#allocation7 + %s1343]]
      %s2651 = sld [smem:[#allocation8 + %s1343]]
      %v2652 = vsel %vm2527, %v1887, -inf
      %v2653 = vsel %vm2528, %v1894, -inf
      %v2654 = vsel %vm243, %v2652, -inf
      %v2655 = vsel %vm243, %v2653, -inf
      %v2656 = vmax.f32 %v2654, %v2655
      %v2657 = vrot.slane %v2656, 4
      %v2658 = vmax.f32 %v2656, %v2657
      %v2659 = vrot.slane %v2658, 2
      %v2660 = vmax.f32 %v2658, %v2659
      %v2661 = vrot.slane %v2660, 1
      %v2662 = vmax.f32 %v2660, %v2661
      %p2663 = scmp.le.s32.totalorder %s2651, %s2650
      %p2664 = por %p2529, %p2663
      %s2665 = scalar_select %p2664, 1, 0
      %v2666 = vstv %s2665
      %vm2667 = vcmp.eq.s32.totalorder %v2666, 1
      %v2668 = vsel %vm2667, 0.0, %v2662
      %2669 = vst.msk [vmem:[%s159 + $0x29] sm:$0x1] %vm1601, %v2668
      %s2670 = sld [smem:[#allocation5 + %s1343]]
      %s2671 = sld [smem:[#allocation6 + %s1343]]
      %v2672 = vstv %s2670
      %vm2673 = vcmp.ge.s32.totalorder %v194, %v2672
      %vm2674 = vcmp.ge.s32.totalorder %v195, %v2672
      %v2675 = vstv %s2671
      %vm2676 = vcmp.lt.s32.totalorder %v194, %v2675
      %vm2677 = vcmp.lt.s32.totalorder %v195, %v2675
      %vm2678 = vmand %vm2673, %vm2676
      %vm2679 = vmand %vm2674, %vm2677
      %p2680 = scmp.le.s32.totalorder %s2671, %s2670
      %s2681 = sld [smem:[#allocation7 + %s196]]
      %s2682 = sld [smem:[#allocation8 + %s196]]
      %v2683 = vsel %vm2678, %v1574, -inf
      %v2684 = vsel %vm2679, %v1581, -inf
      %v2685 = vsel %vm243, %v2683, -inf
      %v2686 = vsel %vm243, %v2684, -inf
      %v2687 = vmax.f32 %v2685, %v2686
      %v2688 = vrot.slane %v2687, 4
      %v2689 = vmax.f32 %v2687, %v2688
      %v2690 = vrot.slane %v2689, 2
      %v2691 = vmax.f32 %v2689, %v2690
      %v2692 = vrot.slane %v2691, 1
      %v2693 = vmax.f32 %v2691, %v2692
      %p2694 = scmp.le.s32.totalorder %s2682, %s2681
      %p2695 = por %p2680, %p2694
      %s2696 = scalar_select %p2695, 1, 0
      %v2697 = vstv %s2696
      %vm2698 = vcmp.eq.s32.totalorder %v2697, 1
      %v2699 = vsel %vm2698, 0.0, %v2693
      %2700 = vst.msk [vmem:[%s159 + $0x2a] sm:$0x1] %vm1601, %v2699
      %s2701 = sld [smem:[#allocation7 + %s388]]
      %s2702 = sld [smem:[#allocation8 + %s388]]
      %v2703 = vsel %vm2678, %v1627, -inf
      %v2704 = vsel %vm2679, %v1634, -inf
      %v2705 = vsel %vm243, %v2703, -inf
      %v2706 = vsel %vm243, %v2704, -inf
      %v2707 = vmax.f32 %v2705, %v2706
      %v2708 = vrot.slane %v2707, 4
      %v2709 = vmax.f32 %v2707, %v2708
      %v2710 = vrot.slane %v2709, 2
      %v2711 = vmax.f32 %v2709, %v2710
      %v2712 = vrot.slane %v2711, 1
      %v2713 = vmax.f32 %v2711, %v2712
      %p2714 = scmp.le.s32.totalorder %s2702, %s2701
      %p2715 = por %p2680, %p2714
      %s2716 = scalar_select %p2715, 1, 0
      %v2717 = vstv %s2716
      %vm2718 = vcmp.eq.s32.totalorder %v2717, 1
      %v2719 = vsel %vm2718, 0.0, %v2713
      %2720 = vst.msk [vmem:[%s159 + $0x2b] sm:$0x1] %vm1601, %v2719
      %s2721 = sld [smem:[#allocation7 + %s579]]
      %s2722 = sld [smem:[#allocation8 + %s579]]
      %v2723 = vsel %vm2678, %v1679, -inf
      %v2724 = vsel %vm2679, %v1686, -inf
      %v2725 = vsel %vm243, %v2723, -inf
      %v2726 = vsel %vm243, %v2724, -inf
      %v2727 = vmax.f32 %v2725, %v2726
      %v2728 = vrot.slane %v2727, 4
      %v2729 = vmax.f32 %v2727, %v2728
      %v2730 = vrot.slane %v2729, 2
      %v2731 = vmax.f32 %v2729, %v2730
      %v2732 = vrot.slane %v2731, 1
      %v2733 = vmax.f32 %v2731, %v2732
      %p2734 = scmp.le.s32.totalorder %s2722, %s2721
      %p2735 = por %p2680, %p2734
      %s2736 = scalar_select %p2735, 1, 0
      %v2737 = vstv %s2736
      %vm2738 = vcmp.eq.s32.totalorder %v2737, 1
      %v2739 = vsel %vm2738, 0.0, %v2733
      %2740 = vst.msk [vmem:[%s159 + $0x2c] sm:$0x1] %vm1601, %v2739
      %s2741 = sld [smem:[#allocation7 + %s770]]
      %s2742 = sld [smem:[#allocation8 + %s770]]
      %v2743 = vsel %vm2678, %v1731, -inf
      %v2744 = vsel %vm2679, %v1738, -inf
      %v2745 = vsel %vm243, %v2743, -inf
      %v2746 = vsel %vm243, %v2744, -inf
      %v2747 = vmax.f32 %v2745, %v2746
      %v2748 = vrot.slane %v2747, 4
      %v2749 = vmax.f32 %v2747, %v2748
      %v2750 = vrot.slane %v2749, 2
      %v2751 = vmax.f32 %v2749, %v2750
      %v2752 = vrot.slane %v2751, 1
      %v2753 = vmax.f32 %v2751, %v2752
      %p2754 = scmp.le.s32.totalorder %s2742, %s2741
      %p2755 = por %p2680, %p2754
      %s2756 = scalar_select %p2755, 1, 0
      %v2757 = vstv %s2756
      %vm2758 = vcmp.eq.s32.totalorder %v2757, 1
      %v2759 = vsel %vm2758, 0.0, %v2753
      %2760 = vst.msk [vmem:[%s159 + $0x2d] sm:$0x1] %vm1601, %v2759
      %s2761 = sld [smem:[#allocation7 + %s961]]
      %s2762 = sld [smem:[#allocation8 + %s961]]
      %v2763 = vsel %vm2678, %v1783, -inf
      %v2764 = vsel %vm2679, %v1790, -inf
      %v2765 = vsel %vm243, %v2763, -inf
      %v2766 = vsel %vm243, %v2764, -inf
      %v2767 = vmax.f32 %v2765, %v2766
      %v2768 = vrot.slane %v2767, 4
      %v2769 = vmax.f32 %v2767, %v2768
      %v2770 = vrot.slane %v2769, 2
      %v2771 = vmax.f32 %v2769, %v2770
      %v2772 = vrot.slane %v2771, 1
      %v2773 = vmax.f32 %v2771, %v2772
      %p2774 = scmp.le.s32.totalorder %s2762, %s2761
      %p2775 = por %p2680, %p2774
      %s2776 = scalar_select %p2775, 1, 0
      %v2777 = vstv %s2776
      %vm2778 = vcmp.eq.s32.totalorder %v2777, 1
      %v2779 = vsel %vm2778, 0.0, %v2773
      %2780 = vst.msk [vmem:[%s159 + $0x2e] sm:$0x1] %vm1601, %v2779
      %s2781 = sld [smem:[#allocation7 + %s1152]]
      %s2782 = sld [smem:[#allocation8 + %s1152]]
      %v2783 = vsel %vm2678, %v1835, -inf
      %v2784 = vsel %vm2679, %v1842, -inf
      %v2785 = vsel %vm243, %v2783, -inf
      %v2786 = vsel %vm243, %v2784, -inf
      %v2787 = vmax.f32 %v2785, %v2786
      %v2788 = vrot.slane %v2787, 4
      %v2789 = vmax.f32 %v2787, %v2788
      %v2790 = vrot.slane %v2789, 2
      %v2791 = vmax.f32 %v2789, %v2790
      %v2792 = vrot.slane %v2791, 1
      %v2793 = vmax.f32 %v2791, %v2792
      %p2794 = scmp.le.s32.totalorder %s2782, %s2781
      %p2795 = por %p2680, %p2794
      %s2796 = scalar_select %p2795, 1, 0
      %v2797 = vstv %s2796
      %vm2798 = vcmp.eq.s32.totalorder %v2797, 1
      %v2799 = vsel %vm2798, 0.0, %v2793
      %2800 = vst.msk [vmem:[%s159 + $0x2f] sm:$0x1] %vm1601, %v2799
      %s2801 = sld [smem:[#allocation7 + %s1343]]
      %s2802 = sld [smem:[#allocation8 + %s1343]]
      %v2803 = vsel %vm2678, %v1887, -inf
      %v2804 = vsel %vm2679, %v1894, -inf
      %v2805 = vsel %vm243, %v2803, -inf
      %v2806 = vsel %vm243, %v2804, -inf
      %v2807 = vmax.f32 %v2805, %v2806
      %v2808 = vrot.slane %v2807, 4
      %v2809 = vmax.f32 %v2807, %v2808
      %v2810 = vrot.slane %v2809, 2
      %v2811 = vmax.f32 %v2809, %v2810
      %v2812 = vrot.slane %v2811, 1
      %v2813 = vmax.f32 %v2811, %v2812
      %p2814 = scmp.le.s32.totalorder %s2802, %s2801
      %p2815 = por %p2680, %p2814
      %s2816 = scalar_select %p2815, 1, 0
      %v2817 = vstv %s2816
      %vm2818 = vcmp.eq.s32.totalorder %v2817, 1
      %v2819 = vsel %vm2818, 0.0, %v2813
      %2820 = vst.msk [vmem:[%s159 + $0x30] sm:$0x1] %vm1601, %v2819
      %s2821 = sld [smem:[#allocation3 + %s44]]
      %p2822 = scmp.lt.s32.totalorder %s2821, 7
      %s2823 = scalar_select %p2822, %s2821, 7
      %s2824 = smul.addr %s2823, 7
      %s2825 = smul.addr %s2824, 8
      %s2826 = scalar_lea.vmem %s7, %s2825
      // Predicated region
      $region25: #{head_forward.2} parent=23 // pred_check
        %p2827 = pneg %p92
      $region26: #{head_forward.2} parent=23 // pred_check_branch
        %2829 = sbr.rel (%p2827) target = $region28
      $region27: #{head_forward.2} parent=23 // pred_region
        %s2830 = sld [smem:[#allocation3 + %s44]]
      $region28: #{head_forward.2} parent=23 // pred_fallthru
        _
    $region24: #{head_forward.2} parent=5 // pred_fallthru
      _
    %p2831 = scmp.le.s32.totalorder 2, %s39
    // Predicated region
    $region29: #{head_forward.2} parent=5 // pred_check
      %p2832 = pneg %p2831
    $region30: #{head_forward.2} parent=5 // pred_check_branch
      %2834 = sbr.rel (%p2832) target = $region32
    $region31: #{head_forward.2} parent=5 // pred_region
      %s2835 = ssub.s32 %s39, 2
      // Predicated region
      $region33: #{head_forward.2} parent=31 // pred_check
        %p2836 = pneg %p98
      $region34: #{head_forward.2} parent=31 // pred_check_branch
        %2838 = sbr.rel (%p2836) target = $region36
      $region35: #{head_forward.2} parent=31 // pred_region
        %s2839 = sld [smem:[#allocation3 + %s45]]
        %p2840 = scmp.lt.s32.totalorder %s2839, 7
        %s2841 = scalar_select %p2840, %s2839, 7
        %s2842 = smul.addr %s2841, 7
        %s2843 = smul.addr %s2842, 8
        %s2844 = scalar_lea.vmem %s7, %s2843
      $region36: #{head_forward.2} parent=31 // pred_fallthru
        _
    $region32: #{head_forward.2} parent=5 // pred_fallthru
      _
  $region6: #{head_forward.2} parent=0 // loop_footer
    %s43 = sadd.s32 1, %s39
  $region7: #{head_forward.2} parent=0 // loop_footer_branch
    %38 = sbr.rel target = $region3
  $region8: #{head_forward.2} parent=0 // loop_exit
    _

// kernel: head_forward.3
$region0: #{head_forward.3}
  #allocation0 [shape = 'u32[]', space=smem, size = 0x4, offset = 0x4, fixed_abs, tag = 'smem constant byte address 0x4 - core index']
  #allocation1 [shape = 'u32[144,128]{1,0:T(1,128)}', space=vmem, size = 0x12000, scoped, tag = 'internal scratch']
  #allocation2 [shape = 'f32[8,512]{1,0:T(8,128)}', space=vmem, size = 0x4000, scoped, tag = 'scratch operand']
  #allocation3 [shape = 'f32[8,128]{1,0:T(8,128)}', space=vmem, size = 0x1000, scoped, tag = 'scratch operand']
  %s0 = inlined_call_operand.vmem [shape: f32[8,512], index: 0, kind: input, shape index: {}]
  %s1 = inlined_call_operand.vmem [shape: f32[512,4096], index: 1, kind: input, shape index: {}]
  %s2 = inlined_call_operand.vmem [shape: f32[1,4096], index: 2, kind: input, shape index: {}]
  %s3 = inlined_call_operand.vmem [shape: f32[4096,128], index: 3, kind: input, shape index: {}]
  %s4 = inlined_call_operand.vmem [shape: f32[1,128], index: 4, kind: input, shape index: {}]
  %s5 = inlined_call_operand.vmem [shape: f32[8,128], index: 5, kind: output, shape index: {}]
  %s6 = sld [smem:[#allocation0]]
  $region92: #{head_forward.3} parent=0
    _
  %s8 = ssub.s32 1, %s6
  %s9 = scalar_select 0, %s8, %s6
  $region1: #{head_forward.3} parent=0
    #allocation4 [shape = 'u8[2097152]{0}', space=vmem, size = 0x200000, scoped, tag = 'input window, operand 1']
    loop: start=0, step=1, limit=10
    $region2: #{head_forward.3} parent=1 // loop_pre_header
      _
    $region3: #{head_forward.3} parent=1 // loop_header
      %s11 = sphi 0, %s15
      %p12 = scmp.ge.s32.totalorder %s11, 10
      %s18 = sphi 0, %s37
      %s19 = sphi 0, %s33
      %s20 = sphi 0, %s29
      %s21 = sphi 0, %s18
      %s22 = sphi 0, %s19
      %s23 = sphi 0, %s20
      %s24 = sphi 0, %s21
      %s25 = sphi 0, %s22
      %s26 = sphi 0, %s23
      %s42 = sphi 0, %s44
      %s45 = sphi 0, %s42
      %s46 = sphi 0, %s45
      %s62 = sphi 0, %s46
      %s70 = sphi 0, %s72
      %s73 = sphi 0, %s70
      %s74 = sphi 0, %s73
      %s90 = sphi 0, %s74
      %s96 = sphi 0, %s98
      %s99 = sphi 0, %s96
      %s100 = sphi 0, %s99
      %s116 = sphi 0, %s100
      %s122 = sphi 0, %s124
      %s125 = sphi 0, %s122
      %s126 = sphi 0, %s125
      %s142 = sphi 0, %s126
      %s146 = sphi 0, %s146
      %s148 = sphi 0, %s146
      %s149 = sphi 0, %s148
      %s163 = sphi 0, %s149
      %s169 = sphi 0, %s171
      %s172 = sphi 0, %s169
      %s173 = sphi 0, %s172
      %s189 = sphi 0, %s173
    $region4: #{head_forward.3} parent=1 // loop_header_branch
      %14 = sbr.rel (%p12) target = $region8
    $region5: #{head_forward.3} parent=1 // loop_body
      %s16 = ssub.s32 %s11, 1
      %s17 = ssub.s32 %s11, 2
      %s27 = sadd.s32 1, %s20
      %p28 = scmp.ge.s32.totalorder %s27, 1
      %s29 = scalar_select %p28, 0, %s27
      %s30 = sadd.s32 1, %s19
      %s31 = scalar_select %p28, %s30, %s19
      %p32 = scmp.ge.s32.totalorder %s31, 8
      %s33 = scalar_select %p32, 0, %s31
      %s34 = sadd.s32 1, %s18
      %s35 = scalar_select %p32, %s34, %s18
      %p36 = scmp.ge.s32.totalorder %s35, 1
      %s37 = scalar_select %p36, 0, %s35
      %s38 = ssub.s32 %s18, %s37
      %s39 = ssub.s32 %s20, %s29
      %s40 = sor.u32 %s38, %s39
      %p41 = scmp.eq.s32.totalorder %s40, 0
      %s43 = sadd.s32 %s42, 1
      %s44 = scalar_select %p41, %s42, %s43
      %p47 = pneg %p41
      %p48 = scmp.eq.s32.totalorder %s11, 7
      %p49 = por %p47, %p48
      %p50 = scmp.ne.s32.totalorder %s42, %s45
      %p51 = scmp.eq.s32.totalorder %s11, 0
      %p52 = por %p50, %p51
      %p53 = scmp.ne.s32.totalorder %s42, %s45
      %p54 = scmp.eq.s32.totalorder %s16, 7
      %p55 = por %p53, %p54
      %p56 = scmp.ne.s32.totalorder %s45, %s46
      %p57 = scmp.eq.s32.totalorder %s16, 0
      %p58 = por %p56, %p57
      %p59 = scmp.ne.s32.totalorder %s45, %s46
      %p60 = scmp.eq.s32.totalorder %s17, 7
      %p61 = por %p59, %p60
      %p63 = scmp.ne.s32.totalorder %s46, %s62
      %p64 = scmp.eq.s32.totalorder %s17, 0
      %p65 = por %p63, %p64
      %s66 = ssub.s32 %s20, %s29
      %s67 = ssub.s32 %s19, %s33
      %s68 = sor.u32 %s66, %s67
      %p69 = scmp.eq.s32.totalorder %s68, 0
      %s71 = sadd.s32 %s70, 1
      %s72 = scalar_select %p69, %s70, %s71
      %p75 = pneg %p69
      %p76 = scmp.eq.s32.totalorder %s11, 7
      %p77 = por %p75, %p76
      %p78 = scmp.ne.s32.totalorder %s70, %s73
      %p79 = scmp.eq.s32.totalorder %s11, 0
      %p80 = por %p78, %p79
      %p81 = scmp.ne.s32.totalorder %s70, %s73
      %p82 = scmp.eq.s32.totalorder %s16, 7
      %p83 = por %p81, %p82
      %p84 = scmp.ne.s32.totalorder %s73, %s74
      %p85 = scmp.eq.s32.totalorder %s16, 0
      %p86 = por %p84, %p85
      %p87 = scmp.ne.s32.totalorder %s73, %s74
      %p88 = scmp.eq.s32.totalorder %s17, 7
      %p89 = por %p87, %p88
      %p91 = scmp.ne.s32.totalorder %s74, %s90
      %p92 = scmp.eq.s32.totalorder %s17, 0
      %p93 = por %p91, %p92
      %s94 = ssub.s32 %s19, %s33
      %p95 = scmp.eq.s32.totalorder %s94, 0
      %s97 = sadd.s32 %s96, 1
      %s98 = scalar_select %p95, %s96, %s97
      %p101 = pneg %p95
      %p102 = scmp.eq.s32.totalorder %s11, 7
      %p103 = por %p101, %p102
      %p104 = scmp.ne.s32.totalorder %s96, %s99
      %p105 = scmp.eq.s32.totalorder %s11, 0
      %p106 = por %p104, %p105
      %p107 = scmp.ne.s32.totalorder %s96, %s99
      %p108 = scmp.eq.s32.totalorder %s16, 7
      %p109 = por %p107, %p108
      %p110 = scmp.ne.s32.totalorder %s99, %s100
      %p111 = scmp.eq.s32.totalorder %s16, 0
      %p112 = por %p110, %p111
      %p113 = scmp.ne.s32.totalorder %s99, %s100
      %p114 = scmp.eq.s32.totalorder %s17, 7
      %p115 = por %p113, %p114
      %p117 = scmp.ne.s32.totalorder %s100, %s116
      %p118 = scmp.eq.s32.totalorder %s17, 0
      %p119 = por %p117, %p118
      %s120 = ssub.s32 %s19, %s33
      %p121 = scmp.eq.s32.totalorder %s120, 0
      %s123 = sadd.s32 %s122, 1
      %s124 = scalar_select %p121, %s122, %s123
      %p127 = pneg %p121
      %p128 = scmp.eq.s32.totalorder %s11, 7
      %p129 = por %p127, %p128
      %p130 = scmp.ne.s32.totalorder %s122, %s125
      %p131 = scmp.eq.s32.totalorder %s11, 0
      %p132 = por %p130, %p131
      %p133 = scmp.ne.s32.totalorder %s122, %s125
      %p134 = scmp.eq.s32.totalorder %s16, 7
      %p135 = por %p133, %p134
      %p136 = scmp.ne.s32.totalorder %s125, %s126
      %p137 = scmp.eq.s32.totalorder %s16, 0
      %p138 = por %p136, %p137
      %p139 = scmp.ne.s32.totalorder %s125, %s126
      %p140 = scmp.eq.s32.totalorder %s17, 7
      %p141 = por %p139, %p140
      %p143 = scmp.ne.s32.totalorder %s126, %s142
      %p144 = scmp.eq.s32.totalorder %s17, 0
      %p145 = por %p143, %p144
      %s147 = sadd.s32 %s146, 1
      %p150 = scmp.eq.s32.totalorder %s11, 7
      %p151 = scmp.ne.s32.totalorder %s146, %s148
      %p152 = scmp.eq.s32.totalorder %s11, 0
      %p153 = por %p151, %p152
      %p154 = scmp.ne.s32.totalorder %s146, %s148
      %p155 = scmp.eq.s32.totalorder %s16, 7
      %p156 = por %p154, %p155
      %p157 = scmp.ne.s32.totalorder %s148, %s149
      %p158 = scmp.eq.s32.totalorder %s16, 0
      %p159 = por %p157, %p158
      %p160 = scmp.ne.s32.totalorder %s148, %s149
      %p161 = scmp.eq.s32.totalorder %s17, 7
      %p162 = por %p160, %p161
      %p164 = scmp.ne.s32.totalorder %s149, %s163
      %p165 = scmp.eq.s32.totalorder %s17, 0
      %p166 = por %p164, %p165
      %s167 = ssub.s32 %s18, %s37
      %p168 = scmp.eq.s32.totalorder %s167, 0
      %s170 = sadd.s32 %s169, 1
      %s171 = scalar_select %p168, %s169, %s170
      %p174 = pneg %p168
      %p175 = scmp.eq.s32.totalorder %s11, 7
      %p176 = por %p174, %p175
      %p177 = scmp.ne.s32.totalorder %s169, %s172
      %p178 = scmp.eq.s32.totalorder %s11, 0
      %p179 = por %p177, %p178
      %p180 = scmp.ne.s32.totalorder %s169, %s172
      %p181 = scmp.eq.s32.totalorder %s16, 7
      %p182 = por %p180, %p181
      %p183 = scmp.ne.s32.totalorder %s172, %s173
      %p184 = scmp.eq.s32.totalorder %s16, 0
      %p185 = por %p183, %p184
      %p186 = scmp.ne.s32.totalorder %s172, %s173
      %p187 = scmp.eq.s32.totalorder %s17, 7
      %p188 = por %p186, %p187
      %p190 = scmp.ne.s32.totalorder %s173, %s189
      %p191 = scmp.eq.s32.totalorder %s17, 0
      %p192 = por %p190, %p191
      %p193 = scmp.le.s32.totalorder 1, %s11
      %p194 = scmp.lt.s32.totalorder %s11, 9
      %p195 = pnand %p193, %p194
      %p196 = pneg %p195
      // Predicated region
      $region9: #{head_forward.3} parent=5 // pred_check
        _
      $region10: #{head_forward.3} parent=5 // pred_check_branch
        %198 = sbr.rel (%p195) target = $region12
      $region11: #{head_forward.3} parent=5 // pred_region
        %s199 = ssub.s32 %s11, 1
        // Predicated region
        $region13: #{head_forward.3} parent=11 // pred_check
          %p200 = pneg %p58
        $region14: #{head_forward.3} parent=11 // pred_check_branch
          %202 = sbr.rel (%p200) target = $region16
        $region15: #{head_forward.3} parent=11 // pred_region
          %s203 = smul.u32 4, %s23
          %p204 = scmp.lt.s32.totalorder %s21, 0
          %s205 = scalar_select %p204, %s21, 0
          %p206 = scmp.lt.s32.totalorder %s203, 3
          %s207 = scalar_select %p206, %s203, 3
          %s208 = smul.addr %s205, 4
          %s209 = sadd.s32 %s207, %s208
          %s210 = smul.addr %s209, 8
          %s211 = scalar_lea.vmem %s0, %s210
          %s212 = smul.u32 4, %s23
        $region16: #{head_forward.3} parent=11 // pred_fallthru
          _
        // Predicated region
        $region17: #{head_forward.3} parent=11 // pred_check
          %p213 = pneg %p159
        $region18: #{head_forward.3} parent=11 // pred_check_branch
          %215 = sbr.rel (%p213) target = $region20
        $region19: #{head_forward.3} parent=11 // pred_region
          _
        $region20: #{head_forward.3} parent=11 // pred_fallthru
          _
      $region12: #{head_forward.3} parent=5 // pred_fallthru
        _
      %p216 = scmp.lt.s32.totalorder %s11, 8
      // Predicated region
      $region21: #{head_forward.3} parent=5 // pred_check
        %p217 = pneg %p216
      $region22: #{head_forward.3} parent=5 // pred_check_branch
        %219 = sbr.rel (%p217) target = $region24
      $region23: #{head_forward.3} parent=5 // pred_region
        // Predicated region
        $region25: #{head_forward.3} parent=23 // pred_check
          %p220 = pneg %p80
        $region26: #{head_forward.3} parent=23 // pred_check_branch
          %222 = sbr.rel (%p220) target = $region28
        $region27: #{head_forward.3} parent=23 // pred_region
          %s223 = sand.u32 %s70, 1
          %s224 = sand.u32 %s70, 1
          %s225 = smul.addr %s224, 2048
          %s226 = scalar_lea.vmem [#allocation4], %s225
          %s227 = smul.u32 64, %s20
          %s228 = smul.u32 4, %s19
          %s229 = smul.addr %s227, 32
          %s230 = sadd.s32 %s228, %s229
          %s231 = smul.addr %s230, 8
          %s232 = scalar_lea.vmem %s1, %s231
          // Predicated region
          $region29: #{head_forward.3} parent=27 // pred_check
            _
          $region30: #{head_forward.3} parent=27 // pred_check_branch
            %234 = sbr.rel (0) target = $region32
          $region31: #{head_forward.3} parent=27 // pred_region
            // Predicated region
            $region33: #{head_forward.3} parent=31 // pred_check
              _
            $region34: #{head_forward.3} parent=31 // pred_check_branch
              %236 = sbr.rel (0) target = $region36
            $region35: #{head_forward.3} parent=31 // pred_region
              loop: start=0, step=1, limit=1
              $region37: #{head_forward.3} parent=35 // loop_pre_header
                _
              $region38: #{head_forward.3} parent=35 // loop_header
                %s238 = sphi 0, %s242
                %p239 = scmp.ge.s32.totalorder %s238, 1
                %s243 = sphi %s232, %s232
                %s244 = sphi %s226, %s226
              $region39: #{head_forward.3} parent=35 // loop_header_branch
                %241 = sbr.rel (%p239) target = $region43
              $region40: #{head_forward.3} parent=35 // loop_body
                %v245 = vld [vmem:[%s243] sm:$0xff]
                %246 = vst [vmem:[%s244] sm:$0xff] %v245
                %v247 = vld [vmem:[%s243 + $0x8] sm:$0xff]
                %248 = vst [vmem:[%s244 + $0x8] sm:$0xff] %v247
                %v249 = vld [vmem:[%s243 + $0x10] sm:$0xff]
                %250 = vst [vmem:[%s244 + $0x10] sm:$0xff] %v249
                %v251 = vld [vmem:[%s243 + $0x18] sm:$0xff]
                %252 = vst [vmem:[%s244 + $0x18] sm:$0xff] %v251
                %v253 = vld [vmem:[%s243 + $0x100] sm:$0xff]
                %254 = vst [vmem:[%s244 + $0x20] sm:$0xff] %v253
                %v255 = vld [vmem:[%s243 + $0x108] sm:$0xff]
                %256 = vst [vmem:[%s244 + $0x28] sm:$0xff] %v255
                %v257 = vld [vmem:[%s243 + $0x110] sm:$0xff]
                %258 = vst [vmem:[%s244 + $0x30] sm:$0xff] %v257
                %v259 = vld [vmem:[%s243 + $0x118] sm:$0xff]
                %260 = vst [vmem:[%s244 + $0x38] sm:$0xff] %v259
                %v261 = vld [vmem:[%s243 + $0x200] sm:$0xff]
                %262 = vst [vmem:[%s244 + $0x40] sm:$0xff] %v261
                %v263 = vld [vmem:[%s243 + $0x208] sm:$0xff]
                %264 = vst [vmem:[%s244 + $0x48] sm:$0xff] %v263
                %v265 = vld [vmem:[%s243 + $0x210] sm:$0xff]
                %266 = vst [vmem:[%s244 + $0x50] sm:$0xff] %v265
                %v267 = vld [vmem:[%s243 + $0x218] sm:$0xff]
                %268 = vst [vmem:[%s244 + $0x58] sm:$0xff] %v267
                %v269 = vld [vmem:[%s243 + $0x300] sm:$0xff]
                %270 = vst [vmem:[%s244 + $0x60] sm:$0xff] %v269
                %v271 = vld [vmem:[%s243 + $0x308] sm:$0xff]
                %272 = vst [vmem:[%s244 + $0x68] sm:$0xff] %v271
                %v273 = vld [vmem:[%s243 + $0x310] sm:$0xff]
                %274 = vst [vmem:[%s244 + $0x70] sm:$0xff] %v273
                %v275 = vld [vmem:[%s243 + $0x318] sm:$0xff]
                %276 = vst [vmem:[%s244 + $0x78] sm:$0xff] %v275
                %v277 = vld [vmem:[%s243 + $0x400] sm:$0xff]
                %278 = vst [vmem:[%s244 + $0x80] sm:$0xff] %v277
                %v279 = vld [vmem:[%s243 + $0x408] sm:$0xff]
                %280 = vst [vmem:[%s244 + $0x88] sm:$0xff] %v279
                %v281 = vld [vmem:[%s243 + $0x410] sm:$0xff]
                %282 = vst [vmem:[%s244 + $0x90] sm:$0xff] %v281
                %v283 = vld [vmem:[%s243 + $0x418] sm:$0xff]
                %284 = vst [vmem:[%s244 + $0x98] sm:$0xff] %v283
                %v285 = vld [vmem:[%s243 + $0x500] sm:$0xff]
                %286 = vst [vmem:[%s244 + $0xa0] sm:$0xff] %v285
                %v287 = vld [vmem:[%s243 + $0x508] sm:$0xff]
                %288 = vst [vmem:[%s244 + $0xa8] sm:$0xff] %v287
                %v289 = vld [vmem:[%s243 + $0x510] sm:$0xff]
                %290 = vst [vmem:[%s244 + $0xb0] sm:$0xff] %v289
                %v291 = vld [vmem:[%s243 + $0x518] sm:$0xff]
                %292 = vst [vmem:[%s244 + $0xb8] sm:$0xff] %v291
                %v293 = vld [vmem:[%s243 + $0x600] sm:$0xff]
                %294 = vst [vmem:[%s244 + $0xc0] sm:$0xff] %v293
                %v295 = vld [vmem:[%s243 + $0x608] sm:$0xff]
                %296 = vst [vmem:[%s244 + $0xc8] sm:$0xff] %v295
                %v297 = vld [vmem:[%s243 + $0x610] sm:$0xff]
                %298 = vst [vmem:[%s244 + $0xd0] sm:$0xff] %v297
                %v299 = vld [vmem:[%s243 + $0x618] sm:$0xff]
                %300 = vst [vmem:[%s244 + $0xd8] sm:$0xff] %v299
                %v301 = vld [vmem:[%s243 + $0x700] sm:$0xff]
                %302 = vst [vmem:[%s244 + $0xe0] sm:$0xff] %v301
                %v303 = vld [vmem:[%s243 + $0x708] sm:$0xff]
                %304 = vst [vmem:[%s244 + $0xe8] sm:$0xff] %v303
                %v305 = vld [vmem:[%s243 + $0x710] sm:$0xff]
                %306 = vst [vmem:[%s244 + $0xf0] sm:$0xff] %v305
                %v307 = vld [vmem:[%s243 + $0x718] sm:$0xff]
                %308 = vst [vmem:[%s244 + $0xf8] sm:$0xff] %v307
                %v309 = vld [vmem:[%s243 + $0x800] sm:$0xff]
                %310 = vst [vmem:[%s244 + $0x100] sm:$0xff] %v309
                %v311 = vld [vmem:[%s243 + $0x808] sm:$0xff]
                %312 = vst [vmem:[%s244 + $0x108] sm:$0xff] %v311
                %v313 = vld [vmem:[%s243 + $0x810] sm:$0xff]
                %314 = vst [vmem:[%s244 + $0x110] sm:$0xff] %v313
                %v315 = vld [vmem:[%s243 + $0x818] sm:$0xff]
                %316 = vst [vmem:[%s244 + $0x118] sm:$0xff] %v315
                %v317 = vld [vmem:[%s243 + $0x900] sm:$0xff]
                %318 = vst [vmem:[%s244 + $0x120] sm:$0xff] %v317
                %v319 = vld [vmem:[%s243 + $0x908] sm:$0xff]
                %320 = vst [vmem:[%s244 + $0x128] sm:$0xff] %v319
                %v321 = vld [vmem:[%s243 + $0x910] sm:$0xff]
                %322 = vst [vmem:[%s244 + $0x130] sm:$0xff] %v321
                %v323 = vld [vmem:[%s243 + $0x918] sm:$0xff]
                %324 = vst [vmem:[%s244 + $0x138] sm:$0xff] %v323
                %v325 = vld [vmem:[%s243 + $0xa00] sm:$0xff]
                %326 = vst [vmem:[%s244 + $0x140] sm:$0xff] %v325
                %v327 = vld [vmem:[%s243 + $0xa08] sm:$0xff]
                %328 = vst [vmem:[%s244 + $0x148] sm:$0xff] %v327
                %v329 = vld [vmem:[%s243 + $0xa10] sm:$0xff]
                %330 = vst [vmem:[%s244 + $0x150] sm:$0xff] %v329
                %v331 = vld [vmem:[%s243 + $0xa18] sm:$0xff]
                %332 = vst [vmem:[%s244 + $0x158] sm:$0xff] %v331
                %v333 = vld [vmem:[%s243 + $0xb00] sm:$0xff]
                %334 = vst [vmem:[%s244 + $0x160] sm:$0xff] %v333
                %v335 = vld [vmem:[%s243 + $0xb08] sm:$0xff]
                %336 = vst [vmem:[%s244 + $0x168] sm:$0xff] %v335
                %v337 = vld [vmem:[%s243 + $0xb10] sm:$0xff]
                %338 = vst [vmem:[%s244 + $0x170] sm:$0xff] %v337
                %v339 = vld [vmem:[%s243 + $0xb18] sm:$0xff]
                %340 = vst [vmem:[%s244 + $0x178] sm:$0xff] %v339
                %v341 = vld [vmem:[%s243 + $0xc00] sm:$0xff]
                %342 = vst [vmem:[%s244 + $0x180] sm:$0xff] %v341
                %v343 = vld [vmem:[%s243 + $0xc08] sm:$0xff]
                %344 = vst [vmem:[%s244 + $0x188] sm:$0xff] %v343
                %v345 = vld [vmem:[%s243 + $0xc10] sm:$0xff]
                %346 = vst [vmem:[%s244 + $0x190] sm:$0xff] %v345
                %v347 = vld [vmem:[%s243 + $0xc18] sm:$0xff]
                %348 = vst [vmem:[%s244 + $0x198] sm:$0xff] %v347
                %v349 = vld [vmem:[%s243 + $0xd00] sm:$0xff]
                %350 = vst [vmem:[%s244 + $0x1a0] sm:$0xff] %v349
                %v351 = vld [vmem:[%s243 + $0xd08] sm:$0xff]
                %352 = vst [vmem:[%s244 + $0x1a8] sm:$0xff] %v351
                %v353 = vld [vmem:[%s243 + $0xd10] sm:$0xff]
                %354 = vst [vmem:[%s244 + $0x1b0] sm:$0xff] %v353
                %v355 = vld [vmem:[%s243 + $0xd18] sm:$0xff]
                %356 = vst [vmem:[%s244 + $0x1b8] sm:$0xff] %v355
                %v357 = vld [vmem:[%s243 + $0xe00] sm:$0xff]
                %358 = vst [vmem:[%s244 + $0x1c0] sm:$0xff] %v357
                %v359 = vld [vmem:[%s243 + $0xe08] sm:$0xff]
                %360 = vst [vmem:[%s244 + $0x1c8] sm:$0xff] %v359
                %v361 = vld [vmem:[%s243 + $0xe10] sm:$0xff]
                %362 = vst [vmem:[%s244 + $0x1d0] sm:$0xff] %v361
                %v363 = vld [vmem:[%s243 + $0xe18] sm:$0xff]
                %364 = vst [vmem:[%s244 + $0x1d8] sm:$0xff] %v363
                %v365 = vld [vmem:[%s243 + $0xf00] sm:$0xff]
                %366 = vst [vmem:[%s244 + $0x1e0] sm:$0xff] %v365
                %v367 = vld [vmem:[%s243 + $0xf08] sm:$0xff]
                %368 = vst [vmem:[%s244 + $0x1e8] sm:$0xff] %v367
                %v369 = vld [vmem:[%s243 + $0xf10] sm:$0xff]
                %370 = vst [vmem:[%s244 + $0x1f0] sm:$0xff] %v369
                %v371 = vld [vmem:[%s243 + $0xf18] sm:$0xff]
                %372 = vst [vmem:[%s244 + $0x1f8] sm:$0xff] %v371
                %v373 = vld [vmem:[%s243 + $0x1000] sm:$0xff]
                %374 = vst [vmem:[%s244 + $0x200] sm:$0xff] %v373
                %v375 = vld [vmem:[%s243 + $0x1008] sm:$0xff]
                %376 = vst [vmem:[%s244 + $0x208] sm:$0xff] %v375
                %v377 = vld [vmem:[%s243 + $0x1010] sm:$0xff]
                %378 = vst [vmem:[%s244 + $0x210] sm:$0xff] %v377
                %v379 = vld [vmem:[%s243 + $0x1018] sm:$0xff]
                %380 = vst [vmem:[%s244 + $0x218] sm:$0xff] %v379
                %v381 = vld [vmem:[%s243 + $0x1100] sm:$0xff]
                %382 = vst [vmem:[%s244 + $0x220] sm:$0xff] %v381
                %v383 = vld [vmem:[%s243 + $0x1108] sm:$0xff]
                %384 = vst [vmem:[%s244 + $0x228] sm:$0xff] %v383
                %v385 = vld [vmem:[%s243 + $0x1110] sm:$0xff]
                %386 = vst [vmem:[%s244 + $0x230] sm:$0xff] %v385
                %v387 = vld [vmem:[%s243 + $0x1118] sm:$0xff]
                %388 = vst [vmem:[%s244 + $0x238] sm:$0xff] %v387
                %v389 = vld [vmem:[%s243 + $0x1200] sm:$0xff]
                %390 = vst [vmem:[%s244 + $0x240] sm:$0xff] %v389
                %v391 = vld [vmem:[%s243 + $0x1208] sm:$0xff]
                %392 = vst [vmem:[%s244 + $0x248] sm:$0xff] %v391
                %v393 = vld [vmem:[%s243 + $0x1210] sm:$0xff]
                %394 = vst [vmem:[%s244 + $0x250] sm:$0xff] %v393
                %v395 = vld [vmem:[%s243 + $0x1218] sm:$0xff]
                %396 = vst [vmem:[%s244 + $0x258] sm:$0xff] %v395
                %v397 = vld [vmem:[%s243 + $0x1300] sm:$0xff]
                %398 = vst [vmem:[%s244 + $0x260] sm:$0xff] %v397
                %v399 = vld [vmem:[%s243 + $0x1308] sm:$0xff]
                %400 = vst [vmem:[%s244 + $0x268] sm:$0xff] %v399
                %v401 = vld [vmem:[%s243 + $0x1310] sm:$0xff]
                %402 = vst [vmem:[%s244 + $0x270] sm:$0xff] %v401
                %v403 = vld [vmem:[%s243 + $0x1318] sm:$0xff]
                %404 = vst [vmem:[%s244 + $0x278] sm:$0xff] %v403
                %v405 = vld [vmem:[%s243 + $0x1400] sm:$0xff]
                %406 = vst [vmem:[%s244 + $0x280] sm:$0xff] %v405
                %v407 = vld [vmem:[%s243 + $0x1408] sm:$0xff]
                %408 = vst [vmem:[%s244 + $0x288] sm:$0xff] %v407
                %v409 = vld [vmem:[%s243 + $0x1410] sm:$0xff]
                %410 = vst [vmem:[%s244 + $0x290] sm:$0xff] %v409
                %v411 = vld [vmem:[%s243 + $0x1418] sm:$0xff]
                %412 = vst [vmem:[%s244 + $0x298] sm:$0xff] %v411
                %v413 = vld [vmem:[%s243 + $0x1500] sm:$0xff]
                %414 = vst [vmem:[%s244 + $0x2a0] sm:$0xff] %v413
                %v415 = vld [vmem:[%s243 + $0x1508] sm:$0xff]
                %416 = vst [vmem:[%s244 + $0x2a8] sm:$0xff] %v415
                %v417 = vld [vmem:[%s243 + $0x1510] sm:$0xff]
                %418 = vst [vmem:[%s244 + $0x2b0] sm:$0xff] %v417
                %v419 = vld [vmem:[%s243 + $0x1518] sm:$0xff]
                %420 = vst [vmem:[%s244 + $0x2b8] sm:$0xff] %v419
                %v421 = vld [vmem:[%s243 + $0x1600] sm:$0xff]
                %422 = vst [vmem:[%s244 + $0x2c0] sm:$0xff] %v421
                %v423 = vld [vmem:[%s243 + $0x1608] sm:$0xff]
                %424 = vst [vmem:[%s244 + $0x2c8] sm:$0xff] %v423
                %v425 = vld [vmem:[%s243 + $0x1610] sm:$0xff]
                %426 = vst [vmem:[%s244 + $0x2d0] sm:$0xff] %v425
                %v427 = vld [vmem:[%s243 + $0x1618] sm:$0xff]
                %428 = vst [vmem:[%s244 + $0x2d8] sm:$0xff] %v427
                %v429 = vld [vmem:[%s243 + $0x1700] sm:$0xff]
                %430 = vst [vmem:[%s244 + $0x2e0] sm:$0xff] %v429
                %v431 = vld [vmem:[%s243 + $0x1708] sm:$0xff]
                %432 = vst [vmem:[%s244 + $0x2e8] sm:$0xff] %v431
                %v433 = vld [vmem:[%s243 + $0x1710] sm:$0xff]
                %434 = vst [vmem:[%s244 + $0x2f0] sm:$0xff] %v433
                %v435 = vld [vmem:[%s243 + $0x1718] sm:$0xff]
                %436 = vst [vmem:[%s244 + $0x2f8] sm:$0xff] %v435
                %v437 = vld [vmem:[%s243 + $0x1800] sm:$0xff]
                %438 = vst [vmem:[%s244 + $0x300] sm:$0xff] %v437
                %v439 = vld [vmem:[%s243 + $0x1808] sm:$0xff]
                %440 = vst [vmem:[%s244 + $0x308] sm:$0xff] %v439
                %v441 = vld [vmem:[%s243 + $0x1810] sm:$0xff]
                %442 = vst [vmem:[%s244 + $0x310] sm:$0xff] %v441
                %v443 = vld [vmem:[%s243 + $0x1818] sm:$0xff]
                %444 = vst [vmem:[%s244 + $0x318] sm:$0xff] %v443
                %v445 = vld [vmem:[%s243 + $0x1900] sm:$0xff]
                %446 = vst [vmem:[%s244 + $0x320] sm:$0xff] %v445
                %v447 = vld [vmem:[%s243 + $0x1908] sm:$0xff]
                %448 = vst [vmem:[%s244 + $0x328] sm:$0xff] %v447
                %v449 = vld [vmem:[%s243 + $0x1910] sm:$0xff]
                %450 = vst [vmem:[%s244 + $0x330] sm:$0xff] %v449
                %v451 = vld [vmem:[%s243 + $0x1918] sm:$0xff]
                %452 = vst [vmem:[%s244 + $0x338] sm:$0xff] %v451
                %v453 = vld [vmem:[%s243 + $0x1a00] sm:$0xff]
                %454 = vst [vmem:[%s244 + $0x340] sm:$0xff] %v453
                %v455 = vld [vmem:[%s243 + $0x1a08] sm:$0xff]
                %456 = vst [vmem:[%s244 + $0x348] sm:$0xff] %v455
                %v457 = vld [vmem:[%s243 + $0x1a10] sm:$0xff]
                %458 = vst [vmem:[%s244 + $0x350] sm:$0xff] %v457
                %v459 = vld [vmem:[%s243 + $0x1a18] sm:$0xff]
                %460 = vst [vmem:[%s244 + $0x358] sm:$0xff] %v459
                %v461 = vld [vmem:[%s243 + $0x1b00] sm:$0xff]
                %462 = vst [vmem:[%s244 + $0x360] sm:$0xff] %v461
                %v463 = vld [vmem:[%s243 + $0x1b08] sm:$0xff]
                %464 = vst [vmem:[%s244 + $0x368] sm:$0xff] %v463
                %v465 = vld [vmem:[%s243 + $0x1b10] sm:$0xff]
                %466 = vst [vmem:[%s244 + $0x370] sm:$0xff] %v465
                %v467 = vld [vmem:[%s243 + $0x1b18] sm:$0xff]
                %468 = vst [vmem:[%s244 + $0x378] sm:$0xff] %v467
                %v469 = vld [vmem:[%s243 + $0x1c00] sm:$0xff]
                %470 = vst [vmem:[%s244 + $0x380] sm:$0xff] %v469
                %v471 = vld [vmem:[%s243 + $0x1c08] sm:$0xff]
                %472 = vst [vmem:[%s244 + $0x388] sm:$0xff] %v471
                %v473 = vld [vmem:[%s243 + $0x1c10] sm:$0xff]
                %474 = vst [vmem:[%s244 + $0x390] sm:$0xff] %v473
                %v475 = vld [vmem:[%s243 + $0x1c18] sm:$0xff]
                %476 = vst [vmem:[%s244 + $0x398] sm:$0xff] %v475
                %v477 = vld [vmem:[%s243 + $0x1d00] sm:$0xff]
                %478 = vst [vmem:[%s244 + $0x3a0] sm:$0xff] %v477
                %v479 = vld [vmem:[%s243 + $0x1d08] sm:$0xff]
                %480 = vst [vmem:[%s244 + $0x3a8] sm:$0xff] %v479
                %v481 = vld [vmem:[%s243 + $0x1d10] sm:$0xff]
                %482 = vst [vmem:[%s244 + $0x3b0] sm:$0xff] %v481
                %v483 = vld [vmem:[%s243 + $0x1d18] sm:$0xff]
                %484 = vst [vmem:[%s244 + $0x3b8] sm:$0xff] %v483
                %v485 = vld [vmem:[%s243 + $0x1e00] sm:$0xff]
                %486 = vst [vmem:[%s244 + $0x3c0] sm:$0xff] %v485
                %v487 = vld [vmem:[%s243 + $0x1e08] sm:$0xff]
                %488 = vst [vmem:[%s244 + $0x3c8] sm:$0xff] %v487
                %v489 = vld [vmem:[%s243 + $0x1e10] sm:$0xff]
                %490 = vst [vmem:[%s244 + $0x3d0] sm:$0xff] %v489
                %v491 = vld [vmem:[%s243 + $0x1e18] sm:$0xff]
                %492 = vst [vmem:[%s244 + $0x3d8] sm:$0xff] %v491
                %v493 = vld [vmem:[%s243 + $0x1f00] sm:$0xff]
                %494 = vst [vmem:[%s244 + $0x3e0] sm:$0xff] %v493
                %v495 = vld [vmem:[%s243 + $0x1f08] sm:$0xff]
                %496 = vst [vmem:[%s244 + $0x3e8] sm:$0xff] %v495
                %v497 = vld [vmem:[%s243 + $0x1f10] sm:$0xff]
                %498 = vst [vmem:[%s244 + $0x3f0] sm:$0xff] %v497
                %v499 = vld [vmem:[%s243 + $0x1f18] sm:$0xff]
                %500 = vst [vmem:[%s244 + $0x3f8] sm:$0xff] %v499
                %v501 = vld [vmem:[%s243 + $0x2000] sm:$0xff]
                %502 = vst [vmem:[%s244 + $0x400] sm:$0xff] %v501
                %v503 = vld [vmem:[%s243 + $0x2008] sm:$0xff]
                %504 = vst [vmem:[%s244 + $0x408] sm:$0xff] %v503
                %v505 = vld [vmem:[%s243 + $0x2010] sm:$0xff]
                %506 = vst [vmem:[%s244 + $0x410] sm:$0xff] %v505
                %v507 = vld [vmem:[%s243 + $0x2018] sm:$0xff]
                %508 = vst [vmem:[%s244 + $0x418] sm:$0xff] %v507
                %v509 = vld [vmem:[%s243 + $0x2100] sm:$0xff]
                %510 = vst [vmem:[%s244 + $0x420] sm:$0xff] %v509
                %v511 = vld [vmem:[%s243 + $0x2108] sm:$0xff]
                %512 = vst [vmem:[%s244 + $0x428] sm:$0xff] %v511
                %v513 = vld [vmem:[%s243 + $0x2110] sm:$0xff]
                %514 = vst [vmem:[%s244 + $0x430] sm:$0xff] %v513
                %v515 = vld [vmem:[%s243 + $0x2118] sm:$0xff]
                %516 = vst [vmem:[%s244 + $0x438] sm:$0xff] %v515
                %v517 = vld [vmem:[%s243 + $0x2200] sm:$0xff]
                %518 = vst [vmem:[%s244 + $0x440] sm:$0xff] %v517
                %v519 = vld [vmem:[%s243 + $0x2208] sm:$0xff]
                %520 = vst [vmem:[%s244 + $0x448] sm:$0xff] %v519
                %v521 = vld [vmem:[%s243 + $0x2210] sm:$0xff]
                %522 = vst [vmem:[%s244 + $0x450] sm:$0xff] %v521
                %v523 = vld [vmem:[%s243 + $0x2218] sm:$0xff]
                %524 = vst [vmem:[%s244 + $0x458] sm:$0xff] %v523
                %v525 = vld [vmem:[%s243 + $0x2300] sm:$0xff]
                %526 = vst [vmem:[%s244 + $0x460] sm:$0xff] %v525
                %v527 = vld [vmem:[%s243 + $0x2308] sm:$0xff]
                %528 = vst [vmem:[%s244 + $0x468] sm:$0xff] %v527
                %v529 = vld [vmem:[%s243 + $0x2310] sm:$0xff]
                %530 = vst [vmem:[%s244 + $0x470] sm:$0xff] %v529
                %v531 = vld [vmem:[%s243 + $0x2318] sm:$0xff]
                %532 = vst [vmem:[%s244 + $0x478] sm:$0xff] %v531
                %v533 = vld [vmem:[%s243 + $0x2400] sm:$0xff]
                %534 = vst [vmem:[%s244 + $0x480] sm:$0xff] %v533
                %v535 = vld [vmem:[%s243 + $0x2408] sm:$0xff]
                %536 = vst [vmem:[%s244 + $0x488] sm:$0xff] %v535
                %v537 = vld [vmem:[%s243 + $0x2410] sm:$0xff]
                %538 = vst [vmem:[%s244 + $0x490] sm:$0xff] %v537
                %v539 = vld [vmem:[%s243 + $0x2418] sm:$0xff]
                %540 = vst [vmem:[%s244 + $0x498] sm:$0xff] %v539
                %v541 = vld [vmem:[%s243 + $0x2500] sm:$0xff]
                %542 = vst [vmem:[%s244 + $0x4a0] sm:$0xff] %v541
                %v543 = vld [vmem:[%s243 + $0x2508] sm:$0xff]
                %544 = vst [vmem:[%s244 + $0x4a8] sm:$0xff] %v543
                %v545 = vld [vmem:[%s243 + $0x2510] sm:$0xff]
                %546 = vst [vmem:[%s244 + $0x4b0] sm:$0xff] %v545
                %v547 = vld [vmem:[%s243 + $0x2518] sm:$0xff]
                %548 = vst [vmem:[%s244 + $0x4b8] sm:$0xff] %v547
                %v549 = vld [vmem:[%s243 + $0x2600] sm:$0xff]
                %550 = vst [vmem:[%s244 + $0x4c0] sm:$0xff] %v549
                %v551 = vld [vmem:[%s243 + $0x2608] sm:$0xff]
                %552 = vst [vmem:[%s244 + $0x4c8] sm:$0xff] %v551
                %v553 = vld [vmem:[%s243 + $0x2610] sm:$0xff]
                %554 = vst [vmem:[%s244 + $0x4d0] sm:$0xff] %v553
                %v555 = vld [vmem:[%s243 + $0x2618] sm:$0xff]
                %556 = vst [vmem:[%s244 + $0x4d8] sm:$0xff] %v555
                %v557 = vld [vmem:[%s243 + $0x2700] sm:$0xff]
                %558 = vst [vmem:[%s244 + $0x4e0] sm:$0xff] %v557
                %v559 = vld [vmem:[%s243 + $0x2708] sm:$0xff]
                %560 = vst [vmem:[%s244 + $0x4e8] sm:$0xff] %v559
                %v561 = vld [vmem:[%s243 + $0x2710] sm:$0xff]
                %562 = vst [vmem:[%s244 + $0x4f0] sm:$0xff] %v561
                %v563 = vld [vmem:[%s243 + $0x2718] sm:$0xff]
                %564 = vst [vmem:[%s244 + $0x4f8] sm:$0xff] %v563
                %v565 = vld [vmem:[%s243 + $0x2800] sm:$0xff]
                %566 = vst [vmem:[%s244 + $0x500] sm:$0xff] %v565
                %v567 = vld [vmem:[%s243 + $0x2808] sm:$0xff]
                %568 = vst [vmem:[%s244 + $0x508] sm:$0xff] %v567
                %v569 = vld [vmem:[%s243 + $0x2810] sm:$0xff]
                %570 = vst [vmem:[%s244 + $0x510] sm:$0xff] %v569
                %v571 = vld [vmem:[%s243 + $0x2818] sm:$0xff]
                %572 = vst [vmem:[%s244 + $0x518] sm:$0xff] %v571
                %v573 = vld [vmem:[%s243 + $0x2900] sm:$0xff]
                %574 = vst [vmem:[%s244 + $0x520] sm:$0xff] %v573
                %v575 = vld [vmem:[%s243 + $0x2908] sm:$0xff]
                %576 = vst [vmem:[%s244 + $0x528] sm:$0xff] %v575
                %v577 = vld [vmem:[%s243 + $0x2910] sm:$0xff]
                %578 = vst [vmem:[%s244 + $0x530] sm:$0xff] %v577
                %v579 = vld [vmem:[%s243 + $0x2918] sm:$0xff]
                %580 = vst [vmem:[%s244 + $0x538] sm:$0xff] %v579
                %v581 = vld [vmem:[%s243 + $0x2a00] sm:$0xff]
                %582 = vst [vmem:[%s244 + $0x540] sm:$0xff] %v581
                %v583 = vld [vmem:[%s243 + $0x2a08] sm:$0xff]
                %584 = vst [vmem:[%s244 + $0x548] sm:$0xff] %v583
                %v585 = vld [vmem:[%s243 + $0x2a10] sm:$0xff]
                %586 = vst [vmem:[%s244 + $0x550] sm:$0xff] %v585
                %v587 = vld [vmem:[%s243 + $0x2a18] sm:$0xff]
                %588 = vst [vmem:[%s244 + $0x558] sm:$0xff] %v587
                %v589 = vld [vmem:[%s243 + $0x2b00] sm:$0xff]
                %590 = vst [vmem:[%s244 + $0x560] sm:$0xff] %v589
                %v591 = vld [vmem:[%s243 + $0x2b08] sm:$0xff]
                %592 = vst [vmem:[%s244 + $0x568] sm:$0xff] %v591
                %v593 = vld [vmem:[%s243 + $0x2b10] sm:$0xff]
                %594 = vst [vmem:[%s244 + $0x570] sm:$0xff] %v593
                %v595 = vld [vmem:[%s243 + $0x2b18] sm:$0xff]
                %596 = vst [vmem:[%s244 + $0x578] sm:$0xff] %v595
                %v597 = vld [vmem:[%s243 + $0x2c00] sm:$0xff]
                %598 = vst [vmem:[%s244 + $0x580] sm:$0xff] %v597
                %v599 = vld [vmem:[%s243 + $0x2c08] sm:$0xff]
                %600 = vst [vmem:[%s244 + $0x588] sm:$0xff] %v599
                %v601 = vld [vmem:[%s243 + $0x2c10] sm:$0xff]
                %602 = vst [vmem:[%s244 + $0x590] sm:$0xff] %v601
                %v603 = vld [vmem:[%s243 + $0x2c18] sm:$0xff]
                %604 = vst [vmem:[%s244 + $0x598] sm:$0xff] %v603
                %v605 = vld [vmem:[%s243 + $0x2d00] sm:$0xff]
                %606 = vst [vmem:[%s244 + $0x5a0] sm:$0xff] %v605
                %v607 = vld [vmem:[%s243 + $0x2d08] sm:$0xff]
                %608 = vst [vmem:[%s244 + $0x5a8] sm:$0xff] %v607
                %v609 = vld [vmem:[%s243 + $0x2d10] sm:$0xff]
                %610 = vst [vmem:[%s244 + $0x5b0] sm:$0xff] %v609
                %v611 = vld [vmem:[%s243 + $0x2d18] sm:$0xff]
                %612 = vst [vmem:[%s244 + $0x5b8] sm:$0xff] %v611
                %v613 = vld [vmem:[%s243 + $0x2e00] sm:$0xff]
                %614 = vst [vmem:[%s244 + $0x5c0] sm:$0xff] %v613
                %v615 = vld [vmem:[%s243 + $0x2e08] sm:$0xff]
                %616 = vst [vmem:[%s244 + $0x5c8] sm:$0xff] %v615
                %v617 = vld [vmem:[%s243 + $0x2e10] sm:$0xff]
                %618 = vst [vmem:[%s244 + $0x5d0] sm:$0xff] %v617
                %v619 = vld [vmem:[%s243 + $0x2e18] sm:$0xff]
                %620 = vst [vmem:[%s244 + $0x5d8] sm:$0xff] %v619
                %v621 = vld [vmem:[%s243 + $0x2f00] sm:$0xff]
                %622 = vst [vmem:[%s244 + $0x5e0] sm:$0xff] %v621
                %v623 = vld [vmem:[%s243 + $0x2f08] sm:$0xff]
                %624 = vst [vmem:[%s244 + $0x5e8] sm:$0xff] %v623
                %v625 = vld [vmem:[%s243 + $0x2f10] sm:$0xff]
                %626 = vst [vmem:[%s244 + $0x5f0] sm:$0xff] %v625
                %v627 = vld [vmem:[%s243 + $0x2f18] sm:$0xff]
                %628 = vst [vmem:[%s244 + $0x5f8] sm:$0xff] %v627
                %v629 = vld [vmem:[%s243 + $0x3000] sm:$0xff]
                %630 = vst [vmem:[%s244 + $0x600] sm:$0xff] %v629
                %v631 = vld [vmem:[%s243 + $0x3008] sm:$0xff]
                %632 = vst [vmem:[%s244 + $0x608] sm:$0xff] %v631
                %v633 = vld [vmem:[%s243 + $0x3010] sm:$0xff]
                %634 = vst [vmem:[%s244 + $0x610] sm:$0xff] %v633
                %v635 = vld [vmem:[%s243 + $0x3018] sm:$0xff]
                %636 = vst [vmem:[%s244 + $0x618] sm:$0xff] %v635
                %v637 = vld [vmem:[%s243 + $0x3100] sm:$0xff]
                %638 = vst [vmem:[%s244 + $0x620] sm:$0xff] %v637
                %v639 = vld [vmem:[%s243 + $0x3108] sm:$0xff]
                %640 = vst [vmem:[%s244 + $0x628] sm:$0xff] %v639
                %v641 = vld [vmem:[%s243 + $0x3110] sm:$0xff]
                %642 = vst [vmem:[%s244 + $0x630] sm:$0xff] %v641
                %v643 = vld [vmem:[%s243 + $0x3118] sm:$0xff]
                %644 = vst [vmem:[%s244 + $0x638] sm:$0xff] %v643
                %v645 = vld [vmem:[%s243 + $0x3200] sm:$0xff]
                %646 = vst [vmem:[%s244 + $0x640] sm:$0xff] %v645
                %v647 = vld [vmem:[%s243 + $0x3208] sm:$0xff]
                %648 = vst [vmem:[%s244 + $0x648] sm:$0xff] %v647
                %v649 = vld [vmem:[%s243 + $0x3210] sm:$0xff]
                %650 = vst [vmem:[%s244 + $0x650] sm:$0xff] %v649
                %v651 = vld [vmem:[%s243 + $0x3218] sm:$0xff]
                %652 = vst [vmem:[%s244 + $0x658] sm:$0xff] %v651
                %v653 = vld [vmem:[%s243 + $0x3300] sm:$0xff]
                %654 = vst [vmem:[%s244 + $0x660] sm:$0xff] %v653
                %v655 = vld [vmem:[%s243 + $0x3308] sm:$0xff]
                %656 = vst [vmem:[%s244 + $0x668] sm:$0xff] %v655
                %v657 = vld [vmem:[%s243 + $0x3310] sm:$0xff]
                %658 = vst [vmem:[%s244 + $0x670] sm:$0xff] %v657
                %v659 = vld [vmem:[%s243 + $0x3318] sm:$0xff]
                %660 = vst [vmem:[%s244 + $0x678] sm:$0xff] %v659
                %v661 = vld [vmem:[%s243 + $0x3400] sm:$0xff]
                %662 = vst [vmem:[%s244 + $0x680] sm:$0xff] %v661
                %v663 = vld [vmem:[%s243 + $0x3408] sm:$0xff]
                %664 = vst [vmem:[%s244 + $0x688] sm:$0xff] %v663
                %v665 = vld [vmem:[%s243 + $0x3410] sm:$0xff]
                %666 = vst [vmem:[%s244 + $0x690] sm:$0xff] %v665
                %v667 = vld [vmem:[%s243 + $0x3418] sm:$0xff]
                %668 = vst [vmem:[%s244 + $0x698] sm:$0xff] %v667
                %v669 = vld [vmem:[%s243 + $0x3500] sm:$0xff]
                %670 = vst [vmem:[%s244 + $0x6a0] sm:$0xff] %v669
                %v671 = vld [vmem:[%s243 + $0x3508] sm:$0xff]
                %672 = vst [vmem:[%s244 + $0x6a8] sm:$0xff] %v671
                %v673 = vld [vmem:[%s243 + $0x3510] sm:$0xff]
                %674 = vst [vmem:[%s244 + $0x6b0] sm:$0xff] %v673
                %v675 = vld [vmem:[%s243 + $0x3518] sm:$0xff]
                %676 = vst [vmem:[%s244 + $0x6b8] sm:$0xff] %v675
                %v677 = vld [vmem:[%s243 + $0x3600] sm:$0xff]
                %678 = vst [vmem:[%s244 + $0x6c0] sm:$0xff] %v677
                %v679 = vld [vmem:[%s243 + $0x3608] sm:$0xff]
                %680 = vst [vmem:[%s244 + $0x6c8] sm:$0xff] %v679
                %v681 = vld [vmem:[%s243 + $0x3610] sm:$0xff]
                %682 = vst [vmem:[%s244 + $0x6d0] sm:$0xff] %v681
                %v683 = vld [vmem:[%s243 + $0x3618] sm:$0xff]
                %684 = vst [vmem:[%s244 + $0x6d8] sm:$0xff] %v683
                %v685 = vld [vmem:[%s243 + $0x3700] sm:$0xff]
                %686 = vst [vmem:[%s244 + $0x6e0] sm:$0xff] %v685
                %v687 = vld [vmem:[%s243 + $0x3708] sm:$0xff]
                %688 = vst [vmem:[%s244 + $0x6e8] sm:$0xff] %v687
                %v689 = vld [vmem:[%s243 + $0x3710] sm:$0xff]
                %690 = vst [vmem:[%s244 + $0x6f0] sm:$0xff] %v689
                %v691 = vld [vmem:[%s243 + $0x3718] sm:$0xff]
                %692 = vst [vmem:[%s244 + $0x6f8] sm:$0xff] %v691
                %v693 = vld [vmem:[%s243 + $0x3800] sm:$0xff]
                %694 = vst [vmem:[%s244 + $0x700] sm:$0xff] %v693
                %v695 = vld [vmem:[%s243 + $0x3808] sm:$0xff]
                %696 = vst [vmem:[%s244 + $0x708] sm:$0xff] %v695
                %v697 = vld [vmem:[%s243 + $0x3810] sm:$0xff]
                %698 = vst [vmem:[%s244 + $0x710] sm:$0xff] %v697
                %v699 = vld [vmem:[%s243 + $0x3818] sm:$0xff]
                %700 = vst [vmem:[%s244 + $0x718] sm:$0xff] %v699
                %v701 = vld [vmem:[%s243 + $0x3900] sm:$0xff]
                %702 = vst [vmem:[%s244 + $0x720] sm:$0xff] %v701
                %v703 = vld [vmem:[%s243 + $0x3908] sm:$0xff]
                %704 = vst [vmem:[%s244 + $0x728] sm:$0xff] %v703
                %v705 = vld [vmem:[%s243 + $0x3910] sm:$0xff]
                %706 = vst [vmem:[%s244 + $0x730] sm:$0xff] %v705
                %v707 = vld [vmem:[%s243 + $0x3918] sm:$0xff]
                %708 = vst [vmem:[%s244 + $0x738] sm:$0xff] %v707
                %v709 = vld [vmem:[%s243 + $0x3a00] sm:$0xff]
                %710 = vst [vmem:[%s244 + $0x740] sm:$0xff] %v709
                %v711 = vld [vmem:[%s243 + $0x3a08] sm:$0xff]
                %712 = vst [vmem:[%s244 + $0x748] sm:$0xff] %v711
                %v713 = vld [vmem:[%s243 + $0x3a10] sm:$0xff]
                %714 = vst [vmem:[%s244 + $0x750] sm:$0xff] %v713
                %v715 = vld [vmem:[%s243 + $0x3a18] sm:$0xff]
                %716 = vst [vmem:[%s244 + $0x758] sm:$0xff] %v715
                %v717 = vld [vmem:[%s243 + $0x3b00] sm:$0xff]
                %718 = vst [vmem:[%s244 + $0x760] sm:$0xff] %v717
                %v719 = vld [vmem:[%s243 + $0x3b08] sm:$0xff]
                %720 = vst [vmem:[%s244 + $0x768] sm:$0xff] %v719
                %v721 = vld [vmem:[%s243 + $0x3b10] sm:$0xff]
                %722 = vst [vmem:[%s244 + $0x770] sm:$0xff] %v721
                %v723 = vld [vmem:[%s243 + $0x3b18] sm:$0xff]
                %724 = vst [vmem:[%s244 + $0x778] sm:$0xff] %v723
                %v725 = vld [vmem:[%s243 + $0x3c00] sm:$0xff]
                %726 = vst [vmem:[%s244 + $0x780] sm:$0xff] %v725
                %v727 = vld [vmem:[%s243 + $0x3c08] sm:$0xff]
                %728 = vst [vmem:[%s244 + $0x788] sm:$0xff] %v727
                %v729 = vld [vmem:[%s243 + $0x3c10] sm:$0xff]
                %730 = vst [vmem:[%s244 + $0x790] sm:$0xff] %v729
                %v731 = vld [vmem:[%s243 + $0x3c18] sm:$0xff]
                %732 = vst [vmem:[%s244 + $0x798] sm:$0xff] %v731
                %v733 = vld [vmem:[%s243 + $0x3d00] sm:$0xff]
                %734 = vst [vmem:[%s244 + $0x7a0] sm:$0xff] %v733
                %v735 = vld [vmem:[%s243 + $0x3d08] sm:$0xff]
                %736 = vst [vmem:[%s244 + $0x7a8] sm:$0xff] %v735
                %v737 = vld [vmem:[%s243 + $0x3d10] sm:$0xff]
                %738 = vst [vmem:[%s244 + $0x7b0] sm:$0xff] %v737
                %v739 = vld [vmem:[%s243 + $0x3d18] sm:$0xff]
                %740 = vst [vmem:[%s244 + $0x7b8] sm:$0xff] %v739
                %v741 = vld [vmem:[%s243 + $0x3e00] sm:$0xff]
                %742 = vst [vmem:[%s244 + $0x7c0] sm:$0xff] %v741
                %v743 = vld [vmem:[%s243 + $0x3e08] sm:$0xff]
                %744 = vst [vmem:[%s244 + $0x7c8] sm:$0xff] %v743
                %v745 = vld [vmem:[%s243 + $0x3e10] sm:$0xff]
                %746 = vst [vmem:[%s244 + $0x7d0] sm:$0xff] %v745
                %v747 = vld [vmem:[%s243 + $0x3e18] sm:$0xff]
                %748 = vst [vmem:[%s244 + $0x7d8] sm:$0xff] %v747
                %v749 = vld [vmem:[%s243 + $0x3f00] sm:$0xff]
                %750 = vst [vmem:[%s244 + $0x7e0] sm:$0xff] %v749
                %v751 = vld [vmem:[%s243 + $0x3f08] sm:$0xff]
                %752 = vst [vmem:[%s244 + $0x7e8] sm:$0xff] %v751
                %v753 = vld [vmem:[%s243 + $0x3f10] sm:$0xff]
                %754 = vst [vmem:[%s244 + $0x7f0] sm:$0xff] %v753
                %v755 = vld [vmem:[%s243 + $0x3f18] sm:$0xff]
                %756 = vst [vmem:[%s244 + $0x7f8] sm:$0xff] %v755
              $region41: #{head_forward.3} parent=35 // loop_footer
                %s242 = sadd.s32 1, %s238
              $region42: #{head_forward.3} parent=35 // loop_footer_branch
                %237 = sbr.rel target = $region38
              $region43: #{head_forward.3} parent=35 // loop_exit
                _
            $region36: #{head_forward.3} parent=31 // pred_fallthru
              _
            // Predicated region
            $region44: #{head_forward.3} parent=31 // pred_check
              _
            $region45: #{head_forward.3} parent=31 // pred_check_branch
              %758 = sbr.rel target = $region47
            $region46: #{head_forward.3} parent=31 // pred_region
              _
            $region47: #{head_forward.3} parent=31 // pred_fallthru
              _
          $region32: #{head_forward.3} parent=27 // pred_fallthru
            _
          %759 = vnop
        $region28: #{head_forward.3} parent=23 // pred_fallthru
          _
        // Predicated region
        $region48: #{head_forward.3} parent=23 // pred_check
          %p760 = pneg %p106
        $region49: #{head_forward.3} parent=23 // pred_check_branch
          %762 = sbr.rel (%p760) target = $region51
        $region50: #{head_forward.3} parent=23 // pred_region
          %s763 = smul.u32 4, %s19
          %p764 = scmp.lt.s32.totalorder %s763, 31
          %s765 = scalar_select %p764, %s763, 31
          %s766 = scalar_lea.vmem %s2, %s765
          %s767 = smul.u32 4, %s19
        $region51: #{head_forward.3} parent=23 // pred_fallthru
          _
        // Predicated region
        $region52: #{head_forward.3} parent=23 // pred_check
          %p768 = pneg %p132
        $region53: #{head_forward.3} parent=23 // pred_check_branch
          %770 = sbr.rel (%p768) target = $region55
        $region54: #{head_forward.3} parent=23 // pred_region
          %s771 = smul.u32 64, %s19
          %p772 = scmp.lt.s32.totalorder %s771, 511
          %s773 = scalar_select %p772, %s771, 511
          %s774 = smul.addr %s773, 8
          %s775 = scalar_lea.vmem %s3, %s774
          %s776 = smul.u32 64, %s19
        $region55: #{head_forward.3} parent=23 // pred_fallthru
          _
      $region24: #{head_forward.3} parent=5 // pred_fallthru
        _
      %p777 = scmp.le.s32.totalorder 1, %s11
      %p778 = scmp.lt.s32.totalorder %s11, 9
      %p779 = pnand %p777, %p778
      %p780 = pneg %p779
      // Predicated region
      $region56: #{head_forward.3} parent=5 // pred_check
        _
      $region57: #{head_forward.3} parent=5 // pred_check_branch
        %782 = sbr.rel (%p779) target = $region59
      $region58: #{head_forward.3} parent=5 // pred_region
        %s783 = ssub.s32 %s11, 1
        %s784 = sand.u32 %s73, 1
        %s785 = sand.u32 %s73, 1
        %s786 = smul.addr %s785, 2048
        %s787 = scalar_lea.vmem [#allocation4], %s786
        // Predicated region
        $region60: #{head_forward.3} parent=58 // pred_check
          %p788 = pneg %p86
        $region61: #{head_forward.3} parent=58 // pred_check_branch
          %790 = sbr.rel (%p788) target = $region63
        $region62: #{head_forward.3} parent=58 // pred_region
          _
        $region63: #{head_forward.3} parent=58 // pred_fallthru
          _
        %s791 = smul.u32 4, %s23
        %p792 = scmp.lt.s32.totalorder %s21, 0
        %s793 = scalar_select %p792, %s21, 0
        %p794 = scmp.lt.s32.totalorder %s791, 3
        %s795 = scalar_select %p794, %s791, 3
        %s796 = smul.addr %s793, 4
        %s797 = sadd.s32 %s795, %s796
        %s798 = smul.addr %s797, 8
        %s799 = scalar_lea.vmem %s0, %s798
        %p800 = pneg %p58
        %p801 = pneg %p55
        %s802 = sand.u32 %s73, 1
        %s803 = sand.u32 %s73, 1
        %s804 = smul.addr %s803, 2048
        %s805 = scalar_lea.vmem [#allocation4], %s804
        %p806 = pneg %p86
        %p807 = pneg %p83
        %s808 = smul.u32 4, %s22
        %p809 = scmp.lt.s32.totalorder %s808, 31
        %s810 = scalar_select %p809, %s808, 31
        %s811 = scalar_lea.vmem %s2, %s810
        %p812 = pneg %p112
        %p813 = pneg %p109
        %s814 = smul.u32 64, %s22
        %p815 = scmp.lt.s32.totalorder %s814, 511
        %s816 = scalar_select %p815, %s814, 511
        %s817 = smul.addr %s816, 8
        %s818 = scalar_lea.vmem %s3, %s817
        %p819 = pneg %p138
        %p820 = pneg %p135
        %p821 = pneg %p159
        %p822 = pneg %p156
        %p823 = pneg %p185
        %p824 = pneg %p182
        %p825 = scmp.lt.s32.totalorder %s21, 0
        %s826 = scalar_select %p825, %s21, 0
        %s827 = smul.addr %s826, 8
        %s828 = scalar_lea.vmem %s5, %s827
        %s829 = smul.u32 4, %s23
        %p830 = scmp.lt.s32.totalorder %s21, 0
        %s831 = scalar_select %p830, %s21, 0
        %p832 = scmp.lt.s32.totalorder %s829, 3
        %s833 = scalar_select %p832, %s829, 3
        %s834 = smul.addr %s831, 4
        %s835 = sadd.s32 %s833, %s834
        %s836 = smul.addr %s835, 8
        %s837 = scalar_lea.vmem %s0, %s836
        %s838 = smul.u32 4, %s23
        %s839 = smul.u32 64, %s23
        %s840 = smul.u32 4, %s22
        %s841 = smul.u32 4, %s22
        %p842 = scmp.lt.s32.totalorder %s841, 31
        %s843 = scalar_select %p842, %s841, 31
        %s844 = scalar_lea.vmem %s2, %s843
        %s845 = smul.u32 4, %s22
        %s846 = smul.u32 64, %s22
        %p847 = scmp.lt.s32.totalorder %s846, 511
        %s848 = scalar_select %p847, %s846, 511
        %s849 = smul.addr %s848, 8
        %s850 = scalar_lea.vmem %s3, %s849
        %s851 = smul.u32 64, %s22
        %p852 = scmp.lt.s32.totalorder %s21, 0
        %s853 = scalar_select %p852, %s21, 0
        %s854 = smul.addr %s853, 8
        %s855 = scalar_lea.vmem %s5, %s854
        %p856 = scmp.eq.s32.totalorder %s22, 0
        %p857 = scmp.eq.s32.totalorder %s23, 0
        %p858 = pnand %p856, %p857
        %p859 = pneg %p858
        // Predicated region
        $region64: #{head_forward.3} parent=58 // pred_check
          _
        $region65: #{head_forward.3} parent=58 // pred_check_branch
          %861 = sbr.rel (%p858) target = $region67
        $region66: #{head_forward.3} parent=58 // pred_region
          %862 = vst [vmem:[#allocation3] sm:$0xff] 0.0
        $region67: #{head_forward.3} parent=58 // pred_fallthru
          _
        // Predicated region
        $region68: #{head_forward.3} parent=58 // pred_check
          %p863 = pneg %p857
        $region69: #{head_forward.3} parent=58 // pred_check_branch
          %865 = sbr.rel (%p863) target = $region71
        $region70: #{head_forward.3} parent=58 // pred_region
          %866 = vst [vmem:[#allocation2] sm:$0xff] 0.0
          %867 = vst [vmem:[#allocation2 + $0x8] sm:$0xff] 0.0
          %868 = vst [vmem:[#allocation2 + $0x10] sm:$0xff] 0.0
          %869 = vst [vmem:[#allocation2 + $0x18] sm:$0xff] 0.0
        $region71: #{head_forward.3} parent=58 // pred_fallthru
          _
        %v870 = vld [vmem:[#allocation2] sm:$0xff]
        %v871 = vld [vmem:[#allocation2 + $0x8] sm:$0xff]
        %v872 = vld [vmem:[#allocation2 + $0x10] sm:$0xff]
        %v873 = vld [vmem:[#allocation2 + $0x18] sm:$0xff]
        %v874 = vld [vmem:[%s837] sm:$0xff]
        %v875 = vld [vmem:[%s837 + $0x8] sm:$0xff]
        %v876 = vld [vmem:[%s837 + $0x10] sm:$0xff]
        %v877 = vld [vmem:[%s837 + $0x18] sm:$0xff]
        %v878 = vld [vmem:[%s787] sm:$0xff]
        %v879 = vld [vmem:[%s787 + $0x8] sm:$0xff]
        %v880 = vld [vmem:[%s787 + $0x10] sm:$0xff]
        %v881 = vld [vmem:[%s787 + $0x18] sm:$0xff]
        %v882 = vld [vmem:[%s787 + $0x20] sm:$0xff]
        %v883 = vld [vmem:[%s787 + $0x28] sm:$0xff]
        %v884 = vld [vmem:[%s787 + $0x30] sm:$0xff]
        %v885 = vld [vmem:[%s787 + $0x38] sm:$0xff]
        %v886 = vld [vmem:[%s787 + $0x40] sm:$0xff]
        %v887 = vld [vmem:[%s787 + $0x48] sm:$0xff]
        %v888 = vld [vmem:[%s787 + $0x50] sm:$0xff]
        %v889 = vld [vmem:[%s787 + $0x58] sm:$0xff]
        %v890 = vld [vmem:[%s787 + $0x60] sm:$0xff]
        %v891 = vld [vmem:[%s787 + $0x68] sm:$0xff]
        %v892 = vld [vmem:[%s787 + $0x70] sm:$0xff]
        %v893 = vld [vmem:[%s787 + $0x78] sm:$0xff]
        %v894 = vld [vmem:[%s787 + $0x80] sm:$0xff]
        %v895 = vld [vmem:[%s787 + $0x88] sm:$0xff]
        %v896 = vld [vmem:[%s787 + $0x90] sm:$0xff]
        %v897 = vld [vmem:[%s787 + $0x98] sm:$0xff]
        %v898 = vld [vmem:[%s787 + $0xa0] sm:$0xff]
        %v899 = vld [vmem:[%s787 + $0xa8] sm:$0xff]
        %v900 = vld [vmem:[%s787 + $0xb0] sm:$0xff]
        %v901 = vld [vmem:[%s787 + $0xb8] sm:$0xff]
        %v902 = vld [vmem:[%s787 + $0xc0] sm:$0xff]
        %v903 = vld [vmem:[%s787 + $0xc8] sm:$0xff]
        %v904 = vld [vmem:[%s787 + $0xd0] sm:$0xff]
        %v905 = vld [vmem:[%s787 + $0xd8] sm:$0xff]
        %v906 = vld [vmem:[%s787 + $0xe0] sm:$0xff]
        %v907 = vld [vmem:[%s787 + $0xe8] sm:$0xff]
        %v908 = vld [vmem:[%s787 + $0xf0] sm:$0xff]
        %v909 = vld [vmem:[%s787 + $0xf8] sm:$0xff]
        %v910 = vld [vmem:[%s787 + $0x100] sm:$0xff]
        %v911 = vld [vmem:[%s787 + $0x108] sm:$0xff]
        %v912 = vld [vmem:[%s787 + $0x110] sm:$0xff]
        %v913 = vld [vmem:[%s787 + $0x118] sm:$0xff]
        %v914 = vld [vmem:[%s787 + $0x120] sm:$0xff]
        %v915 = vld [vmem:[%s787 + $0x128] sm:$0xff]
        %v916 = vld [vmem:[%s787 + $0x130] sm:$0xff]
        %v917 = vld [vmem:[%s787 + $0x138] sm:$0xff]
        %v918 = vld [vmem:[%s787 + $0x140] sm:$0xff]
        %v919 = vld [vmem:[%s787 + $0x148] sm:$0xff]
        %v920 = vld [vmem:[%s787 + $0x150] sm:$0xff]
        %v921 = vld [vmem:[%s787 + $0x158] sm:$0xff]
        %v922 = vld [vmem:[%s787 + $0x160] sm:$0xff]
        %v923 = vld [vmem:[%s787 + $0x168] sm:$0xff]
        %v924 = vld [vmem:[%s787 + $0x170] sm:$0xff]
        %v925 = vld [vmem:[%s787 + $0x178] sm:$0xff]
        %v926 = vld [vmem:[%s787 + $0x180] sm:$0xff]
        %v927 = vld [vmem:[%s787 + $0x188] sm:$0xff]
        %v928 = vld [vmem:[%s787 + $0x190] sm:$0xff]
        %v929 = vld [vmem:[%s787 + $0x198] sm:$0xff]
        %v930 = vld [vmem:[%s787 + $0x1a0] sm:$0xff]
        %v931 = vld [vmem:[%s787 + $0x1a8] sm:$0xff]
        %v932 = vld [vmem:[%s787 + $0x1b0] sm:$0xff]
        %v933 = vld [vmem:[%s787 + $0x1b8] sm:$0xff]
        %v934 = vld [vmem:[%s787 + $0x1c0] sm:$0xff]
        %v935 = vld [vmem:[%s787 + $0x1c8] sm:$0xff]
        %v936 = vld [vmem:[%s787 + $0x1d0] sm:$0xff]
        %v937 = vld [vmem:[%s787 + $0x1d8] sm:$0xff]
        %v938 = vld [vmem:[%s787 + $0x1e0] sm:$0xff]
        %v939 = vld [vmem:[%s787 + $0x1e8] sm:$0xff]
        %v940 = vld [vmem:[%s787 + $0x1f0] sm:$0xff]
        %v941 = vld [vmem:[%s787 + $0x1f8] sm:$0xff]
        %v942 = vld [vmem:[%s787 + $0x200] sm:$0xff]
        %v943 = vld [vmem:[%s787 + $0x208] sm:$0xff]
        %v944 = vld [vmem:[%s787 + $0x210] sm:$0xff]
        %v945 = vld [vmem:[%s787 + $0x218] sm:$0xff]
        %v946 = vld [vmem:[%s787 + $0x220] sm:$0xff]
        %v947 = vld [vmem:[%s787 + $0x228] sm:$0xff]
        %v948 = vld [vmem:[%s787 + $0x230] sm:$0xff]
        %v949 = vld [vmem:[%s787 + $0x238] sm:$0xff]
        %v950 = vld [vmem:[%s787 + $0x240] sm:$0xff]
        %v951 = vld [vmem:[%s787 + $0x248] sm:$0xff]
        %v952 = vld [vmem:[%s787 + $0x250] sm:$0xff]
        %v953 = vld [vmem:[%s787 + $0x258] sm:$0xff]
        %v954 = vld [vmem:[%s787 + $0x260] sm:$0xff]
        %v955 = vld [vmem:[%s787 + $0x268] sm:$0xff]
        %v956 = vld [vmem:[%s787 + $0x270] sm:$0xff]
        %v957 = vld [vmem:[%s787 + $0x278] sm:$0xff]
        %v958 = vld [vmem:[%s787 + $0x280] sm:$0xff]
        %v959 = vld [vmem:[%s787 + $0x288] sm:$0xff]
        %v960 = vld [vmem:[%s787 + $0x290] sm:$0xff]
        %v961 = vld [vmem:[%s787 + $0x298] sm:$0xff]
        %v962 = vld [vmem:[%s787 + $0x2a0] sm:$0xff]
        %v963 = vld [vmem:[%s787 + $0x2a8] sm:$0xff]
        %v964 = vld [vmem:[%s787 + $0x2b0] sm:$0xff]
        %v965 = vld [vmem:[%s787 + $0x2b8] sm:$0xff]
        %v966 = vld [vmem:[%s787 + $0x2c0] sm:$0xff]
        %v967 = vld [vmem:[%s787 + $0x2c8] sm:$0xff]
        %v968 = vld [vmem:[%s787 + $0x2d0] sm:$0xff]
        %v969 = vld [vmem:[%s787 + $0x2d8] sm:$0xff]
        %v970 = vld [vmem:[%s787 + $0x2e0] sm:$0xff]
        %v971 = vld [vmem:[%s787 + $0x2e8] sm:$0xff]
        %v972 = vld [vmem:[%s787 + $0x2f0] sm:$0xff]
        %v973 = vld [vmem:[%s787 + $0x2f8] sm:$0xff]
        %v974 = vld [vmem:[%s787 + $0x300] sm:$0xff]
        %v975 = vld [vmem:[%s787 + $0x308] sm:$0xff]
        %v976 = vld [vmem:[%s787 + $0x310] sm:$0xff]
        %v977 = vld [vmem:[%s787 + $0x318] sm:$0xff]
        %v978 = vld [vmem:[%s787 + $0x320] sm:$0xff]
        %v979 = vld [vmem:[%s787 + $0x328] sm:$0xff]
        %v980 = vld [vmem:[%s787 + $0x330] sm:$0xff]
        %v981 = vld [vmem:[%s787 + $0x338] sm:$0xff]
        %v982 = vld [vmem:[%s787 + $0x340] sm:$0xff]
        %v983 = vld [vmem:[%s787 + $0x348] sm:$0xff]
        %v984 = vld [vmem:[%s787 + $0x350] sm:$0xff]
        %v985 = vld [vmem:[%s787 + $0x358] sm:$0xff]
        %v986 = vld [vmem:[%s787 + $0x360] sm:$0xff]
        %v987 = vld [vmem:[%s787 + $0x368] sm:$0xff]
        %v988 = vld [vmem:[%s787 + $0x370] sm:$0xff]
        %v989 = vld [vmem:[%s787 + $0x378] sm:$0xff]
        %v990 = vld [vmem:[%s787 + $0x380] sm:$0xff]
        %v991 = vld [vmem:[%s787 + $0x388] sm:$0xff]
        %v992 = vld [vmem:[%s787 + $0x390] sm:$0xff]
        %v993 = vld [vmem:[%s787 + $0x398] sm:$0xff]
        %v994 = vld [vmem:[%s787 + $0x3a0] sm:$0xff]
        %v995 = vld [vmem:[%s787 + $0x3a8] sm:$0xff]
        %v996 = vld [vmem:[%s787 + $0x3b0] sm:$0xff]
        %v997 = vld [vmem:[%s787 + $0x3b8] sm:$0xff]
        %v998 = vld [vmem:[%s787 + $0x3c0] sm:$0xff]
        %v999 = vld [vmem:[%s787 + $0x3c8] sm:$0xff]
        %v1000 = vld [vmem:[%s787 + $0x3d0] sm:$0xff]
        %v1001 = vld [vmem:[%s787 + $0x3d8] sm:$0xff]
        %v1002 = vld [vmem:[%s787 + $0x3e0] sm:$0xff]
        %v1003 = vld [vmem:[%s787 + $0x3e8] sm:$0xff]
        %v1004 = vld [vmem:[%s787 + $0x3f0] sm:$0xff]
        %v1005 = vld [vmem:[%s787 + $0x3f8] sm:$0xff]
        %v1006 = vld [vmem:[%s787 + $0x400] sm:$0xff]
        %v1007 = vld [vmem:[%s787 + $0x408] sm:$0xff]
        %v1008 = vld [vmem:[%s787 + $0x410] sm:$0xff]
        %v1009 = vld [vmem:[%s787 + $0x418] sm:$0xff]
        %v1010 = vld [vmem:[%s787 + $0x420] sm:$0xff]
        %v1011 = vld [vmem:[%s787 + $0x428] sm:$0xff]
        %v1012 = vld [vmem:[%s787 + $0x430] sm:$0xff]
        %v1013 = vld [vmem:[%s787 + $0x438] sm:$0xff]
        %v1014 = vld [vmem:[%s787 + $0x440] sm:$0xff]
        %v1015 = vld [vmem:[%s787 + $0x448] sm:$0xff]
        %v1016 = vld [vmem:[%s787 + $0x450] sm:$0xff]
        %v1017 = vld [vmem:[%s787 + $0x458] sm:$0xff]
        %v1018 = vld [vmem:[%s787 + $0x460] sm:$0xff]
        %v1019 = vld [vmem:[%s787 + $0x468] sm:$0xff]
        %v1020 = vld [vmem:[%s787 + $0x470] sm:$0xff]
        %v1021 = vld [vmem:[%s787 + $0x478] sm:$0xff]
        %v1022 = vld [vmem:[%s787 + $0x480] sm:$0xff]
        %v1023 = vld [vmem:[%s787 + $0x488] sm:$0xff]
        %v1024 = vld [vmem:[%s787 + $0x490] sm:$0xff]
        %v1025 = vld [vmem:[%s787 + $0x498] sm:$0xff]
        %v1026 = vld [vmem:[%s787 + $0x4a0] sm:$0xff]
        %v1027 = vld [vmem:[%s787 + $0x4a8] sm:$0xff]
        %v1028 = vld [vmem:[%s787 + $0x4b0] sm:$0xff]
        %v1029 = vld [vmem:[%s787 + $0x4b8] sm:$0xff]
        %v1030 = vld [vmem:[%s787 + $0x4c0] sm:$0xff]
        %v1031 = vld [vmem:[%s787 + $0x4c8] sm:$0xff]
        %v1032 = vld [vmem:[%s787 + $0x4d0] sm:$0xff]
        %v1033 = vld [vmem:[%s787 + $0x4d8] sm:$0xff]
        %v1034 = vld [vmem:[%s787 + $0x4e0] sm:$0xff]
        %v1035 = vld [vmem:[%s787 + $0x4e8] sm:$0xff]
        %v1036 = vld [vmem:[%s787 + $0x4f0] sm:$0xff]
        %v1037 = vld [vmem:[%s787 + $0x4f8] sm:$0xff]
        %v1038 = vld [vmem:[%s787 + $0x500] sm:$0xff]
        %v1039 = vld [vmem:[%s787 + $0x508] sm:$0xff]
        %v1040 = vld [vmem:[%s787 + $0x510] sm:$0xff]
        %v1041 = vld [vmem:[%s787 + $0x518] sm:$0xff]
        %v1042 = vld [vmem:[%s787 + $0x520] sm:$0xff]
        %v1043 = vld [vmem:[%s787 + $0x528] sm:$0xff]
        %v1044 = vld [vmem:[%s787 + $0x530] sm:$0xff]
        %v1045 = vld [vmem:[%s787 + $0x538] sm:$0xff]
        %v1046 = vld [vmem:[%s787 + $0x540] sm:$0xff]
        %v1047 = vld [vmem:[%s787 + $0x548] sm:$0xff]
        %v1048 = vld [vmem:[%s787 + $0x550] sm:$0xff]
        %v1049 = vld [vmem:[%s787 + $0x558] sm:$0xff]
        %v1050 = vld [vmem:[%s787 + $0x560] sm:$0xff]
        %v1051 = vld [vmem:[%s787 + $0x568] sm:$0xff]
        %v1052 = vld [vmem:[%s787 + $0x570] sm:$0xff]
        %v1053 = vld [vmem:[%s787 + $0x578] sm:$0xff]
        %v1054 = vld [vmem:[%s787 + $0x580] sm:$0xff]
        %v1055 = vld [vmem:[%s787 + $0x588] sm:$0xff]
        %v1056 = vld [vmem:[%s787 + $0x590] sm:$0xff]
        %v1057 = vld [vmem:[%s787 + $0x598] sm:$0xff]
        %v1058 = vld [vmem:[%s787 + $0x5a0] sm:$0xff]
        %v1059 = vld [vmem:[%s787 + $0x5a8] sm:$0xff]
        %v1060 = vld [vmem:[%s787 + $0x5b0] sm:$0xff]
        %v1061 = vld [vmem:[%s787 + $0x5b8] sm:$0xff]
        %v1062 = vld [vmem:[%s787 + $0x5c0] sm:$0xff]
        %v1063 = vld [vmem:[%s787 + $0x5c8] sm:$0xff]
        %v1064 = vld [vmem:[%s787 + $0x5d0] sm:$0xff]
        %v1065 = vld [vmem:[%s787 + $0x5d8] sm:$0xff]
        %v1066 = vld [vmem:[%s787 + $0x5e0] sm:$0xff]
        %v1067 = vld [vmem:[%s787 + $0x5e8] sm:$0xff]
        %v1068 = vld [vmem:[%s787 + $0x5f0] sm:$0xff]
        %v1069 = vld [vmem:[%s787 + $0x5f8] sm:$0xff]
        %v1070 = vld [vmem:[%s787 + $0x600] sm:$0xff]
        %v1071 = vld [vmem:[%s787 + $0x608] sm:$0xff]
        %v1072 = vld [vmem:[%s787 + $0x610] sm:$0xff]
        %v1073 = vld [vmem:[%s787 + $0x618] sm:$0xff]
        %v1074 = vld [vmem:[%s787 + $0x620] sm:$0xff]
        %v1075 = vld [vmem:[%s787 + $0x628] sm:$0xff]
        %v1076 = vld [vmem:[%s787 + $0x630] sm:$0xff]
        %v1077 = vld [vmem:[%s787 + $0x638] sm:$0xff]
        %v1078 = vld [vmem:[%s787 + $0x640] sm:$0xff]
        %v1079 = vld [vmem:[%s787 + $0x648] sm:$0xff]
        %v1080 = vld [vmem:[%s787 + $0x650] sm:$0xff]
        %v1081 = vld [vmem:[%s787 + $0x658] sm:$0xff]
        %v1082 = vld [vmem:[%s787 + $0x660] sm:$0xff]
        %v1083 = vld [vmem:[%s787 + $0x668] sm:$0xff]
        %v1084 = vld [vmem:[%s787 + $0x670] sm:$0xff]
        %v1085 = vld [vmem:[%s787 + $0x678] sm:$0xff]
        %v1086 = vld [vmem:[%s787 + $0x680] sm:$0xff]
        %v1087 = vld [vmem:[%s787 + $0x688] sm:$0xff]
        %v1088 = vld [vmem:[%s787 + $0x690] sm:$0xff]
        %v1089 = vld [vmem:[%s787 + $0x698] sm:$0xff]
        %v1090 = vld [vmem:[%s787 + $0x6a0] sm:$0xff]
        %v1091 = vld [vmem:[%s787 + $0x6a8] sm:$0xff]
        %v1092 = vld [vmem:[%s787 + $0x6b0] sm:$0xff]
        %v1093 = vld [vmem:[%s787 + $0x6b8] sm:$0xff]
        %v1094 = vld [vmem:[%s787 + $0x6c0] sm:$0xff]
        %v1095 = vld [vmem:[%s787 + $0x6c8] sm:$0xff]
        %v1096 = vld [vmem:[%s787 + $0x6d0] sm:$0xff]
        %v1097 = vld [vmem:[%s787 + $0x6d8] sm:$0xff]
        %v1098 = vld [vmem:[%s787 + $0x6e0] sm:$0xff]
        %v1099 = vld [vmem:[%s787 + $0x6e8] sm:$0xff]
        %v1100 = vld [vmem:[%s787 + $0x6f0] sm:$0xff]
        %v1101 = vld [vmem:[%s787 + $0x6f8] sm:$0xff]
        %v1102 = vld [vmem:[%s787 + $0x700] sm:$0xff]
        %v1103 = vld [vmem:[%s787 + $0x708] sm:$0xff]
        %v1104 = vld [vmem:[%s787 + $0x710] sm:$0xff]
        %v1105 = vld [vmem:[%s787 + $0x718] sm:$0xff]
        %v1106 = vld [vmem:[%s787 + $0x720] sm:$0xff]
        %v1107 = vld [vmem:[%s787 + $0x728] sm:$0xff]
        %v1108 = vld [vmem:[%s787 + $0x730] sm:$0xff]
        %v1109 = vld [vmem:[%s787 + $0x738] sm:$0xff]
        %v1110 = vld [vmem:[%s787 + $0x740] sm:$0xff]
        %v1111 = vld [vmem:[%s787 + $0x748] sm:$0xff]
        %v1112 = vld [vmem:[%s787 + $0x750] sm:$0xff]
        %v1113 = vld [vmem:[%s787 + $0x758] sm:$0xff]
        %v1114 = vld [vmem:[%s787 + $0x760] sm:$0xff]
        %v1115 = vld [vmem:[%s787 + $0x768] sm:$0xff]
        %v1116 = vld [vmem:[%s787 + $0x770] sm:$0xff]
        %v1117 = vld [vmem:[%s787 + $0x778] sm:$0xff]
        %v1118 = vld [vmem:[%s787 + $0x780] sm:$0xff]
        %v1119 = vld [vmem:[%s787 + $0x788] sm:$0xff]
        %v1120 = vld [vmem:[%s787 + $0x790] sm:$0xff]
        %v1121 = vld [vmem:[%s787 + $0x798] sm:$0xff]
        %v1122 = vld [vmem:[%s787 + $0x7a0] sm:$0xff]
        %v1123 = vld [vmem:[%s787 + $0x7a8] sm:$0xff]
        %v1124 = vld [vmem:[%s787 + $0x7b0] sm:$0xff]
        %v1125 = vld [vmem:[%s787 + $0x7b8] sm:$0xff]
        %v1126 = vld [vmem:[%s787 + $0x7c0] sm:$0xff]
        %v1127 = vld [vmem:[%s787 + $0x7c8] sm:$0xff]
        %v1128 = vld [vmem:[%s787 + $0x7d0] sm:$0xff]
        %v1129 = vld [vmem:[%s787 + $0x7d8] sm:$0xff]
        %v1130 = vld [vmem:[%s787 + $0x7e0] sm:$0xff]
        %v1131 = vld [vmem:[%s787 + $0x7e8] sm:$0xff]
        %v1132 = vld [vmem:[%s787 + $0x7f0] sm:$0xff]
        %v1133 = vld [vmem:[%s787 + $0x7f8] sm:$0xff]
        %1134 = vmatprep.subr.mxu0 %v939
        %1135 = vmatpush1.msra.mxu0 %v938
        %1136 = vmatprep.subr.mxu0 %v935
        %1137 = vmatpush1.msra.mxu0 %v934
        %1138 = vmatprep.subr.mxu0 %v931
        %1139 = vmatpush1.msra.mxu0 %v930
        %1140 = vmatprep.subr.mxu0 %v927
        %1141 = vmatpush1.msra.mxu0 %v926
        %1142 = vmatprep.subr.mxu0 %v923
        %1143 = vmatpush1.msra.mxu0 %v922
        %1144 = vmatprep.subr.mxu0 %v919
        %1145 = vmatpush1.msra.mxu0 %v918
        %1146 = vmatprep.subr.mxu0 %v915
        %1147 = vmatpush1.msra.mxu0 %v914
        %1148 = vmatprep.subr.mxu0 %v911
        %1149 = vmatpush1.msra.mxu0 %v910
        %1150 = vmatprep.subr.mxu0 %v907
        %1151 = vmatpush1.msra.mxu0 %v906
        %1152 = vmatprep.subr.mxu0 %v903
        %1153 = vmatpush1.msra.mxu0 %v902
        %1154 = vmatprep.subr.mxu0 %v899
        %1155 = vmatpush1.msra.mxu0 %v898
        %1156 = vmatprep.subr.mxu0 %v895
        %1157 = vmatpush1.msra.mxu0 %v894
        %1158 = vmatprep.subr.mxu0 %v891
        %1159 = vmatpush1.msra.mxu0 %v890
        %1160 = vmatprep.subr.mxu0 %v887
        %1161 = vmatpush1.msra.mxu0 %v886
        %1162 = vmatprep.subr.mxu0 %v883
        %1163 = vmatpush1.msra.mxu0 %v882
        %1164 = vmatprep.subr.mxu0 %v879
        %1165 = vmatpush1.msra.mxu0 %v878
        %1166 = vmatprep.subr.mxu0 %v1003
        %1167 = vmatpush2.msra.mxu0 %v1002
        %1168 = vmatprep.subr.mxu0 %v999
        %1169 = vmatpush2.msra.mxu0 %v998
        %1170 = vmatprep.subr.mxu0 %v995
        %1171 = vmatpush2.msra.mxu0 %v994
        %1172 = vmatprep.subr.mxu0 %v991
        %1173 = vmatpush2.msra.mxu0 %v990
        %1174 = vmatprep.subr.mxu0 %v987
        %1175 = vmatpush2.msra.mxu0 %v986
        %1176 = vmatprep.subr.mxu0 %v983
        %1177 = vmatpush2.msra.mxu0 %v982
        %1178 = vmatprep.subr.mxu0 %v979
        %1179 = vmatpush2.msra.mxu0 %v978
        %1180 = vmatprep.subr.mxu0 %v975
        %1181 = vmatpush2.msra.mxu0 %v974
        %1182 = vmatprep.subr.mxu0 %v971
        %1183 = vmatpush2.msra.mxu0 %v970
        %1184 = vmatprep.subr.mxu0 %v967
        %1185 = vmatpush2.msra.mxu0 %v966
        %1186 = vmatprep.subr.mxu0 %v963
        %1187 = vmatpush2.msra.mxu0 %v962
        %1188 = vmatprep.subr.mxu0 %v959
        %1189 = vmatpush2.msra.mxu0 %v958
        %1190 = vmatprep.subr.mxu0 %v955
        %1191 = vmatpush2.msra.mxu0 %v954
        %1192 = vmatprep.subr.mxu0 %v951
        %1193 = vmatpush2.msra.mxu0 %v950
        %1194 = vmatprep.subr.mxu0 %v947
        %1195 = vmatpush2.msra.mxu0 %v946
        %1196 = vmatprep.subr.mxu0 %v943
        %1197 = vmatpush2.msra.mxu0 %v942
        %1198 = vmatprep.mubr.f32.mxu0 %v875
        %1199 = vmatmul.mubr.f32.gmra.mxu0 %v874
        %v1200 = vpop.f32.mrf.mxu0
        %v1201 = vadd.f32 0.0, %v1200
        %v1202 = vpop.f32.mrf.mxu0
        %v1203 = vadd.f32 0.0, %v1202
        %1204 = vdwg.mxu0
        %1205 = vmatprep.subr.mxu0 %v1067
        %1206 = vmatpush1.msra.mxu0 %v1066
        %1207 = vmatprep.subr.mxu0 %v1063
        %1208 = vmatpush1.msra.mxu0 %v1062
        %1209 = vmatprep.subr.mxu0 %v1059
        %1210 = vmatpush1.msra.mxu0 %v1058
        %1211 = vmatprep.subr.mxu0 %v1055
        %1212 = vmatpush1.msra.mxu0 %v1054
        %1213 = vmatprep.subr.mxu0 %v1051
        %1214 = vmatpush1.msra.mxu0 %v1050
        %1215 = vmatprep.subr.mxu0 %v1047
        %1216 = vmatpush1.msra.mxu0 %v1046
        %1217 = vmatprep.subr.mxu0 %v1043
        %1218 = vmatpush1.msra.mxu0 %v1042
        %1219 = vmatprep.subr.mxu0 %v1039
        %1220 = vmatpush1.msra.mxu0 %v1038
        %1221 = vmatprep.subr.mxu0 %v1035
        %1222 = vmatpush1.msra.mxu0 %v1034
        %1223 = vmatprep.subr.mxu0 %v1031
        %1224 = vmatpush1.msra.mxu0 %v1030
        %1225 = vmatprep.subr.mxu0 %v1027
        %1226 = vmatpush1.msra.mxu0 %v1026
        %1227 = vmatprep.subr.mxu0 %v1023
        %1228 = vmatpush1.msra.mxu0 %v1022
        %1229 = vmatprep.subr.mxu0 %v1019
        %1230 = vmatpush1.msra.mxu0 %v1018
        %1231 = vmatprep.subr.mxu0 %v1015
        %1232 = vmatpush1.msra.mxu0 %v1014
        %1233 = vmatprep.subr.mxu0 %v1011
        %1234 = vmatpush1.msra.mxu0 %v1010
        %1235 = vmatprep.subr.mxu0 %v1007
        %1236 = vmatpush1.msra.mxu0 %v1006
        %1237 = vmatprep.subr.mxu0 %v1131
        %1238 = vmatpush2.msra.mxu0 %v1130
        %1239 = vmatprep.subr.mxu0 %v1127
        %1240 = vmatpush2.msra.mxu0 %v1126
        %1241 = vmatprep.subr.mxu0 %v1123
        %1242 = vmatpush2.msra.mxu0 %v1122
        %1243 = vmatprep.subr.mxu0 %v1119
        %1244 = vmatpush2.msra.mxu0 %v1118
        %1245 = vmatprep.subr.mxu0 %v1115
        %1246 = vmatpush2.msra.mxu0 %v1114
        %1247 = vmatprep.subr.mxu0 %v1111
        %1248 = vmatpush2.msra.mxu0 %v1110
        %1249 = vmatprep.subr.mxu0 %v1107
        %1250 = vmatpush2.msra.mxu0 %v1106
        %1251 = vmatprep.subr.mxu0 %v1103
        %1252 = vmatpush2.msra.mxu0 %v1102
        %1253 = vmatprep.subr.mxu0 %v1099
        %1254 = vmatpush2.msra.mxu0 %v1098
        %1255 = vmatprep.subr.mxu0 %v1095
        %1256 = vmatpush2.msra.mxu0 %v1094
        %1257 = vmatprep.subr.mxu0 %v1091
        %1258 = vmatpush2.msra.mxu0 %v1090
        %1259 = vmatprep.subr.mxu0 %v1087
        %1260 = vmatpush2.msra.mxu0 %v1086
        %1261 = vmatprep.subr.mxu0 %v1083
        %1262 = vmatpush2.msra.mxu0 %v1082
        %1263 = vmatprep.subr.mxu0 %v1079
        %1264 = vmatpush2.msra.mxu0 %v1078
        %1265 = vmatprep.subr.mxu0 %v1075
        %1266 = vmatpush2.msra.mxu0 %v1074
        %1267 = vmatprep.subr.mxu0 %v1071
        %1268 = vmatpush2.msra.mxu0 %v1070
        %1269 = vmatprep.mubr.f32.mxu0 %v877
        %1270 = vmatmul.mubr.f32.gmra.mxu0 %v876
        %v1271 = vpop.f32.mrf.mxu0
        %v1272 = vadd.f32 %v1201, %v1271
        %v1273 = vpop.f32.mrf.mxu0
        %v1274 = vadd.f32 %v1203, %v1273
        %1275 = vdwg.mxu0
        %1276 = vmatprep.subr.mxu0 %v941
        %1277 = vmatpush1.msra.mxu0 %v940
        %1278 = vmatprep.subr.mxu0 %v937
        %1279 = vmatpush1.msra.mxu0 %v936
        %1280 = vmatprep.subr.mxu0 %v933
        %1281 = vmatpush1.msra.mxu0 %v932
        %1282 = vmatprep.subr.mxu0 %v929
        %1283 = vmatpush1.msra.mxu0 %v928
        %1284 = vmatprep.subr.mxu0 %v925
        %1285 = vmatpush1.msra.mxu0 %v924
        %1286 = vmatprep.subr.mxu0 %v921
        %1287 = vmatpush1.msra.mxu0 %v920
        %1288 = vmatprep.subr.mxu0 %v917
        %1289 = vmatpush1.msra.mxu0 %v916
        %1290 = vmatprep.subr.mxu0 %v913
        %1291 = vmatpush1.msra.mxu0 %v912
        %1292 = vmatprep.subr.mxu0 %v909
        %1293 = vmatpush1.msra.mxu0 %v908
        %1294 = vmatprep.subr.mxu0 %v905
        %1295 = vmatpush1.msra.mxu0 %v904
        %1296 = vmatprep.subr.mxu0 %v901
        %1297 = vmatpush1.msra.mxu0 %v900
        %1298 = vmatprep.subr.mxu0 %v897
        %1299 = vmatpush1.msra.mxu0 %v896
        %1300 = vmatprep.subr.mxu0 %v893
        %1301 = vmatpush1.msra.mxu0 %v892
        %1302 = vmatprep.subr.mxu0 %v889
        %1303 = vmatpush1.msra.mxu0 %v888
        %1304 = vmatprep.subr.mxu0 %v885
        %1305 = vmatpush1.msra.mxu0 %v884
        %1306 = vmatprep.subr.mxu0 %v881
        %1307 = vmatpush1.msra.mxu0 %v880
        %1308 = vmatprep.subr.mxu0 %v1005
        %1309 = vmatpush2.msra.mxu0 %v1004
        %1310 = vmatprep.subr.mxu0 %v1001
        %1311 = vmatpush2.msra.mxu0 %v1000
        %1312 = vmatprep.subr.mxu0 %v997
        %1313 = vmatpush2.msra.mxu0 %v996
        %1314 = vmatprep.subr.mxu0 %v993
        %1315 = vmatpush2.msra.mxu0 %v992
        %1316 = vmatprep.subr.mxu0 %v989
        %1317 = vmatpush2.msra.mxu0 %v988
        %1318 = vmatprep.subr.mxu0 %v985
        %1319 = vmatpush2.msra.mxu0 %v984
        %1320 = vmatprep.subr.mxu0 %v981
        %1321 = vmatpush2.msra.mxu0 %v980
        %1322 = vmatprep.subr.mxu0 %v977
        %1323 = vmatpush2.msra.mxu0 %v976
        %1324 = vmatprep.subr.mxu0 %v973
        %1325 = vmatpush2.msra.mxu0 %v972
        %1326 = vmatprep.subr.mxu0 %v969
        %1327 = vmatpush2.msra.mxu0 %v968
        %1328 = vmatprep.subr.mxu0 %v965
        %1329 = vmatpush2.msra.mxu0 %v964
        %1330 = vmatprep.subr.mxu0 %v961
        %1331 = vmatpush2.msra.mxu0 %v960
        %1332 = vmatprep.subr.mxu0 %v957
        %1333 = vmatpush2.msra.mxu0 %v956
        %1334 = vmatprep.subr.mxu0 %v953
        %1335 = vmatpush2.msra.mxu0 %v952
        %1336 = vmatprep.subr.mxu0 %v949
        %1337 = vmatpush2.msra.mxu0 %v948
        %1338 = vmatprep.subr.mxu0 %v945
        %1339 = vmatpush2.msra.mxu0 %v944
        %1340 = vmatprep.mubr.f32.mxu0 %v875
        %1341 = vmatmul.mubr.f32.gmra.mxu0 %v874
        %v1342 = vpop.f32.mrf.mxu0
        %v1343 = vadd.f32 0.0, %v1342
        %v1344 = vpop.f32.mrf.mxu0
        %v1345 = vadd.f32 0.0, %v1344
        %1346 = vdwg.mxu0
        %1347 = vmatprep.subr.mxu0 %v1069
        %1348 = vmatpush1.msra.mxu0 %v1068
        %1349 = vmatprep.subr.mxu0 %v1065
        %1350 = vmatpush1.msra.mxu0 %v1064
        %1351 = vmatprep.subr.mxu0 %v1061
        %1352 = vmatpush1.msra.mxu0 %v1060
        %1353 = vmatprep.subr.mxu0 %v1057
        %1354 = vmatpush1.msra.mxu0 %v1056
        %1355 = vmatprep.subr.mxu0 %v1053
        %1356 = vmatpush1.msra.mxu0 %v1052
        %1357 = vmatprep.subr.mxu0 %v1049
        %1358 = vmatpush1.msra.mxu0 %v1048
        %1359 = vmatprep.subr.mxu0 %v1045
        %1360 = vmatpush1.msra.mxu0 %v1044
        %1361 = vmatprep.subr.mxu0 %v1041
        %1362 = vmatpush1.msra.mxu0 %v1040
        %1363 = vmatprep.subr.mxu0 %v1037
        %1364 = vmatpush1.msra.mxu0 %v1036
        %1365 = vmatprep.subr.mxu0 %v1033
        %1366 = vmatpush1.msra.mxu0 %v1032
        %1367 = vmatprep.subr.mxu0 %v1029
        %1368 = vmatpush1.msra.mxu0 %v1028
        %1369 = vmatprep.subr.mxu0 %v1025
        %1370 = vmatpush1.msra.mxu0 %v1024
        %1371 = vmatprep.subr.mxu0 %v1021
        %1372 = vmatpush1.msra.mxu0 %v1020
        %1373 = vmatprep.subr.mxu0 %v1017
        %1374 = vmatpush1.msra.mxu0 %v1016
        %1375 = vmatprep.subr.mxu0 %v1013
        %1376 = vmatpush1.msra.mxu0 %v1012
        %1377 = vmatprep.subr.mxu0 %v1009
        %1378 = vmatpush1.msra.mxu0 %v1008
        %1379 = vmatprep.subr.mxu0 %v1133
        %1380 = vmatpush2.msra.mxu0 %v1132
        %1381 = vmatprep.subr.mxu0 %v1129
        %1382 = vmatpush2.msra.mxu0 %v1128
        %1383 = vmatprep.subr.mxu0 %v1125
        %1384 = vmatpush2.msra.mxu0 %v1124
        %1385 = vmatprep.subr.mxu0 %v1121
        %1386 = vmatpush2.msra.mxu0 %v1120
        %1387 = vmatprep.subr.mxu0 %v1117
        %1388 = vmatpush2.msra.mxu0 %v1116
        %1389 = vmatprep.subr.mxu0 %v1113
        %1390 = vmatpush2.msra.mxu0 %v1112
        %1391 = vmatprep.subr.mxu0 %v1109
        %1392 = vmatpush2.msra.mxu0 %v1108
        %1393 = vmatprep.subr.mxu0 %v1105
        %1394 = vmatpush2.msra.mxu0 %v1104
        %1395 = vmatprep.subr.mxu0 %v1101
        %1396 = vmatpush2.msra.mxu0 %v1100
        %1397 = vmatprep.subr.mxu0 %v1097
        %1398 = vmatpush2.msra.mxu0 %v1096
        %1399 = vmatprep.subr.mxu0 %v1093
        %1400 = vmatpush2.msra.mxu0 %v1092
        %1401 = vmatprep.subr.mxu0 %v1089
        %1402 = vmatpush2.msra.mxu0 %v1088
        %1403 = vmatprep.subr.mxu0 %v1085
        %1404 = vmatpush2.msra.mxu0 %v1084
        %1405 = vmatprep.subr.mxu0 %v1081
        %1406 = vmatpush2.msra.mxu0 %v1080
        %1407 = vmatprep.subr.mxu0 %v1077
        %1408 = vmatpush2.msra.mxu0 %v1076
        %1409 = vmatprep.subr.mxu0 %v1073
        %1410 = vmatpush2.msra.mxu0 %v1072
        %1411 = vmatprep.mubr.f32.mxu0 %v877
        %1412 = vmatmul.mubr.f32.gmra.mxu0 %v876
        %v1413 = vpop.f32.mrf.mxu0
        %v1414 = vadd.f32 %v1343, %v1413
        %v1415 = vpop.f32.mrf.mxu0
        %v1416 = vadd.f32 %v1345, %v1415
        %1417 = vdwg.mxu0
        %v1418 = vadd.f32 %v870, %v1272
        %v1419 = vadd.f32 %v871, %v1274
        %v1420 = vadd.f32 %v872, %v1414
        %v1421 = vadd.f32 %v873, %v1416
        %1422 = vst [vmem:[#allocation2] sm:$0xff] %v1418
        %1423 = vst [vmem:[#allocation2 + $0x8] sm:$0xff] %v1419
        %1424 = vst [vmem:[#allocation2 + $0x10] sm:$0xff] %v1420
        %1425 = vst [vmem:[#allocation2 + $0x18] sm:$0xff] %v1421
        // Predicated region
        $region72: #{head_forward.3} parent=58 // pred_check
          %p1426 = pneg %p857
        $region73: #{head_forward.3} parent=58 // pred_check_branch
          %1428 = sbr.rel (%p1426) target = $region75
        $region74: #{head_forward.3} parent=58 // pred_region
          %v1429 = vld [vmem:[#allocation2] sm:$0xff]
          %v1430 = vld [vmem:[#allocation2 + $0x8] sm:$0xff]
          %v1431 = vld [vmem:[#allocation2 + $0x10] sm:$0xff]
          %v1432 = vld [vmem:[#allocation2 + $0x18] sm:$0xff]
          %v1433 = vld [vmem:[%s844] sm:$0xf]
          %v1435 = vlaneseq
          %v1436 = vshrl.u32 %v1435, 7
          %v1437 = vsub.s32 0, %v1436
          %v1438 = vrot.slane %v1433, %v1437
          %v1439 = vlaneseq
          %v1440 = vshrl.u32 %v1439, 7
          %v1441 = vsub.s32 1, %v1440
          %v1442 = vrot.slane %v1433, %v1441
          %v1443 = vlaneseq
          %v1444 = vshrl.u32 %v1443, 7
          %v1445 = vsub.s32 2, %v1444
          %v1446 = vrot.slane %v1433, %v1445
          %v1447 = vlaneseq
          %v1448 = vshrl.u32 %v1447, 7
          %v1449 = vsub.s32 3, %v1448
          %v1450 = vrot.slane %v1433, %v1449
          %v1455 = vadd.f32 %v1429, %v1438
          %v1456 = vadd.f32 %v1430, %v1442
          %v1457 = vadd.f32 %v1431, %v1446
          %v1458 = vadd.f32 %v1432, %v1450
          %v1459 = vmax.f32 %v1455, 0.0
          %v1460 = vmax.f32 %v1456, 0.0
          %v1461 = vmax.f32 %v1457, 0.0
          %v1462 = vmax.f32 %v1458, 0.0
          %v1463 = vld [vmem:[#allocation3] sm:$0xff]
          %v1464 = vld [vmem:[%s850] sm:$0xff]
          %v1465 = vld [vmem:[%s850 + $0x8] sm:$0xff]
          %v1466 = vld [vmem:[%s850 + $0x10] sm:$0xff]
          %v1467 = vld [vmem:[%s850 + $0x18] sm:$0xff]
          %v1468 = vld [vmem:[%s850 + $0x20] sm:$0xff]
          %v1469 = vld [vmem:[%s850 + $0x28] sm:$0xff]
          %v1470 = vld [vmem:[%s850 + $0x30] sm:$0xff]
          %v1471 = vld [vmem:[%s850 + $0x38] sm:$0xff]
          %v1472 = vld [vmem:[%s850 + $0x40] sm:$0xff]
          %v1473 = vld [vmem:[%s850 + $0x48] sm:$0xff]
          %v1474 = vld [vmem:[%s850 + $0x50] sm:$0xff]
          %v1475 = vld [vmem:[%s850 + $0x58] sm:$0xff]
          %v1476 = vld [vmem:[%s850 + $0x60] sm:$0xff]
          %v1477 = vld [vmem:[%s850 + $0x68] sm:$0xff]
          %v1478 = vld [vmem:[%s850 + $0x70] sm:$0xff]
          %v1479 = vld [vmem:[%s850 + $0x78] sm:$0xff]
          %v1480 = vld [vmem:[%s850 + $0x80] sm:$0xff]
          %v1481 = vld [vmem:[%s850 + $0x88] sm:$0xff]
          %v1482 = vld [vmem:[%s850 + $0x90] sm:$0xff]
          %v1483 = vld [vmem:[%s850 + $0x98] sm:$0xff]
          %v1484 = vld [vmem:[%s850 + $0xa0] sm:$0xff]
          %v1485 = vld [vmem:[%s850 + $0xa8] sm:$0xff]
          %v1486 = vld [vmem:[%s850 + $0xb0] sm:$0xff]
          %v1487 = vld [vmem:[%s850 + $0xb8] sm:$0xff]
          %v1488 = vld [vmem:[%s850 + $0xc0] sm:$0xff]
          %v1489 = vld [vmem:[%s850 + $0xc8] sm:$0xff]
          %v1490 = vld [vmem:[%s850 + $0xd0] sm:$0xff]
          %v1491 = vld [vmem:[%s850 + $0xd8] sm:$0xff]
          %v1492 = vld [vmem:[%s850 + $0xe0] sm:$0xff]
          %v1493 = vld [vmem:[%s850 + $0xe8] sm:$0xff]
          %v1494 = vld [vmem:[%s850 + $0xf0] sm:$0xff]
          %v1495 = vld [vmem:[%s850 + $0xf8] sm:$0xff]
          %v1496 = vld [vmem:[%s850 + $0x100] sm:$0xff]
          %v1497 = vld [vmem:[%s850 + $0x108] sm:$0xff]
          %v1498 = vld [vmem:[%s850 + $0x110] sm:$0xff]
          %v1499 = vld [vmem:[%s850 + $0x118] sm:$0xff]
          %v1500 = vld [vmem:[%s850 + $0x120] sm:$0xff]
          %v1501 = vld [vmem:[%s850 + $0x128] sm:$0xff]
          %v1502 = vld [vmem:[%s850 + $0x130] sm:$0xff]
          %v1503 = vld [vmem:[%s850 + $0x138] sm:$0xff]
          %v1504 = vld [vmem:[%s850 + $0x140] sm:$0xff]
          %v1505 = vld [vmem:[%s850 + $0x148] sm:$0xff]
          %v1506 = vld [vmem:[%s850 + $0x150] sm:$0xff]
          %v1507 = vld [vmem:[%s850 + $0x158] sm:$0xff]
          %v1508 = vld [vmem:[%s850 + $0x160] sm:$0xff]
          %v1509 = vld [vmem:[%s850 + $0x168] sm:$0xff]
          %v1510 = vld [vmem:[%s850 + $0x170] sm:$0xff]
          %v1511 = vld [vmem:[%s850 + $0x178] sm:$0xff]
          %v1512 = vld [vmem:[%s850 + $0x180] sm:$0xff]
          %v1513 = vld [vmem:[%s850 + $0x188] sm:$0xff]
          %v1514 = vld [vmem:[%s850 + $0x190] sm:$0xff]
          %v1515 = vld [vmem:[%s850 + $0x198] sm:$0xff]
          %v1516 = vld [vmem:[%s850 + $0x1a0] sm:$0xff]
          %v1517 = vld [vmem:[%s850 + $0x1a8] sm:$0xff]
          %v1518 = vld [vmem:[%s850 + $0x1b0] sm:$0xff]
          %v1519 = vld [vmem:[%s850 + $0x1b8] sm:$0xff]
          %v1520 = vld [vmem:[%s850 + $0x1c0] sm:$0xff]
          %v1521 = vld [vmem:[%s850 + $0x1c8] sm:$0xff]
          %v1522 = vld [vmem:[%s850 + $0x1d0] sm:$0xff]
          %v1523 = vld [vmem:[%s850 + $0x1d8] sm:$0xff]
          %v1524 = vld [vmem:[%s850 + $0x1e0] sm:$0xff]
          %v1525 = vld [vmem:[%s850 + $0x1e8] sm:$0xff]
          %v1526 = vld [vmem:[%s850 + $0x1f0] sm:$0xff]
          %v1527 = vld [vmem:[%s850 + $0x1f8] sm:$0xff]
          %1528 = vmatprep.subr.mxu0 0.0
          %1529 = vmatpush1.msra.mxu0 %v1479
          %1530 = vmatprep.subr.mxu0 0.0
          %1531 = vmatpush1.msra.mxu0 %v1478
          %1532 = vmatprep.subr.mxu0 0.0
          %1533 = vmatpush1.msra.mxu0 %v1477
          %1534 = vmatprep.subr.mxu0 0.0
          %1535 = vmatpush1.msra.mxu0 %v1476
          %1536 = vmatprep.subr.mxu0 0.0
          %1537 = vmatpush1.msra.mxu0 %v1475
          %1538 = vmatprep.subr.mxu0 0.0
          %1539 = vmatpush1.msra.mxu0 %v1474
          %1540 = vmatprep.subr.mxu0 0.0
          %1541 = vmatpush1.msra.mxu0 %v1473
          %1542 = vmatprep.subr.mxu0 0.0
          %1543 = vmatpush1.msra.mxu0 %v1472
          %1544 = vmatprep.subr.mxu0 0.0
          %1545 = vmatpush1.msra.mxu0 %v1471
          %1546 = vmatprep.subr.mxu0 0.0
          %1547 = vmatpush1.msra.mxu0 %v1470
          %1548 = vmatprep.subr.mxu0 0.0
          %1549 = vmatpush1.msra.mxu0 %v1469
          %1550 = vmatprep.subr.mxu0 0.0
          %1551 = vmatpush1.msra.mxu0 %v1468
          %1552 = vmatprep.subr.mxu0 0.0
          %1553 = vmatpush1.msra.mxu0 %v1467
          %1554 = vmatprep.subr.mxu0 0.0
          %1555 = vmatpush1.msra.mxu0 %v1466
          %1556 = vmatprep.subr.mxu0 0.0
          %1557 = vmatpush1.msra.mxu0 %v1465
          %1558 = vmatprep.subr.mxu0 0.0
          %1559 = vmatpush1.msra.mxu0 %v1464
          %1560 = vmatprep.subr.mxu0 0.0
          %1561 = vmatpush2.msra.mxu0 %v1495
          %1562 = vmatprep.subr.mxu0 0.0
          %1563 = vmatpush2.msra.mxu0 %v1494
          %1564 = vmatprep.subr.mxu0 0.0
          %1565 = vmatpush2.msra.mxu0 %v1493
          %1566 = vmatprep.subr.mxu0 0.0
          %1567 = vmatpush2.msra.mxu0 %v1492
          %1568 = vmatprep.subr.mxu0 0.0
          %1569 = vmatpush2.msra.mxu0 %v1491
          %1570 = vmatprep.subr.mxu0 0.0
          %1571 = vmatpush2.msra.mxu0 %v1490
          %1572 = vmatprep.subr.mxu0 0.0
          %1573 = vmatpush2.msra.mxu0 %v1489
          %1574 = vmatprep.subr.mxu0 0.0
          %1575 = vmatpush2.msra.mxu0 %v1488
          %1576 = vmatprep.subr.mxu0 0.0
          %1577 = vmatpush2.msra.mxu0 %v1487
          %1578 = vmatprep.subr.mxu0 0.0
          %1579 = vmatpush2.msra.mxu0 %v1486
          %1580 = vmatprep.subr.mxu0 0.0
          %1581 = vmatpush2.msra.mxu0 %v1485
          %1582 = vmatprep.subr.mxu0 0.0
          %1583 = vmatpush2.msra.mxu0 %v1484
          %1584 = vmatprep.subr.mxu0 0.0
          %1585 = vmatpush2.msra.mxu0 %v1483
          %1586 = vmatprep.subr.mxu0 0.0
          %1587 = vmatpush2.msra.mxu0 %v1482
          %1588 = vmatprep.subr.mxu0 0.0
          %1589 = vmatpush2.msra.mxu0 %v1481
          %1590 = vmatprep.subr.mxu0 0.0
          %1591 = vmatpush2.msra.mxu0 %v1480
          %1592 = vmatprep.mubr.f32.mxu0 %v1460
          %1593 = vmatmul.mubr.f32.gmra.mxu0 %v1459
          %v1594 = vpop.f32.mrf.mxu0
          %v1595 = vadd.f32 0.0, %v1594
          %v1596 = vpop.f32.mrf.mxu0
          %1597 = vdwg.mxu0
          %1598 = vmatprep.subr.mxu0 0.0
          %1599 = vmatpush1.msra.mxu0 %v1511
          %1600 = vmatprep.subr.mxu0 0.0
          %1601 = vmatpush1.msra.mxu0 %v1510
          %1602 = vmatprep.subr.mxu0 0.0
          %1603 = vmatpush1.msra.mxu0 %v1509
          %1604 = vmatprep.subr.mxu0 0.0
          %1605 = vmatpush1.msra.mxu0 %v1508
          %1606 = vmatprep.subr.mxu0 0.0
          %1607 = vmatpush1.msra.mxu0 %v1507
          %1608 = vmatprep.subr.mxu0 0.0
          %1609 = vmatpush1.msra.mxu0 %v1506
          %1610 = vmatprep.subr.mxu0 0.0
          %1611 = vmatpush1.msra.mxu0 %v1505
          %1612 = vmatprep.subr.mxu0 0.0
          %1613 = vmatpush1.msra.mxu0 %v1504
          %1614 = vmatprep.subr.mxu0 0.0
          %1615 = vmatpush1.msra.mxu0 %v1503
          %1616 = vmatprep.subr.mxu0 0.0
          %1617 = vmatpush1.msra.mxu0 %v1502
          %1618 = vmatprep.subr.mxu0 0.0
          %1619 = vmatpush1.msra.mxu0 %v1501
          %1620 = vmatprep.subr.mxu0 0.0
          %1621 = vmatpush1.msra.mxu0 %v1500
          %1622 = vmatprep.subr.mxu0 0.0
          %1623 = vmatpush1.msra.mxu0 %v1499
          %1624 = vmatprep.subr.mxu0 0.0
          %1625 = vmatpush1.msra.mxu0 %v1498
          %1626 = vmatprep.subr.mxu0 0.0
          %1627 = vmatpush1.msra.mxu0 %v1497
          %1628 = vmatprep.subr.mxu0 0.0
          %1629 = vmatpush1.msra.mxu0 %v1496
          %1630 = vmatprep.subr.mxu0 0.0
          %1631 = vmatpush2.msra.mxu0 %v1527
          %1632 = vmatprep.subr.mxu0 0.0
          %1633 = vmatpush2.msra.mxu0 %v1526
          %1634 = vmatprep.subr.mxu0 0.0
          %1635 = vmatpush2.msra.mxu0 %v1525
          %1636 = vmatprep.subr.mxu0 0.0
          %1637 = vmatpush2.msra.mxu0 %v1524
          %1638 = vmatprep.subr.mxu0 0.0
          %1639 = vmatpush2.msra.mxu0 %v1523
          %1640 = vmatprep.subr.mxu0 0.0
          %1641 = vmatpush2.msra.mxu0 %v1522
          %1642 = vmatprep.subr.mxu0 0.0
          %1643 = vmatpush2.msra.mxu0 %v1521
          %1644 = vmatprep.subr.mxu0 0.0
          %1645 = vmatpush2.msra.mxu0 %v1520
          %1646 = vmatprep.subr.mxu0 0.0
          %1647 = vmatpush2.msra.mxu0 %v1519
          %1648 = vmatprep.subr.mxu0 0.0
          %1649 = vmatpush2.msra.mxu0 %v1518
          %1650 = vmatprep.subr.mxu0 0.0
          %1651 = vmatpush2.msra.mxu0 %v1517
          %1652 = vmatprep.subr.mxu0 0.0
          %1653 = vmatpush2.msra.mxu0 %v1516
          %1654 = vmatprep.subr.mxu0 0.0
          %1655 = vmatpush2.msra.mxu0 %v1515
          %1656 = vmatprep.subr.mxu0 0.0
          %1657 = vmatpush2.msra.mxu0 %v1514
          %1658 = vmatprep.subr.mxu0 0.0
          %1659 = vmatpush2.msra.mxu0 %v1513
          %1660 = vmatprep.subr.mxu0 0.0
          %1661 = vmatpush2.msra.mxu0 %v1512
          %1662 = vmatprep.mubr.f32.mxu0 %v1462
          %1663 = vmatmul.mubr.f32.gmra.mxu0 %v1461
          %v1664 = vpop.f32.mrf.mxu0
          %v1665 = vadd.f32 %v1595, %v1664
          %v1666 = vpop.f32.mrf.mxu0
          %1667 = vdwg.mxu0
          %v1668 = vadd.f32 %v1463, %v1665
          %1669 = vst [vmem:[#allocation3] sm:$0xff] %v1668
        $region75: #{head_forward.3} parent=58 // pred_fallthru
          _
        %p1670 = scmp.eq.s32.totalorder %s22, 7
        %p1671 = pnand %p857, %p1670
        %p1672 = pneg %p1671
        // Predicated region
        $region76: #{head_forward.3} parent=58 // pred_check
          _
        $region77: #{head_forward.3} parent=58 // pred_check_branch
          %1674 = sbr.rel (%p1671) target = $region79
        $region78: #{head_forward.3} parent=58 // pred_region
          %v1675 = vld [vmem:[#allocation3] sm:$0xff]
          %v1676 = vld [vmem:[%s4] sm:$0x1]
          %v1678 = vlaneseq
          %v1679 = vshrl.u32 %v1678, 7
          %v1680 = vsub.s32 0, %v1679
          %v1681 = vrot.slane %v1676, %v1680
          %v1683 = vadd.f32 %v1675, %v1681
          %1684 = vst [vmem:[%s855] sm:$0xff] %v1683
        $region79: #{head_forward.3} parent=58 // pred_fallthru
          _
        %p1685 = scmp.lt.s32.totalorder %s21, 0
        %s1686 = scalar_select %p1685, %s21, 0
        %s1687 = smul.addr %s1686, 8
        %s1688 = scalar_lea.vmem %s5, %s1687
        // Predicated region
        $region80: #{head_forward.3} parent=58 // pred_check
          %p1689 = pneg %p182
        $region81: #{head_forward.3} parent=58 // pred_check_branch
          %1691 = sbr.rel (%p1689) target = $region83
        $region82: #{head_forward.3} parent=58 // pred_region
          _
        $region83: #{head_forward.3} parent=58 // pred_fallthru
          _
        // Predicated region
        $region84: #{head_forward.3} parent=58 // pred_check
          %p1692 = pneg %p182
        $region85: #{head_forward.3} parent=58 // pred_check_branch
          %1694 = sbr.rel (%p1692) target = $region87
        $region86: #{head_forward.3} parent=58 // pred_region
          %p1695 = scmp.lt.s32.totalorder %s21, 0
          %s1696 = scalar_select %p1695, %s21, 0
          %s1697 = smul.addr %s1696, 8
          %s1698 = scalar_lea.vmem %s5, %s1697
        $region87: #{head_forward.3} parent=58 // pred_fallthru
          _
      $region59: #{head_forward.3} parent=5 // pred_fallthru
        _
      %p1699 = scmp.le.s32.totalorder 2, %s11
      // Predicated region
      $region88: #{head_forward.3} parent=5 // pred_check
        %p1700 = pneg %p1699
      $region89: #{head_forward.3} parent=5 // pred_check_branch
        %1702 = sbr.rel (%p1700) target = $region91
      $region90: #{head_forward.3} parent=5 // pred_region
        %s1703 = ssub.s32 %s11, 2
      $region91: #{head_forward.3} parent=5 // pred_fallthru
        _
    $region6: #{head_forward.3} parent=1 // loop_footer
      %s15 = sadd.s32 1, %s11
    $region7: #{head_forward.3} parent=1 // loop_footer_branch
      %10 = sbr.rel target = $region3
    $region8: #{head_forward.3} parent=1 // loop_exit
      _

</llo_original>
